<compile_context>
chip_gen: v7x
topology: tpu7x:2x2x1
jax: 0.10.0
libtpu: 0.0.40
codegen_flags: <defaults>
</compile_context>

<pallas_src>
import functools
import math

import jax
import jax.numpy as jnp
from jax.experimental import pallas as pl
from jax.experimental.pallas import tpu as pltpu

NEG_INF = float("-inf")
_MASK_NEG = -1e30  # large finite negative: same softmax result as -inf, no inf-inf NaNs

_CP = pltpu.CompilerParams(
    dimension_semantics=("parallel",),          # batch axis -> shard across TCs (v7x megacore)
    vmem_limit_bytes=32 * 1024 * 1024,          # safe on v5e/v6e/v7x; tiles here are tiny
)


# ---------------------------------------------------------------- BlockSpec helpers

def _bspec(shape):
    """Batched along the leading (grid) dim: block (1, *rest)."""
    n_rest = len(shape) - 1
    return pl.BlockSpec((1,) + tuple(shape[1:]), lambda n: (n,) + (0,) * n_rest)


def _sspec(shape):
    """Shared operand (weights / masks / norm params): full-array block every step."""
    nd = len(shape)
    return pl.BlockSpec(tuple(shape), lambda n: (0,) * nd)


# ---------------------------------------------------------------- in-kernel helpers

def _layernorm(x, g, b, eps=1e-5):
    """LayerNorm over last dim (biased variance, torch.nn.LayerNorm semantics). x: (M, E)."""
    mu = jnp.mean(x, axis=-1, keepdims=True)
    var = jnp.mean((x - mu) * (x - mu), axis=-1, keepdims=True)
    return (x - mu) * jax.lax.rsqrt(var + eps) * g + b


def _heads_attention_outproj(q, k, v, kmask, wo, nhead):
    """Per-head scaled-dot-product attention + out-projection, accumulated over heads.
    q: (Sq, E), k/v: (Sk, E), kmask: (Sq, Sk) or (1, Sk) additive, wo: (E, E) in (in,out) layout.
    Returns (Sq, E) = concat_heads(attn) @ Wo (bias added by caller)."""
    _, E = q.shape
    D = E // nhead
    inv_sqrt_d = 1.0 / math.sqrt(D)
    acc = None
    for h in range(nhead):
        lo, hi = h * D, (h + 1) * D
        # scores = q_h @ k_h^T  (MXU handles the transposed operand natively via dot_general)
        s = jax.lax.dot_general(q[:, lo:hi], k[:, lo:hi],
                                (((1,), (1,)), ((), ())),
                                preferred_element_type=jnp.float32)
        s = s * inv_sqrt_d + kmask
        m = jnp.max(s, axis=-1, keepdims=True)
        p = jnp.exp(s - m)
        den = jnp.sum(p, axis=-1, keepdims=True)
        p = p * pl.reciprocal(den, approx=True)           # EUP reciprocal (free-ish slot)
        ctx = jnp.dot(p, v[:, lo:hi], preferred_element_type=jnp.float32)          # (Sq, D)
        head_out = jnp.dot(ctx, wo[lo:hi, :], preferred_element_type=jnp.float32)  # (Sq, E)
        acc = head_out if acc is None else acc + head_out
    return acc


# ---------------------------------------------------------------- fused kernels

def _embed_pe_kernel(x_ref, pe_ref, o_ref, *, scale):
    # o = tok_emb * sqrt(E) + positional_encoding  (dropout = identity)
    o_ref[0] = (x_ref[0] * scale + pe_ref[0]).astype(o_ref.dtype)


def _self_mha_ln_kernel(x_ref, wqkv_ref, bqkv_ref, wo_ref, bo_ref,
                        amask_ref, kpm_ref, g_ref, b_ref, o_ref, *, nhead):
    """norm(x + SelfMHA(x)) for one batch element. Single fused (E,3E) QKV matmul."""
    E = x_ref.shape[2]
    x = x_ref[0].astype(jnp.float32)                                          # (S, E)
    qkv = jnp.dot(x, wqkv_ref[...], preferred_element_type=jnp.float32) + bqkv_ref[...]
    kmask = amask_ref[...] + kpm_ref[0]                                       # (S,S) + (1,S)
    attn = _heads_attention_outproj(qkv[:, :E], qkv[:, E:2 * E], qkv[:, 2 * E:],
                                    kmask, wo_ref[...], nhead)
    y = x + attn + bo_ref[...]                                                # residual + out-proj bias
    o_ref[0] = _layernorm(y, g_ref[...], b_ref[...]).astype(o_ref.dtype)


def _cross_mha_ln_kernel(x_ref, mem_ref, wq_ref, bq_ref, wkv_ref, bkv_ref,
                         wo_ref, bo_ref, kpm_ref, g_ref, b_ref, o_ref, *, nhead):
    """norm(x + CrossMHA(x, memory)) for one batch element (memory_mask=None)."""
    E = x_ref.shape[2]
    x = x_ref[0].astype(jnp.float32)                                          # (T, E)
    mem = mem_ref[0].astype(jnp.float32)                                      # (S, E)
    q = jnp.dot(x, wq_ref[...], preferred_element_type=jnp.float32) + bq_ref[...]
    kv = jnp.dot(mem, wkv_ref[...], preferred_element_type=jnp.float32) + bkv_ref[...]
    attn = _heads_attention_outproj(q, kv[:, :E], kv[:, E:], kpm_ref[0],
                                    wo_ref[...], nhead)
    y = x + attn + bo_ref[...]
    o_ref[0] = _layernorm(y, g_ref[...], b_ref[...]).astype(o_ref.dtype)


def _ffn_ln_kernel(x_ref, w1_ref, b1_ref, w2_ref, b2_ref, g_ref, b_ref, o_ref):
    """norm(x + linear2(relu(linear1(x)))) for one batch element."""
    x = x_ref[0].astype(jnp.float32)
    h = jnp.maximum(jnp.dot(x, w1_ref[...], preferred_element_type=jnp.float32) + b1_ref[...], 0.0)
    y = jnp.dot(h, w2_ref[...], preferred_element_type=jnp.float32) + b2_ref[...]
    o_ref[0] = _layernorm(x + y, g_ref[...], b_ref[...]).astype(o_ref.dtype)


def _ln_kernel(x_ref, g_ref, b_ref, o_ref):
    o_ref[0] = _layernorm(x_ref[0].astype(jnp.float32), g_ref[...], b_ref[...]).astype(o_ref.dtype)


def _ln_generator_kernel(x_ref, g_ref, b_ref, wg_ref, bg_ref, o_ref):
    """Final decoder LayerNorm fused with the generator matmul (lane-padded vocab)."""
    h = _layernorm(x_ref[0].astype(jnp.float32), g_ref[...], b_ref[...])
    o_ref[0] = (jnp.dot(h, wg_ref[...], preferred_element_type=jnp.float32)
                + bg_ref[...]).astype(o_ref.dtype)


# ---------------------------------------------------------------- pallas_call wrappers

def pallas_embed_pe(x, pe, scale):
    nb = x.shape[0]
    kern = functools.partial(_embed_pe_kernel, scale=scale)
    return pl.pallas_call(
        kern, grid=(nb,),
        out_shape=jax.ShapeDtypeStruct(x.shape, x.dtype),
        in_specs=[_bspec(x.shape), _sspec(pe.shape)],
        out_specs=_bspec(x.shape),
        compiler_params=_CP,
    )(x, pe)


def pallas_self_mha_ln(x, ap, nhead, amask, kpm3, g, b):
    nb = x.shape[0]
    kern = functools.partial(_self_mha_ln_kernel, nhead=nhead)
    return pl.pallas_call(
        kern, grid=(nb,),
        out_shape=jax.ShapeDtypeStruct(x.shape, x.dtype),
        in_specs=[_bspec(x.shape),
                  _sspec(ap["wqkv"].shape), _sspec(ap["bqkv"].shape),
                  _sspec(ap["wo"].shape), _sspec(ap["bo"].shape),
                  _sspec(amask.shape), _bspec(kpm3.shape),
                  _sspec(g.shape), _sspec(b.shape)],
        out_specs=_bspec(x.shape),
        compiler_params=_CP,
    )(x, ap["wqkv"], ap["bqkv"], ap["wo"], ap["bo"], amask, kpm3, g, b)


def pallas_cross_mha_ln(x, mem, ap, nhead, kpm3, g, b):
    nb = x.shape[0]
    kern = functools.partial(_cross_mha_ln_kernel, nhead=nhead)
    return pl.pallas_call(
        kern, grid=(nb,),
        out_shape=jax.ShapeDtypeStruct(x.shape, x.dtype),
        in_specs=[_bspec(x.shape), _bspec(mem.shape),
                  _sspec(ap["wq"].shape), _sspec(ap["bq"].shape),
                  _sspec(ap["wkv"].shape), _sspec(ap["bkv"].shape),
                  _sspec(ap["wo"].shape), _sspec(ap["bo"].shape),
                  _bspec(kpm3.shape),
                  _sspec(g.shape), _sspec(b.shape)],
        out_specs=_bspec(x.shape),
        compiler_params=_CP,
    )(x, mem, ap["wq"], ap["bq"], ap["wkv"], ap["bkv"], ap["wo"], ap["bo"], kpm3, g, b)


def pallas_ffn_ln(x, w1, b1, w2, b2, g, b):
    nb = x.shape[0]
    return pl.pallas_call(
        _ffn_ln_kernel, grid=(nb,),
        out_shape=jax.ShapeDtypeStruct(x.shape, x.dtype),
        in_specs=[_bspec(x.shape), _sspec(w1.shape), _sspec(b1.shape),
                  _sspec(w2.shape), _sspec(b2.shape), _sspec(g.shape), _sspec(b.shape)],
        out_specs=_bspec(x.shape),
        compiler_params=_CP,
    )(x, w1, b1, w2, b2, g, b)


def pallas_layernorm(x, g, b):
    nb = x.shape[0]
    return pl.pallas_call(
        _ln_kernel, grid=(nb,),
        out_shape=jax.ShapeDtypeStruct(x.shape, x.dtype),
        in_specs=[_bspec(x.shape), _sspec(g.shape), _sspec(b.shape)],
        out_specs=_bspec(x.shape),
        compiler_params=_CP,
    )(x, g, b)


def pallas_ln_generator(x, g, b, wg, bg):
    nb, t, _ = x.shape
    vp = wg.shape[1]
    return pl.pallas_call(
        _ln_generator_kernel, grid=(nb,),
        out_shape=jax.ShapeDtypeStruct((nb, t, vp), x.dtype),
        in_specs=[_bspec(x.shape), _sspec(g.shape), _sspec(b.shape),
                  _sspec(wg.shape), _sspec(bg.shape)],
        out_specs=_bspec((nb, t, vp)),
        compiler_params=_CP,
    )(x, g, b, wg, bg)


# ---------------------------------------------------------------- forward pass

def seq2seq_transformer_forward(params, src, trg, src_mask, tgt_mask,
                                src_padding_mask, tgt_padding_mask,
                                memory_key_padding_mask, *, nhead, tgt_vocab_size):
    E = params["src_tok_emb"].shape[1]
    scale = math.sqrt(E)
    S, _ = src.shape
    T = trg.shape[0]
    pe = params["pos_embedding"]                                  # (maxlen, E)

    # Token embedding gathered directly into batch-first (N, S, E) layout
    # (transpose the tiny int token matrix instead of float activations).
    src_emb = params["src_tok_emb"][src.T]                        # (N, S, E)
    tgt_emb = params["tgt_tok_emb"][trg.T]                        # (N, T, E)
    x = pallas_embed_pe(src_emb, pe[None, :S, :], scale)
    y = pallas_embed_pe(tgt_emb, pe[None, :T, :], scale)

    # Additive float masks (tiny), sanitized to a large finite negative.
    src_amask = jnp.maximum(src_mask.astype(jnp.float32), _MASK_NEG)          # (S, S)
    tgt_amask = jnp.maximum(tgt_mask.astype(jnp.float32), _MASK_NEG)          # (T, T)
    src_kpm = jnp.where(src_padding_mask, _MASK_NEG, 0.0).astype(jnp.float32)[:, None, :]  # (N,1,S)
    tgt_kpm = jnp.where(tgt_padding_mask, _MASK_NEG, 0.0).astype(jnp.float32)[:, None, :]  # (N,1,T)
    mem_kpm = jnp.where(memory_key_padding_mask, _MASK_NEG, 0.0).astype(jnp.float32)[:, None, :]

    # encoder (post-norm TransformerEncoderLayer, ReLU FFN, dropout=identity)
    for lp in params["encoder_layers"]:
        x = pallas_self_mha_ln(x, lp["self_attn"], nhead, src_amask, src_kpm,
                               lp["norm1_g"], lp["norm1_b"])
        x = pallas_ffn_ln(x, lp["w1"], lp["b1"], lp["w2"], lp["b2"],
                          lp["norm2_g"], lp["norm2_b"])
    memory = pallas_layernorm(x, params["encoder_norm_g"], params["encoder_norm_b"])

    # decoder
    for lp in params["decoder_layers"]:
        y = pallas_self_mha_ln(y, lp["self_attn"], nhead, tgt_amask, tgt_kpm,
                               lp["norm1_g"], lp["norm1_b"])
        y = pallas_cross_mha_ln(y, memory, lp["cross_attn"], nhead, mem_kpm,
                                lp["norm2_g"], lp["norm2_b"])
        y = pallas_ffn_ln(y, lp["w1"], lp["b1"], lp["w2"], lp["b2"],
                          lp["norm3_g"], lp["norm3_b"])

    # final decoder norm + generator (vocab padded to 128 lanes inside the kernel)
    logits_p = pallas_ln_generator(y, params["decoder_norm_g"], params["decoder_norm_b"],
                                   params["generator_w"], params["generator_b"])   # (N, T, Vpad)
    return logits_p[:, :, :tgt_vocab_size].transpose(1, 0, 2)                      # (T, N, Vt)


# ---------------------------------------------------------------- parameters

def init_params(key, num_encoder_layers, num_decoder_layers, emb_size, nhead,
                src_vocab_size, tgt_vocab_size, dim_feedforward, maxlen=64):
    """PyTorch-layout parameters (same conventions as nn.Transformer)."""
    keys = iter(jax.random.split(key, 512))

    def dense(shape, s=0.05):
        return s * jax.random.normal(next(keys), shape, jnp.float32)

    def attn_params():
        return {"in_proj_weight": dense((3 * emb_size, emb_size)),
                "in_proj_bias": jnp.zeros((3 * emb_size,), jnp.float32),
                "out_proj_weight": dense((emb_size, emb_size)),
                "out_proj_bias": jnp.zeros((emb_size,), jnp.float32)}

    def enc_layer():
        return {"self_attn": attn_params(),
                "linear1_w": dense((dim_feedforward, emb_size)),
                "linear1_b": jnp.zeros((dim_feedforward,), jnp.float32),
                "linear2_w": dense((emb_size, dim_feedforward)),
                "linear2_b": jnp.zeros((emb_size,), jnp.float32),
                "norm1_g": jnp.ones((emb_size,), jnp.float32),
                "norm1_b": jnp.zeros((emb_size,), jnp.float32),
                "norm2_g": jnp.ones((emb_size,), jnp.float32),
                "norm2_b": jnp.zeros((emb_size,), jnp.float32)}

    def dec_layer():
        d = enc_layer()
        d["cross_attn"] = attn_params()
        d["norm3_g"] = jnp.ones((emb_size,), jnp.float32)
        d["norm3_b"] = jnp.zeros((emb_size,), jnp.float32)
        return d

    # positional-encoding buffer, same formula as the PyTorch module
    den = jnp.exp(-jnp.arange(0, emb_size, 2, dtype=jnp.float32) * math.log(10000.0) / emb_size)
    pos = jnp.arange(0, maxlen, dtype=jnp.float32).reshape(maxlen, 1)
    pe = jnp.zeros((maxlen, emb_size), jnp.float32)
    pe = pe.at[:, 0::2].set(jnp.sin(pos * den))
    pe = pe.at[:, 1::2].set(jnp.cos(pos * den))
    pe = pe[:, None, :]                                            # (maxlen, 1, E)

    return {
        "src_tok_emb": dense((src_vocab_size, emb_size), 1.0),
        "tgt_tok_emb": dense((tgt_vocab_size, emb_size), 1.0),
        "pos_embedding": pe,
        "encoder_layers": [enc_layer() for _ in range(num_encoder_layers)],
        "decoder_layers": [dec_layer() for _ in range(num_decoder_layers)],
        "encoder_norm_g": jnp.ones((emb_size,), jnp.float32),
        "encoder_norm_b": jnp.zeros((emb_size,), jnp.float32),
        "decoder_norm_g": jnp.ones((emb_size,), jnp.float32),
        "decoder_norm_b": jnp.zeros((emb_size,), jnp.float32),
        "generator_w": dense((tgt_vocab_size, emb_size)),
        "generator_b": jnp.zeros((tgt_vocab_size,), jnp.float32),
    }


def prepare_params(raw):
    """One-time re-layout so the hot path has no transposes / relayout copies:
    weights -> (in, out); biases & norm params -> (1, X); cross-attn QKV split into Wq / Wkv;
    generator padded to a lane-dense multiple of 128 columns."""
    E = raw["src_tok_emb"].shape[1]

    def self_attn(p):
        return {"wqkv": p["in_proj_weight"].T,                       # (E, 3E)
                "bqkv": p["in_proj_bias"].reshape(1, -1),
                "wo": p["out_proj_weight"].T,                        # (E, E)
                "bo": p["out_proj_bias"].reshape(1, -1)}

    def cross_attn(p):
        return {"wq": p["in_proj_weight"][:E].T,                     # (E, E)
                "bq": p["in_proj_bias"][:E].reshape(1, -1),
                "wkv": p["in_proj_weight"][E:].T,                    # (E, 2E)
                "bkv": p["in_proj_bias"][E:].reshape(1, -1),
                "wo": p["out_proj_weight"].T,
                "bo": p["out_proj_bias"].reshape(1, -1)}

    def enc_layer(lp):
        return {"self_attn": self_attn(lp["self_attn"]),
                "w1": lp["linear1_w"].T, "b1": lp["linear1_b"].reshape(1, -1),
                "w2": lp["linear2_w"].T, "b2": lp["linear2_b"].reshape(1, -1),
                "norm1_g": lp["norm1_g"].reshape(1, -1), "norm1_b": lp["norm1_b"].reshape(1, -1),
                "norm2_g": lp["norm2_g"].reshape(1, -1), "norm2_b": lp["norm2_b"].reshape(1, -1)}

    def dec_layer(lp):
        d = enc_layer(lp)
        d["cross_attn"] = cross_attn(lp["cross_attn"])
        d["norm3_g"] = lp["norm3_g"].reshape(1, -1)
        d["norm3_b"] = lp["norm3_b"].reshape(1, -1)
        return d

    vt = raw["generator_w"].shape[0]
    vt_pad = ((vt + 127) // 128) * 128
    wg = jnp.zeros((E, vt_pad), jnp.float32).at[:, :vt].set(raw["generator_w"].T)
    bg = jnp.zeros((1, vt_pad), jnp.float32).at[:, :vt].set(raw["generator_b"].reshape(1, -1))

    return {
        "src_tok_emb": raw["src_tok_emb"],
        "tgt_tok_emb": raw["tgt_tok_emb"],
        "pos_embedding": raw["pos_embedding"][:, 0, :],              # (maxlen, E)
        "encoder_layers": [enc_layer(lp) for lp in raw["encoder_layers"]],
        "decoder_layers": [dec_layer(lp) for lp in raw["decoder_layers"]],
        "encoder_norm_g": raw["encoder_norm_g"].reshape(1, -1),
        "encoder_norm_b": raw["encoder_norm_b"].reshape(1, -1),
        "decoder_norm_g": raw["decoder_norm_g"].reshape(1, -1),
        "decoder_norm_b": raw["decoder_norm_b"].reshape(1, -1),
        "generator_w": wg,
        "generator_b": bg,
    }


# ---------------------------------------------------------------- demo

if __name__ == "__main__":
    NUM_ENC, NUM_DEC = 2, 2
    EMB, NHEAD, FF = 32, 4, 64
    SRC_VOCAB, TGT_VOCAB = 48, 56
    S, T, N = 16, 8, 2          # tile-friendly sequence lengths (multiples of 8)

    key = jax.random.PRNGKey(0)
    kp, ks, kt = jax.random.split(key, 3)
    params = prepare_params(
        init_params(kp, NUM_ENC, NUM_DEC, EMB, NHEAD, SRC_VOCAB, TGT_VOCAB, FF))

    src = jax.random.randint(ks, (S, N), 1, SRC_VOCAB, dtype=jnp.int32)
    trg = jax.random.randint(kt, (T, N), 1, TGT_VOCAB, dtype=jnp.int32)

    # masks follow the standard nn.Transformer tutorial conventions
    src_mask = jnp.zeros((S, S), jnp.float32)
    tgt_mask = jnp.where(jnp.triu(jnp.ones((T, T), jnp.bool_), k=1), NEG_INF, 0.0).astype(jnp.float32)
    src_padding_mask = jnp.arange(S)[None, :] >= (S - jnp.array([0, 3]))[:, None]   # (N, S) bool
    tgt_padding_mask = jnp.arange(T)[None, :] >= (T - jnp.array([0, 2]))[:, None]   # (N, T) bool
    memory_key_padding_mask = src_padding_mask

    fwd = jax.jit(functools.partial(seq2seq_transformer_forward,
                                    nhead=NHEAD, tgt_vocab_size=TGT_VOCAB))
    logits = fwd(params, src, trg, src_mask, tgt_mask,
                 src_padding_mask, tgt_padding_mask, memory_key_padding_mask)
    logits = jax.block_until_ready(logits)

    assert logits.shape == (T, N, TGT_VOCAB)
    assert bool(jnp.all(jnp.isfinite(logits)))
    print("KERNEL_OK")
</pallas_src>

<mosaic_0001>
module attributes {stable_mosaic.version = 11 : i64} {
  func.func @_embed_pe_kernel(%arg0: i32, %arg1: memref<1x16x32xf32, #tpu.memory_space<vmem>>, %arg2: memref<1x16x32xf32, #tpu.memory_space<vmem>>, %arg3: memref<1x16x32xf32, #tpu.memory_space<vmem>>) attributes {dimension_semantics = [#tpu.dimension_semantics<parallel>], iteration_bounds = array<i64: 2>, scalar_prefetch = 0 : i64, scratch_operands = 0 : i64, tpu.core_type = #tpu.core_type<tc>, window_params = [{transform_indices = @transform_0, window_bounds = array<i64: 1, 16, 32>}, {pipeline_mode = #tpu.pipeline_mode<synchronous>, transform_indices = @transform_1, window_bounds = array<i64: 1, 16, 32>}, {transform_indices = @transform_2, window_bounds = array<i64: 1, 16, 32>}]} {
    %c0 = arith.constant 0 : index
    %c0_0 = arith.constant 0 : index
    %c0_1 = arith.constant 0 : index
    %0 = vector.load %arg1[%c0, %c0_0, %c0_1] : memref<1x16x32xf32, #tpu.memory_space<vmem>>, vector<1x16x32xf32>
    %1 = vector.shape_cast %0 : vector<1x16x32xf32> to vector<16x32xf32>
    %cst = arith.constant 5.65685415 : f32
    %2 = vector.broadcast %cst : f32 to vector<16x32xf32>
    %3 = arith.mulf %1, %2 : vector<16x32xf32>
    %c0_2 = arith.constant 0 : index
    %c0_3 = arith.constant 0 : index
    %c0_4 = arith.constant 0 : index
    %4 = vector.load %arg2[%c0_2, %c0_3, %c0_4] : memref<1x16x32xf32, #tpu.memory_space<vmem>>, vector<1x16x32xf32>
    %5 = vector.shape_cast %4 : vector<1x16x32xf32> to vector<16x32xf32>
    %6 = arith.addf %3, %5 : vector<16x32xf32>
    %c0_5 = arith.constant 0 : index
    %c0_6 = arith.constant 0 : index
    %c0_7 = arith.constant 0 : index
    %7 = vector.load %arg3[%c0_5, %c0_6, %c0_7] : memref<1x16x32xf32, #tpu.memory_space<vmem>>, vector<1x16x32xf32>
    %8 = vector.shape_cast %7 : vector<1x16x32xf32> to vector<16x32xf32>
    %9 = vector.shape_cast %6 : vector<16x32xf32> to vector<1x16x32xf32>
    tpu.vector_store %arg3[%c0_5, %c0_6, %c0_7], %9 {strides = array<i32>} : memref<1x16x32xf32, #tpu.memory_space<vmem>>, vector<1x16x32xf32>,
    return
  }
  func.func @transform_0(%arg0: i32) -> (i32, i32, i32) {
    %c0_i32 = arith.constant 0 : i32
    %c0_i32_0 = arith.constant 0 : i32
    %c0_i32_1 = arith.constant 0 : i32
    return %arg0, %c0_i32, %c0_i32_0 : i32, i32, i32
  }
  func.func @transform_1(%arg0: i32) -> (i32, i32, i32) {
    %c0_i32 = arith.constant 0 : i32
    %c0_i32_0 = arith.constant 0 : i32
    %c0_i32_1 = arith.constant 0 : i32
    %c0_i32_2 = arith.constant 0 : i32
    return %c0_i32, %c0_i32_0, %c0_i32_1 : i32, i32, i32
  }
  func.func @transform_2(%arg0: i32) -> (i32, i32, i32) {
    %c0_i32 = arith.constant 0 : i32
    %c0_i32_0 = arith.constant 0 : i32
    %c0_i32_1 = arith.constant 0 : i32
    return %arg0, %c0_i32, %c0_i32_0 : i32, i32, i32
  }
}

module attributes {stable_mosaic.version = 11 : i64} {
  func.func @_ffn_ln_kernel(%arg0: i32, %arg1: memref<1x16x32xf32, #tpu.memory_space<vmem>>, %arg2: memref<32x64xf32, #tpu.memory_space<vmem>>, %arg3: memref<1x64xf32, #tpu.memory_space<vmem>>, %arg4: memref<64x32xf32, #tpu.memory_space<vmem>>, %arg5: memref<1x32xf32, #tpu.memory_space<vmem>>, %arg6: memref<1x32xf32, #tpu.memory_space<vmem>>, %arg7: memref<1x32xf32, #tpu.memory_space<vmem>>, %arg8: memref<1x16x32xf32, #tpu.memory_space<vmem>>) attributes {dimension_semantics = [#tpu.dimension_semantics<parallel>], iteration_bounds = array<i64: 2>, scalar_prefetch = 0 : i64, scratch_operands = 0 : i64, tpu.core_type = #tpu.core_type<tc>, window_params = [{transform_indices = @transform_0, window_bounds = array<i64: 1, 16, 32>}, {pipeline_mode = #tpu.pipeline_mode<synchronous>, transform_indices = @transform_1, window_bounds = array<i64: 32, 64>}, {pipeline_mode = #tpu.pipeline_mode<synchronous>, transform_indices = @transform_2, window_bounds = array<i64: 1, 64>}, {pipeline_mode = #tpu.pipeline_mode<synchronous>, transform_indices = @transform_3, window_bounds = array<i64: 64, 32>}, {pipeline_mode = #tpu.pipeline_mode<synchronous>, transform_indices = @transform_4, window_bounds = array<i64: 1, 32>}, {pipeline_mode = #tpu.pipeline_mode<synchronous>, transform_indices = @transform_5, window_bounds = array<i64: 1, 32>}, {pipeline_mode = #tpu.pipeline_mode<synchronous>, transform_indices = @transform_6, window_bounds = array<i64: 1, 32>}, {transform_indices = @transform_7, window_bounds = array<i64: 1, 16, 32>}]} {
    %c0 = arith.constant 0 : index
    %c0_0 = arith.constant 0 : index
    %c0_1 = arith.constant 0 : index
    %0 = vector.load %arg1[%c0, %c0_0, %c0_1] : memref<1x16x32xf32, #tpu.memory_space<vmem>>, vector<1x16x32xf32>
    %1 = vector.shape_cast %0 : vector<1x16x32xf32> to vector<16x32xf32>
    %c0_2 = arith.constant 0 : index
    %c0_3 = arith.constant 0 : index
    %2 = vector.load %arg2[%c0_2, %c0_3] : memref<32x64xf32, #tpu.memory_space<vmem>>, vector<32x64xf32>
    %cst = arith.constant dense<0.000000e+00> : vector<16x64xf32>
    %3 = tpu.matmul %1, %2, %cst {dimension_numbers = #tpu.dot_dimension_numbers<[1], [0], [0], [1], [0, 0, 1, 1], [], []>} : vector<16x32xf32>, vector<32x64xf32>, vector<16x64xf32> -> vector<16x64xf32>
    %c0_4 = arith.constant 0 : index
    %c0_5 = arith.constant 0 : index
    %4 = vector.load %arg3[%c0_4, %c0_5] : memref<1x64xf32, #tpu.memory_space<vmem>>, vector<1x64xf32>
    %5 = vector.broadcast %4 : vector<1x64xf32> to vector<16x64xf32>
    %6 = arith.addf %3, %5 : vector<16x64xf32>
    %cst_6 = arith.constant 0.000000e+00 : f32
    %7 = vector.broadcast %cst_6 : f32 to vector<16x64xf32>
    %8 = arith.maximumf %6, %7 : vector<16x64xf32>
    %c0_7 = arith.constant 0 : index
    %c0_8 = arith.constant 0 : index
    %9 = vector.load %arg4[%c0_7, %c0_8] : memref<64x32xf32, #tpu.memory_space<vmem>>, vector<64x32xf32>
    %cst_9 = arith.constant dense<0.000000e+00> : vector<16x32xf32>
    %10 = tpu.matmul %8, %9, %cst_9 {dimension_numbers = #tpu.dot_dimension_numbers<[1], [0], [0], [1], [0, 0, 1, 1], [], []>} : vector<16x64xf32>, vector<64x32xf32>, vector<16x32xf32> -> vector<16x32xf32>
    %c0_10 = arith.constant 0 : index
    %c0_11 = arith.constant 0 : index
    %11 = vector.load %arg5[%c0_10, %c0_11] : memref<1x32xf32, #tpu.memory_space<vmem>>, vector<1x32xf32>
    %12 = vector.broadcast %11 : vector<1x32xf32> to vector<16x32xf32>
    %13 = arith.addf %10, %12 : vector<16x32xf32>
    %14 = arith.addf %1, %13 : vector<16x32xf32>
    %c0_12 = arith.constant 0 : index
    %c0_13 = arith.constant 0 : index
    %15 = vector.load %arg6[%c0_12, %c0_13] : memref<1x32xf32, #tpu.memory_space<vmem>>, vector<1x32xf32>
    %c0_14 = arith.constant 0 : index
    %c0_15 = arith.constant 0 : index
    %16 = vector.load %arg7[%c0_14, %c0_15] : memref<1x32xf32, #tpu.memory_space<vmem>>, vector<1x32xf32>
    %cst_16 = arith.constant dense<0.000000e+00> : vector<16xf32>
    %17 = vector.multi_reduction <add>, %14, %cst_16 [1] : vector<16x32xf32> to vector<16xf32>
    %18 = vector.shape_cast %17 : vector<16xf32> to vector<16x1xf32>
    %cst_17 = arith.constant 3.200000e+01 : f32
    %19 = vector.broadcast %cst_17 : f32 to vector<16x1xf32>
    %20 = arith.divf %18, %19 : vector<16x1xf32>
    %21 = vector.broadcast %20 : vector<16x1xf32> to vector<16x32xf32>
    %22 = arith.subf %14, %21 : vector<16x32xf32>
    %23 = vector.broadcast %20 : vector<16x1xf32> to vector<16x32xf32>
    %24 = arith.subf %14, %23 : vector<16x32xf32>
    %25 = arith.mulf %22, %24 : vector<16x32xf32>
    %cst_18 = arith.constant dense<0.000000e+00> : vector<16xf32>
    %26 = vector.multi_reduction <add>, %25, %cst_18 [1] : vector<16x32xf32> to vector<16xf32>
    %27 = vector.shape_cast %26 : vector<16xf32> to vector<16x1xf32>
    %cst_19 = arith.constant 3.200000e+01 : f32
    %28 = vector.broadcast %cst_19 : f32 to vector<16x1xf32>
    %29 = arith.divf %27, %28 : vector<16x1xf32>
    %30 = vector.broadcast %20 : vector<16x1xf32> to vector<16x32xf32>
    %31 = arith.subf %14, %30 : vector<16x32xf32>
    %cst_20 = arith.constant 9.99999974E-6 : f32
    %32 = vector.broadcast %cst_20 : f32 to vector<16x1xf32>
    %33 = arith.addf %29, %32 : vector<16x1xf32>
    %34 = math.rsqrt %33 : vector<16x1xf32>
    %35 = vector.broadcast %34 : vector<16x1xf32> to vector<16x32xf32>
    %36 = arith.mulf %31, %35 : vector<16x32xf32>
    %37 = vector.broadcast %15 : vector<1x32xf32> to vector<16x32xf32>
    %38 = arith.mulf %36, %37 : vector<16x32xf32>
    %39 = vector.broadcast %16 : vector<1x32xf32> to vector<16x32xf32>
    %40 = arith.addf %38, %39 : vector<16x32xf32>
    %c0_21 = arith.constant 0 : index
    %c0_22 = arith.constant 0 : index
    %c0_23 = arith.constant 0 : index
    %41 = vector.load %arg8[%c0_21, %c0_22, %c0_23] : memref<1x16x32xf32, #tpu.memory_space<vmem>>, vector<1x16x32xf32>
    %42 = vector.shape_cast %41 : vector<1x16x32xf32> to vector<16x32xf32>
    %43 = vector.shape_cast %40 : vector<16x32xf32> to vector<1x16x32xf32>
    tpu.vector_store %arg8[%c0_21, %c0_22, %c0_23], %43 {strides = array<i32>} : memref<1x16x32xf32, #tpu.memory_space<vmem>>, vector<1x16x32xf32>,
    return
  }
  func.func @transform_0(%arg0: i32) -> (i32, i32, i32) {
    %c0_i32 = arith.constant 0 : i32
    %c0_i32_0 = arith.constant 0 : i32
    %c0_i32_1 = arith.constant 0 : i32
    return %arg0, %c0_i32, %c0_i32_0 : i32, i32, i32
  }
  func.func @transform_1(%arg0: i32) -> (i32, i32) {
    %c0_i32 = arith.constant 0 : i32
    %c0_i32_0 = arith.constant 0 : i32
    %c0_i32_1 = arith.constant 0 : i32
    return %c0_i32, %c0_i32_0 : i32, i32
  }
  func.func @transform_2(%arg0: i32) -> (i32, i32) {
    %c0_i32 = arith.constant 0 : i32
    %c0_i32_0 = arith.constant 0 : i32
    %c0_i32_1 = arith.constant 0 : i32
    return %c0_i32, %c0_i32_0 : i32, i32
  }
  func.func @transform_3(%arg0: i32) -> (i32, i32) {
    %c0_i32 = arith.constant 0 : i32
    %c0_i32_0 = arith.constant 0 : i32
    %c0_i32_1 = arith.constant 0 : i32
    return %c0_i32, %c0_i32_0 : i32, i32
  }
  func.func @transform_4(%arg0: i32) -> (i32, i32) {
    %c0_i32 = arith.constant 0 : i32
    %c0_i32_0 = arith.constant 0 : i32
    %c0_i32_1 = arith.constant 0 : i32
    return %c0_i32, %c0_i32_0 : i32, i32
  }
  func.func @transform_5(%arg0: i32) -> (i32, i32) {
    %c0_i32 = arith.constant 0 : i32
    %c0_i32_0 = arith.constant 0 : i32
    %c0_i32_1 = arith.constant 0 : i32
    return %c0_i32, %c0_i32_0 : i32, i32
  }
  func.func @transform_6(%arg0: i32) -> (i32, i32) {
    %c0_i32 = arith.constant 0 : i32
    %c0_i32_0 = arith.constant 0 : i32
    %c0_i32_1 = arith.constant 0 : i32
    return %c0_i32, %c0_i32_0 : i32, i32
  }
  func.func @transform_7(%arg0: i32) -> (i32, i32, i32) {
    %c0_i32 = arith.constant 0 : i32
    %c0_i32_0 = arith.constant 0 : i32
    %c0_i32_1 = arith.constant 0 : i32
    return %arg0, %c0_i32, %c0_i32_0 : i32, i32, i32
  }
}

module attributes {stable_mosaic.version = 11 : i64} {
  func.func @_ln_kernel(%arg0: i32, %arg1: memref<1x16x32xf32, #tpu.memory_space<vmem>>, %arg2: memref<1x32xf32, #tpu.memory_space<vmem>>, %arg3: memref<1x32xf32, #tpu.memory_space<vmem>>, %arg4: memref<1x16x32xf32, #tpu.memory_space<vmem>>) attributes {dimension_semantics = [#tpu.dimension_semantics<parallel>], iteration_bounds = array<i64: 2>, scalar_prefetch = 0 : i64, scratch_operands = 0 : i64, tpu.core_type = #tpu.core_type<tc>, window_params = [{transform_indices = @transform_0, window_bounds = array<i64: 1, 16, 32>}, {pipeline_mode = #tpu.pipeline_mode<synchronous>, transform_indices = @transform_1, window_bounds = array<i64: 1, 32>}, {pipeline_mode = #tpu.pipeline_mode<synchronous>, transform_indices = @transform_2, window_bounds = array<i64: 1, 32>}, {transform_indices = @transform_3, window_bounds = array<i64: 1, 16, 32>}]} {
    %c0 = arith.constant 0 : index
    %c0_0 = arith.constant 0 : index
    %c0_1 = arith.constant 0 : index
    %0 = vector.load %arg1[%c0, %c0_0, %c0_1] : memref<1x16x32xf32, #tpu.memory_space<vmem>>, vector<1x16x32xf32>
    %1 = vector.shape_cast %0 : vector<1x16x32xf32> to vector<16x32xf32>
    %c0_2 = arith.constant 0 : index
    %c0_3 = arith.constant 0 : index
    %2 = vector.load %arg2[%c0_2, %c0_3] : memref<1x32xf32, #tpu.memory_space<vmem>>, vector<1x32xf32>
    %c0_4 = arith.constant 0 : index
    %c0_5 = arith.constant 0 : index
    %3 = vector.load %arg3[%c0_4, %c0_5] : memref<1x32xf32, #tpu.memory_space<vmem>>, vector<1x32xf32>
    %cst = arith.constant dense<0.000000e+00> : vector<16xf32>
    %4 = vector.multi_reduction <add>, %1, %cst [1] : vector<16x32xf32> to vector<16xf32>
    %5 = vector.shape_cast %4 : vector<16xf32> to vector<16x1xf32>
    %cst_6 = arith.constant 3.200000e+01 : f32
    %6 = vector.broadcast %cst_6 : f32 to vector<16x1xf32>
    %7 = arith.divf %5, %6 : vector<16x1xf32>
    %8 = vector.broadcast %7 : vector<16x1xf32> to vector<16x32xf32>
    %9 = arith.subf %1, %8 : vector<16x32xf32>
    %10 = vector.broadcast %7 : vector<16x1xf32> to vector<16x32xf32>
    %11 = arith.subf %1, %10 : vector<16x32xf32>
    %12 = arith.mulf %9, %11 : vector<16x32xf32>
    %cst_7 = arith.constant dense<0.000000e+00> : vector<16xf32>
    %13 = vector.multi_reduction <add>, %12, %cst_7 [1] : vector<16x32xf32> to vector<16xf32>
    %14 = vector.shape_cast %13 : vector<16xf32> to vector<16x1xf32>
    %cst_8 = arith.constant 3.200000e+01 : f32
    %15 = vector.broadcast %cst_8 : f32 to vector<16x1xf32>
    %16 = arith.divf %14, %15 : vector<16x1xf32>
    %17 = vector.broadcast %7 : vector<16x1xf32> to vector<16x32xf32>
    %18 = arith.subf %1, %17 : vector<16x32xf32>
    %cst_9 = arith.constant 9.99999974E-6 : f32
    %19 = vector.broadcast %cst_9 : f32 to vector<16x1xf32>
    %20 = arith.addf %16, %19 : vector<16x1xf32>
    %21 = math.rsqrt %20 : vector<16x1xf32>
    %22 = vector.broadcast %21 : vector<16x1xf32> to vector<16x32xf32>
    %23 = arith.mulf %18, %22 : vector<16x32xf32>
    %24 = vector.broadcast %2 : vector<1x32xf32> to vector<16x32xf32>
    %25 = arith.mulf %23, %24 : vector<16x32xf32>
    %26 = vector.broadcast %3 : vector<1x32xf32> to vector<16x32xf32>
    %27 = arith.addf %25, %26 : vector<16x32xf32>
    %c0_10 = arith.constant 0 : index
    %c0_11 = arith.constant 0 : index
    %c0_12 = arith.constant 0 : index
    %28 = vector.load %arg4[%c0_10, %c0_11, %c0_12] : memref<1x16x32xf32, #tpu.memory_space<vmem>>, vector<1x16x32xf32>
    %29 = vector.shape_cast %28 : vector<1x16x32xf32> to vector<16x32xf32>
    %30 = vector.shape_cast %27 : vector<16x32xf32> to vector<1x16x32xf32>
    tpu.vector_store %arg4[%c0_10, %c0_11, %c0_12], %30 {strides = array<i32>} : memref<1x16x32xf32, #tpu.memory_space<vmem>>, vector<1x16x32xf32>,
    return
  }
  func.func @transform_0(%arg0: i32) -> (i32, i32, i32) {
    %c0_i32 = arith.constant 0 : i32
    %c0_i32_0 = arith.constant 0 : i32
    %c0_i32_1 = arith.constant 0 : i32
    return %arg0, %c0_i32, %c0_i32_0 : i32, i32, i32
  }
  func.func @transform_1(%arg0: i32) -> (i32, i32) {
    %c0_i32 = arith.constant 0 : i32
    %c0_i32_0 = arith.constant 0 : i32
    %c0_i32_1 = arith.constant 0 : i32
    return %c0_i32, %c0_i32_0 : i32, i32
  }
  func.func @transform_2(%arg0: i32) -> (i32, i32) {
    %c0_i32 = arith.constant 0 : i32
    %c0_i32_0 = arith.constant 0 : i32
    %c0_i32_1 = arith.constant 0 : i32
    return %c0_i32, %c0_i32_0 : i32, i32
  }
  func.func @transform_3(%arg0: i32) -> (i32, i32, i32) {
    %c0_i32 = arith.constant 0 : i32
    %c0_i32_0 = arith.constant 0 : i32
    %c0_i32_1 = arith.constant 0 : i32
    return %arg0, %c0_i32, %c0_i32_0 : i32, i32, i32
  }
}

module attributes {stable_mosaic.version = 11 : i64} {
  func.func @_self_mha_ln_kernel(%arg0: i32, %arg1: memref<1x16x32xf32, #tpu.memory_space<vmem>>, %arg2: memref<32x96xf32, #tpu.memory_space<vmem>>, %arg3: memref<1x96xf32, #tpu.memory_space<vmem>>, %arg4: memref<32x32xf32, #tpu.memory_space<vmem>>, %arg5: memref<1x32xf32, #tpu.memory_space<vmem>>, %arg6: memref<16x16xf32, #tpu.memory_space<vmem>>, %arg7: memref<1x1x16xf32, #tpu.memory_space<vmem>>, %arg8: memref<1x32xf32, #tpu.memory_space<vmem>>, %arg9: memref<1x32xf32, #tpu.memory_space<vmem>>, %arg10: memref<1x16x32xf32, #tpu.memory_space<vmem>>) attributes {dimension_semantics = [#tpu.dimension_semantics<parallel>], iteration_bounds = array<i64: 2>, scalar_prefetch = 0 : i64, scratch_operands = 0 : i64, tpu.core_type = #tpu.core_type<tc>, window_params = [{transform_indices = @transform_0, window_bounds = array<i64: 1, 16, 32>}, {pipeline_mode = #tpu.pipeline_mode<synchronous>, transform_indices = @transform_1, window_bounds = array<i64: 32, 96>}, {pipeline_mode = #tpu.pipeline_mode<synchronous>, transform_indices = @transform_2, window_bounds = array<i64: 1, 96>}, {pipeline_mode = #tpu.pipeline_mode<synchronous>, transform_indices = @transform_3, window_bounds = array<i64: 32, 32>}, {pipeline_mode = #tpu.pipeline_mode<synchronous>, transform_indices = @transform_4, window_bounds = array<i64: 1, 32>}, {pipeline_mode = #tpu.pipeline_mode<synchronous>, transform_indices = @transform_5, window_bounds = array<i64: 16, 16>}, {transform_indices = @transform_6, window_bounds = array<i64: 1, 1, 16>}, {pipeline_mode = #tpu.pipeline_mode<synchronous>, transform_indices = @transform_7, window_bounds = array<i64: 1, 32>}, {pipeline_mode = #tpu.pipeline_mode<synchronous>, transform_indices = @transform_8, window_bounds = array<i64: 1, 32>}, {transform_indices = @transform_9, window_bounds = array<i64: 1, 16, 32>}]} {
    %c0 = arith.constant 0 : index
    %c0_0 = arith.constant 0 : index
    %c0_1 = arith.constant 0 : index
    %0 = vector.load %arg1[%c0, %c0_0, %c0_1] : memref<1x16x32xf32, #tpu.memory_space<vmem>>, vector<1x16x32xf32>
    %1 = vector.shape_cast %0 : vector<1x16x32xf32> to vector<16x32xf32>
    %c0_2 = arith.constant 0 : index
    %c0_3 = arith.constant 0 : index
    %2 = vector.load %arg2[%c0_2, %c0_3] : memref<32x96xf32, #tpu.memory_space<vmem>>, vector<32x96xf32>
    %cst = arith.constant dense<0.000000e+00> : vector<16x96xf32>
    %3 = tpu.matmul %1, %2, %cst {dimension_numbers = #tpu.dot_dimension_numbers<[1], [0], [0], [1], [0, 0, 1, 1], [], []>} : vector<16x32xf32>, vector<32x96xf32>, vector<16x96xf32> -> vector<16x96xf32>
    %c0_4 = arith.constant 0 : index
    %c0_5 = arith.constant 0 : index
    %4 = vector.load %arg3[%c0_4, %c0_5] : memref<1x96xf32, #tpu.memory_space<vmem>>, vector<1x96xf32>
    %5 = vector.broadcast %4 : vector<1x96xf32> to vector<16x96xf32>
    %6 = arith.addf %3, %5 : vector<16x96xf32>
    %c0_6 = arith.constant 0 : index
    %c0_7 = arith.constant 0 : index
    %7 = vector.load %arg6[%c0_6, %c0_7] : memref<16x16xf32, #tpu.memory_space<vmem>>, vector<16x16xf32>
    %c0_8 = arith.constant 0 : index
    %c0_9 = arith.constant 0 : index
    %c0_10 = arith.constant 0 : index
    %8 = vector.load %arg7[%c0_8, %c0_9, %c0_10] : memref<1x1x16xf32, #tpu.memory_space<vmem>>, vector<1x1x16xf32>
    %9 = vector.shape_cast %8 : vector<1x1x16xf32> to vector<1x16xf32>
    %10 = vector.broadcast %9 : vector<1x16xf32> to vector<16x16xf32>
    %11 = arith.addf %7, %10 : vector<16x16xf32>
    %12 = vector.extract_strided_slice %6 {offsets = [0, 0], sizes = [16, 32], strides = [1, 1]} : vector<16x96xf32> to vector<16x32xf32>
    %13 = vector.extract_strided_slice %6 {offsets = [0, 32], sizes = [16, 32], strides = [1, 1]} : vector<16x96xf32> to vector<16x32xf32>
    %14 = vector.extract_strided_slice %6 {offsets = [0, 64], sizes = [16, 32], strides = [1, 1]} : vector<16x96xf32> to vector<16x32xf32>
    %c0_11 = arith.constant 0 : index
    %c0_12 = arith.constant 0 : index
    %15 = vector.load %arg4[%c0_11, %c0_12] : memref<32x32xf32, #tpu.memory_space<vmem>>, vector<32x32xf32>
    %16 = vector.extract_strided_slice %12 {offsets = [0, 0], sizes = [16, 8], strides = [1, 1]} : vector<16x32xf32> to vector<16x8xf32>
    %17 = vector.extract_strided_slice %13 {offsets = [0, 0], sizes = [16, 8], strides = [1, 1]} : vector<16x32xf32> to vector<16x8xf32>
    %cst_13 = arith.constant dense<0.000000e+00> : vector<16x16xf32>
    %18 = tpu.matmul %16, %17, %cst_13 {dimension_numbers = #tpu.dot_dimension_numbers<[1], [1], [0], [0], [0, 0, 1, 0], [], []>} : vector<16x8xf32>, vector<16x8xf32>, vector<16x16xf32> -> vector<16x16xf32>
    %cst_14 = arith.constant 0.353553385 : f32
    %19 = vector.broadcast %cst_14 : f32 to vector<16x16xf32>
    %20 = arith.mulf %18, %19 : vector<16x16xf32>
    %21 = arith.addf %20, %11 : vector<16x16xf32>
    %cst_15 = arith.constant dense<0xFF800000> : vector<16xf32>
    %22 = vector.multi_reduction <maximumf>, %21, %cst_15 [1] : vector<16x16xf32> to vector<16xf32>
    %23 = vector.shape_cast %22 : vector<16xf32> to vector<16x1xf32>
    %24 = vector.broadcast %23 : vector<16x1xf32> to vector<16x16xf32>
    %25 = arith.subf %21, %24 : vector<16x16xf32>
    %26 = math.exp %25 : vector<16x16xf32>
    %cst_16 = arith.constant dense<0.000000e+00> : vector<16xf32>
    %27 = vector.multi_reduction <add>, %26, %cst_16 [1] : vector<16x16xf32> to vector<16xf32>
    %28 = vector.shape_cast %27 : vector<16xf32> to vector<16x1xf32>
    %29 = tpu.reciprocal %28 {approx = true} : vector<16x1xf32> -> vector<16x1xf32>
    %30 = vector.broadcast %29 : vector<16x1xf32> to vector<16x16xf32>
    %31 = arith.mulf %26, %30 : vector<16x16xf32>
    %32 = vector.extract_strided_slice %14 {offsets = [0, 0], sizes = [16, 8], strides = [1, 1]} : vector<16x32xf32> to vector<16x8xf32>
    %cst_17 = arith.constant dense<0.000000e+00> : vector<16x8xf32>
    %33 = tpu.matmul %31, %32, %cst_17 {dimension_numbers = #tpu.dot_dimension_numbers<[1], [0], [0], [1], [0, 0, 1, 1], [], []>} : vector<16x16xf32>, vector<16x8xf32>, vector<16x8xf32> -> vector<16x8xf32>
    %34 = vector.extract_strided_slice %15 {offsets = [0, 0], sizes = [8, 32], strides = [1, 1]} : vector<32x32xf32> to vector<8x32xf32>
    %cst_18 = arith.constant dense<0.000000e+00> : vector<16x32xf32>
    %35 = tpu.matmul %33, %34, %cst_18 {dimension_numbers = #tpu.dot_dimension_numbers<[1], [0], [0], [1], [0, 0, 1, 1], [], []>} : vector<16x8xf32>, vector<8x32xf32>, vector<16x32xf32> -> vector<16x32xf32>
    %36 = vector.extract_strided_slice %12 {offsets = [0, 8], sizes = [16, 8], strides = [1, 1]} : vector<16x32xf32> to vector<16x8xf32>
    %37 = vector.extract_strided_slice %13 {offsets = [0, 8], sizes = [16, 8], strides = [1, 1]} : vector<16x32xf32> to vector<16x8xf32>
    %cst_19 = arith.constant dense<0.000000e+00> : vector<16x16xf32>
    %38 = tpu.matmul %36, %37, %cst_19 {dimension_numbers = #tpu.dot_dimension_numbers<[1], [1], [0], [0], [0, 0, 1, 0], [], []>} : vector<16x8xf32>, vector<16x8xf32>, vector<16x16xf32> -> vector<16x16xf32>
    %cst_20 = arith.constant 0.353553385 : f32
    %39 = vector.broadcast %cst_20 : f32 to vector<16x16xf32>
    %40 = arith.mulf %38, %39 : vector<16x16xf32>
    %41 = arith.addf %40, %11 : vector<16x16xf32>
    %cst_21 = arith.constant dense<0xFF800000> : vector<16xf32>
    %42 = vector.multi_reduction <maximumf>, %41, %cst_21 [1] : vector<16x16xf32> to vector<16xf32>
    %43 = vector.shape_cast %42 : vector<16xf32> to vector<16x1xf32>
    %44 = vector.broadcast %43 : vector<16x1xf32> to vector<16x16xf32>
    %45 = arith.subf %41, %44 : vector<16x16xf32>
    %46 = math.exp %45 : vector<16x16xf32>
    %cst_22 = arith.constant dense<0.000000e+00> : vector<16xf32>
    %47 = vector.multi_reduction <add>, %46, %cst_22 [1] : vector<16x16xf32> to vector<16xf32>
    %48 = vector.shape_cast %47 : vector<16xf32> to vector<16x1xf32>
    %49 = tpu.reciprocal %48 {approx = true} : vector<16x1xf32> -> vector<16x1xf32>
    %50 = vector.broadcast %49 : vector<16x1xf32> to vector<16x16xf32>
    %51 = arith.mulf %46, %50 : vector<16x16xf32>
    %52 = vector.extract_strided_slice %14 {offsets = [0, 8], sizes = [16, 8], strides = [1, 1]} : vector<16x32xf32> to vector<16x8xf32>
    %cst_23 = arith.constant dense<0.000000e+00> : vector<16x8xf32>
    %53 = tpu.matmul %51, %52, %cst_23 {dimension_numbers = #tpu.dot_dimension_numbers<[1], [0], [0], [1], [0, 0, 1, 1], [], []>} : vector<16x16xf32>, vector<16x8xf32>, vector<16x8xf32> -> vector<16x8xf32>
    %54 = vector.extract_strided_slice %15 {offsets = [8, 0], sizes = [8, 32], strides = [1, 1]} : vector<32x32xf32> to vector<8x32xf32>
    %cst_24 = arith.constant dense<0.000000e+00> : vector<16x32xf32>
    %55 = tpu.matmul %53, %54, %cst_24 {dimension_numbers = #tpu.dot_dimension_numbers<[1], [0], [0], [1], [0, 0, 1, 1], [], []>} : vector<16x8xf32>, vector<8x32xf32>, vector<16x32xf32> -> vector<16x32xf32>
    %56 = arith.addf %35, %55 : vector<16x32xf32>
    %57 = vector.extract_strided_slice %12 {offsets = [0, 16], sizes = [16, 8], strides = [1, 1]} : vector<16x32xf32> to vector<16x8xf32>
    %58 = vector.extract_strided_slice %13 {offsets = [0, 16], sizes = [16, 8], strides = [1, 1]} : vector<16x32xf32> to vector<16x8xf32>
    %cst_25 = arith.constant dense<0.000000e+00> : vector<16x16xf32>
    %59 = tpu.matmul %57, %58, %cst_25 {dimension_numbers = #tpu.dot_dimension_numbers<[1], [1], [0], [0], [0, 0, 1, 0], [], []>} : vector<16x8xf32>, vector<16x8xf32>, vector<16x16xf32> -> vector<16x16xf32>
    %cst_26 = arith.constant 0.353553385 : f32
    %60 = vector.broadcast %cst_26 : f32 to vector<16x16xf32>
    %61 = arith.mulf %59, %60 : vector<16x16xf32>
    %62 = arith.addf %61, %11 : vector<16x16xf32>
    %cst_27 = arith.constant dense<0xFF800000> : vector<16xf32>
    %63 = vector.multi_reduction <maximumf>, %62, %cst_27 [1] : vector<16x16xf32> to vector<16xf32>
    %64 = vector.shape_cast %63 : vector<16xf32> to vector<16x1xf32>
    %65 = vector.broadcast %64 : vector<16x1xf32> to vector<16x16xf32>
    %66 = arith.subf %62, %65 : vector<16x16xf32>
    %67 = math.exp %66 : vector<16x16xf32>
    %cst_28 = arith.constant dense<0.000000e+00> : vector<16xf32>
    %68 = vector.multi_reduction <add>, %67, %cst_28 [1] : vector<16x16xf32> to vector<16xf32>
    %69 = vector.shape_cast %68 : vector<16xf32> to vector<16x1xf32>
    %70 = tpu.reciprocal %69 {approx = true} : vector<16x1xf32> -> vector<16x1xf32>
    %71 = vector.broadcast %70 : vector<16x1xf32> to vector<16x16xf32>
    %72 = arith.mulf %67, %71 : vector<16x16xf32>
    %73 = vector.extract_strided_slice %14 {offsets = [0, 16], sizes = [16, 8], strides = [1, 1]} : vector<16x32xf32> to vector<16x8xf32>
    %cst_29 = arith.constant dense<0.000000e+00> : vector<16x8xf32>
    %74 = tpu.matmul %72, %73, %cst_29 {dimension_numbers = #tpu.dot_dimension_numbers<[1], [0], [0], [1], [0, 0, 1, 1], [], []>} : vector<16x16xf32>, vector<16x8xf32>, vector<16x8xf32> -> vector<16x8xf32>
    %75 = vector.extract_strided_slice %15 {offsets = [16, 0], sizes = [8, 32], strides = [1, 1]} : vector<32x32xf32> to vector<8x32xf32>
    %cst_30 = arith.constant dense<0.000000e+00> : vector<16x32xf32>
    %76 = tpu.matmul %74, %75, %cst_30 {dimension_numbers = #tpu.dot_dimension_numbers<[1], [0], [0], [1], [0, 0, 1, 1], [], []>} : vector<16x8xf32>, vector<8x32xf32>, vector<16x32xf32> -> vector<16x32xf32>
    %77 = arith.addf %56, %76 : vector<16x32xf32>
    %78 = vector.extract_strided_slice %12 {offsets = [0, 24], sizes = [16, 8], strides = [1, 1]} : vector<16x32xf32> to vector<16x8xf32>
    %79 = vector.extract_strided_slice %13 {offsets = [0, 24], sizes = [16, 8], strides = [1, 1]} : vector<16x32xf32> to vector<16x8xf32>
    %cst_31 = arith.constant dense<0.000000e+00> : vector<16x16xf32>
    %80 = tpu.matmul %78, %79, %cst_31 {dimension_numbers = #tpu.dot_dimension_numbers<[1], [1], [0], [0], [0, 0, 1, 0], [], []>} : vector<16x8xf32>, vector<16x8xf32>, vector<16x16xf32> -> vector<16x16xf32>
    %cst_32 = arith.constant 0.353553385 : f32
    %81 = vector.broadcast %cst_32 : f32 to vector<16x16xf32>
    %82 = arith.mulf %80, %81 : vector<16x16xf32>
    %83 = arith.addf %82, %11 : vector<16x16xf32>
    %cst_33 = arith.constant dense<0xFF800000> : vector<16xf32>
    %84 = vector.multi_reduction <maximumf>, %83, %cst_33 [1] : vector<16x16xf32> to vector<16xf32>
    %85 = vector.shape_cast %84 : vector<16xf32> to vector<16x1xf32>
    %86 = vector.broadcast %85 : vector<16x1xf32> to vector<16x16xf32>
    %87 = arith.subf %83, %86 : vector<16x16xf32>
    %88 = math.exp %87 : vector<16x16xf32>
    %cst_34 = arith.constant dense<0.000000e+00> : vector<16xf32>
    %89 = vector.multi_reduction <add>, %88, %cst_34 [1] : vector<16x16xf32> to vector<16xf32>
    %90 = vector.shape_cast %89 : vector<16xf32> to vector<16x1xf32>
    %91 = tpu.reciprocal %90 {approx = true} : vector<16x1xf32> -> vector<16x1xf32>
    %92 = vector.broadcast %91 : vector<16x1xf32> to vector<16x16xf32>
    %93 = arith.mulf %88, %92 : vector<16x16xf32>
    %94 = vector.extract_strided_slice %14 {offsets = [0, 24], sizes = [16, 8], strides = [1, 1]} : vector<16x32xf32> to vector<16x8xf32>
    %cst_35 = arith.constant dense<0.000000e+00> : vector<16x8xf32>
    %95 = tpu.matmul %93, %94, %cst_35 {dimension_numbers = #tpu.dot_dimension_numbers<[1], [0], [0], [1], [0, 0, 1, 1], [], []>} : vector<16x16xf32>, vector<16x8xf32>, vector<16x8xf32> -> vector<16x8xf32>
    %96 = vector.extract_strided_slice %15 {offsets = [24, 0], sizes = [8, 32], strides = [1, 1]} : vector<32x32xf32> to vector<8x32xf32>
    %cst_36 = arith.constant dense<0.000000e+00> : vector<16x32xf32>
    %97 = tpu.matmul %95, %96, %cst_36 {dimension_numbers = #tpu.dot_dimension_numbers<[1], [0], [0], [1], [0, 0, 1, 1], [], []>} : vector<16x8xf32>, vector<8x32xf32>, vector<16x32xf32> -> vector<16x32xf32>
    %98 = arith.addf %77, %97 : vector<16x32xf32>
    %99 = arith.addf %1, %98 : vector<16x32xf32>
    %c0_37 = arith.constant 0 : index
    %c0_38 = arith.constant 0 : index
    %100 = vector.load %arg5[%c0_37, %c0_38] : memref<1x32xf32, #tpu.memory_space<vmem>>, vector<1x32xf32>
    %101 = vector.broadcast %100 : vector<1x32xf32> to vector<16x32xf32>
    %102 = arith.addf %99, %101 : vector<16x32xf32>
    %c0_39 = arith.constant 0 : index
    %c0_40 = arith.constant 0 : index
    %103 = vector.load %arg8[%c0_39, %c0_40] : memref<1x32xf32, #tpu.memory_space<vmem>>, vector<1x32xf32>
    %c0_41 = arith.constant 0 : index
    %c0_42 = arith.constant 0 : index
    %104 = vector.load %arg9[%c0_41, %c0_42] : memref<1x32xf32, #tpu.memory_space<vmem>>, vector<1x32xf32>
    %cst_43 = arith.constant dense<0.000000e+00> : vector<16xf32>
    %105 = vector.multi_reduction <add>, %102, %cst_43 [1] : vector<16x32xf32> to vector<16xf32>
    %106 = vector.shape_cast %105 : vector<16xf32> to vector<16x1xf32>
    %cst_44 = arith.constant 3.200000e+01 : f32
    %107 = vector.broadcast %cst_44 : f32 to vector<16x1xf32>
    %108 = arith.divf %106, %107 : vector<16x1xf32>
    %109 = vector.broadcast %108 : vector<16x1xf32> to vector<16x32xf32>
    %110 = arith.subf %102, %109 : vector<16x32xf32>
    %111 = vector.broadcast %108 : vector<16x1xf32> to vector<16x32xf32>
    %112 = arith.subf %102, %111 : vector<16x32xf32>
    %113 = arith.mulf %110, %112 : vector<16x32xf32>
    %cst_45 = arith.constant dense<0.000000e+00> : vector<16xf32>
    %114 = vector.multi_reduction <add>, %113, %cst_45 [1] : vector<16x32xf32> to vector<16xf32>
    %115 = vector.shape_cast %114 : vector<16xf32> to vector<16x1xf32>
    %cst_46 = arith.constant 3.200000e+01 : f32
    %116 = vector.broadcast %cst_46 : f32 to vector<16x1xf32>
    %117 = arith.divf %115, %116 : vector<16x1xf32>
    %118 = vector.broadcast %108 : vector<16x1xf32> to vector<16x32xf32>
    %119 = arith.subf %102, %118 : vector<16x32xf32>
    %cst_47 = arith.constant 9.99999974E-6 : f32
    %120 = vector.broadcast %cst_47 : f32 to vector<16x1xf32>
    %121 = arith.addf %117, %120 : vector<16x1xf32>
    %122 = math.rsqrt %121 : vector<16x1xf32>
    %123 = vector.broadcast %122 : vector<16x1xf32> to vector<16x32xf32>
    %124 = arith.mulf %119, %123 : vector<16x32xf32>
    %125 = vector.broadcast %103 : vector<1x32xf32> to vector<16x32xf32>
    %126 = arith.mulf %124, %125 : vector<16x32xf32>
    %127 = vector.broadcast %104 : vector<1x32xf32> to vector<16x32xf32>
    %128 = arith.addf %126, %127 : vector<16x32xf32>
    %c0_48 = arith.constant 0 : index
    %c0_49 = arith.constant 0 : index
    %c0_50 = arith.constant 0 : index
    %129 = vector.load %arg10[%c0_48, %c0_49, %c0_50] : memref<1x16x32xf32, #tpu.memory_space<vmem>>, vector<1x16x32xf32>
    %130 = vector.shape_cast %129 : vector<1x16x32xf32> to vector<16x32xf32>
    %131 = vector.shape_cast %128 : vector<16x32xf32> to vector<1x16x32xf32>
    tpu.vector_store %arg10[%c0_48, %c0_49, %c0_50], %131 {strides = array<i32>} : memref<1x16x32xf32, #tpu.memory_space<vmem>>, vector<1x16x32xf32>,
    return
  }
  func.func @transform_0(%arg0: i32) -> (i32, i32, i32) {
    %c0_i32 = arith.constant 0 : i32
    %c0_i32_0 = arith.constant 0 : i32
    %c0_i32_1 = arith.constant 0 : i32
    return %arg0, %c0_i32, %c0_i32_0 : i32, i32, i32
  }
  func.func @transform_1(%arg0: i32) -> (i32, i32) {
    %c0_i32 = arith.constant 0 : i32
    %c0_i32_0 = arith.constant 0 : i32
    %c0_i32_1 = arith.constant 0 : i32
    return %c0_i32, %c0_i32_0 : i32, i32
  }
  func.func @transform_2(%arg0: i32) -> (i32, i32) {
    %c0_i32 = arith.constant 0 : i32
    %c0_i32_0 = arith.constant 0 : i32
    %c0_i32_1 = arith.constant 0 : i32
    return %c0_i32, %c0_i32_0 : i32, i32
  }
  func.func @transform_3(%arg0: i32) -> (i32, i32) {
    %c0_i32 = arith.constant 0 : i32
    %c0_i32_0 = arith.constant 0 : i32
    %c0_i32_1 = arith.constant 0 : i32
    return %c0_i32, %c0_i32_0 : i32, i32
  }
  func.func @transform_4(%arg0: i32) -> (i32, i32) {
    %c0_i32 = arith.constant 0 : i32
    %c0_i32_0 = arith.constant 0 : i32
    %c0_i32_1 = arith.constant 0 : i32
    return %c0_i32, %c0_i32_0 : i32, i32
  }
  func.func @transform_5(%arg0: i32) -> (i32, i32) {
    %c0_i32 = arith.constant 0 : i32
    %c0_i32_0 = arith.constant 0 : i32
    %c0_i32_1 = arith.constant 0 : i32
    return %c0_i32, %c0_i32_0 : i32, i32
  }
  func.func @transform_6(%arg0: i32) -> (i32, i32, i32) {
    %c0_i32 = arith.constant 0 : i32
    %c0_i32_0 = arith.constant 0 : i32
    %c0_i32_1 = arith.constant 0 : i32
    return %arg0, %c0_i32, %c0_i32_0 : i32, i32, i32
  }
  func.func @transform_7(%arg0: i32) -> (i32, i32) {
    %c0_i32 = arith.constant 0 : i32
    %c0_i32_0 = arith.constant 0 : i32
    %c0_i32_1 = arith.constant 0 : i32
    return %c0_i32, %c0_i32_0 : i32, i32
  }
  func.func @transform_8(%arg0: i32) -> (i32, i32) {
    %c0_i32 = arith.constant 0 : i32
    %c0_i32_0 = arith.constant 0 : i32
    %c0_i32_1 = arith.constant 0 : i32
    return %c0_i32, %c0_i32_0 : i32, i32
  }
  func.func @transform_9(%arg0: i32) -> (i32, i32, i32) {
    %c0_i32 = arith.constant 0 : i32
    %c0_i32_0 = arith.constant 0 : i32
    %c0_i32_1 = arith.constant 0 : i32
    return %arg0, %c0_i32, %c0_i32_0 : i32, i32, i32
  }
}

module attributes {stable_mosaic.version = 11 : i64} {
  func.func @_embed_pe_kernel(%arg0: i32, %arg1: memref<1x8x32xf32, #tpu.memory_space<vmem>>, %arg2: memref<1x8x32xf32, #tpu.memory_space<vmem>>, %arg3: memref<1x8x32xf32, #tpu.memory_space<vmem>>) attributes {dimension_semantics = [#tpu.dimension_semantics<parallel>], iteration_bounds = array<i64: 2>, scalar_prefetch = 0 : i64, scratch_operands = 0 : i64, tpu.core_type = #tpu.core_type<tc>, window_params = [{transform_indices = @transform_0, window_bounds = array<i64: 1, 8, 32>}, {pipeline_mode = #tpu.pipeline_mode<synchronous>, transform_indices = @transform_1, window_bounds = array<i64: 1, 8, 32>}, {transform_indices = @transform_2, window_bounds = array<i64: 1, 8, 32>}]} {
    %c0 = arith.constant 0 : index
    %c0_0 = arith.constant 0 : index
    %c0_1 = arith.constant 0 : index
    %0 = vector.load %arg1[%c0, %c0_0, %c0_1] : memref<1x8x32xf32, #tpu.memory_space<vmem>>, vector<1x8x32xf32>
    %1 = vector.shape_cast %0 : vector<1x8x32xf32> to vector<8x32xf32>
    %cst = arith.constant 5.65685415 : f32
    %2 = vector.broadcast %cst : f32 to vector<8x32xf32>
    %3 = arith.mulf %1, %2 : vector<8x32xf32>
    %c0_2 = arith.constant 0 : index
    %c0_3 = arith.constant 0 : index
    %c0_4 = arith.constant 0 : index
    %4 = vector.load %arg2[%c0_2, %c0_3, %c0_4] : memref<1x8x32xf32, #tpu.memory_space<vmem>>, vector<1x8x32xf32>
    %5 = vector.shape_cast %4 : vector<1x8x32xf32> to vector<8x32xf32>
    %6 = arith.addf %3, %5 : vector<8x32xf32>
    %c0_5 = arith.constant 0 : index
    %c0_6 = arith.constant 0 : index
    %c0_7 = arith.constant 0 : index
    %7 = vector.load %arg3[%c0_5, %c0_6, %c0_7] : memref<1x8x32xf32, #tpu.memory_space<vmem>>, vector<1x8x32xf32>
    %8 = vector.shape_cast %7 : vector<1x8x32xf32> to vector<8x32xf32>
    %9 = vector.shape_cast %6 : vector<8x32xf32> to vector<1x8x32xf32>
    tpu.vector_store %arg3[%c0_5, %c0_6, %c0_7], %9 {strides = array<i32>} : memref<1x8x32xf32, #tpu.memory_space<vmem>>, vector<1x8x32xf32>,
    return
  }
  func.func @transform_0(%arg0: i32) -> (i32, i32, i32) {
    %c0_i32 = arith.constant 0 : i32
    %c0_i32_0 = arith.constant 0 : i32
    %c0_i32_1 = arith.constant 0 : i32
    return %arg0, %c0_i32, %c0_i32_0 : i32, i32, i32
  }
  func.func @transform_1(%arg0: i32) -> (i32, i32, i32) {
    %c0_i32 = arith.constant 0 : i32
    %c0_i32_0 = arith.constant 0 : i32
    %c0_i32_1 = arith.constant 0 : i32
    %c0_i32_2 = arith.constant 0 : i32
    return %c0_i32, %c0_i32_0, %c0_i32_1 : i32, i32, i32
  }
  func.func @transform_2(%arg0: i32) -> (i32, i32, i32) {
    %c0_i32 = arith.constant 0 : i32
    %c0_i32_0 = arith.constant 0 : i32
    %c0_i32_1 = arith.constant 0 : i32
    return %arg0, %c0_i32, %c0_i32_0 : i32, i32, i32
  }
}

module attributes {stable_mosaic.version = 11 : i64} {
  func.func @_cross_mha_ln_kernel(%arg0: i32, %arg1: memref<1x8x32xf32, #tpu.memory_space<vmem>>, %arg2: memref<1x16x32xf32, #tpu.memory_space<vmem>>, %arg3: memref<32x32xf32, #tpu.memory_space<vmem>>, %arg4: memref<1x32xf32, #tpu.memory_space<vmem>>, %arg5: memref<32x64xf32, #tpu.memory_space<vmem>>, %arg6: memref<1x64xf32, #tpu.memory_space<vmem>>, %arg7: memref<32x32xf32, #tpu.memory_space<vmem>>, %arg8: memref<1x32xf32, #tpu.memory_space<vmem>>, %arg9: memref<1x1x16xf32, #tpu.memory_space<vmem>>, %arg10: memref<1x32xf32, #tpu.memory_space<vmem>>, %arg11: memref<1x32xf32, #tpu.memory_space<vmem>>, %arg12: memref<1x8x32xf32, #tpu.memory_space<vmem>>) attributes {dimension_semantics = [#tpu.dimension_semantics<parallel>], iteration_bounds = array<i64: 2>, scalar_prefetch = 0 : i64, scratch_operands = 0 : i64, tpu.core_type = #tpu.core_type<tc>, window_params = [{transform_indices = @transform_0, window_bounds = array<i64: 1, 8, 32>}, {transform_indices = @transform_1, window_bounds = array<i64: 1, 16, 32>}, {pipeline_mode = #tpu.pipeline_mode<synchronous>, transform_indices = @transform_2, window_bounds = array<i64: 32, 32>}, {pipeline_mode = #tpu.pipeline_mode<synchronous>, transform_indices = @transform_3, window_bounds = array<i64: 1, 32>}, {pipeline_mode = #tpu.pipeline_mode<synchronous>, transform_indices = @transform_4, window_bounds = array<i64: 32, 64>}, {pipeline_mode = #tpu.pipeline_mode<synchronous>, transform_indices = @transform_5, window_bounds = array<i64: 1, 64>}, {pipeline_mode = #tpu.pipeline_mode<synchronous>, transform_indices = @transform_6, window_bounds = array<i64: 32, 32>}, {pipeline_mode = #tpu.pipeline_mode<synchronous>, transform_indices = @transform_7, window_bounds = array<i64: 1, 32>}, {transform_indices = @transform_8, window_bounds = array<i64: 1, 1, 16>}, {pipeline_mode = #tpu.pipeline_mode<synchronous>, transform_indices = @transform_9, window_bounds = array<i64: 1, 32>}, {pipeline_mode = #tpu.pipeline_mode<synchronous>, transform_indices = @transform_10, window_bounds = array<i64: 1, 32>}, {transform_indices = @transform_11, window_bounds = array<i64: 1, 8, 32>}]} {
    %c0 = arith.constant 0 : index
    %c0_0 = arith.constant 0 : index
    %c0_1 = arith.constant 0 : index
    %0 = vector.load %arg1[%c0, %c0_0, %c0_1] : memref<1x8x32xf32, #tpu.memory_space<vmem>>, vector<1x8x32xf32>
    %1 = vector.shape_cast %0 : vector<1x8x32xf32> to vector<8x32xf32>
    %c0_2 = arith.constant 0 : index
    %c0_3 = arith.constant 0 : index
    %c0_4 = arith.constant 0 : index
    %2 = vector.load %arg2[%c0_2, %c0_3, %c0_4] : memref<1x16x32xf32, #tpu.memory_space<vmem>>, vector<1x16x32xf32>
    %3 = vector.shape_cast %2 : vector<1x16x32xf32> to vector<16x32xf32>
    %c0_5 = arith.constant 0 : index
    %c0_6 = arith.constant 0 : index
    %4 = vector.load %arg3[%c0_5, %c0_6] : memref<32x32xf32, #tpu.memory_space<vmem>>, vector<32x32xf32>
    %cst = arith.constant dense<0.000000e+00> : vector<8x32xf32>
    %5 = tpu.matmul %1, %4, %cst {dimension_numbers = #tpu.dot_dimension_numbers<[1], [0], [0], [1], [0, 0, 1, 1], [], []>} : vector<8x32xf32>, vector<32x32xf32>, vector<8x32xf32> -> vector<8x32xf32>
    %c0_7 = arith.constant 0 : index
    %c0_8 = arith.constant 0 : index
    %6 = vector.load %arg4[%c0_7, %c0_8] : memref<1x32xf32, #tpu.memory_space<vmem>>, vector<1x32xf32>
    %7 = vector.broadcast %6 : vector<1x32xf32> to vector<8x32xf32>
    %8 = arith.addf %5, %7 : vector<8x32xf32>
    %c0_9 = arith.constant 0 : index
    %c0_10 = arith.constant 0 : index
    %9 = vector.load %arg5[%c0_9, %c0_10] : memref<32x64xf32, #tpu.memory_space<vmem>>, vector<32x64xf32>
    %cst_11 = arith.constant dense<0.000000e+00> : vector<16x64xf32>
    %10 = tpu.matmul %3, %9, %cst_11 {dimension_numbers = #tpu.dot_dimension_numbers<[1], [0], [0], [1], [0, 0, 1, 1], [], []>} : vector<16x32xf32>, vector<32x64xf32>, vector<16x64xf32> -> vector<16x64xf32>
    %c0_12 = arith.constant 0 : index
    %c0_13 = arith.constant 0 : index
    %11 = vector.load %arg6[%c0_12, %c0_13] : memref<1x64xf32, #tpu.memory_space<vmem>>, vector<1x64xf32>
    %12 = vector.broadcast %11 : vector<1x64xf32> to vector<16x64xf32>
    %13 = arith.addf %10, %12 : vector<16x64xf32>
    %14 = vector.extract_strided_slice %13 {offsets = [0, 0], sizes = [16, 32], strides = [1, 1]} : vector<16x64xf32> to vector<16x32xf32>
    %15 = vector.extract_strided_slice %13 {offsets = [0, 32], sizes = [16, 32], strides = [1, 1]} : vector<16x64xf32> to vector<16x32xf32>
    %c0_14 = arith.constant 0 : index
    %c0_15 = arith.constant 0 : index
    %c0_16 = arith.constant 0 : index
    %16 = vector.load %arg9[%c0_14, %c0_15, %c0_16] : memref<1x1x16xf32, #tpu.memory_space<vmem>>, vector<1x1x16xf32>
    %17 = vector.shape_cast %16 : vector<1x1x16xf32> to vector<1x16xf32>
    %c0_17 = arith.constant 0 : index
    %c0_18 = arith.constant 0 : index
    %18 = vector.load %arg7[%c0_17, %c0_18] : memref<32x32xf32, #tpu.memory_space<vmem>>, vector<32x32xf32>
    %19 = vector.extract_strided_slice %8 {offsets = [0, 0], sizes = [8, 8], strides = [1, 1]} : vector<8x32xf32> to vector<8x8xf32>
    %20 = vector.extract_strided_slice %14 {offsets = [0, 0], sizes = [16, 8], strides = [1, 1]} : vector<16x32xf32> to vector<16x8xf32>
    %cst_19 = arith.constant dense<0.000000e+00> : vector<8x16xf32>
    %21 = tpu.matmul %19, %20, %cst_19 {dimension_numbers = #tpu.dot_dimension_numbers<[1], [1], [0], [0], [0, 0, 1, 0], [], []>} : vector<8x8xf32>, vector<16x8xf32>, vector<8x16xf32> -> vector<8x16xf32>
    %cst_20 = arith.constant 0.353553385 : f32
    %22 = vector.broadcast %cst_20 : f32 to vector<8x16xf32>
    %23 = arith.mulf %21, %22 : vector<8x16xf32>
    %24 = vector.broadcast %17 : vector<1x16xf32> to vector<8x16xf32>
    %25 = arith.addf %23, %24 : vector<8x16xf32>
    %cst_21 = arith.constant dense<0xFF800000> : vector<8xf32>
    %26 = vector.multi_reduction <maximumf>, %25, %cst_21 [1] : vector<8x16xf32> to vector<8xf32>
    %27 = vector.shape_cast %26 : vector<8xf32> to vector<8x1xf32>
    %28 = vector.broadcast %27 : vector<8x1xf32> to vector<8x16xf32>
    %29 = arith.subf %25, %28 : vector<8x16xf32>
    %30 = math.exp %29 : vector<8x16xf32>
    %cst_22 = arith.constant dense<0.000000e+00> : vector<8xf32>
    %31 = vector.multi_reduction <add>, %30, %cst_22 [1] : vector<8x16xf32> to vector<8xf32>
    %32 = vector.shape_cast %31 : vector<8xf32> to vector<8x1xf32>
    %33 = tpu.reciprocal %32 {approx = true} : vector<8x1xf32> -> vector<8x1xf32>
    %34 = vector.broadcast %33 : vector<8x1xf32> to vector<8x16xf32>
    %35 = arith.mulf %30, %34 : vector<8x16xf32>
    %36 = vector.extract_strided_slice %15 {offsets = [0, 0], sizes = [16, 8], strides = [1, 1]} : vector<16x32xf32> to vector<16x8xf32>
    %cst_23 = arith.constant dense<0.000000e+00> : vector<8x8xf32>
    %37 = tpu.matmul %35, %36, %cst_23 {dimension_numbers = #tpu.dot_dimension_numbers<[1], [0], [0], [1], [0, 0, 1, 1], [], []>} : vector<8x16xf32>, vector<16x8xf32>, vector<8x8xf32> -> vector<8x8xf32>
    %38 = vector.extract_strided_slice %18 {offsets = [0, 0], sizes = [8, 32], strides = [1, 1]} : vector<32x32xf32> to vector<8x32xf32>
    %cst_24 = arith.constant dense<0.000000e+00> : vector<8x32xf32>
    %39 = tpu.matmul %37, %38, %cst_24 {dimension_numbers = #tpu.dot_dimension_numbers<[1], [0], [0], [1], [0, 0, 1, 1], [], []>} : vector<8x8xf32>, vector<8x32xf32>, vector<8x32xf32> -> vector<8x32xf32>
    %40 = vector.extract_strided_slice %8 {offsets = [0, 8], sizes = [8, 8], strides = [1, 1]} : vector<8x32xf32> to vector<8x8xf32>
    %41 = vector.extract_strided_slice %14 {offsets = [0, 8], sizes = [16, 8], strides = [1, 1]} : vector<16x32xf32> to vector<16x8xf32>
    %cst_25 = arith.constant dense<0.000000e+00> : vector<8x16xf32>
    %42 = tpu.matmul %40, %41, %cst_25 {dimension_numbers = #tpu.dot_dimension_numbers<[1], [1], [0], [0], [0, 0, 1, 0], [], []>} : vector<8x8xf32>, vector<16x8xf32>, vector<8x16xf32> -> vector<8x16xf32>
    %cst_26 = arith.constant 0.353553385 : f32
    %43 = vector.broadcast %cst_26 : f32 to vector<8x16xf32>
    %44 = arith.mulf %42, %43 : vector<8x16xf32>
    %45 = vector.broadcast %17 : vector<1x16xf32> to vector<8x16xf32>
    %46 = arith.addf %44, %45 : vector<8x16xf32>
    %cst_27 = arith.constant dense<0xFF800000> : vector<8xf32>
    %47 = vector.multi_reduction <maximumf>, %46, %cst_27 [1] : vector<8x16xf32> to vector<8xf32>
    %48 = vector.shape_cast %47 : vector<8xf32> to vector<8x1xf32>
    %49 = vector.broadcast %48 : vector<8x1xf32> to vector<8x16xf32>
    %50 = arith.subf %46, %49 : vector<8x16xf32>
    %51 = math.exp %50 : vector<8x16xf32>
    %cst_28 = arith.constant dense<0.000000e+00> : vector<8xf32>
    %52 = vector.multi_reduction <add>, %51, %cst_28 [1] : vector<8x16xf32> to vector<8xf32>
    %53 = vector.shape_cast %52 : vector<8xf32> to vector<8x1xf32>
    %54 = tpu.reciprocal %53 {approx = true} : vector<8x1xf32> -> vector<8x1xf32>
    %55 = vector.broadcast %54 : vector<8x1xf32> to vector<8x16xf32>
    %56 = arith.mulf %51, %55 : vector<8x16xf32>
    %57 = vector.extract_strided_slice %15 {offsets = [0, 8], sizes = [16, 8], strides = [1, 1]} : vector<16x32xf32> to vector<16x8xf32>
    %cst_29 = arith.constant dense<0.000000e+00> : vector<8x8xf32>
    %58 = tpu.matmul %56, %57, %cst_29 {dimension_numbers = #tpu.dot_dimension_numbers<[1], [0], [0], [1], [0, 0, 1, 1], [], []>} : vector<8x16xf32>, vector<16x8xf32>, vector<8x8xf32> -> vector<8x8xf32>
    %59 = vector.extract_strided_slice %18 {offsets = [8, 0], sizes = [8, 32], strides = [1, 1]} : vector<32x32xf32> to vector<8x32xf32>
    %cst_30 = arith.constant dense<0.000000e+00> : vector<8x32xf32>
    %60 = tpu.matmul %58, %59, %cst_30 {dimension_numbers = #tpu.dot_dimension_numbers<[1], [0], [0], [1], [0, 0, 1, 1], [], []>} : vector<8x8xf32>, vector<8x32xf32>, vector<8x32xf32> -> vector<8x32xf32>
    %61 = arith.addf %39, %60 : vector<8x32xf32>
    %62 = vector.extract_strided_slice %8 {offsets = [0, 16], sizes = [8, 8], strides = [1, 1]} : vector<8x32xf32> to vector<8x8xf32>
    %63 = vector.extract_strided_slice %14 {offsets = [0, 16], sizes = [16, 8], strides = [1, 1]} : vector<16x32xf32> to vector<16x8xf32>
    %cst_31 = arith.constant dense<0.000000e+00> : vector<8x16xf32>
    %64 = tpu.matmul %62, %63, %cst_31 {dimension_numbers = #tpu.dot_dimension_numbers<[1], [1], [0], [0], [0, 0, 1, 0], [], []>} : vector<8x8xf32>, vector<16x8xf32>, vector<8x16xf32> -> vector<8x16xf32>
    %cst_32 = arith.constant 0.353553385 : f32
    %65 = vector.broadcast %cst_32 : f32 to vector<8x16xf32>
    %66 = arith.mulf %64, %65 : vector<8x16xf32>
    %67 = vector.broadcast %17 : vector<1x16xf32> to vector<8x16xf32>
    %68 = arith.addf %66, %67 : vector<8x16xf32>
    %cst_33 = arith.constant dense<0xFF800000> : vector<8xf32>
    %69 = vector.multi_reduction <maximumf>, %68, %cst_33 [1] : vector<8x16xf32> to vector<8xf32>
    %70 = vector.shape_cast %69 : vector<8xf32> to vector<8x1xf32>
    %71 = vector.broadcast %70 : vector<8x1xf32> to vector<8x16xf32>
    %72 = arith.subf %68, %71 : vector<8x16xf32>
    %73 = math.exp %72 : vector<8x16xf32>
    %cst_34 = arith.constant dense<0.000000e+00> : vector<8xf32>
    %74 = vector.multi_reduction <add>, %73, %cst_34 [1] : vector<8x16xf32> to vector<8xf32>
    %75 = vector.shape_cast %74 : vector<8xf32> to vector<8x1xf32>
    %76 = tpu.reciprocal %75 {approx = true} : vector<8x1xf32> -> vector<8x1xf32>
    %77 = vector.broadcast %76 : vector<8x1xf32> to vector<8x16xf32>
    %78 = arith.mulf %73, %77 : vector<8x16xf32>
    %79 = vector.extract_strided_slice %15 {offsets = [0, 16], sizes = [16, 8], strides = [1, 1]} : vector<16x32xf32> to vector<16x8xf32>
    %cst_35 = arith.constant dense<0.000000e+00> : vector<8x8xf32>
    %80 = tpu.matmul %78, %79, %cst_35 {dimension_numbers = #tpu.dot_dimension_numbers<[1], [0], [0], [1], [0, 0, 1, 1], [], []>} : vector<8x16xf32>, vector<16x8xf32>, vector<8x8xf32> -> vector<8x8xf32>
    %81 = vector.extract_strided_slice %18 {offsets = [16, 0], sizes = [8, 32], strides = [1, 1]} : vector<32x32xf32> to vector<8x32xf32>
    %cst_36 = arith.constant dense<0.000000e+00> : vector<8x32xf32>
    %82 = tpu.matmul %80, %81, %cst_36 {dimension_numbers = #tpu.dot_dimension_numbers<[1], [0], [0], [1], [0, 0, 1, 1], [], []>} : vector<8x8xf32>, vector<8x32xf32>, vector<8x32xf32> -> vector<8x32xf32>
    %83 = arith.addf %61, %82 : vector<8x32xf32>
    %84 = vector.extract_strided_slice %8 {offsets = [0, 24], sizes = [8, 8], strides = [1, 1]} : vector<8x32xf32> to vector<8x8xf32>
    %85 = vector.extract_strided_slice %14 {offsets = [0, 24], sizes = [16, 8], strides = [1, 1]} : vector<16x32xf32> to vector<16x8xf32>
    %cst_37 = arith.constant dense<0.000000e+00> : vector<8x16xf32>
    %86 = tpu.matmul %84, %85, %cst_37 {dimension_numbers = #tpu.dot_dimension_numbers<[1], [1], [0], [0], [0, 0, 1, 0], [], []>} : vector<8x8xf32>, vector<16x8xf32>, vector<8x16xf32> -> vector<8x16xf32>
    %cst_38 = arith.constant 0.353553385 : f32
    %87 = vector.broadcast %cst_38 : f32 to vector<8x16xf32>
    %88 = arith.mulf %86, %87 : vector<8x16xf32>
    %89 = vector.broadcast %17 : vector<1x16xf32> to vector<8x16xf32>
    %90 = arith.addf %88, %89 : vector<8x16xf32>
    %cst_39 = arith.constant dense<0xFF800000> : vector<8xf32>
    %91 = vector.multi_reduction <maximumf>, %90, %cst_39 [1] : vector<8x16xf32> to vector<8xf32>
    %92 = vector.shape_cast %91 : vector<8xf32> to vector<8x1xf32>
    %93 = vector.broadcast %92 : vector<8x1xf32> to vector<8x16xf32>
    %94 = arith.subf %90, %93 : vector<8x16xf32>
    %95 = math.exp %94 : vector<8x16xf32>
    %cst_40 = arith.constant dense<0.000000e+00> : vector<8xf32>
    %96 = vector.multi_reduction <add>, %95, %cst_40 [1] : vector<8x16xf32> to vector<8xf32>
    %97 = vector.shape_cast %96 : vector<8xf32> to vector<8x1xf32>
    %98 = tpu.reciprocal %97 {approx = true} : vector<8x1xf32> -> vector<8x1xf32>
    %99 = vector.broadcast %98 : vector<8x1xf32> to vector<8x16xf32>
    %100 = arith.mulf %95, %99 : vector<8x16xf32>
    %101 = vector.extract_strided_slice %15 {offsets = [0, 24], sizes = [16, 8], strides = [1, 1]} : vector<16x32xf32> to vector<16x8xf32>
    %cst_41 = arith.constant dense<0.000000e+00> : vector<8x8xf32>
    %102 = tpu.matmul %100, %101, %cst_41 {dimension_numbers = #tpu.dot_dimension_numbers<[1], [0], [0], [1], [0, 0, 1, 1], [], []>} : vector<8x16xf32>, vector<16x8xf32>, vector<8x8xf32> -> vector<8x8xf32>
    %103 = vector.extract_strided_slice %18 {offsets = [24, 0], sizes = [8, 32], strides = [1, 1]} : vector<32x32xf32> to vector<8x32xf32>
    %cst_42 = arith.constant dense<0.000000e+00> : vector<8x32xf32>
    %104 = tpu.matmul %102, %103, %cst_42 {dimension_numbers = #tpu.dot_dimension_numbers<[1], [0], [0], [1], [0, 0, 1, 1], [], []>} : vector<8x8xf32>, vector<8x32xf32>, vector<8x32xf32> -> vector<8x32xf32>
    %105 = arith.addf %83, %104 : vector<8x32xf32>
    %106 = arith.addf %1, %105 : vector<8x32xf32>
    %c0_43 = arith.constant 0 : index
    %c0_44 = arith.constant 0 : index
    %107 = vector.load %arg8[%c0_43, %c0_44] : memref<1x32xf32, #tpu.memory_space<vmem>>, vector<1x32xf32>
    %108 = vector.broadcast %107 : vector<1x32xf32> to vector<8x32xf32>
    %109 = arith.addf %106, %108 : vector<8x32xf32>
    %c0_45 = arith.constant 0 : index
    %c0_46 = arith.constant 0 : index
    %110 = vector.load %arg10[%c0_45, %c0_46] : memref<1x32xf32, #tpu.memory_space<vmem>>, vector<1x32xf32>
    %c0_47 = arith.constant 0 : index
    %c0_48 = arith.constant 0 : index
    %111 = vector.load %arg11[%c0_47, %c0_48] : memref<1x32xf32, #tpu.memory_space<vmem>>, vector<1x32xf32>
    %cst_49 = arith.constant dense<0.000000e+00> : vector<8xf32>
    %112 = vector.multi_reduction <add>, %109, %cst_49 [1] : vector<8x32xf32> to vector<8xf32>
    %113 = vector.shape_cast %112 : vector<8xf32> to vector<8x1xf32>
    %cst_50 = arith.constant 3.200000e+01 : f32
    %114 = vector.broadcast %cst_50 : f32 to vector<8x1xf32>
    %115 = arith.divf %113, %114 : vector<8x1xf32>
    %116 = vector.broadcast %115 : vector<8x1xf32> to vector<8x32xf32>
    %117 = arith.subf %109, %116 : vector<8x32xf32>
    %118 = vector.broadcast %115 : vector<8x1xf32> to vector<8x32xf32>
    %119 = arith.subf %109, %118 : vector<8x32xf32>
    %120 = arith.mulf %117, %119 : vector<8x32xf32>
    %cst_51 = arith.constant dense<0.000000e+00> : vector<8xf32>
    %121 = vector.multi_reduction <add>, %120, %cst_51 [1] : vector<8x32xf32> to vector<8xf32>
    %122 = vector.shape_cast %121 : vector<8xf32> to vector<8x1xf32>
    %cst_52 = arith.constant 3.200000e+01 : f32
    %123 = vector.broadcast %cst_52 : f32 to vector<8x1xf32>
    %124 = arith.divf %122, %123 : vector<8x1xf32>
    %125 = vector.broadcast %115 : vector<8x1xf32> to vector<8x32xf32>
    %126 = arith.subf %109, %125 : vector<8x32xf32>
    %cst_53 = arith.constant 9.99999974E-6 : f32
    %127 = vector.broadcast %cst_53 : f32 to vector<8x1xf32>
    %128 = arith.addf %124, %127 : vector<8x1xf32>
    %129 = math.rsqrt %128 : vector<8x1xf32>
    %130 = vector.broadcast %129 : vector<8x1xf32> to vector<8x32xf32>
    %131 = arith.mulf %126, %130 : vector<8x32xf32>
    %132 = vector.broadcast %110 : vector<1x32xf32> to vector<8x32xf32>
    %133 = arith.mulf %131, %132 : vector<8x32xf32>
    %134 = vector.broadcast %111 : vector<1x32xf32> to vector<8x32xf32>
    %135 = arith.addf %133, %134 : vector<8x32xf32>
    %c0_54 = arith.constant 0 : index
    %c0_55 = arith.constant 0 : index
    %c0_56 = arith.constant 0 : index
    %136 = vector.load %arg12[%c0_54, %c0_55, %c0_56] : memref<1x8x32xf32, #tpu.memory_space<vmem>>, vector<1x8x32xf32>
    %137 = vector.shape_cast %136 : vector<1x8x32xf32> to vector<8x32xf32>
    %138 = vector.shape_cast %135 : vector<8x32xf32> to vector<1x8x32xf32>
    tpu.vector_store %arg12[%c0_54, %c0_55, %c0_56], %138 {strides = array<i32>} : memref<1x8x32xf32, #tpu.memory_space<vmem>>, vector<1x8x32xf32>,
    return
  }
  func.func @transform_0(%arg0: i32) -> (i32, i32, i32) {
    %c0_i32 = arith.constant 0 : i32
    %c0_i32_0 = arith.constant 0 : i32
    %c0_i32_1 = arith.constant 0 : i32
    return %arg0, %c0_i32, %c0_i32_0 : i32, i32, i32
  }
  func.func @transform_1(%arg0: i32) -> (i32, i32, i32) {
    %c0_i32 = arith.constant 0 : i32
    %c0_i32_0 = arith.constant 0 : i32
    %c0_i32_1 = arith.constant 0 : i32
    return %arg0, %c0_i32, %c0_i32_0 : i32, i32, i32
  }
  func.func @transform_2(%arg0: i32) -> (i32, i32) {
    %c0_i32 = arith.constant 0 : i32
    %c0_i32_0 = arith.constant 0 : i32
    %c0_i32_1 = arith.constant 0 : i32
    return %c0_i32, %c0_i32_0 : i32, i32
  }
  func.func @transform_3(%arg0: i32) -> (i32, i32) {
    %c0_i32 = arith.constant 0 : i32
    %c0_i32_0 = arith.constant 0 : i32
    %c0_i32_1 = arith.constant 0 : i32
    return %c0_i32, %c0_i32_0 : i32, i32
  }
  func.func @transform_4(%arg0: i32) -> (i32, i32) {
    %c0_i32 = arith.constant 0 : i32
    %c0_i32_0 = arith.constant 0 : i32
    %c0_i32_1 = arith.constant 0 : i32
    return %c0_i32, %c0_i32_0 : i32, i32
  }
  func.func @transform_5(%arg0: i32) -> (i32, i32) {
    %c0_i32 = arith.constant 0 : i32
    %c0_i32_0 = arith.constant 0 : i32
    %c0_i32_1 = arith.constant 0 : i32
    return %c0_i32, %c0_i32_0 : i32, i32
  }
  func.func @transform_6(%arg0: i32) -> (i32, i32) {
    %c0_i32 = arith.constant 0 : i32
    %c0_i32_0 = arith.constant 0 : i32
    %c0_i32_1 = arith.constant 0 : i32
    return %c0_i32, %c0_i32_0 : i32, i32
  }
  func.func @transform_7(%arg0: i32) -> (i32, i32) {
    %c0_i32 = arith.constant 0 : i32
    %c0_i32_0 = arith.constant 0 : i32
    %c0_i32_1 = arith.constant 0 : i32
    return %c0_i32, %c0_i32_0 : i32, i32
  }
  func.func @transform_8(%arg0: i32) -> (i32, i32, i32) {
    %c0_i32 = arith.constant 0 : i32
    %c0_i32_0 = arith.constant 0 : i32
    %c0_i32_1 = arith.constant 0 : i32
    return %arg0, %c0_i32, %c0_i32_0 : i32, i32, i32
  }
  func.func @transform_9(%arg0: i32) -> (i32, i32) {
    %c0_i32 = arith.constant 0 : i32
    %c0_i32_0 = arith.constant 0 : i32
    %c0_i32_1 = arith.constant 0 : i32
    return %c0_i32, %c0_i32_0 : i32, i32
  }
  func.func @transform_10(%arg0: i32) -> (i32, i32) {
    %c0_i32 = arith.constant 0 : i32
    %c0_i32_0 = arith.constant 0 : i32
    %c0_i32_1 = arith.constant 0 : i32
    return %c0_i32, %c0_i32_0 : i32, i32
  }
  func.func @transform_11(%arg0: i32) -> (i32, i32, i32) {
    %c0_i32 = arith.constant 0 : i32
    %c0_i32_0 = arith.constant 0 : i32
    %c0_i32_1 = arith.constant 0 : i32
    return %arg0, %c0_i32, %c0_i32_0 : i32, i32, i32
  }
}

module attributes {stable_mosaic.version = 11 : i64} {
  func.func @_self_mha_ln_kernel(%arg0: i32, %arg1: memref<1x8x32xf32, #tpu.memory_space<vmem>>, %arg2: memref<32x96xf32, #tpu.memory_space<vmem>>, %arg3: memref<1x96xf32, #tpu.memory_space<vmem>>, %arg4: memref<32x32xf32, #tpu.memory_space<vmem>>, %arg5: memref<1x32xf32, #tpu.memory_space<vmem>>, %arg6: memref<8x8xf32, #tpu.memory_space<vmem>>, %arg7: memref<1x1x8xf32, #tpu.memory_space<vmem>>, %arg8: memref<1x32xf32, #tpu.memory_space<vmem>>, %arg9: memref<1x32xf32, #tpu.memory_space<vmem>>, %arg10: memref<1x8x32xf32, #tpu.memory_space<vmem>>) attributes {dimension_semantics = [#tpu.dimension_semantics<parallel>], iteration_bounds = array<i64: 2>, scalar_prefetch = 0 : i64, scratch_operands = 0 : i64, tpu.core_type = #tpu.core_type<tc>, window_params = [{transform_indices = @transform_0, window_bounds = array<i64: 1, 8, 32>}, {pipeline_mode = #tpu.pipeline_mode<synchronous>, transform_indices = @transform_1, window_bounds = array<i64: 32, 96>}, {pipeline_mode = #tpu.pipeline_mode<synchronous>, transform_indices = @transform_2, window_bounds = array<i64: 1, 96>}, {pipeline_mode = #tpu.pipeline_mode<synchronous>, transform_indices = @transform_3, window_bounds = array<i64: 32, 32>}, {pipeline_mode = #tpu.pipeline_mode<synchronous>, transform_indices = @transform_4, window_bounds = array<i64: 1, 32>}, {pipeline_mode = #tpu.pipeline_mode<synchronous>, transform_indices = @transform_5, window_bounds = array<i64: 8, 8>}, {transform_indices = @transform_6, window_bounds = array<i64: 1, 1, 8>}, {pipeline_mode = #tpu.pipeline_mode<synchronous>, transform_indices = @transform_7, window_bounds = array<i64: 1, 32>}, {pipeline_mode = #tpu.pipeline_mode<synchronous>, transform_indices = @transform_8, window_bounds = array<i64: 1, 32>}, {transform_indices = @transform_9, window_bounds = array<i64: 1, 8, 32>}]} {
    %c0 = arith.constant 0 : index
    %c0_0 = arith.constant 0 : index
    %c0_1 = arith.constant 0 : index
    %0 = vector.load %arg1[%c0, %c0_0, %c0_1] : memref<1x8x32xf32, #tpu.memory_space<vmem>>, vector<1x8x32xf32>
    %1 = vector.shape_cast %0 : vector<1x8x32xf32> to vector<8x32xf32>
    %c0_2 = arith.constant 0 : index
    %c0_3 = arith.constant 0 : index
    %2 = vector.load %arg2[%c0_2, %c0_3] : memref<32x96xf32, #tpu.memory_space<vmem>>, vector<32x96xf32>
    %cst = arith.constant dense<0.000000e+00> : vector<8x96xf32>
    %3 = tpu.matmul %1, %2, %cst {dimension_numbers = #tpu.dot_dimension_numbers<[1], [0], [0], [1], [0, 0, 1, 1], [], []>} : vector<8x32xf32>, vector<32x96xf32>, vector<8x96xf32> -> vector<8x96xf32>
    %c0_4 = arith.constant 0 : index
    %c0_5 = arith.constant 0 : index
    %4 = vector.load %arg3[%c0_4, %c0_5] : memref<1x96xf32, #tpu.memory_space<vmem>>, vector<1x96xf32>
    %5 = vector.broadcast %4 : vector<1x96xf32> to vector<8x96xf32>
    %6 = arith.addf %3, %5 : vector<8x96xf32>
    %c0_6 = arith.constant 0 : index
    %c0_7 = arith.constant 0 : index
    %7 = vector.load %arg6[%c0_6, %c0_7] : memref<8x8xf32, #tpu.memory_space<vmem>>, vector<8x8xf32>
    %c0_8 = arith.constant 0 : index
    %c0_9 = arith.constant 0 : index
    %c0_10 = arith.constant 0 : index
    %8 = vector.load %arg7[%c0_8, %c0_9, %c0_10] : memref<1x1x8xf32, #tpu.memory_space<vmem>>, vector<1x1x8xf32>
    %9 = vector.shape_cast %8 : vector<1x1x8xf32> to vector<1x8xf32>
    %10 = vector.broadcast %9 : vector<1x8xf32> to vector<8x8xf32>
    %11 = arith.addf %7, %10 : vector<8x8xf32>
    %12 = vector.extract_strided_slice %6 {offsets = [0, 0], sizes = [8, 32], strides = [1, 1]} : vector<8x96xf32> to vector<8x32xf32>
    %13 = vector.extract_strided_slice %6 {offsets = [0, 32], sizes = [8, 32], strides = [1, 1]} : vector<8x96xf32> to vector<8x32xf32>
    %14 = vector.extract_strided_slice %6 {offsets = [0, 64], sizes = [8, 32], strides = [1, 1]} : vector<8x96xf32> to vector<8x32xf32>
    %c0_11 = arith.constant 0 : index
    %c0_12 = arith.constant 0 : index
    %15 = vector.load %arg4[%c0_11, %c0_12] : memref<32x32xf32, #tpu.memory_space<vmem>>, vector<32x32xf32>
    %16 = vector.extract_strided_slice %12 {offsets = [0, 0], sizes = [8, 8], strides = [1, 1]} : vector<8x32xf32> to vector<8x8xf32>
    %17 = vector.extract_strided_slice %13 {offsets = [0, 0], sizes = [8, 8], strides = [1, 1]} : vector<8x32xf32> to vector<8x8xf32>
    %cst_13 = arith.constant dense<0.000000e+00> : vector<8x8xf32>
    %18 = tpu.matmul %16, %17, %cst_13 {dimension_numbers = #tpu.dot_dimension_numbers<[1], [1], [0], [0], [0, 0, 1, 0], [], []>} : vector<8x8xf32>, vector<8x8xf32>, vector<8x8xf32> -> vector<8x8xf32>
    %cst_14 = arith.constant 0.353553385 : f32
    %19 = vector.broadcast %cst_14 : f32 to vector<8x8xf32>
    %20 = arith.mulf %18, %19 : vector<8x8xf32>
    %21 = arith.addf %20, %11 : vector<8x8xf32>
    %cst_15 = arith.constant dense<0xFF800000> : vector<8xf32>
    %22 = vector.multi_reduction <maximumf>, %21, %cst_15 [1] : vector<8x8xf32> to vector<8xf32>
    %23 = vector.shape_cast %22 : vector<8xf32> to vector<8x1xf32>
    %24 = vector.broadcast %23 : vector<8x1xf32> to vector<8x8xf32>
    %25 = arith.subf %21, %24 : vector<8x8xf32>
    %26 = math.exp %25 : vector<8x8xf32>
    %cst_16 = arith.constant dense<0.000000e+00> : vector<8xf32>
    %27 = vector.multi_reduction <add>, %26, %cst_16 [1] : vector<8x8xf32> to vector<8xf32>
    %28 = vector.shape_cast %27 : vector<8xf32> to vector<8x1xf32>
    %29 = tpu.reciprocal %28 {approx = true} : vector<8x1xf32> -> vector<8x1xf32>
    %30 = vector.broadcast %29 : vector<8x1xf32> to vector<8x8xf32>
    %31 = arith.mulf %26, %30 : vector<8x8xf32>
    %32 = vector.extract_strided_slice %14 {offsets = [0, 0], sizes = [8, 8], strides = [1, 1]} : vector<8x32xf32> to vector<8x8xf32>
    %cst_17 = arith.constant dense<0.000000e+00> : vector<8x8xf32>
    %33 = tpu.matmul %31, %32, %cst_17 {dimension_numbers = #tpu.dot_dimension_numbers<[1], [0], [0], [1], [0, 0, 1, 1], [], []>} : vector<8x8xf32>, vector<8x8xf32>, vector<8x8xf32> -> vector<8x8xf32>
    %34 = vector.extract_strided_slice %15 {offsets = [0, 0], sizes = [8, 32], strides = [1, 1]} : vector<32x32xf32> to vector<8x32xf32>
    %cst_18 = arith.constant dense<0.000000e+00> : vector<8x32xf32>
    %35 = tpu.matmul %33, %34, %cst_18 {dimension_numbers = #tpu.dot_dimension_numbers<[1], [0], [0], [1], [0, 0, 1, 1], [], []>} : vector<8x8xf32>, vector<8x32xf32>, vector<8x32xf32> -> vector<8x32xf32>
    %36 = vector.extract_strided_slice %12 {offsets = [0, 8], sizes = [8, 8], strides = [1, 1]} : vector<8x32xf32> to vector<8x8xf32>
    %37 = vector.extract_strided_slice %13 {offsets = [0, 8], sizes = [8, 8], strides = [1, 1]} : vector<8x32xf32> to vector<8x8xf32>
    %cst_19 = arith.constant dense<0.000000e+00> : vector<8x8xf32>
    %38 = tpu.matmul %36, %37, %cst_19 {dimension_numbers = #tpu.dot_dimension_numbers<[1], [1], [0], [0], [0, 0, 1, 0], [], []>} : vector<8x8xf32>, vector<8x8xf32>, vector<8x8xf32> -> vector<8x8xf32>
    %cst_20 = arith.constant 0.353553385 : f32
    %39 = vector.broadcast %cst_20 : f32 to vector<8x8xf32>
    %40 = arith.mulf %38, %39 : vector<8x8xf32>
    %41 = arith.addf %40, %11 : vector<8x8xf32>
    %cst_21 = arith.constant dense<0xFF800000> : vector<8xf32>
    %42 = vector.multi_reduction <maximumf>, %41, %cst_21 [1] : vector<8x8xf32> to vector<8xf32>
    %43 = vector.shape_cast %42 : vector<8xf32> to vector<8x1xf32>
    %44 = vector.broadcast %43 : vector<8x1xf32> to vector<8x8xf32>
    %45 = arith.subf %41, %44 : vector<8x8xf32>
    %46 = math.exp %45 : vector<8x8xf32>
    %cst_22 = arith.constant dense<0.000000e+00> : vector<8xf32>
    %47 = vector.multi_reduction <add>, %46, %cst_22 [1] : vector<8x8xf32> to vector<8xf32>
    %48 = vector.shape_cast %47 : vector<8xf32> to vector<8x1xf32>
    %49 = tpu.reciprocal %48 {approx = true} : vector<8x1xf32> -> vector<8x1xf32>
    %50 = vector.broadcast %49 : vector<8x1xf32> to vector<8x8xf32>
    %51 = arith.mulf %46, %50 : vector<8x8xf32>
    %52 = vector.extract_strided_slice %14 {offsets = [0, 8], sizes = [8, 8], strides = [1, 1]} : vector<8x32xf32> to vector<8x8xf32>
    %cst_23 = arith.constant dense<0.000000e+00> : vector<8x8xf32>
    %53 = tpu.matmul %51, %52, %cst_23 {dimension_numbers = #tpu.dot_dimension_numbers<[1], [0], [0], [1], [0, 0, 1, 1], [], []>} : vector<8x8xf32>, vector<8x8xf32>, vector<8x8xf32> -> vector<8x8xf32>
    %54 = vector.extract_strided_slice %15 {offsets = [8, 0], sizes = [8, 32], strides = [1, 1]} : vector<32x32xf32> to vector<8x32xf32>
    %cst_24 = arith.constant dense<0.000000e+00> : vector<8x32xf32>
    %55 = tpu.matmul %53, %54, %cst_24 {dimension_numbers = #tpu.dot_dimension_numbers<[1], [0], [0], [1], [0, 0, 1, 1], [], []>} : vector<8x8xf32>, vector<8x32xf32>, vector<8x32xf32> -> vector<8x32xf32>
    %56 = arith.addf %35, %55 : vector<8x32xf32>
    %57 = vector.extract_strided_slice %12 {offsets = [0, 16], sizes = [8, 8], strides = [1, 1]} : vector<8x32xf32> to vector<8x8xf32>
    %58 = vector.extract_strided_slice %13 {offsets = [0, 16], sizes = [8, 8], strides = [1, 1]} : vector<8x32xf32> to vector<8x8xf32>
    %cst_25 = arith.constant dense<0.000000e+00> : vector<8x8xf32>
    %59 = tpu.matmul %57, %58, %cst_25 {dimension_numbers = #tpu.dot_dimension_numbers<[1], [1], [0], [0], [0, 0, 1, 0], [], []>} : vector<8x8xf32>, vector<8x8xf32>, vector<8x8xf32> -> vector<8x8xf32>
    %cst_26 = arith.constant 0.353553385 : f32
    %60 = vector.broadcast %cst_26 : f32 to vector<8x8xf32>
    %61 = arith.mulf %59, %60 : vector<8x8xf32>
    %62 = arith.addf %61, %11 : vector<8x8xf32>
    %cst_27 = arith.constant dense<0xFF800000> : vector<8xf32>
    %63 = vector.multi_reduction <maximumf>, %62, %cst_27 [1] : vector<8x8xf32> to vector<8xf32>
    %64 = vector.shape_cast %63 : vector<8xf32> to vector<8x1xf32>
    %65 = vector.broadcast %64 : vector<8x1xf32> to vector<8x8xf32>
    %66 = arith.subf %62, %65 : vector<8x8xf32>
    %67 = math.exp %66 : vector<8x8xf32>
    %cst_28 = arith.constant dense<0.000000e+00> : vector<8xf32>
    %68 = vector.multi_reduction <add>, %67, %cst_28 [1] : vector<8x8xf32> to vector<8xf32>
    %69 = vector.shape_cast %68 : vector<8xf32> to vector<8x1xf32>
    %70 = tpu.reciprocal %69 {approx = true} : vector<8x1xf32> -> vector<8x1xf32>
    %71 = vector.broadcast %70 : vector<8x1xf32> to vector<8x8xf32>
    %72 = arith.mulf %67, %71 : vector<8x8xf32>
    %73 = vector.extract_strided_slice %14 {offsets = [0, 16], sizes = [8, 8], strides = [1, 1]} : vector<8x32xf32> to vector<8x8xf32>
    %cst_29 = arith.constant dense<0.000000e+00> : vector<8x8xf32>
    %74 = tpu.matmul %72, %73, %cst_29 {dimension_numbers = #tpu.dot_dimension_numbers<[1], [0], [0], [1], [0, 0, 1, 1], [], []>} : vector<8x8xf32>, vector<8x8xf32>, vector<8x8xf32> -> vector<8x8xf32>
    %75 = vector.extract_strided_slice %15 {offsets = [16, 0], sizes = [8, 32], strides = [1, 1]} : vector<32x32xf32> to vector<8x32xf32>
    %cst_30 = arith.constant dense<0.000000e+00> : vector<8x32xf32>
    %76 = tpu.matmul %74, %75, %cst_30 {dimension_numbers = #tpu.dot_dimension_numbers<[1], [0], [0], [1], [0, 0, 1, 1], [], []>} : vector<8x8xf32>, vector<8x32xf32>, vector<8x32xf32> -> vector<8x32xf32>
    %77 = arith.addf %56, %76 : vector<8x32xf32>
    %78 = vector.extract_strided_slice %12 {offsets = [0, 24], sizes = [8, 8], strides = [1, 1]} : vector<8x32xf32> to vector<8x8xf32>
    %79 = vector.extract_strided_slice %13 {offsets = [0, 24], sizes = [8, 8], strides = [1, 1]} : vector<8x32xf32> to vector<8x8xf32>
    %cst_31 = arith.constant dense<0.000000e+00> : vector<8x8xf32>
    %80 = tpu.matmul %78, %79, %cst_31 {dimension_numbers = #tpu.dot_dimension_numbers<[1], [1], [0], [0], [0, 0, 1, 0], [], []>} : vector<8x8xf32>, vector<8x8xf32>, vector<8x8xf32> -> vector<8x8xf32>
    %cst_32 = arith.constant 0.353553385 : f32
    %81 = vector.broadcast %cst_32 : f32 to vector<8x8xf32>
    %82 = arith.mulf %80, %81 : vector<8x8xf32>
    %83 = arith.addf %82, %11 : vector<8x8xf32>
    %cst_33 = arith.constant dense<0xFF800000> : vector<8xf32>
    %84 = vector.multi_reduction <maximumf>, %83, %cst_33 [1] : vector<8x8xf32> to vector<8xf32>
    %85 = vector.shape_cast %84 : vector<8xf32> to vector<8x1xf32>
    %86 = vector.broadcast %85 : vector<8x1xf32> to vector<8x8xf32>
    %87 = arith.subf %83, %86 : vector<8x8xf32>
    %88 = math.exp %87 : vector<8x8xf32>
    %cst_34 = arith.constant dense<0.000000e+00> : vector<8xf32>
    %89 = vector.multi_reduction <add>, %88, %cst_34 [1] : vector<8x8xf32> to vector<8xf32>
    %90 = vector.shape_cast %89 : vector<8xf32> to vector<8x1xf32>
    %91 = tpu.reciprocal %90 {approx = true} : vector<8x1xf32> -> vector<8x1xf32>
    %92 = vector.broadcast %91 : vector<8x1xf32> to vector<8x8xf32>
    %93 = arith.mulf %88, %92 : vector<8x8xf32>
    %94 = vector.extract_strided_slice %14 {offsets = [0, 24], sizes = [8, 8], strides = [1, 1]} : vector<8x32xf32> to vector<8x8xf32>
    %cst_35 = arith.constant dense<0.000000e+00> : vector<8x8xf32>
    %95 = tpu.matmul %93, %94, %cst_35 {dimension_numbers = #tpu.dot_dimension_numbers<[1], [0], [0], [1], [0, 0, 1, 1], [], []>} : vector<8x8xf32>, vector<8x8xf32>, vector<8x8xf32> -> vector<8x8xf32>
    %96 = vector.extract_strided_slice %15 {offsets = [24, 0], sizes = [8, 32], strides = [1, 1]} : vector<32x32xf32> to vector<8x32xf32>
    %cst_36 = arith.constant dense<0.000000e+00> : vector<8x32xf32>
    %97 = tpu.matmul %95, %96, %cst_36 {dimension_numbers = #tpu.dot_dimension_numbers<[1], [0], [0], [1], [0, 0, 1, 1], [], []>} : vector<8x8xf32>, vector<8x32xf32>, vector<8x32xf32> -> vector<8x32xf32>
    %98 = arith.addf %77, %97 : vector<8x32xf32>
    %99 = arith.addf %1, %98 : vector<8x32xf32>
    %c0_37 = arith.constant 0 : index
    %c0_38 = arith.constant 0 : index
    %100 = vector.load %arg5[%c0_37, %c0_38] : memref<1x32xf32, #tpu.memory_space<vmem>>, vector<1x32xf32>
    %101 = vector.broadcast %100 : vector<1x32xf32> to vector<8x32xf32>
    %102 = arith.addf %99, %101 : vector<8x32xf32>
    %c0_39 = arith.constant 0 : index
    %c0_40 = arith.constant 0 : index
    %103 = vector.load %arg8[%c0_39, %c0_40] : memref<1x32xf32, #tpu.memory_space<vmem>>, vector<1x32xf32>
    %c0_41 = arith.constant 0 : index
    %c0_42 = arith.constant 0 : index
    %104 = vector.load %arg9[%c0_41, %c0_42] : memref<1x32xf32, #tpu.memory_space<vmem>>, vector<1x32xf32>
    %cst_43 = arith.constant dense<0.000000e+00> : vector<8xf32>
    %105 = vector.multi_reduction <add>, %102, %cst_43 [1] : vector<8x32xf32> to vector<8xf32>
    %106 = vector.shape_cast %105 : vector<8xf32> to vector<8x1xf32>
    %cst_44 = arith.constant 3.200000e+01 : f32
    %107 = vector.broadcast %cst_44 : f32 to vector<8x1xf32>
    %108 = arith.divf %106, %107 : vector<8x1xf32>
    %109 = vector.broadcast %108 : vector<8x1xf32> to vector<8x32xf32>
    %110 = arith.subf %102, %109 : vector<8x32xf32>
    %111 = vector.broadcast %108 : vector<8x1xf32> to vector<8x32xf32>
    %112 = arith.subf %102, %111 : vector<8x32xf32>
    %113 = arith.mulf %110, %112 : vector<8x32xf32>
    %cst_45 = arith.constant dense<0.000000e+00> : vector<8xf32>
    %114 = vector.multi_reduction <add>, %113, %cst_45 [1] : vector<8x32xf32> to vector<8xf32>
    %115 = vector.shape_cast %114 : vector<8xf32> to vector<8x1xf32>
    %cst_46 = arith.constant 3.200000e+01 : f32
    %116 = vector.broadcast %cst_46 : f32 to vector<8x1xf32>
    %117 = arith.divf %115, %116 : vector<8x1xf32>
    %118 = vector.broadcast %108 : vector<8x1xf32> to vector<8x32xf32>
    %119 = arith.subf %102, %118 : vector<8x32xf32>
    %cst_47 = arith.constant 9.99999974E-6 : f32
    %120 = vector.broadcast %cst_47 : f32 to vector<8x1xf32>
    %121 = arith.addf %117, %120 : vector<8x1xf32>
    %122 = math.rsqrt %121 : vector<8x1xf32>
    %123 = vector.broadcast %122 : vector<8x1xf32> to vector<8x32xf32>
    %124 = arith.mulf %119, %123 : vector<8x32xf32>
    %125 = vector.broadcast %103 : vector<1x32xf32> to vector<8x32xf32>
    %126 = arith.mulf %124, %125 : vector<8x32xf32>
    %127 = vector.broadcast %104 : vector<1x32xf32> to vector<8x32xf32>
    %128 = arith.addf %126, %127 : vector<8x32xf32>
    %c0_48 = arith.constant 0 : index
    %c0_49 = arith.constant 0 : index
    %c0_50 = arith.constant 0 : index
    %129 = vector.load %arg10[%c0_48, %c0_49, %c0_50] : memref<1x8x32xf32, #tpu.memory_space<vmem>>, vector<1x8x32xf32>
    %130 = vector.shape_cast %129 : vector<1x8x32xf32> to vector<8x32xf32>
    %131 = vector.shape_cast %128 : vector<8x32xf32> to vector<1x8x32xf32>
    tpu.vector_store %arg10[%c0_48, %c0_49, %c0_50], %131 {strides = array<i32>} : memref<1x8x32xf32, #tpu.memory_space<vmem>>, vector<1x8x32xf32>,
    return
  }
  func.func @transform_0(%arg0: i32) -> (i32, i32, i32) {
    %c0_i32 = arith.constant 0 : i32
    %c0_i32_0 = arith.constant 0 : i32
    %c0_i32_1 = arith.constant 0 : i32
    return %arg0, %c0_i32, %c0_i32_0 : i32, i32, i32
  }
  func.func @transform_1(%arg0: i32) -> (i32, i32) {
    %c0_i32 = arith.constant 0 : i32
    %c0_i32_0 = arith.constant 0 : i32
    %c0_i32_1 = arith.constant 0 : i32
    return %c0_i32, %c0_i32_0 : i32, i32
  }
  func.func @transform_2(%arg0: i32) -> (i32, i32) {
    %c0_i32 = arith.constant 0 : i32
    %c0_i32_0 = arith.constant 0 : i32
    %c0_i32_1 = arith.constant 0 : i32
    return %c0_i32, %c0_i32_0 : i32, i32
  }
  func.func @transform_3(%arg0: i32) -> (i32, i32) {
    %c0_i32 = arith.constant 0 : i32
    %c0_i32_0 = arith.constant 0 : i32
    %c0_i32_1 = arith.constant 0 : i32
    return %c0_i32, %c0_i32_0 : i32, i32
  }
  func.func @transform_4(%arg0: i32) -> (i32, i32) {
    %c0_i32 = arith.constant 0 : i32
    %c0_i32_0 = arith.constant 0 : i32
    %c0_i32_1 = arith.constant 0 : i32
    return %c0_i32, %c0_i32_0 : i32, i32
  }
  func.func @transform_5(%arg0: i32) -> (i32, i32) {
    %c0_i32 = arith.constant 0 : i32
    %c0_i32_0 = arith.constant 0 : i32
    %c0_i32_1 = arith.constant 0 : i32
    return %c0_i32, %c0_i32_0 : i32, i32
  }
  func.func @transform_6(%arg0: i32) -> (i32, i32, i32) {
    %c0_i32 = arith.constant 0 : i32
    %c0_i32_0 = arith.constant 0 : i32
    %c0_i32_1 = arith.constant 0 : i32
    return %arg0, %c0_i32, %c0_i32_0 : i32, i32, i32
  }
  func.func @transform_7(%arg0: i32) -> (i32, i32) {
    %c0_i32 = arith.constant 0 : i32
    %c0_i32_0 = arith.constant 0 : i32
    %c0_i32_1 = arith.constant 0 : i32
    return %c0_i32, %c0_i32_0 : i32, i32
  }
  func.func @transform_8(%arg0: i32) -> (i32, i32) {
    %c0_i32 = arith.constant 0 : i32
    %c0_i32_0 = arith.constant 0 : i32
    %c0_i32_1 = arith.constant 0 : i32
    return %c0_i32, %c0_i32_0 : i32, i32
  }
  func.func @transform_9(%arg0: i32) -> (i32, i32, i32) {
    %c0_i32 = arith.constant 0 : i32
    %c0_i32_0 = arith.constant 0 : i32
    %c0_i32_1 = arith.constant 0 : i32
    return %arg0, %c0_i32, %c0_i32_0 : i32, i32, i32
  }
}

module attributes {stable_mosaic.version = 11 : i64} {
  func.func @_ln_generator_kernel(%arg0: i32, %arg1: memref<1x8x32xf32, #tpu.memory_space<vmem>>, %arg2: memref<1x32xf32, #tpu.memory_space<vmem>>, %arg3: memref<1x32xf32, #tpu.memory_space<vmem>>, %arg4: memref<32x128xf32, #tpu.memory_space<vmem>>, %arg5: memref<1x128xf32, #tpu.memory_space<vmem>>, %arg6: memref<1x8x128xf32, #tpu.memory_space<vmem>>) attributes {dimension_semantics = [#tpu.dimension_semantics<parallel>], iteration_bounds = array<i64: 2>, scalar_prefetch = 0 : i64, scratch_operands = 0 : i64, tpu.core_type = #tpu.core_type<tc>, window_params = [{transform_indices = @transform_0, window_bounds = array<i64: 1, 8, 32>}, {pipeline_mode = #tpu.pipeline_mode<synchronous>, transform_indices = @transform_1, window_bounds = array<i64: 1, 32>}, {pipeline_mode = #tpu.pipeline_mode<synchronous>, transform_indices = @transform_2, window_bounds = array<i64: 1, 32>}, {pipeline_mode = #tpu.pipeline_mode<synchronous>, transform_indices = @transform_3, window_bounds = array<i64: 32, 128>}, {pipeline_mode = #tpu.pipeline_mode<synchronous>, transform_indices = @transform_4, window_bounds = array<i64: 1, 128>}, {transform_indices = @transform_5, window_bounds = array<i64: 1, 8, 128>}]} {
    %c0 = arith.constant 0 : index
    %c0_0 = arith.constant 0 : index
    %c0_1 = arith.constant 0 : index
    %0 = vector.load %arg1[%c0, %c0_0, %c0_1] : memref<1x8x32xf32, #tpu.memory_space<vmem>>, vector<1x8x32xf32>
    %1 = vector.shape_cast %0 : vector<1x8x32xf32> to vector<8x32xf32>
    %c0_2 = arith.constant 0 : index
    %c0_3 = arith.constant 0 : index
    %2 = vector.load %arg2[%c0_2, %c0_3] : memref<1x32xf32, #tpu.memory_space<vmem>>, vector<1x32xf32>
    %c0_4 = arith.constant 0 : index
    %c0_5 = arith.constant 0 : index
    %3 = vector.load %arg3[%c0_4, %c0_5] : memref<1x32xf32, #tpu.memory_space<vmem>>, vector<1x32xf32>
    %cst = arith.constant dense<0.000000e+00> : vector<8xf32>
    %4 = vector.multi_reduction <add>, %1, %cst [1] : vector<8x32xf32> to vector<8xf32>
    %5 = vector.shape_cast %4 : vector<8xf32> to vector<8x1xf32>
    %cst_6 = arith.constant 3.200000e+01 : f32
    %6 = vector.broadcast %cst_6 : f32 to vector<8x1xf32>
    %7 = arith.divf %5, %6 : vector<8x1xf32>
    %8 = vector.broadcast %7 : vector<8x1xf32> to vector<8x32xf32>
    %9 = arith.subf %1, %8 : vector<8x32xf32>
    %10 = vector.broadcast %7 : vector<8x1xf32> to vector<8x32xf32>
    %11 = arith.subf %1, %10 : vector<8x32xf32>
    %12 = arith.mulf %9, %11 : vector<8x32xf32>
    %cst_7 = arith.constant dense<0.000000e+00> : vector<8xf32>
    %13 = vector.multi_reduction <add>, %12, %cst_7 [1] : vector<8x32xf32> to vector<8xf32>
    %14 = vector.shape_cast %13 : vector<8xf32> to vector<8x1xf32>
    %cst_8 = arith.constant 3.200000e+01 : f32
    %15 = vector.broadcast %cst_8 : f32 to vector<8x1xf32>
    %16 = arith.divf %14, %15 : vector<8x1xf32>
    %17 = vector.broadcast %7 : vector<8x1xf32> to vector<8x32xf32>
    %18 = arith.subf %1, %17 : vector<8x32xf32>
    %cst_9 = arith.constant 9.99999974E-6 : f32
    %19 = vector.broadcast %cst_9 : f32 to vector<8x1xf32>
    %20 = arith.addf %16, %19 : vector<8x1xf32>
    %21 = math.rsqrt %20 : vector<8x1xf32>
    %22 = vector.broadcast %21 : vector<8x1xf32> to vector<8x32xf32>
    %23 = arith.mulf %18, %22 : vector<8x32xf32>
    %24 = vector.broadcast %2 : vector<1x32xf32> to vector<8x32xf32>
    %25 = arith.mulf %23, %24 : vector<8x32xf32>
    %26 = vector.broadcast %3 : vector<1x32xf32> to vector<8x32xf32>
    %27 = arith.addf %25, %26 : vector<8x32xf32>
    %c0_10 = arith.constant 0 : index
    %c0_11 = arith.constant 0 : index
    %28 = vector.load %arg4[%c0_10, %c0_11] : memref<32x128xf32, #tpu.memory_space<vmem>>, vector<32x128xf32>
    %cst_12 = arith.constant dense<0.000000e+00> : vector<8x128xf32>
    %29 = tpu.matmul %27, %28, %cst_12 {dimension_numbers = #tpu.dot_dimension_numbers<[1], [0], [0], [1], [0, 0, 1, 1], [], []>} : vector<8x32xf32>, vector<32x128xf32>, vector<8x128xf32> -> vector<8x128xf32>
    %c0_13 = arith.constant 0 : index
    %c0_14 = arith.constant 0 : index
    %30 = vector.load %arg5[%c0_13, %c0_14] : memref<1x128xf32, #tpu.memory_space<vmem>>, vector<1x128xf32>
    %31 = vector.broadcast %30 : vector<1x128xf32> to vector<8x128xf32>
    %32 = arith.addf %29, %31 : vector<8x128xf32>
    %c0_15 = arith.constant 0 : index
    %c0_16 = arith.constant 0 : index
    %c0_17 = arith.constant 0 : index
    %33 = vector.load %arg6[%c0_15, %c0_16, %c0_17] : memref<1x8x128xf32, #tpu.memory_space<vmem>>, vector<1x8x128xf32>
    %34 = vector.shape_cast %33 : vector<1x8x128xf32> to vector<8x128xf32>
    %35 = vector.shape_cast %32 : vector<8x128xf32> to vector<1x8x128xf32>
    tpu.vector_store %arg6[%c0_15, %c0_16, %c0_17], %35 {strides = array<i32>} : memref<1x8x128xf32, #tpu.memory_space<vmem>>, vector<1x8x128xf32>,
    return
  }
  func.func @transform_0(%arg0: i32) -> (i32, i32, i32) {
    %c0_i32 = arith.constant 0 : i32
    %c0_i32_0 = arith.constant 0 : i32
    %c0_i32_1 = arith.constant 0 : i32
    return %arg0, %c0_i32, %c0_i32_0 : i32, i32, i32
  }
  func.func @transform_1(%arg0: i32) -> (i32, i32) {
    %c0_i32 = arith.constant 0 : i32
    %c0_i32_0 = arith.constant 0 : i32
    %c0_i32_1 = arith.constant 0 : i32
    return %c0_i32, %c0_i32_0 : i32, i32
  }
  func.func @transform_2(%arg0: i32) -> (i32, i32) {
    %c0_i32 = arith.constant 0 : i32
    %c0_i32_0 = arith.constant 0 : i32
    %c0_i32_1 = arith.constant 0 : i32
    return %c0_i32, %c0_i32_0 : i32, i32
  }
  func.func @transform_3(%arg0: i32) -> (i32, i32) {
    %c0_i32 = arith.constant 0 : i32
    %c0_i32_0 = arith.constant 0 : i32
    %c0_i32_1 = arith.constant 0 : i32
    return %c0_i32, %c0_i32_0 : i32, i32
  }
  func.func @transform_4(%arg0: i32) -> (i32, i32) {
    %c0_i32 = arith.constant 0 : i32
    %c0_i32_0 = arith.constant 0 : i32
    %c0_i32_1 = arith.constant 0 : i32
    return %c0_i32, %c0_i32_0 : i32, i32
  }
  func.func @transform_5(%arg0: i32) -> (i32, i32, i32) {
    %c0_i32 = arith.constant 0 : i32
    %c0_i32_0 = arith.constant 0 : i32
    %c0_i32_1 = arith.constant 0 : i32
    return %arg0, %c0_i32, %c0_i32_0 : i32, i32, i32
  }
}

module attributes {stable_mosaic.version = 11 : i64} {
  func.func @_ffn_ln_kernel(%arg0: i32, %arg1: memref<1x8x32xf32, #tpu.memory_space<vmem>>, %arg2: memref<32x64xf32, #tpu.memory_space<vmem>>, %arg3: memref<1x64xf32, #tpu.memory_space<vmem>>, %arg4: memref<64x32xf32, #tpu.memory_space<vmem>>, %arg5: memref<1x32xf32, #tpu.memory_space<vmem>>, %arg6: memref<1x32xf32, #tpu.memory_space<vmem>>, %arg7: memref<1x32xf32, #tpu.memory_space<vmem>>, %arg8: memref<1x8x32xf32, #tpu.memory_space<vmem>>) attributes {dimension_semantics = [#tpu.dimension_semantics<parallel>], iteration_bounds = array<i64: 2>, scalar_prefetch = 0 : i64, scratch_operands = 0 : i64, tpu.core_type = #tpu.core_type<tc>, window_params = [{transform_indices = @transform_0, window_bounds = array<i64: 1, 8, 32>}, {pipeline_mode = #tpu.pipeline_mode<synchronous>, transform_indices = @transform_1, window_bounds = array<i64: 32, 64>}, {pipeline_mode = #tpu.pipeline_mode<synchronous>, transform_indices = @transform_2, window_bounds = array<i64: 1, 64>}, {pipeline_mode = #tpu.pipeline_mode<synchronous>, transform_indices = @transform_3, window_bounds = array<i64: 64, 32>}, {pipeline_mode = #tpu.pipeline_mode<synchronous>, transform_indices = @transform_4, window_bounds = array<i64: 1, 32>}, {pipeline_mode = #tpu.pipeline_mode<synchronous>, transform_indices = @transform_5, window_bounds = array<i64: 1, 32>}, {pipeline_mode = #tpu.pipeline_mode<synchronous>, transform_indices = @transform_6, window_bounds = array<i64: 1, 32>}, {transform_indices = @transform_7, window_bounds = array<i64: 1, 8, 32>}]} {
    %c0 = arith.constant 0 : index
    %c0_0 = arith.constant 0 : index
    %c0_1 = arith.constant 0 : index
    %0 = vector.load %arg1[%c0, %c0_0, %c0_1] : memref<1x8x32xf32, #tpu.memory_space<vmem>>, vector<1x8x32xf32>
    %1 = vector.shape_cast %0 : vector<1x8x32xf32> to vector<8x32xf32>
    %c0_2 = arith.constant 0 : index
    %c0_3 = arith.constant 0 : index
    %2 = vector.load %arg2[%c0_2, %c0_3] : memref<32x64xf32, #tpu.memory_space<vmem>>, vector<32x64xf32>
    %cst = arith.constant dense<0.000000e+00> : vector<8x64xf32>
    %3 = tpu.matmul %1, %2, %cst {dimension_numbers = #tpu.dot_dimension_numbers<[1], [0], [0], [1], [0, 0, 1, 1], [], []>} : vector<8x32xf32>, vector<32x64xf32>, vector<8x64xf32> -> vector<8x64xf32>
    %c0_4 = arith.constant 0 : index
    %c0_5 = arith.constant 0 : index
    %4 = vector.load %arg3[%c0_4, %c0_5] : memref<1x64xf32, #tpu.memory_space<vmem>>, vector<1x64xf32>
    %5 = vector.broadcast %4 : vector<1x64xf32> to vector<8x64xf32>
    %6 = arith.addf %3, %5 : vector<8x64xf32>
    %cst_6 = arith.constant 0.000000e+00 : f32
    %7 = vector.broadcast %cst_6 : f32 to vector<8x64xf32>
    %8 = arith.maximumf %6, %7 : vector<8x64xf32>
    %c0_7 = arith.constant 0 : index
    %c0_8 = arith.constant 0 : index
    %9 = vector.load %arg4[%c0_7, %c0_8] : memref<64x32xf32, #tpu.memory_space<vmem>>, vector<64x32xf32>
    %cst_9 = arith.constant dense<0.000000e+00> : vector<8x32xf32>
    %10 = tpu.matmul %8, %9, %cst_9 {dimension_numbers = #tpu.dot_dimension_numbers<[1], [0], [0], [1], [0, 0, 1, 1], [], []>} : vector<8x64xf32>, vector<64x32xf32>, vector<8x32xf32> -> vector<8x32xf32>
    %c0_10 = arith.constant 0 : index
    %c0_11 = arith.constant 0 : index
    %11 = vector.load %arg5[%c0_10, %c0_11] : memref<1x32xf32, #tpu.memory_space<vmem>>, vector<1x32xf32>
    %12 = vector.broadcast %11 : vector<1x32xf32> to vector<8x32xf32>
    %13 = arith.addf %10, %12 : vector<8x32xf32>
    %14 = arith.addf %1, %13 : vector<8x32xf32>
    %c0_12 = arith.constant 0 : index
    %c0_13 = arith.constant 0 : index
    %15 = vector.load %arg6[%c0_12, %c0_13] : memref<1x32xf32, #tpu.memory_space<vmem>>, vector<1x32xf32>
    %c0_14 = arith.constant 0 : index
    %c0_15 = arith.constant 0 : index
    %16 = vector.load %arg7[%c0_14, %c0_15] : memref<1x32xf32, #tpu.memory_space<vmem>>, vector<1x32xf32>
    %cst_16 = arith.constant dense<0.000000e+00> : vector<8xf32>
    %17 = vector.multi_reduction <add>, %14, %cst_16 [1] : vector<8x32xf32> to vector<8xf32>
    %18 = vector.shape_cast %17 : vector<8xf32> to vector<8x1xf32>
    %cst_17 = arith.constant 3.200000e+01 : f32
    %19 = vector.broadcast %cst_17 : f32 to vector<8x1xf32>
    %20 = arith.divf %18, %19 : vector<8x1xf32>
    %21 = vector.broadcast %20 : vector<8x1xf32> to vector<8x32xf32>
    %22 = arith.subf %14, %21 : vector<8x32xf32>
    %23 = vector.broadcast %20 : vector<8x1xf32> to vector<8x32xf32>
    %24 = arith.subf %14, %23 : vector<8x32xf32>
    %25 = arith.mulf %22, %24 : vector<8x32xf32>
    %cst_18 = arith.constant dense<0.000000e+00> : vector<8xf32>
    %26 = vector.multi_reduction <add>, %25, %cst_18 [1] : vector<8x32xf32> to vector<8xf32>
    %27 = vector.shape_cast %26 : vector<8xf32> to vector<8x1xf32>
    %cst_19 = arith.constant 3.200000e+01 : f32
    %28 = vector.broadcast %cst_19 : f32 to vector<8x1xf32>
    %29 = arith.divf %27, %28 : vector<8x1xf32>
    %30 = vector.broadcast %20 : vector<8x1xf32> to vector<8x32xf32>
    %31 = arith.subf %14, %30 : vector<8x32xf32>
    %cst_20 = arith.constant 9.99999974E-6 : f32
    %32 = vector.broadcast %cst_20 : f32 to vector<8x1xf32>
    %33 = arith.addf %29, %32 : vector<8x1xf32>
    %34 = math.rsqrt %33 : vector<8x1xf32>
    %35 = vector.broadcast %34 : vector<8x1xf32> to vector<8x32xf32>
    %36 = arith.mulf %31, %35 : vector<8x32xf32>
    %37 = vector.broadcast %15 : vector<1x32xf32> to vector<8x32xf32>
    %38 = arith.mulf %36, %37 : vector<8x32xf32>
    %39 = vector.broadcast %16 : vector<1x32xf32> to vector<8x32xf32>
    %40 = arith.addf %38, %39 : vector<8x32xf32>
    %c0_21 = arith.constant 0 : index
    %c0_22 = arith.constant 0 : index
    %c0_23 = arith.constant 0 : index
    %41 = vector.load %arg8[%c0_21, %c0_22, %c0_23] : memref<1x8x32xf32, #tpu.memory_space<vmem>>, vector<1x8x32xf32>
    %42 = vector.shape_cast %41 : vector<1x8x32xf32> to vector<8x32xf32>
    %43 = vector.shape_cast %40 : vector<8x32xf32> to vector<1x8x32xf32>
    tpu.vector_store %arg8[%c0_21, %c0_22, %c0_23], %43 {strides = array<i32>} : memref<1x8x32xf32, #tpu.memory_space<vmem>>, vector<1x8x32xf32>,
    return
  }
  func.func @transform_0(%arg0: i32) -> (i32, i32, i32) {
    %c0_i32 = arith.constant 0 : i32
    %c0_i32_0 = arith.constant 0 : i32
    %c0_i32_1 = arith.constant 0 : i32
    return %arg0, %c0_i32, %c0_i32_0 : i32, i32, i32
  }
  func.func @transform_1(%arg0: i32) -> (i32, i32) {
    %c0_i32 = arith.constant 0 : i32
    %c0_i32_0 = arith.constant 0 : i32
    %c0_i32_1 = arith.constant 0 : i32
    return %c0_i32, %c0_i32_0 : i32, i32
  }
  func.func @transform_2(%arg0: i32) -> (i32, i32) {
    %c0_i32 = arith.constant 0 : i32
    %c0_i32_0 = arith.constant 0 : i32
    %c0_i32_1 = arith.constant 0 : i32
    return %c0_i32, %c0_i32_0 : i32, i32
  }
  func.func @transform_3(%arg0: i32) -> (i32, i32) {
    %c0_i32 = arith.constant 0 : i32
    %c0_i32_0 = arith.constant 0 : i32
    %c0_i32_1 = arith.constant 0 : i32
    return %c0_i32, %c0_i32_0 : i32, i32
  }
  func.func @transform_4(%arg0: i32) -> (i32, i32) {
    %c0_i32 = arith.constant 0 : i32
    %c0_i32_0 = arith.constant 0 : i32
    %c0_i32_1 = arith.constant 0 : i32
    return %c0_i32, %c0_i32_0 : i32, i32
  }
  func.func @transform_5(%arg0: i32) -> (i32, i32) {
    %c0_i32 = arith.constant 0 : i32
    %c0_i32_0 = arith.constant 0 : i32
    %c0_i32_1 = arith.constant 0 : i32
    return %c0_i32, %c0_i32_0 : i32, i32
  }
  func.func @transform_6(%arg0: i32) -> (i32, i32) {
    %c0_i32 = arith.constant 0 : i32
    %c0_i32_0 = arith.constant 0 : i32
    %c0_i32_1 = arith.constant 0 : i32
    return %c0_i32, %c0_i32_0 : i32, i32
  }
  func.func @transform_7(%arg0: i32) -> (i32, i32, i32) {
    %c0_i32 = arith.constant 0 : i32
    %c0_i32_0 = arith.constant 0 : i32
    %c0_i32_1 = arith.constant 0 : i32
    return %arg0, %c0_i32, %c0_i32_0 : i32, i32, i32
  }
}

</mosaic_0001>

<llo_original>
// kernel: seq2seq_transformer_forward.14
$region0: #{seq2seq_transformer_forward.14}
  #allocation0 [shape = 'u32[]', space=smem, size = 0x4, offset = 0x4, fixed_abs, tag = 'smem constant byte address 0x4 - core index']
  #allocation1 [shape = 'u32[144,128]{1,0:T(1,128)}', space=vmem, size = 0x12000, scoped, tag = 'internal scratch']
  %s0 = inlined_call_operand.vmem [shape: f32[2,16,32], index: 0, kind: input, shape index: {}]
  %s1 = inlined_call_operand.vmem [shape: f32[1,16,32], index: 1, kind: input, shape index: {}]
  %s2 = inlined_call_operand.vmem [shape: f32[2,16,32], index: 2, kind: output, shape index: {}]
  %s3 = sld [smem:[#allocation0]]
  $region41: #{seq2seq_transformer_forward.14} parent=0
    _
  %s5 = ssub.s32 1, %s3
  %s6 = scalar_select 0, %s5, %s3
  loop: start=0, step=1, limit=4
  $region2: #{seq2seq_transformer_forward.14} parent=0 // loop_pre_header
    _
  $region3: #{seq2seq_transformer_forward.14} parent=0 // loop_header
    %s8 = sphi 0, %s12
    %p9 = scmp.ge.s32.totalorder %s8, 4
    %s18 = sphi 0, %s20
    %s21 = sphi 0, %s18
    %s22 = sphi 0, %s21
    %s38 = sphi 0, %s22
    %s42 = sphi 0, %s42
    %s44 = sphi 0, %s42
    %s45 = sphi 0, %s44
    %s59 = sphi 0, %s45
    %s65 = sphi 0, %s67
    %s68 = sphi 0, %s65
    %s69 = sphi 0, %s68
    %s85 = sphi 0, %s69
  $region4: #{seq2seq_transformer_forward.14} parent=0 // loop_header_branch
    %11 = sbr.rel (%p9) target = $region8
  $region5: #{seq2seq_transformer_forward.14} parent=0 // loop_body
    %s13 = ssub.s32 %s8, 1
    %s14 = ssub.s32 %s8, 2
    %s15 = sadd.s32 %s8, 1
    %s16 = ssub.s32 %s8, %s15
    %p17 = scmp.eq.s32.totalorder %s16, 0
    %s19 = sadd.s32 %s18, 1
    %s20 = scalar_select %p17, %s18, %s19
    %p23 = pneg %p17
    %p24 = scmp.eq.s32.totalorder %s8, 1
    %p25 = por %p23, %p24
    %p26 = scmp.ne.s32.totalorder %s18, %s21
    %p27 = scmp.eq.s32.totalorder %s8, 0
    %p28 = por %p26, %p27
    %p29 = scmp.ne.s32.totalorder %s18, %s21
    %p30 = scmp.eq.s32.totalorder %s13, 1
    %p31 = por %p29, %p30
    %p32 = scmp.ne.s32.totalorder %s21, %s22
    %p33 = scmp.eq.s32.totalorder %s13, 0
    %p34 = por %p32, %p33
    %p35 = scmp.ne.s32.totalorder %s21, %s22
    %p36 = scmp.eq.s32.totalorder %s14, 1
    %p37 = por %p35, %p36
    %p39 = scmp.ne.s32.totalorder %s22, %s38
    %p40 = scmp.eq.s32.totalorder %s14, 0
    %p41 = por %p39, %p40
    %s43 = sadd.s32 %s42, 1
    %p46 = scmp.eq.s32.totalorder %s8, 1
    %p47 = scmp.ne.s32.totalorder %s42, %s44
    %p48 = scmp.eq.s32.totalorder %s8, 0
    %p49 = por %p47, %p48
    %p50 = scmp.ne.s32.totalorder %s42, %s44
    %p51 = scmp.eq.s32.totalorder %s13, 1
    %p52 = por %p50, %p51
    %p53 = scmp.ne.s32.totalorder %s44, %s45
    %p54 = scmp.eq.s32.totalorder %s13, 0
    %p55 = por %p53, %p54
    %p56 = scmp.ne.s32.totalorder %s44, %s45
    %p57 = scmp.eq.s32.totalorder %s14, 1
    %p58 = por %p56, %p57
    %p60 = scmp.ne.s32.totalorder %s45, %s59
    %p61 = scmp.eq.s32.totalorder %s14, 0
    %p62 = por %p60, %p61
    %s63 = ssub.s32 %s8, %s15
    %p64 = scmp.eq.s32.totalorder %s63, 0
    %s66 = sadd.s32 %s65, 1
    %s67 = scalar_select %p64, %s65, %s66
    %p70 = pneg %p64
    %p71 = scmp.eq.s32.totalorder %s8, 1
    %p72 = por %p70, %p71
    %p73 = scmp.ne.s32.totalorder %s65, %s68
    %p74 = scmp.eq.s32.totalorder %s8, 0
    %p75 = por %p73, %p74
    %p76 = scmp.ne.s32.totalorder %s65, %s68
    %p77 = scmp.eq.s32.totalorder %s13, 1
    %p78 = por %p76, %p77
    %p79 = scmp.ne.s32.totalorder %s68, %s69
    %p80 = scmp.eq.s32.totalorder %s13, 0
    %p81 = por %p79, %p80
    %p82 = scmp.ne.s32.totalorder %s68, %s69
    %p83 = scmp.eq.s32.totalorder %s14, 1
    %p84 = por %p82, %p83
    %p86 = scmp.ne.s32.totalorder %s69, %s85
    %p87 = scmp.eq.s32.totalorder %s14, 0
    %p88 = por %p86, %p87
    %p89 = scmp.le.s32.totalorder 1, %s8
    %p90 = scmp.lt.s32.totalorder %s8, 3
    %p91 = pnand %p89, %p90
    %p92 = pneg %p91
    // Predicated region
    $region9: #{seq2seq_transformer_forward.14} parent=5 // pred_check
      _
    $region10: #{seq2seq_transformer_forward.14} parent=5 // pred_check_branch
      %94 = sbr.rel (%p91) target = $region12
    $region11: #{seq2seq_transformer_forward.14} parent=5 // pred_region
      %s95 = ssub.s32 %s8, 1
      // Predicated region
      $region13: #{seq2seq_transformer_forward.14} parent=11 // pred_check
        %p96 = pneg %p55
      $region14: #{seq2seq_transformer_forward.14} parent=11 // pred_check_branch
        %98 = sbr.rel (%p96) target = $region16
      $region15: #{seq2seq_transformer_forward.14} parent=11 // pred_region
        _
      $region16: #{seq2seq_transformer_forward.14} parent=11 // pred_fallthru
        _
    $region12: #{seq2seq_transformer_forward.14} parent=5 // pred_fallthru
      _
    %p99 = scmp.lt.s32.totalorder %s8, 2
    // Predicated region
    $region17: #{seq2seq_transformer_forward.14} parent=5 // pred_check
      %p100 = pneg %p99
    $region18: #{seq2seq_transformer_forward.14} parent=5 // pred_check_branch
      %102 = sbr.rel (%p100) target = $region20
    $region19: #{seq2seq_transformer_forward.14} parent=5 // pred_region
      // Predicated region
      $region21: #{seq2seq_transformer_forward.14} parent=19 // pred_check
        %p103 = pneg %p28
      $region22: #{seq2seq_transformer_forward.14} parent=19 // pred_check_branch
        %105 = sbr.rel (%p103) target = $region24
      $region23: #{seq2seq_transformer_forward.14} parent=19 // pred_region
        %p106 = scmp.lt.s32.totalorder %s8, 1
        %s107 = scalar_select %p106, %s8, 1
        %s108 = smul.addr %s107, 2
        %s109 = smul.addr %s108, 8
        %s110 = scalar_lea.vmem %s0, %s109
      $region24: #{seq2seq_transformer_forward.14} parent=19 // pred_fallthru
        _
    $region20: #{seq2seq_transformer_forward.14} parent=5 // pred_fallthru
      _
    %p111 = scmp.le.s32.totalorder 1, %s8
    %p112 = scmp.lt.s32.totalorder %s8, 3
    %p113 = pnand %p111, %p112
    %p114 = pneg %p113
    // Predicated region
    $region25: #{seq2seq_transformer_forward.14} parent=5 // pred_check
      _
    $region26: #{seq2seq_transformer_forward.14} parent=5 // pred_check_branch
      %116 = sbr.rel (%p113) target = $region28
    $region27: #{seq2seq_transformer_forward.14} parent=5 // pred_region
      %s117 = ssub.s32 %s8, 1
      %p118 = scmp.lt.s32.totalorder %s13, 1
      %s119 = scalar_select %p118, %s13, 1
      %s120 = smul.addr %s119, 2
      %s121 = smul.addr %s120, 8
      %s122 = scalar_lea.vmem %s0, %s121
      %p123 = pneg %p34
      %p124 = pneg %p31
      %p125 = pneg %p55
      %p126 = pneg %p52
      %p127 = pneg %p81
      %p128 = pneg %p78
      %p129 = scmp.lt.s32.totalorder %s13, 1
      %s130 = scalar_select %p129, %s13, 1
      %s131 = smul.addr %s130, 2
      %s132 = smul.addr %s131, 8
      %s133 = scalar_lea.vmem %s2, %s132
      %p134 = scmp.lt.s32.totalorder %s13, 1
      %s135 = scalar_select %p134, %s13, 1
      %s136 = smul.addr %s135, 2
      %s137 = smul.addr %s136, 8
      %s138 = scalar_lea.vmem %s0, %s137
      %p139 = scmp.lt.s32.totalorder %s13, 1
      %s140 = scalar_select %p139, %s13, 1
      %s141 = smul.addr %s140, 2
      %s142 = smul.addr %s141, 8
      %s143 = scalar_lea.vmem %s2, %s142
      %v144 = vld [vmem:[%s138] sm:$0xff]
      %v145 = vld [vmem:[%s138 + $0x8] sm:$0xff]
      %v146 = vmul.f32 %v144, 5.656854
      %v147 = vmul.f32 %v145, 5.656854
      %v148 = vld [vmem:[%s1] sm:$0xff]
      %v149 = vld [vmem:[%s1 + $0x8] sm:$0xff]
      %v150 = vadd.f32 %v146, %v148
      %v151 = vadd.f32 %v147, %v149
      %vm152 = vcmask 261120
      %153 = vst.msk [vmem:[%s143] sm:$0xff] %vm152, %v150
      %154 = vst.msk [vmem:[%s143 + $0x8] sm:$0xff] %vm152, %v151
      %p155 = scmp.lt.s32.totalorder %s13, 1
      %s156 = scalar_select %p155, %s13, 1
      %s157 = smul.addr %s156, 2
      %s158 = smul.addr %s157, 8
      %s159 = scalar_lea.vmem %s2, %s158
      // Predicated region
      $region29: #{seq2seq_transformer_forward.14} parent=27 // pred_check
        %p160 = pneg %p78
      $region30: #{seq2seq_transformer_forward.14} parent=27 // pred_check_branch
        %162 = sbr.rel (%p160) target = $region32
      $region31: #{seq2seq_transformer_forward.14} parent=27 // pred_region
        _
      $region32: #{seq2seq_transformer_forward.14} parent=27 // pred_fallthru
        _
    $region28: #{seq2seq_transformer_forward.14} parent=5 // pred_fallthru
      _
    %p163 = scmp.le.s32.totalorder 2, %s8
    // Predicated region
    $region33: #{seq2seq_transformer_forward.14} parent=5 // pred_check
      %p164 = pneg %p163
    $region34: #{seq2seq_transformer_forward.14} parent=5 // pred_check_branch
      %166 = sbr.rel (%p164) target = $region36
    $region35: #{seq2seq_transformer_forward.14} parent=5 // pred_region
      %s167 = ssub.s32 %s8, 2
      // Predicated region
      $region37: #{seq2seq_transformer_forward.14} parent=35 // pred_check
        %p168 = pneg %p84
      $region38: #{seq2seq_transformer_forward.14} parent=35 // pred_check_branch
        %170 = sbr.rel (%p168) target = $region40
      $region39: #{seq2seq_transformer_forward.14} parent=35 // pred_region
        %p171 = scmp.lt.s32.totalorder %s14, 1
        %s172 = scalar_select %p171, %s14, 1
        %s173 = smul.addr %s172, 2
        %s174 = smul.addr %s173, 8
        %s175 = scalar_lea.vmem %s2, %s174
      $region40: #{seq2seq_transformer_forward.14} parent=35 // pred_fallthru
        _
    $region36: #{seq2seq_transformer_forward.14} parent=5 // pred_fallthru
      _
  $region6: #{seq2seq_transformer_forward.14} parent=0 // loop_footer
    %s12 = sadd.s32 1, %s8
  $region7: #{seq2seq_transformer_forward.14} parent=0 // loop_footer_branch
    %7 = sbr.rel target = $region3
  $region8: #{seq2seq_transformer_forward.14} parent=0 // loop_exit
    _

// kernel: seq2seq_transformer_forward.20
$region0: #{seq2seq_transformer_forward.20}
  #allocation0 [shape = 'u32[]', space=smem, size = 0x4, offset = 0x4, fixed_abs, tag = 'smem constant byte address 0x4 - core index']
  #allocation1 [shape = 'u32[144,128]{1,0:T(1,128)}', space=vmem, size = 0x12000, scoped, tag = 'internal scratch']
  %s0 = inlined_call_operand.vmem [shape: f32[2,16,32], index: 0, kind: input, shape index: {}]
  %s1 = inlined_call_operand.vmem [shape: f32[1,32], index: 1, kind: input, shape index: {}]
  %s2 = inlined_call_operand.vmem [shape: f32[1,32], index: 2, kind: input, shape index: {}]
  %s3 = inlined_call_operand.vmem [shape: f32[2,16,32], index: 3, kind: output, shape index: {}]
  %s4 = sld [smem:[#allocation0]]
  $region45: #{seq2seq_transformer_forward.20} parent=0
    _
  %s6 = ssub.s32 1, %s4
  %s7 = scalar_select 0, %s6, %s4
  loop: start=0, step=1, limit=4
  $region2: #{seq2seq_transformer_forward.20} parent=0 // loop_pre_header
    _
  $region3: #{seq2seq_transformer_forward.20} parent=0 // loop_header
    %s9 = sphi 0, %s13
    %p10 = scmp.ge.s32.totalorder %s9, 4
    %s19 = sphi 0, %s21
    %s22 = sphi 0, %s19
    %s23 = sphi 0, %s22
    %s39 = sphi 0, %s23
    %s43 = sphi 0, %s43
    %s45 = sphi 0, %s43
    %s46 = sphi 0, %s45
    %s60 = sphi 0, %s46
    %s64 = sphi 0, %s64
    %s66 = sphi 0, %s64
    %s67 = sphi 0, %s66
    %s81 = sphi 0, %s67
    %s87 = sphi 0, %s89
    %s90 = sphi 0, %s87
    %s91 = sphi 0, %s90
    %s107 = sphi 0, %s91
  $region4: #{seq2seq_transformer_forward.20} parent=0 // loop_header_branch
    %12 = sbr.rel (%p10) target = $region8
  $region5: #{seq2seq_transformer_forward.20} parent=0 // loop_body
    %s14 = ssub.s32 %s9, 1
    %s15 = ssub.s32 %s9, 2
    %s16 = sadd.s32 %s9, 1
    %s17 = ssub.s32 %s9, %s16
    %p18 = scmp.eq.s32.totalorder %s17, 0
    %s20 = sadd.s32 %s19, 1
    %s21 = scalar_select %p18, %s19, %s20
    %p24 = pneg %p18
    %p25 = scmp.eq.s32.totalorder %s9, 1
    %p26 = por %p24, %p25
    %p27 = scmp.ne.s32.totalorder %s19, %s22
    %p28 = scmp.eq.s32.totalorder %s9, 0
    %p29 = por %p27, %p28
    %p30 = scmp.ne.s32.totalorder %s19, %s22
    %p31 = scmp.eq.s32.totalorder %s14, 1
    %p32 = por %p30, %p31
    %p33 = scmp.ne.s32.totalorder %s22, %s23
    %p34 = scmp.eq.s32.totalorder %s14, 0
    %p35 = por %p33, %p34
    %p36 = scmp.ne.s32.totalorder %s22, %s23
    %p37 = scmp.eq.s32.totalorder %s15, 1
    %p38 = por %p36, %p37
    %p40 = scmp.ne.s32.totalorder %s23, %s39
    %p41 = scmp.eq.s32.totalorder %s15, 0
    %p42 = por %p40, %p41
    %s44 = sadd.s32 %s43, 1
    %p47 = scmp.eq.s32.totalorder %s9, 1
    %p48 = scmp.ne.s32.totalorder %s43, %s45
    %p49 = scmp.eq.s32.totalorder %s9, 0
    %p50 = por %p48, %p49
    %p51 = scmp.ne.s32.totalorder %s43, %s45
    %p52 = scmp.eq.s32.totalorder %s14, 1
    %p53 = por %p51, %p52
    %p54 = scmp.ne.s32.totalorder %s45, %s46
    %p55 = scmp.eq.s32.totalorder %s14, 0
    %p56 = por %p54, %p55
    %p57 = scmp.ne.s32.totalorder %s45, %s46
    %p58 = scmp.eq.s32.totalorder %s15, 1
    %p59 = por %p57, %p58
    %p61 = scmp.ne.s32.totalorder %s46, %s60
    %p62 = scmp.eq.s32.totalorder %s15, 0
    %p63 = por %p61, %p62
    %s65 = sadd.s32 %s64, 1
    %p68 = scmp.eq.s32.totalorder %s9, 1
    %p69 = scmp.ne.s32.totalorder %s64, %s66
    %p70 = scmp.eq.s32.totalorder %s9, 0
    %p71 = por %p69, %p70
    %p72 = scmp.ne.s32.totalorder %s64, %s66
    %p73 = scmp.eq.s32.totalorder %s14, 1
    %p74 = por %p72, %p73
    %p75 = scmp.ne.s32.totalorder %s66, %s67
    %p76 = scmp.eq.s32.totalorder %s14, 0
    %p77 = por %p75, %p76
    %p78 = scmp.ne.s32.totalorder %s66, %s67
    %p79 = scmp.eq.s32.totalorder %s15, 1
    %p80 = por %p78, %p79
    %p82 = scmp.ne.s32.totalorder %s67, %s81
    %p83 = scmp.eq.s32.totalorder %s15, 0
    %p84 = por %p82, %p83
    %s85 = ssub.s32 %s9, %s16
    %p86 = scmp.eq.s32.totalorder %s85, 0
    %s88 = sadd.s32 %s87, 1
    %s89 = scalar_select %p86, %s87, %s88
    %p92 = pneg %p86
    %p93 = scmp.eq.s32.totalorder %s9, 1
    %p94 = por %p92, %p93
    %p95 = scmp.ne.s32.totalorder %s87, %s90
    %p96 = scmp.eq.s32.totalorder %s9, 0
    %p97 = por %p95, %p96
    %p98 = scmp.ne.s32.totalorder %s87, %s90
    %p99 = scmp.eq.s32.totalorder %s14, 1
    %p100 = por %p98, %p99
    %p101 = scmp.ne.s32.totalorder %s90, %s91
    %p102 = scmp.eq.s32.totalorder %s14, 0
    %p103 = por %p101, %p102
    %p104 = scmp.ne.s32.totalorder %s90, %s91
    %p105 = scmp.eq.s32.totalorder %s15, 1
    %p106 = por %p104, %p105
    %p108 = scmp.ne.s32.totalorder %s91, %s107
    %p109 = scmp.eq.s32.totalorder %s15, 0
    %p110 = por %p108, %p109
    %p111 = scmp.le.s32.totalorder 1, %s9
    %p112 = scmp.lt.s32.totalorder %s9, 3
    %p113 = pnand %p111, %p112
    %p114 = pneg %p113
    // Predicated region
    $region9: #{seq2seq_transformer_forward.20} parent=5 // pred_check
      _
    $region10: #{seq2seq_transformer_forward.20} parent=5 // pred_check_branch
      %116 = sbr.rel (%p113) target = $region12
    $region11: #{seq2seq_transformer_forward.20} parent=5 // pred_region
      %s117 = ssub.s32 %s9, 1
      // Predicated region
      $region13: #{seq2seq_transformer_forward.20} parent=11 // pred_check
        %p118 = pneg %p56
      $region14: #{seq2seq_transformer_forward.20} parent=11 // pred_check_branch
        %120 = sbr.rel (%p118) target = $region16
      $region15: #{seq2seq_transformer_forward.20} parent=11 // pred_region
        _
      $region16: #{seq2seq_transformer_forward.20} parent=11 // pred_fallthru
        _
      // Predicated region
      $region17: #{seq2seq_transformer_forward.20} parent=11 // pred_check
        %p121 = pneg %p77
      $region18: #{seq2seq_transformer_forward.20} parent=11 // pred_check_branch
        %123 = sbr.rel (%p121) target = $region20
      $region19: #{seq2seq_transformer_forward.20} parent=11 // pred_region
        _
      $region20: #{seq2seq_transformer_forward.20} parent=11 // pred_fallthru
        _
    $region12: #{seq2seq_transformer_forward.20} parent=5 // pred_fallthru
      _
    %p124 = scmp.lt.s32.totalorder %s9, 2
    // Predicated region
    $region21: #{seq2seq_transformer_forward.20} parent=5 // pred_check
      %p125 = pneg %p124
    $region22: #{seq2seq_transformer_forward.20} parent=5 // pred_check_branch
      %127 = sbr.rel (%p125) target = $region24
    $region23: #{seq2seq_transformer_forward.20} parent=5 // pred_region
      // Predicated region
      $region25: #{seq2seq_transformer_forward.20} parent=23 // pred_check
        %p128 = pneg %p29
      $region26: #{seq2seq_transformer_forward.20} parent=23 // pred_check_branch
        %130 = sbr.rel (%p128) target = $region28
      $region27: #{seq2seq_transformer_forward.20} parent=23 // pred_region
        %p131 = scmp.lt.s32.totalorder %s9, 1
        %s132 = scalar_select %p131, %s9, 1
        %s133 = smul.addr %s132, 2
        %s134 = smul.addr %s133, 8
        %s135 = scalar_lea.vmem %s0, %s134
      $region28: #{seq2seq_transformer_forward.20} parent=23 // pred_fallthru
        _
    $region24: #{seq2seq_transformer_forward.20} parent=5 // pred_fallthru
      _
    %p136 = scmp.le.s32.totalorder 1, %s9
    %p137 = scmp.lt.s32.totalorder %s9, 3
    %p138 = pnand %p136, %p137
    %p139 = pneg %p138
    // Predicated region
    $region29: #{seq2seq_transformer_forward.20} parent=5 // pred_check
      _
    $region30: #{seq2seq_transformer_forward.20} parent=5 // pred_check_branch
      %141 = sbr.rel (%p138) target = $region32
    $region31: #{seq2seq_transformer_forward.20} parent=5 // pred_region
      %s142 = ssub.s32 %s9, 1
      %p143 = scmp.lt.s32.totalorder %s14, 1
      %s144 = scalar_select %p143, %s14, 1
      %s145 = smul.addr %s144, 2
      %s146 = smul.addr %s145, 8
      %s147 = scalar_lea.vmem %s0, %s146
      %p148 = pneg %p35
      %p149 = pneg %p32
      %p150 = pneg %p56
      %p151 = pneg %p53
      %p152 = pneg %p77
      %p153 = pneg %p74
      %p154 = pneg %p103
      %p155 = pneg %p100
      %p156 = scmp.lt.s32.totalorder %s14, 1
      %s157 = scalar_select %p156, %s14, 1
      %s158 = smul.addr %s157, 2
      %s159 = smul.addr %s158, 8
      %s160 = scalar_lea.vmem %s3, %s159
      %p161 = scmp.lt.s32.totalorder %s14, 1
      %s162 = scalar_select %p161, %s14, 1
      %s163 = smul.addr %s162, 2
      %s164 = smul.addr %s163, 8
      %s165 = scalar_lea.vmem %s0, %s164
      %p166 = scmp.lt.s32.totalorder %s14, 1
      %s167 = scalar_select %p166, %s14, 1
      %s168 = smul.addr %s167, 2
      %s169 = smul.addr %s168, 8
      %s170 = scalar_lea.vmem %s3, %s169
      %v171 = vld [vmem:[%s165] sm:$0xff]
      %v172 = vld [vmem:[%s165 + $0x8] sm:$0xff]
      %v173 = vld [vmem:[%s1] sm:$0x1]
      %v174 = vld [vmem:[%s2] sm:$0x1]
      %vm175 = vcmask 261120
      %v176 = vsel %vm175, %v171, 0.0
      %177 = vadd.xlane.f32.xlu0 %v176
      %v178 = vpop.xlane.xlu0 %177
      %v179 = vsel %vm175, %v172, 0.0
      %180 = vadd.xlane.f32.xlu0 %v179
      %v181 = vpop.xlane.xlu0 %180
      %v182 = vrcp.pop 32.0
      %v183 = vmul.f32 %v178, %v182
      %v184 = vmul.f32 %v181, %v182
      %v185 = vsub.f32 %v171, %v183
      %v186 = vsub.f32 %v172, %v184
      %v187 = vmul.f32 %v185, %v185
      %v188 = vmul.f32 %v186, %v186
      %v189 = vsel %vm175, %v187, 0.0
      %190 = vadd.xlane.f32.xlu0 %v189
      %v191 = vpop.xlane.xlu0 %190
      %v192 = vsel %vm175, %v188, 0.0
      %193 = vadd.xlane.f32.xlu0 %v192
      %v194 = vpop.xlane.xlu0 %193
      %v195 = vmul.f32 %v191, %v182
      %v196 = vmul.f32 %v194, %v182
      %v197 = vadd.f32 %v195, 1e-05
      %v198 = vadd.f32 %v196, 1e-05
      %v199 = vrsqrt.pop %v197
      %v200 = vrsqrt.pop %v198
      %v201 = vmul.f32 %v185, %v199
      %v202 = vmul.f32 %v186, %v200
      %v204 = vlaneseq
      %v205 = vshrl.u32 %v204, 7
      %v206 = vsub.s32 0, %v205
      %v207 = vrot.slane %v173, %v206
      %v209 = vmul.f32 %v201, %v207
      %v210 = vmul.f32 %v202, %v207
      %v212 = vlaneseq
      %v213 = vshrl.u32 %v212, 7
      %v214 = vsub.s32 0, %v213
      %v215 = vrot.slane %v174, %v214
      %v217 = vadd.f32 %v209, %v215
      %v218 = vadd.f32 %v210, %v215
      %219 = vst.msk [vmem:[%s170] sm:$0xff] %vm175, %v217
      %220 = vst.msk [vmem:[%s170 + $0x8] sm:$0xff] %vm175, %v218
      %p221 = scmp.lt.s32.totalorder %s14, 1
      %s222 = scalar_select %p221, %s14, 1
      %s223 = smul.addr %s222, 2
      %s224 = smul.addr %s223, 8
      %s225 = scalar_lea.vmem %s3, %s224
      // Predicated region
      $region33: #{seq2seq_transformer_forward.20} parent=31 // pred_check
        %p226 = pneg %p100
      $region34: #{seq2seq_transformer_forward.20} parent=31 // pred_check_branch
        %228 = sbr.rel (%p226) target = $region36
      $region35: #{seq2seq_transformer_forward.20} parent=31 // pred_region
        _
      $region36: #{seq2seq_transformer_forward.20} parent=31 // pred_fallthru
        _
    $region32: #{seq2seq_transformer_forward.20} parent=5 // pred_fallthru
      _
    %p229 = scmp.le.s32.totalorder 2, %s9
    // Predicated region
    $region37: #{seq2seq_transformer_forward.20} parent=5 // pred_check
      %p230 = pneg %p229
    $region38: #{seq2seq_transformer_forward.20} parent=5 // pred_check_branch
      %232 = sbr.rel (%p230) target = $region40
    $region39: #{seq2seq_transformer_forward.20} parent=5 // pred_region
      %s233 = ssub.s32 %s9, 2
      // Predicated region
      $region41: #{seq2seq_transformer_forward.20} parent=39 // pred_check
        %p234 = pneg %p106
      $region42: #{seq2seq_transformer_forward.20} parent=39 // pred_check_branch
        %236 = sbr.rel (%p234) target = $region44
      $region43: #{seq2seq_transformer_forward.20} parent=39 // pred_region
        %p237 = scmp.lt.s32.totalorder %s15, 1
        %s238 = scalar_select %p237, %s15, 1
        %s239 = smul.addr %s238, 2
        %s240 = smul.addr %s239, 8
        %s241 = scalar_lea.vmem %s3, %s240
      $region44: #{seq2seq_transformer_forward.20} parent=39 // pred_fallthru
        _
    $region40: #{seq2seq_transformer_forward.20} parent=5 // pred_fallthru
      _
  $region6: #{seq2seq_transformer_forward.20} parent=0 // loop_footer
    %s13 = sadd.s32 1, %s9
  $region7: #{seq2seq_transformer_forward.20} parent=0 // loop_footer_branch
    %8 = sbr.rel target = $region3
  $region8: #{seq2seq_transformer_forward.20} parent=0 // loop_exit
    _

// kernel: seq2seq_transformer_forward.17
$region0: #{seq2seq_transformer_forward.17}
  #allocation0 [shape = 'u32[]', space=smem, size = 0x4, offset = 0x4, fixed_abs, tag = 'smem constant byte address 0x4 - core index']
  #allocation1 [shape = 'u32[144,128]{1,0:T(1,128)}', space=vmem, size = 0x12000, scoped, tag = 'internal scratch']
  %s0 = inlined_call_operand.vmem [shape: f32[2,16,32], index: 0, kind: input, shape index: {}]
  %s1 = inlined_call_operand.vmem [shape: f32[32,64], index: 1, kind: input, shape index: {}]
  %s2 = inlined_call_operand.vmem [shape: f32[1,64], index: 2, kind: input, shape index: {}]
  %s3 = inlined_call_operand.vmem [shape: f32[64,32], index: 3, kind: input, shape index: {}]
  %s4 = inlined_call_operand.vmem [shape: f32[1,32], index: 4, kind: input, shape index: {}]
  %s5 = inlined_call_operand.vmem [shape: f32[1,32], index: 5, kind: input, shape index: {}]
  %s6 = inlined_call_operand.vmem [shape: f32[1,32], index: 6, kind: input, shape index: {}]
  %s7 = inlined_call_operand.vmem [shape: f32[2,16,32], index: 7, kind: output, shape index: {}]
  %s8 = sld [smem:[#allocation0]]
  $region61: #{seq2seq_transformer_forward.17} parent=0
    _
  %s10 = ssub.s32 1, %s8
  %s11 = scalar_select 0, %s10, %s8
  loop: start=0, step=1, limit=4
  $region2: #{seq2seq_transformer_forward.17} parent=0 // loop_pre_header
    _
  $region3: #{seq2seq_transformer_forward.17} parent=0 // loop_header
    %s13 = sphi 0, %s17
    %p14 = scmp.ge.s32.totalorder %s13, 4
    %s23 = sphi 0, %s25
    %s26 = sphi 0, %s23
    %s27 = sphi 0, %s26
    %s43 = sphi 0, %s27
    %s47 = sphi 0, %s47
    %s49 = sphi 0, %s47
    %s50 = sphi 0, %s49
    %s64 = sphi 0, %s50
    %s68 = sphi 0, %s68
    %s70 = sphi 0, %s68
    %s71 = sphi 0, %s70
    %s85 = sphi 0, %s71
    %s89 = sphi 0, %s89
    %s91 = sphi 0, %s89
    %s92 = sphi 0, %s91
    %s106 = sphi 0, %s92
    %s110 = sphi 0, %s110
    %s112 = sphi 0, %s110
    %s113 = sphi 0, %s112
    %s127 = sphi 0, %s113
    %s131 = sphi 0, %s131
    %s133 = sphi 0, %s131
    %s134 = sphi 0, %s133
    %s148 = sphi 0, %s134
    %s152 = sphi 0, %s152
    %s154 = sphi 0, %s152
    %s155 = sphi 0, %s154
    %s169 = sphi 0, %s155
    %s175 = sphi 0, %s177
    %s178 = sphi 0, %s175
    %s179 = sphi 0, %s178
    %s195 = sphi 0, %s179
  $region4: #{seq2seq_transformer_forward.17} parent=0 // loop_header_branch
    %16 = sbr.rel (%p14) target = $region8
  $region5: #{seq2seq_transformer_forward.17} parent=0 // loop_body
    %s18 = ssub.s32 %s13, 1
    %s19 = ssub.s32 %s13, 2
    %s20 = sadd.s32 %s13, 1
    %s21 = ssub.s32 %s13, %s20
    %p22 = scmp.eq.s32.totalorder %s21, 0
    %s24 = sadd.s32 %s23, 1
    %s25 = scalar_select %p22, %s23, %s24
    %p28 = pneg %p22
    %p29 = scmp.eq.s32.totalorder %s13, 1
    %p30 = por %p28, %p29
    %p31 = scmp.ne.s32.totalorder %s23, %s26
    %p32 = scmp.eq.s32.totalorder %s13, 0
    %p33 = por %p31, %p32
    %p34 = scmp.ne.s32.totalorder %s23, %s26
    %p35 = scmp.eq.s32.totalorder %s18, 1
    %p36 = por %p34, %p35
    %p37 = scmp.ne.s32.totalorder %s26, %s27
    %p38 = scmp.eq.s32.totalorder %s18, 0
    %p39 = por %p37, %p38
    %p40 = scmp.ne.s32.totalorder %s26, %s27
    %p41 = scmp.eq.s32.totalorder %s19, 1
    %p42 = por %p40, %p41
    %p44 = scmp.ne.s32.totalorder %s27, %s43
    %p45 = scmp.eq.s32.totalorder %s19, 0
    %p46 = por %p44, %p45
    %s48 = sadd.s32 %s47, 1
    %p51 = scmp.eq.s32.totalorder %s13, 1
    %p52 = scmp.ne.s32.totalorder %s47, %s49
    %p53 = scmp.eq.s32.totalorder %s13, 0
    %p54 = por %p52, %p53
    %p55 = scmp.ne.s32.totalorder %s47, %s49
    %p56 = scmp.eq.s32.totalorder %s18, 1
    %p57 = por %p55, %p56
    %p58 = scmp.ne.s32.totalorder %s49, %s50
    %p59 = scmp.eq.s32.totalorder %s18, 0
    %p60 = por %p58, %p59
    %p61 = scmp.ne.s32.totalorder %s49, %s50
    %p62 = scmp.eq.s32.totalorder %s19, 1
    %p63 = por %p61, %p62
    %p65 = scmp.ne.s32.totalorder %s50, %s64
    %p66 = scmp.eq.s32.totalorder %s19, 0
    %p67 = por %p65, %p66
    %s69 = sadd.s32 %s68, 1
    %p72 = scmp.eq.s32.totalorder %s13, 1
    %p73 = scmp.ne.s32.totalorder %s68, %s70
    %p74 = scmp.eq.s32.totalorder %s13, 0
    %p75 = por %p73, %p74
    %p76 = scmp.ne.s32.totalorder %s68, %s70
    %p77 = scmp.eq.s32.totalorder %s18, 1
    %p78 = por %p76, %p77
    %p79 = scmp.ne.s32.totalorder %s70, %s71
    %p80 = scmp.eq.s32.totalorder %s18, 0
    %p81 = por %p79, %p80
    %p82 = scmp.ne.s32.totalorder %s70, %s71
    %p83 = scmp.eq.s32.totalorder %s19, 1
    %p84 = por %p82, %p83
    %p86 = scmp.ne.s32.totalorder %s71, %s85
    %p87 = scmp.eq.s32.totalorder %s19, 0
    %p88 = por %p86, %p87
    %s90 = sadd.s32 %s89, 1
    %p93 = scmp.eq.s32.totalorder %s13, 1
    %p94 = scmp.ne.s32.totalorder %s89, %s91
    %p95 = scmp.eq.s32.totalorder %s13, 0
    %p96 = por %p94, %p95
    %p97 = scmp.ne.s32.totalorder %s89, %s91
    %p98 = scmp.eq.s32.totalorder %s18, 1
    %p99 = por %p97, %p98
    %p100 = scmp.ne.s32.totalorder %s91, %s92
    %p101 = scmp.eq.s32.totalorder %s18, 0
    %p102 = por %p100, %p101
    %p103 = scmp.ne.s32.totalorder %s91, %s92
    %p104 = scmp.eq.s32.totalorder %s19, 1
    %p105 = por %p103, %p104
    %p107 = scmp.ne.s32.totalorder %s92, %s106
    %p108 = scmp.eq.s32.totalorder %s19, 0
    %p109 = por %p107, %p108
    %s111 = sadd.s32 %s110, 1
    %p114 = scmp.eq.s32.totalorder %s13, 1
    %p115 = scmp.ne.s32.totalorder %s110, %s112
    %p116 = scmp.eq.s32.totalorder %s13, 0
    %p117 = por %p115, %p116
    %p118 = scmp.ne.s32.totalorder %s110, %s112
    %p119 = scmp.eq.s32.totalorder %s18, 1
    %p120 = por %p118, %p119
    %p121 = scmp.ne.s32.totalorder %s112, %s113
    %p122 = scmp.eq.s32.totalorder %s18, 0
    %p123 = por %p121, %p122
    %p124 = scmp.ne.s32.totalorder %s112, %s113
    %p125 = scmp.eq.s32.totalorder %s19, 1
    %p126 = por %p124, %p125
    %p128 = scmp.ne.s32.totalorder %s113, %s127
    %p129 = scmp.eq.s32.totalorder %s19, 0
    %p130 = por %p128, %p129
    %s132 = sadd.s32 %s131, 1
    %p135 = scmp.eq.s32.totalorder %s13, 1
    %p136 = scmp.ne.s32.totalorder %s131, %s133
    %p137 = scmp.eq.s32.totalorder %s13, 0
    %p138 = por %p136, %p137
    %p139 = scmp.ne.s32.totalorder %s131, %s133
    %p140 = scmp.eq.s32.totalorder %s18, 1
    %p141 = por %p139, %p140
    %p142 = scmp.ne.s32.totalorder %s133, %s134
    %p143 = scmp.eq.s32.totalorder %s18, 0
    %p144 = por %p142, %p143
    %p145 = scmp.ne.s32.totalorder %s133, %s134
    %p146 = scmp.eq.s32.totalorder %s19, 1
    %p147 = por %p145, %p146
    %p149 = scmp.ne.s32.totalorder %s134, %s148
    %p150 = scmp.eq.s32.totalorder %s19, 0
    %p151 = por %p149, %p150
    %s153 = sadd.s32 %s152, 1
    %p156 = scmp.eq.s32.totalorder %s13, 1
    %p157 = scmp.ne.s32.totalorder %s152, %s154
    %p158 = scmp.eq.s32.totalorder %s13, 0
    %p159 = por %p157, %p158
    %p160 = scmp.ne.s32.totalorder %s152, %s154
    %p161 = scmp.eq.s32.totalorder %s18, 1
    %p162 = por %p160, %p161
    %p163 = scmp.ne.s32.totalorder %s154, %s155
    %p164 = scmp.eq.s32.totalorder %s18, 0
    %p165 = por %p163, %p164
    %p166 = scmp.ne.s32.totalorder %s154, %s155
    %p167 = scmp.eq.s32.totalorder %s19, 1
    %p168 = por %p166, %p167
    %p170 = scmp.ne.s32.totalorder %s155, %s169
    %p171 = scmp.eq.s32.totalorder %s19, 0
    %p172 = por %p170, %p171
    %s173 = ssub.s32 %s13, %s20
    %p174 = scmp.eq.s32.totalorder %s173, 0
    %s176 = sadd.s32 %s175, 1
    %s177 = scalar_select %p174, %s175, %s176
    %p180 = pneg %p174
    %p181 = scmp.eq.s32.totalorder %s13, 1
    %p182 = por %p180, %p181
    %p183 = scmp.ne.s32.totalorder %s175, %s178
    %p184 = scmp.eq.s32.totalorder %s13, 0
    %p185 = por %p183, %p184
    %p186 = scmp.ne.s32.totalorder %s175, %s178
    %p187 = scmp.eq.s32.totalorder %s18, 1
    %p188 = por %p186, %p187
    %p189 = scmp.ne.s32.totalorder %s178, %s179
    %p190 = scmp.eq.s32.totalorder %s18, 0
    %p191 = por %p189, %p190
    %p192 = scmp.ne.s32.totalorder %s178, %s179
    %p193 = scmp.eq.s32.totalorder %s19, 1
    %p194 = por %p192, %p193
    %p196 = scmp.ne.s32.totalorder %s179, %s195
    %p197 = scmp.eq.s32.totalorder %s19, 0
    %p198 = por %p196, %p197
    %p199 = scmp.le.s32.totalorder 1, %s13
    %p200 = scmp.lt.s32.totalorder %s13, 3
    %p201 = pnand %p199, %p200
    %p202 = pneg %p201
    // Predicated region
    $region9: #{seq2seq_transformer_forward.17} parent=5 // pred_check
      _
    $region10: #{seq2seq_transformer_forward.17} parent=5 // pred_check_branch
      %204 = sbr.rel (%p201) target = $region12
    $region11: #{seq2seq_transformer_forward.17} parent=5 // pred_region
      %s205 = ssub.s32 %s13, 1
      // Predicated region
      $region13: #{seq2seq_transformer_forward.17} parent=11 // pred_check
        %p206 = pneg %p60
      $region14: #{seq2seq_transformer_forward.17} parent=11 // pred_check_branch
        %208 = sbr.rel (%p206) target = $region16
      $region15: #{seq2seq_transformer_forward.17} parent=11 // pred_region
        _
      $region16: #{seq2seq_transformer_forward.17} parent=11 // pred_fallthru
        _
      // Predicated region
      $region17: #{seq2seq_transformer_forward.17} parent=11 // pred_check
        %p209 = pneg %p81
      $region18: #{seq2seq_transformer_forward.17} parent=11 // pred_check_branch
        %211 = sbr.rel (%p209) target = $region20
      $region19: #{seq2seq_transformer_forward.17} parent=11 // pred_region
        _
      $region20: #{seq2seq_transformer_forward.17} parent=11 // pred_fallthru
        _
      // Predicated region
      $region21: #{seq2seq_transformer_forward.17} parent=11 // pred_check
        %p212 = pneg %p102
      $region22: #{seq2seq_transformer_forward.17} parent=11 // pred_check_branch
        %214 = sbr.rel (%p212) target = $region24
      $region23: #{seq2seq_transformer_forward.17} parent=11 // pred_region
        _
      $region24: #{seq2seq_transformer_forward.17} parent=11 // pred_fallthru
        _
      // Predicated region
      $region25: #{seq2seq_transformer_forward.17} parent=11 // pred_check
        %p215 = pneg %p123
      $region26: #{seq2seq_transformer_forward.17} parent=11 // pred_check_branch
        %217 = sbr.rel (%p215) target = $region28
      $region27: #{seq2seq_transformer_forward.17} parent=11 // pred_region
        _
      $region28: #{seq2seq_transformer_forward.17} parent=11 // pred_fallthru
        _
      // Predicated region
      $region29: #{seq2seq_transformer_forward.17} parent=11 // pred_check
        %p218 = pneg %p144
      $region30: #{seq2seq_transformer_forward.17} parent=11 // pred_check_branch
        %220 = sbr.rel (%p218) target = $region32
      $region31: #{seq2seq_transformer_forward.17} parent=11 // pred_region
        _
      $region32: #{seq2seq_transformer_forward.17} parent=11 // pred_fallthru
        _
      // Predicated region
      $region33: #{seq2seq_transformer_forward.17} parent=11 // pred_check
        %p221 = pneg %p165
      $region34: #{seq2seq_transformer_forward.17} parent=11 // pred_check_branch
        %223 = sbr.rel (%p221) target = $region36
      $region35: #{seq2seq_transformer_forward.17} parent=11 // pred_region
        _
      $region36: #{seq2seq_transformer_forward.17} parent=11 // pred_fallthru
        _
    $region12: #{seq2seq_transformer_forward.17} parent=5 // pred_fallthru
      _
    %p224 = scmp.lt.s32.totalorder %s13, 2
    // Predicated region
    $region37: #{seq2seq_transformer_forward.17} parent=5 // pred_check
      %p225 = pneg %p224
    $region38: #{seq2seq_transformer_forward.17} parent=5 // pred_check_branch
      %227 = sbr.rel (%p225) target = $region40
    $region39: #{seq2seq_transformer_forward.17} parent=5 // pred_region
      // Predicated region
      $region41: #{seq2seq_transformer_forward.17} parent=39 // pred_check
        %p228 = pneg %p33
      $region42: #{seq2seq_transformer_forward.17} parent=39 // pred_check_branch
        %230 = sbr.rel (%p228) target = $region44
      $region43: #{seq2seq_transformer_forward.17} parent=39 // pred_region
        %p231 = scmp.lt.s32.totalorder %s13, 1
        %s232 = scalar_select %p231, %s13, 1
        %s233 = smul.addr %s232, 2
        %s234 = smul.addr %s233, 8
        %s235 = scalar_lea.vmem %s0, %s234
      $region44: #{seq2seq_transformer_forward.17} parent=39 // pred_fallthru
        _
    $region40: #{seq2seq_transformer_forward.17} parent=5 // pred_fallthru
      _
    %p236 = scmp.le.s32.totalorder 1, %s13
    %p237 = scmp.lt.s32.totalorder %s13, 3
    %p238 = pnand %p236, %p237
    %p239 = pneg %p238
    // Predicated region
    $region45: #{seq2seq_transformer_forward.17} parent=5 // pred_check
      _
    $region46: #{seq2seq_transformer_forward.17} parent=5 // pred_check_branch
      %241 = sbr.rel (%p238) target = $region48
    $region47: #{seq2seq_transformer_forward.17} parent=5 // pred_region
      %s242 = ssub.s32 %s13, 1
      %p243 = scmp.lt.s32.totalorder %s18, 1
      %s244 = scalar_select %p243, %s18, 1
      %s245 = smul.addr %s244, 2
      %s246 = smul.addr %s245, 8
      %s247 = scalar_lea.vmem %s0, %s246
      %p248 = pneg %p39
      %p249 = pneg %p36
      %p250 = pneg %p60
      %p251 = pneg %p57
      %p252 = pneg %p81
      %p253 = pneg %p78
      %p254 = pneg %p102
      %p255 = pneg %p99
      %p256 = pneg %p123
      %p257 = pneg %p120
      %p258 = pneg %p144
      %p259 = pneg %p141
      %p260 = pneg %p165
      %p261 = pneg %p162
      %p262 = pneg %p191
      %p263 = pneg %p188
      %p264 = scmp.lt.s32.totalorder %s18, 1
      %s265 = scalar_select %p264, %s18, 1
      %s266 = smul.addr %s265, 2
      %s267 = smul.addr %s266, 8
      %s268 = scalar_lea.vmem %s7, %s267
      %p269 = scmp.lt.s32.totalorder %s18, 1
      %s270 = scalar_select %p269, %s18, 1
      %s271 = smul.addr %s270, 2
      %s272 = smul.addr %s271, 8
      %s273 = scalar_lea.vmem %s0, %s272
      %p274 = scmp.lt.s32.totalorder %s18, 1
      %s275 = scalar_select %p274, %s18, 1
      %s276 = smul.addr %s275, 2
      %s277 = smul.addr %s276, 8
      %s278 = scalar_lea.vmem %s7, %s277
      %v279 = vld [vmem:[%s273] sm:$0xff]
      %v280 = vld [vmem:[%s273 + $0x8] sm:$0xff]
      %v281 = vld [vmem:[%s1] sm:$0xff]
      %v282 = vld [vmem:[%s1 + $0x8] sm:$0xff]
      %v283 = vld [vmem:[%s1 + $0x10] sm:$0xff]
      %v284 = vld [vmem:[%s1 + $0x18] sm:$0xff]
      %v285 = vld [vmem:[%s2] sm:$0x1]
      %v287 = vlaneseq
      %v288 = vshrl.u32 %v287, 7
      %v289 = vsub.s32 0, %v288
      %v290 = vrot.slane %v285, %v289
      %vm292 = vcmask 261120
      %v294 = vsel %vm292, %v279, 0
      %v297 = vsel %vm292, %v280, 0
      %299 = vmatprep.subr.mxu0 0.0
      %300 = vmatpush1.msra.mxu0 %v281
      %301 = vmatprep.subr.mxu0 0.0
      %302 = vmatpush1.msra.mxu0 %v282
      %303 = vmatprep.subr.mxu0 0.0
      %304 = vmatpush1.msra.mxu0 %v283
      %305 = vmatprep.subr.mxu0 0.0
      %306 = vmatpush1.msra.mxu0 %v284
      %307 = vmatprep.subr.mxu0 0.0
      %308 = vmatpush1.msra.mxu0 0.0
      %309 = vmatprep.subr.mxu0 0.0
      %310 = vmatpush1.msra.mxu0 0.0
      %311 = vmatprep.subr.mxu0 0.0
      %312 = vmatpush1.msra.mxu0 0.0
      %313 = vmatprep.subr.mxu0 0.0
      %314 = vmatpush1.msra.mxu0 0.0
      %315 = vmatprep.subr.mxu0 0.0
      %316 = vmatpush1.msra.mxu0 0.0
      %317 = vmatprep.subr.mxu0 0.0
      %318 = vmatpush1.msra.mxu0 0.0
      %319 = vmatprep.subr.mxu0 0.0
      %320 = vmatpush1.msra.mxu0 0.0
      %321 = vmatprep.subr.mxu0 0.0
      %322 = vmatpush1.msra.mxu0 0.0
      %323 = vmatprep.subr.mxu0 0.0
      %324 = vmatpush1.msra.mxu0 0.0
      %325 = vmatprep.subr.mxu0 0.0
      %326 = vmatpush1.msra.mxu0 0.0
      %327 = vmatprep.subr.mxu0 0.0
      %328 = vmatpush1.msra.mxu0 0.0
      %329 = vmatprep.subr.mxu0 0.0
      %330 = vmatpush1.msra.mxu0 0.0
      %331 = vmatprep.subr.mxu0 0.0
      %332 = vmatpush1.msra.mxu0 0.0
      %333 = vmatprep.subr.mxu0 0.0
      %334 = vmatpush1.msra.mxu0 0.0
      %335 = vmatprep.subr.mxu0 0.0
      %336 = vmatpush1.msra.mxu0 0.0
      %337 = vmatprep.subr.mxu0 0.0
      %338 = vmatpush1.msra.mxu0 0.0
      %339 = vmatprep.subr.mxu0 0.0
      %340 = vmatpush1.msra.mxu0 0.0
      %341 = vmatprep.subr.mxu0 0.0
      %342 = vmatpush1.msra.mxu0 0.0
      %343 = vmatprep.subr.mxu0 0.0
      %344 = vmatpush1.msra.mxu0 0.0
      %345 = vmatprep.subr.mxu0 0.0
      %346 = vmatpush1.msra.mxu0 0.0
      %347 = vmatprep.subr.mxu0 0.0
      %348 = vmatpush1.msra.mxu0 0.0
      %349 = vmatprep.subr.mxu0 0.0
      %350 = vmatpush1.msra.mxu0 0.0
      %351 = vmatprep.subr.mxu0 0.0
      %352 = vmatpush1.msra.mxu0 0.0
      %353 = vmatprep.subr.mxu0 0.0
      %354 = vmatpush1.msra.mxu0 0.0
      %355 = vmatprep.subr.mxu0 0.0
      %356 = vmatpush1.msra.mxu0 0.0
      %357 = vmatprep.subr.mxu0 0.0
      %358 = vmatpush1.msra.mxu0 0.0
      %359 = vmatprep.subr.mxu0 0.0
      %360 = vmatpush1.msra.mxu0 0.0
      %361 = vmatprep.subr.mxu0 0.0
      %362 = vmatpush1.msra.mxu0 0.0
      %363 = vmatprep.mubr.f32.mxu0 0.0
      %364 = vmatmul.mubr.f32.gmra.mrb[0].mxu0 %v294
      %v365 = vpop.f32.mrb[0].mxu0
      %v366 = vadd.f32 %v290, %v365
      %v367 = vpop.f32.mrb[0].mxu0
      %368 = vmatprep.mubr.f32.mxu0 0.0
      %369 = vmatmul.mubr.f32.gmra.mrb[0].mxu0 %v297
      %v370 = vpop.f32.mrb[0].mxu0
      %v371 = vadd.f32 %v290, %v370
      %v372 = vpop.f32.mrb[0].mxu0
      %373 = vdwg.mxu0
      %v374 = vmax.f32 %v366, 0.0
      %v375 = vmax.f32 %v371, 0.0
      %v376 = vld [vmem:[%s3] sm:$0xff]
      %v377 = vld [vmem:[%s3 + $0x8] sm:$0xff]
      %v378 = vld [vmem:[%s3 + $0x10] sm:$0xff]
      %v379 = vld [vmem:[%s3 + $0x18] sm:$0xff]
      %v380 = vld [vmem:[%s3 + $0x20] sm:$0xff]
      %v381 = vld [vmem:[%s3 + $0x28] sm:$0xff]
      %v382 = vld [vmem:[%s3 + $0x30] sm:$0xff]
      %v383 = vld [vmem:[%s3 + $0x38] sm:$0xff]
      %v384 = vld [vmem:[%s4] sm:$0x1]
      %v386 = vlaneseq
      %v387 = vshrl.u32 %v386, 7
      %v388 = vsub.s32 0, %v387
      %v389 = vrot.slane %v384, %v388
      %vm391 = vcmask 523264
      %v393 = vsel %vm391, %v374, 0
      %v396 = vsel %vm391, %v375, 0
      %398 = vmatprep.subr.mxu0 0.0
      %399 = vmatpush1.msra.mxu0 %v376
      %400 = vmatprep.subr.mxu0 0.0
      %401 = vmatpush1.msra.mxu0 %v377
      %402 = vmatprep.subr.mxu0 0.0
      %403 = vmatpush1.msra.mxu0 %v378
      %404 = vmatprep.subr.mxu0 0.0
      %405 = vmatpush1.msra.mxu0 %v379
      %406 = vmatprep.subr.mxu0 0.0
      %407 = vmatpush1.msra.mxu0 %v380
      %408 = vmatprep.subr.mxu0 0.0
      %409 = vmatpush1.msra.mxu0 %v381
      %410 = vmatprep.subr.mxu0 0.0
      %411 = vmatpush1.msra.mxu0 %v382
      %412 = vmatprep.subr.mxu0 0.0
      %413 = vmatpush1.msra.mxu0 %v383
      %414 = vmatprep.subr.mxu0 0.0
      %415 = vmatpush1.msra.mxu0 0.0
      %416 = vmatprep.subr.mxu0 0.0
      %417 = vmatpush1.msra.mxu0 0.0
      %418 = vmatprep.subr.mxu0 0.0
      %419 = vmatpush1.msra.mxu0 0.0
      %420 = vmatprep.subr.mxu0 0.0
      %421 = vmatpush1.msra.mxu0 0.0
      %422 = vmatprep.subr.mxu0 0.0
      %423 = vmatpush1.msra.mxu0 0.0
      %424 = vmatprep.subr.mxu0 0.0
      %425 = vmatpush1.msra.mxu0 0.0
      %426 = vmatprep.subr.mxu0 0.0
      %427 = vmatpush1.msra.mxu0 0.0
      %428 = vmatprep.subr.mxu0 0.0
      %429 = vmatpush1.msra.mxu0 0.0
      %430 = vmatprep.subr.mxu0 0.0
      %431 = vmatpush1.msra.mxu0 0.0
      %432 = vmatprep.subr.mxu0 0.0
      %433 = vmatpush1.msra.mxu0 0.0
      %434 = vmatprep.subr.mxu0 0.0
      %435 = vmatpush1.msra.mxu0 0.0
      %436 = vmatprep.subr.mxu0 0.0
      %437 = vmatpush1.msra.mxu0 0.0
      %438 = vmatprep.subr.mxu0 0.0
      %439 = vmatpush1.msra.mxu0 0.0
      %440 = vmatprep.subr.mxu0 0.0
      %441 = vmatpush1.msra.mxu0 0.0
      %442 = vmatprep.subr.mxu0 0.0
      %443 = vmatpush1.msra.mxu0 0.0
      %444 = vmatprep.subr.mxu0 0.0
      %445 = vmatpush1.msra.mxu0 0.0
      %446 = vmatprep.subr.mxu0 0.0
      %447 = vmatpush1.msra.mxu0 0.0
      %448 = vmatprep.subr.mxu0 0.0
      %449 = vmatpush1.msra.mxu0 0.0
      %450 = vmatprep.subr.mxu0 0.0
      %451 = vmatpush1.msra.mxu0 0.0
      %452 = vmatprep.subr.mxu0 0.0
      %453 = vmatpush1.msra.mxu0 0.0
      %454 = vmatprep.subr.mxu0 0.0
      %455 = vmatpush1.msra.mxu0 0.0
      %456 = vmatprep.subr.mxu0 0.0
      %457 = vmatpush1.msra.mxu0 0.0
      %458 = vmatprep.subr.mxu0 0.0
      %459 = vmatpush1.msra.mxu0 0.0
      %460 = vmatprep.subr.mxu0 0.0
      %461 = vmatpush1.msra.mxu0 0.0
      %462 = vmatprep.mubr.f32.mxu0 0.0
      %463 = vmatmul.mubr.f32.gmra.mrb[0].mxu0 %v393
      %v464 = vpop.f32.mrb[0].mxu0
      %v465 = vadd.f32 %v389, %v464
      %v466 = vpop.f32.mrb[0].mxu0
      %467 = vmatprep.mubr.f32.mxu0 0.0
      %468 = vmatmul.mubr.f32.gmra.mrb[0].mxu0 %v396
      %v469 = vpop.f32.mrb[0].mxu0
      %v470 = vadd.f32 %v389, %v469
      %v471 = vpop.f32.mrb[0].mxu0
      %472 = vdwg.mxu0
      %v473 = vadd.f32 %v279, %v465
      %v474 = vadd.f32 %v280, %v470
      %v475 = vld [vmem:[%s5] sm:$0x1]
      %v476 = vld [vmem:[%s6] sm:$0x1]
      %v477 = vsel %vm292, %v473, 0.0
      %478 = vadd.xlane.f32.xlu0 %v477
      %v479 = vpop.xlane.xlu0 %478
      %v480 = vsel %vm292, %v474, 0.0
      %481 = vadd.xlane.f32.xlu0 %v480
      %v482 = vpop.xlane.xlu0 %481
      %v483 = vrcp.pop 32.0
      %v484 = vmul.f32 %v479, %v483
      %v485 = vmul.f32 %v482, %v483
      %v486 = vsub.f32 %v473, %v484
      %v487 = vsub.f32 %v474, %v485
      %v488 = vmul.f32 %v486, %v486
      %v489 = vmul.f32 %v487, %v487
      %v490 = vsel %vm292, %v488, 0.0
      %491 = vadd.xlane.f32.xlu0 %v490
      %v492 = vpop.xlane.xlu0 %491
      %v493 = vsel %vm292, %v489, 0.0
      %494 = vadd.xlane.f32.xlu0 %v493
      %v495 = vpop.xlane.xlu0 %494
      %v496 = vmul.f32 %v492, %v483
      %v497 = vmul.f32 %v495, %v483
      %v498 = vadd.f32 %v496, 1e-05
      %v499 = vadd.f32 %v497, 1e-05
      %v500 = vrsqrt.pop %v498
      %v501 = vrsqrt.pop %v499
      %v502 = vmul.f32 %v486, %v500
      %v503 = vmul.f32 %v487, %v501
      %v505 = vlaneseq
      %v506 = vshrl.u32 %v505, 7
      %v507 = vsub.s32 0, %v506
      %v508 = vrot.slane %v475, %v507
      %v510 = vmul.f32 %v502, %v508
      %v511 = vmul.f32 %v503, %v508
      %v513 = vlaneseq
      %v514 = vshrl.u32 %v513, 7
      %v515 = vsub.s32 0, %v514
      %v516 = vrot.slane %v476, %v515
      %v518 = vadd.f32 %v510, %v516
      %v519 = vadd.f32 %v511, %v516
      %520 = vst.msk [vmem:[%s278] sm:$0xff] %vm292, %v518
      %521 = vst.msk [vmem:[%s278 + $0x8] sm:$0xff] %vm292, %v519
      %p522 = scmp.lt.s32.totalorder %s18, 1
      %s523 = scalar_select %p522, %s18, 1
      %s524 = smul.addr %s523, 2
      %s525 = smul.addr %s524, 8
      %s526 = scalar_lea.vmem %s7, %s525
      // Predicated region
      $region49: #{seq2seq_transformer_forward.17} parent=47 // pred_check
        %p527 = pneg %p188
      $region50: #{seq2seq_transformer_forward.17} parent=47 // pred_check_branch
        %529 = sbr.rel (%p527) target = $region52
      $region51: #{seq2seq_transformer_forward.17} parent=47 // pred_region
        _
      $region52: #{seq2seq_transformer_forward.17} parent=47 // pred_fallthru
        _
    $region48: #{seq2seq_transformer_forward.17} parent=5 // pred_fallthru
      _
    %p530 = scmp.le.s32.totalorder 2, %s13
    // Predicated region
    $region53: #{seq2seq_transformer_forward.17} parent=5 // pred_check
      %p531 = pneg %p530
    $region54: #{seq2seq_transformer_forward.17} parent=5 // pred_check_branch
      %533 = sbr.rel (%p531) target = $region56
    $region55: #{seq2seq_transformer_forward.17} parent=5 // pred_region
      %s534 = ssub.s32 %s13, 2
      // Predicated region
      $region57: #{seq2seq_transformer_forward.17} parent=55 // pred_check
        %p535 = pneg %p194
      $region58: #{seq2seq_transformer_forward.17} parent=55 // pred_check_branch
        %537 = sbr.rel (%p535) target = $region60
      $region59: #{seq2seq_transformer_forward.17} parent=55 // pred_region
        %p538 = scmp.lt.s32.totalorder %s19, 1
        %s539 = scalar_select %p538, %s19, 1
        %s540 = smul.addr %s539, 2
        %s541 = smul.addr %s540, 8
        %s542 = scalar_lea.vmem %s7, %s541
      $region60: #{seq2seq_transformer_forward.17} parent=55 // pred_fallthru
        _
    $region56: #{seq2seq_transformer_forward.17} parent=5 // pred_fallthru
      _
  $region6: #{seq2seq_transformer_forward.17} parent=0 // loop_footer
    %s17 = sadd.s32 1, %s13
  $region7: #{seq2seq_transformer_forward.17} parent=0 // loop_footer_branch
    %12 = sbr.rel target = $region3
  $region8: #{seq2seq_transformer_forward.17} parent=0 // loop_exit
    _

// kernel: seq2seq_transformer_forward.16
$region0: #{seq2seq_transformer_forward.16}
  #allocation0 [shape = 'u32[]', space=smem, size = 0x4, offset = 0x4, fixed_abs, tag = 'smem constant byte address 0x4 - core index']
  #allocation1 [shape = 'u32[144,128]{1,0:T(1,128)}', space=vmem, size = 0x12000, scoped, tag = 'internal scratch']
  %s0 = inlined_call_operand.vmem [shape: f32[2,16,32], index: 0, kind: input, shape index: {}]
  %s1 = inlined_call_operand.vmem [shape: f32[32,96], index: 1, kind: input, shape index: {}]
  %s2 = inlined_call_operand.vmem [shape: f32[1,96], index: 2, kind: input, shape index: {}]
  %s3 = inlined_call_operand.vmem [shape: f32[32,32], index: 3, kind: input, shape index: {}]
  %s4 = inlined_call_operand.vmem [shape: f32[1,32], index: 4, kind: input, shape index: {}]
  %s5 = inlined_call_operand.vmem [shape: f32[16,16], index: 5, kind: input, shape index: {}]
  %s6 = inlined_call_operand.vmem [shape: f32[2,1,16], index: 6, kind: input, shape index: {}]
  %s7 = inlined_call_operand.vmem [shape: f32[1,32], index: 7, kind: input, shape index: {}]
  %s8 = inlined_call_operand.vmem [shape: f32[1,32], index: 8, kind: input, shape index: {}]
  %s9 = inlined_call_operand.vmem [shape: f32[2,16,32], index: 9, kind: output, shape index: {}]
  %s10 = sld [smem:[#allocation0]]
  $region69: #{seq2seq_transformer_forward.16} parent=0
    _
  %s12 = ssub.s32 1, %s10
  %s13 = scalar_select 0, %s12, %s10
  loop: start=0, step=1, limit=4
  $region2: #{seq2seq_transformer_forward.16} parent=0 // loop_pre_header
    _
  $region3: #{seq2seq_transformer_forward.16} parent=0 // loop_header
    %s15 = sphi 0, %s19
    %p16 = scmp.ge.s32.totalorder %s15, 4
    %s25 = sphi 0, %s27
    %s28 = sphi 0, %s25
    %s29 = sphi 0, %s28
    %s45 = sphi 0, %s29
    %s49 = sphi 0, %s49
    %s51 = sphi 0, %s49
    %s52 = sphi 0, %s51
    %s66 = sphi 0, %s52
    %s70 = sphi 0, %s70
    %s72 = sphi 0, %s70
    %s73 = sphi 0, %s72
    %s87 = sphi 0, %s73
    %s91 = sphi 0, %s91
    %s93 = sphi 0, %s91
    %s94 = sphi 0, %s93
    %s108 = sphi 0, %s94
    %s112 = sphi 0, %s112
    %s114 = sphi 0, %s112
    %s115 = sphi 0, %s114
    %s129 = sphi 0, %s115
    %s133 = sphi 0, %s133
    %s135 = sphi 0, %s133
    %s136 = sphi 0, %s135
    %s150 = sphi 0, %s136
    %s156 = sphi 0, %s158
    %s159 = sphi 0, %s156
    %s160 = sphi 0, %s159
    %s176 = sphi 0, %s160
    %s180 = sphi 0, %s180
    %s182 = sphi 0, %s180
    %s183 = sphi 0, %s182
    %s197 = sphi 0, %s183
    %s201 = sphi 0, %s201
    %s203 = sphi 0, %s201
    %s204 = sphi 0, %s203
    %s218 = sphi 0, %s204
    %s224 = sphi 0, %s226
    %s227 = sphi 0, %s224
    %s228 = sphi 0, %s227
    %s244 = sphi 0, %s228
  $region4: #{seq2seq_transformer_forward.16} parent=0 // loop_header_branch
    %18 = sbr.rel (%p16) target = $region8
  $region5: #{seq2seq_transformer_forward.16} parent=0 // loop_body
    %s20 = ssub.s32 %s15, 1
    %s21 = ssub.s32 %s15, 2
    %s22 = sadd.s32 %s15, 1
    %s23 = ssub.s32 %s15, %s22
    %p24 = scmp.eq.s32.totalorder %s23, 0
    %s26 = sadd.s32 %s25, 1
    %s27 = scalar_select %p24, %s25, %s26
    %p30 = pneg %p24
    %p31 = scmp.eq.s32.totalorder %s15, 1
    %p32 = por %p30, %p31
    %p33 = scmp.ne.s32.totalorder %s25, %s28
    %p34 = scmp.eq.s32.totalorder %s15, 0
    %p35 = por %p33, %p34
    %p36 = scmp.ne.s32.totalorder %s25, %s28
    %p37 = scmp.eq.s32.totalorder %s20, 1
    %p38 = por %p36, %p37
    %p39 = scmp.ne.s32.totalorder %s28, %s29
    %p40 = scmp.eq.s32.totalorder %s20, 0
    %p41 = por %p39, %p40
    %p42 = scmp.ne.s32.totalorder %s28, %s29
    %p43 = scmp.eq.s32.totalorder %s21, 1
    %p44 = por %p42, %p43
    %p46 = scmp.ne.s32.totalorder %s29, %s45
    %p47 = scmp.eq.s32.totalorder %s21, 0
    %p48 = por %p46, %p47
    %s50 = sadd.s32 %s49, 1
    %p53 = scmp.eq.s32.totalorder %s15, 1
    %p54 = scmp.ne.s32.totalorder %s49, %s51
    %p55 = scmp.eq.s32.totalorder %s15, 0
    %p56 = por %p54, %p55
    %p57 = scmp.ne.s32.totalorder %s49, %s51
    %p58 = scmp.eq.s32.totalorder %s20, 1
    %p59 = por %p57, %p58
    %p60 = scmp.ne.s32.totalorder %s51, %s52
    %p61 = scmp.eq.s32.totalorder %s20, 0
    %p62 = por %p60, %p61
    %p63 = scmp.ne.s32.totalorder %s51, %s52
    %p64 = scmp.eq.s32.totalorder %s21, 1
    %p65 = por %p63, %p64
    %p67 = scmp.ne.s32.totalorder %s52, %s66
    %p68 = scmp.eq.s32.totalorder %s21, 0
    %p69 = por %p67, %p68
    %s71 = sadd.s32 %s70, 1
    %p74 = scmp.eq.s32.totalorder %s15, 1
    %p75 = scmp.ne.s32.totalorder %s70, %s72
    %p76 = scmp.eq.s32.totalorder %s15, 0
    %p77 = por %p75, %p76
    %p78 = scmp.ne.s32.totalorder %s70, %s72
    %p79 = scmp.eq.s32.totalorder %s20, 1
    %p80 = por %p78, %p79
    %p81 = scmp.ne.s32.totalorder %s72, %s73
    %p82 = scmp.eq.s32.totalorder %s20, 0
    %p83 = por %p81, %p82
    %p84 = scmp.ne.s32.totalorder %s72, %s73
    %p85 = scmp.eq.s32.totalorder %s21, 1
    %p86 = por %p84, %p85
    %p88 = scmp.ne.s32.totalorder %s73, %s87
    %p89 = scmp.eq.s32.totalorder %s21, 0
    %p90 = por %p88, %p89
    %s92 = sadd.s32 %s91, 1
    %p95 = scmp.eq.s32.totalorder %s15, 1
    %p96 = scmp.ne.s32.totalorder %s91, %s93
    %p97 = scmp.eq.s32.totalorder %s15, 0
    %p98 = por %p96, %p97
    %p99 = scmp.ne.s32.totalorder %s91, %s93
    %p100 = scmp.eq.s32.totalorder %s20, 1
    %p101 = por %p99, %p100
    %p102 = scmp.ne.s32.totalorder %s93, %s94
    %p103 = scmp.eq.s32.totalorder %s20, 0
    %p104 = por %p102, %p103
    %p105 = scmp.ne.s32.totalorder %s93, %s94
    %p106 = scmp.eq.s32.totalorder %s21, 1
    %p107 = por %p105, %p106
    %p109 = scmp.ne.s32.totalorder %s94, %s108
    %p110 = scmp.eq.s32.totalorder %s21, 0
    %p111 = por %p109, %p110
    %s113 = sadd.s32 %s112, 1
    %p116 = scmp.eq.s32.totalorder %s15, 1
    %p117 = scmp.ne.s32.totalorder %s112, %s114
    %p118 = scmp.eq.s32.totalorder %s15, 0
    %p119 = por %p117, %p118
    %p120 = scmp.ne.s32.totalorder %s112, %s114
    %p121 = scmp.eq.s32.totalorder %s20, 1
    %p122 = por %p120, %p121
    %p123 = scmp.ne.s32.totalorder %s114, %s115
    %p124 = scmp.eq.s32.totalorder %s20, 0
    %p125 = por %p123, %p124
    %p126 = scmp.ne.s32.totalorder %s114, %s115
    %p127 = scmp.eq.s32.totalorder %s21, 1
    %p128 = por %p126, %p127
    %p130 = scmp.ne.s32.totalorder %s115, %s129
    %p131 = scmp.eq.s32.totalorder %s21, 0
    %p132 = por %p130, %p131
    %s134 = sadd.s32 %s133, 1
    %p137 = scmp.eq.s32.totalorder %s15, 1
    %p138 = scmp.ne.s32.totalorder %s133, %s135
    %p139 = scmp.eq.s32.totalorder %s15, 0
    %p140 = por %p138, %p139
    %p141 = scmp.ne.s32.totalorder %s133, %s135
    %p142 = scmp.eq.s32.totalorder %s20, 1
    %p143 = por %p141, %p142
    %p144 = scmp.ne.s32.totalorder %s135, %s136
    %p145 = scmp.eq.s32.totalorder %s20, 0
    %p146 = por %p144, %p145
    %p147 = scmp.ne.s32.totalorder %s135, %s136
    %p148 = scmp.eq.s32.totalorder %s21, 1
    %p149 = por %p147, %p148
    %p151 = scmp.ne.s32.totalorder %s136, %s150
    %p152 = scmp.eq.s32.totalorder %s21, 0
    %p153 = por %p151, %p152
    %s154 = ssub.s32 %s15, %s22
    %p155 = scmp.eq.s32.totalorder %s154, 0
    %s157 = sadd.s32 %s156, 1
    %s158 = scalar_select %p155, %s156, %s157
    %p161 = pneg %p155
    %p162 = scmp.eq.s32.totalorder %s15, 1
    %p163 = por %p161, %p162
    %p164 = scmp.ne.s32.totalorder %s156, %s159
    %p165 = scmp.eq.s32.totalorder %s15, 0
    %p166 = por %p164, %p165
    %p167 = scmp.ne.s32.totalorder %s156, %s159
    %p168 = scmp.eq.s32.totalorder %s20, 1
    %p169 = por %p167, %p168
    %p170 = scmp.ne.s32.totalorder %s159, %s160
    %p171 = scmp.eq.s32.totalorder %s20, 0
    %p172 = por %p170, %p171
    %p173 = scmp.ne.s32.totalorder %s159, %s160
    %p174 = scmp.eq.s32.totalorder %s21, 1
    %p175 = por %p173, %p174
    %p177 = scmp.ne.s32.totalorder %s160, %s176
    %p178 = scmp.eq.s32.totalorder %s21, 0
    %p179 = por %p177, %p178
    %s181 = sadd.s32 %s180, 1
    %p184 = scmp.eq.s32.totalorder %s15, 1
    %p185 = scmp.ne.s32.totalorder %s180, %s182
    %p186 = scmp.eq.s32.totalorder %s15, 0
    %p187 = por %p185, %p186
    %p188 = scmp.ne.s32.totalorder %s180, %s182
    %p189 = scmp.eq.s32.totalorder %s20, 1
    %p190 = por %p188, %p189
    %p191 = scmp.ne.s32.totalorder %s182, %s183
    %p192 = scmp.eq.s32.totalorder %s20, 0
    %p193 = por %p191, %p192
    %p194 = scmp.ne.s32.totalorder %s182, %s183
    %p195 = scmp.eq.s32.totalorder %s21, 1
    %p196 = por %p194, %p195
    %p198 = scmp.ne.s32.totalorder %s183, %s197
    %p199 = scmp.eq.s32.totalorder %s21, 0
    %p200 = por %p198, %p199
    %s202 = sadd.s32 %s201, 1
    %p205 = scmp.eq.s32.totalorder %s15, 1
    %p206 = scmp.ne.s32.totalorder %s201, %s203
    %p207 = scmp.eq.s32.totalorder %s15, 0
    %p208 = por %p206, %p207
    %p209 = scmp.ne.s32.totalorder %s201, %s203
    %p210 = scmp.eq.s32.totalorder %s20, 1
    %p211 = por %p209, %p210
    %p212 = scmp.ne.s32.totalorder %s203, %s204
    %p213 = scmp.eq.s32.totalorder %s20, 0
    %p214 = por %p212, %p213
    %p215 = scmp.ne.s32.totalorder %s203, %s204
    %p216 = scmp.eq.s32.totalorder %s21, 1
    %p217 = por %p215, %p216
    %p219 = scmp.ne.s32.totalorder %s204, %s218
    %p220 = scmp.eq.s32.totalorder %s21, 0
    %p221 = por %p219, %p220
    %s222 = ssub.s32 %s15, %s22
    %p223 = scmp.eq.s32.totalorder %s222, 0
    %s225 = sadd.s32 %s224, 1
    %s226 = scalar_select %p223, %s224, %s225
    %p229 = pneg %p223
    %p230 = scmp.eq.s32.totalorder %s15, 1
    %p231 = por %p229, %p230
    %p232 = scmp.ne.s32.totalorder %s224, %s227
    %p233 = scmp.eq.s32.totalorder %s15, 0
    %p234 = por %p232, %p233
    %p235 = scmp.ne.s32.totalorder %s224, %s227
    %p236 = scmp.eq.s32.totalorder %s20, 1
    %p237 = por %p235, %p236
    %p238 = scmp.ne.s32.totalorder %s227, %s228
    %p239 = scmp.eq.s32.totalorder %s20, 0
    %p240 = por %p238, %p239
    %p241 = scmp.ne.s32.totalorder %s227, %s228
    %p242 = scmp.eq.s32.totalorder %s21, 1
    %p243 = por %p241, %p242
    %p245 = scmp.ne.s32.totalorder %s228, %s244
    %p246 = scmp.eq.s32.totalorder %s21, 0
    %p247 = por %p245, %p246
    %p248 = scmp.le.s32.totalorder 1, %s15
    %p249 = scmp.lt.s32.totalorder %s15, 3
    %p250 = pnand %p248, %p249
    %p251 = pneg %p250
    // Predicated region
    $region9: #{seq2seq_transformer_forward.16} parent=5 // pred_check
      _
    $region10: #{seq2seq_transformer_forward.16} parent=5 // pred_check_branch
      %253 = sbr.rel (%p250) target = $region12
    $region11: #{seq2seq_transformer_forward.16} parent=5 // pred_region
      %s254 = ssub.s32 %s15, 1
      // Predicated region
      $region13: #{seq2seq_transformer_forward.16} parent=11 // pred_check
        %p255 = pneg %p62
      $region14: #{seq2seq_transformer_forward.16} parent=11 // pred_check_branch
        %257 = sbr.rel (%p255) target = $region16
      $region15: #{seq2seq_transformer_forward.16} parent=11 // pred_region
        _
      $region16: #{seq2seq_transformer_forward.16} parent=11 // pred_fallthru
        _
      // Predicated region
      $region17: #{seq2seq_transformer_forward.16} parent=11 // pred_check
        %p258 = pneg %p83
      $region18: #{seq2seq_transformer_forward.16} parent=11 // pred_check_branch
        %260 = sbr.rel (%p258) target = $region20
      $region19: #{seq2seq_transformer_forward.16} parent=11 // pred_region
        _
      $region20: #{seq2seq_transformer_forward.16} parent=11 // pred_fallthru
        _
      // Predicated region
      $region21: #{seq2seq_transformer_forward.16} parent=11 // pred_check
        %p261 = pneg %p104
      $region22: #{seq2seq_transformer_forward.16} parent=11 // pred_check_branch
        %263 = sbr.rel (%p261) target = $region24
      $region23: #{seq2seq_transformer_forward.16} parent=11 // pred_region
        _
      $region24: #{seq2seq_transformer_forward.16} parent=11 // pred_fallthru
        _
      // Predicated region
      $region25: #{seq2seq_transformer_forward.16} parent=11 // pred_check
        %p264 = pneg %p125
      $region26: #{seq2seq_transformer_forward.16} parent=11 // pred_check_branch
        %266 = sbr.rel (%p264) target = $region28
      $region27: #{seq2seq_transformer_forward.16} parent=11 // pred_region
        _
      $region28: #{seq2seq_transformer_forward.16} parent=11 // pred_fallthru
        _
      // Predicated region
      $region29: #{seq2seq_transformer_forward.16} parent=11 // pred_check
        %p267 = pneg %p146
      $region30: #{seq2seq_transformer_forward.16} parent=11 // pred_check_branch
        %269 = sbr.rel (%p267) target = $region32
      $region31: #{seq2seq_transformer_forward.16} parent=11 // pred_region
        _
      $region32: #{seq2seq_transformer_forward.16} parent=11 // pred_fallthru
        _
      // Predicated region
      $region33: #{seq2seq_transformer_forward.16} parent=11 // pred_check
        %p270 = pneg %p193
      $region34: #{seq2seq_transformer_forward.16} parent=11 // pred_check_branch
        %272 = sbr.rel (%p270) target = $region36
      $region35: #{seq2seq_transformer_forward.16} parent=11 // pred_region
        _
      $region36: #{seq2seq_transformer_forward.16} parent=11 // pred_fallthru
        _
      // Predicated region
      $region37: #{seq2seq_transformer_forward.16} parent=11 // pred_check
        %p273 = pneg %p214
      $region38: #{seq2seq_transformer_forward.16} parent=11 // pred_check_branch
        %275 = sbr.rel (%p273) target = $region40
      $region39: #{seq2seq_transformer_forward.16} parent=11 // pred_region
        _
      $region40: #{seq2seq_transformer_forward.16} parent=11 // pred_fallthru
        _
    $region12: #{seq2seq_transformer_forward.16} parent=5 // pred_fallthru
      _
    %p276 = scmp.lt.s32.totalorder %s15, 2
    // Predicated region
    $region41: #{seq2seq_transformer_forward.16} parent=5 // pred_check
      %p277 = pneg %p276
    $region42: #{seq2seq_transformer_forward.16} parent=5 // pred_check_branch
      %279 = sbr.rel (%p277) target = $region44
    $region43: #{seq2seq_transformer_forward.16} parent=5 // pred_region
      // Predicated region
      $region45: #{seq2seq_transformer_forward.16} parent=43 // pred_check
        %p280 = pneg %p35
      $region46: #{seq2seq_transformer_forward.16} parent=43 // pred_check_branch
        %282 = sbr.rel (%p280) target = $region48
      $region47: #{seq2seq_transformer_forward.16} parent=43 // pred_region
        %p283 = scmp.lt.s32.totalorder %s15, 1
        %s284 = scalar_select %p283, %s15, 1
        %s285 = smul.addr %s284, 2
        %s286 = smul.addr %s285, 8
        %s287 = scalar_lea.vmem %s0, %s286
      $region48: #{seq2seq_transformer_forward.16} parent=43 // pred_fallthru
        _
      // Predicated region
      $region49: #{seq2seq_transformer_forward.16} parent=43 // pred_check
        %p288 = pneg %p166
      $region50: #{seq2seq_transformer_forward.16} parent=43 // pred_check_branch
        %290 = sbr.rel (%p288) target = $region52
      $region51: #{seq2seq_transformer_forward.16} parent=43 // pred_region
        %p291 = scmp.lt.s32.totalorder %s15, 1
        %s292 = scalar_select %p291, %s15, 1
        %s293 = scalar_lea.vmem %s6, %s292
      $region52: #{seq2seq_transformer_forward.16} parent=43 // pred_fallthru
        _
    $region44: #{seq2seq_transformer_forward.16} parent=5 // pred_fallthru
      _
    %p294 = scmp.le.s32.totalorder 1, %s15
    %p295 = scmp.lt.s32.totalorder %s15, 3
    %p296 = pnand %p294, %p295
    %p297 = pneg %p296
    // Predicated region
    $region53: #{seq2seq_transformer_forward.16} parent=5 // pred_check
      _
    $region54: #{seq2seq_transformer_forward.16} parent=5 // pred_check_branch
      %299 = sbr.rel (%p296) target = $region56
    $region55: #{seq2seq_transformer_forward.16} parent=5 // pred_region
      %s300 = ssub.s32 %s15, 1
      %p301 = scmp.lt.s32.totalorder %s20, 1
      %s302 = scalar_select %p301, %s20, 1
      %s303 = smul.addr %s302, 2
      %s304 = smul.addr %s303, 8
      %s305 = scalar_lea.vmem %s0, %s304
      %p306 = pneg %p41
      %p307 = pneg %p38
      %p308 = pneg %p62
      %p309 = pneg %p59
      %p310 = pneg %p83
      %p311 = pneg %p80
      %p312 = pneg %p104
      %p313 = pneg %p101
      %p314 = pneg %p125
      %p315 = pneg %p122
      %p316 = pneg %p146
      %p317 = pneg %p143
      %p318 = scmp.lt.s32.totalorder %s20, 1
      %s319 = scalar_select %p318, %s20, 1
      %s320 = scalar_lea.vmem %s6, %s319
      %p321 = pneg %p172
      %p322 = pneg %p169
      %p323 = pneg %p193
      %p324 = pneg %p190
      %p325 = pneg %p214
      %p326 = pneg %p211
      %p327 = pneg %p240
      %p328 = pneg %p237
      %p329 = scmp.lt.s32.totalorder %s20, 1
      %s330 = scalar_select %p329, %s20, 1
      %s331 = smul.addr %s330, 2
      %s332 = smul.addr %s331, 8
      %s333 = scalar_lea.vmem %s9, %s332
      %p334 = scmp.lt.s32.totalorder %s20, 1
      %s335 = scalar_select %p334, %s20, 1
      %s336 = smul.addr %s335, 2
      %s337 = smul.addr %s336, 8
      %s338 = scalar_lea.vmem %s0, %s337
      %p339 = scmp.lt.s32.totalorder %s20, 1
      %s340 = scalar_select %p339, %s20, 1
      %s341 = scalar_lea.vmem %s6, %s340
      %p342 = scmp.lt.s32.totalorder %s20, 1
      %s343 = scalar_select %p342, %s20, 1
      %s344 = smul.addr %s343, 2
      %s345 = smul.addr %s344, 8
      %s346 = scalar_lea.vmem %s9, %s345
      %v347 = vld [vmem:[%s338] sm:$0xff]
      %v348 = vld [vmem:[%s338 + $0x8] sm:$0xff]
      %v349 = vld [vmem:[%s1] sm:$0xff]
      %v350 = vld [vmem:[%s1 + $0x8] sm:$0xff]
      %v351 = vld [vmem:[%s1 + $0x10] sm:$0xff]
      %v352 = vld [vmem:[%s1 + $0x18] sm:$0xff]
      %v353 = vld [vmem:[%s2] sm:$0x1]
      %v355 = vlaneseq
      %v356 = vshrl.u32 %v355, 7
      %v357 = vsub.s32 0, %v356
      %v358 = vrot.slane %v353, %v357
      %vm360 = vcmask 261120
      %v362 = vsel %vm360, %v347, 0
      %v365 = vsel %vm360, %v348, 0
      %367 = vmatprep.subr.mxu0 0.0
      %368 = vmatpush1.msra.mxu0 %v349
      %369 = vmatprep.subr.mxu0 0.0
      %370 = vmatpush1.msra.mxu0 %v350
      %371 = vmatprep.subr.mxu0 0.0
      %372 = vmatpush1.msra.mxu0 %v351
      %373 = vmatprep.subr.mxu0 0.0
      %374 = vmatpush1.msra.mxu0 %v352
      %375 = vmatprep.subr.mxu0 0.0
      %376 = vmatpush1.msra.mxu0 0.0
      %377 = vmatprep.subr.mxu0 0.0
      %378 = vmatpush1.msra.mxu0 0.0
      %379 = vmatprep.subr.mxu0 0.0
      %380 = vmatpush1.msra.mxu0 0.0
      %381 = vmatprep.subr.mxu0 0.0
      %382 = vmatpush1.msra.mxu0 0.0
      %383 = vmatprep.subr.mxu0 0.0
      %384 = vmatpush1.msra.mxu0 0.0
      %385 = vmatprep.subr.mxu0 0.0
      %386 = vmatpush1.msra.mxu0 0.0
      %387 = vmatprep.subr.mxu0 0.0
      %388 = vmatpush1.msra.mxu0 0.0
      %389 = vmatprep.subr.mxu0 0.0
      %390 = vmatpush1.msra.mxu0 0.0
      %391 = vmatprep.subr.mxu0 0.0
      %392 = vmatpush1.msra.mxu0 0.0
      %393 = vmatprep.subr.mxu0 0.0
      %394 = vmatpush1.msra.mxu0 0.0
      %395 = vmatprep.subr.mxu0 0.0
      %396 = vmatpush1.msra.mxu0 0.0
      %397 = vmatprep.subr.mxu0 0.0
      %398 = vmatpush1.msra.mxu0 0.0
      %399 = vmatprep.subr.mxu0 0.0
      %400 = vmatpush1.msra.mxu0 0.0
      %401 = vmatprep.subr.mxu0 0.0
      %402 = vmatpush1.msra.mxu0 0.0
      %403 = vmatprep.subr.mxu0 0.0
      %404 = vmatpush1.msra.mxu0 0.0
      %405 = vmatprep.subr.mxu0 0.0
      %406 = vmatpush1.msra.mxu0 0.0
      %407 = vmatprep.subr.mxu0 0.0
      %408 = vmatpush1.msra.mxu0 0.0
      %409 = vmatprep.subr.mxu0 0.0
      %410 = vmatpush1.msra.mxu0 0.0
      %411 = vmatprep.subr.mxu0 0.0
      %412 = vmatpush1.msra.mxu0 0.0
      %413 = vmatprep.subr.mxu0 0.0
      %414 = vmatpush1.msra.mxu0 0.0
      %415 = vmatprep.subr.mxu0 0.0
      %416 = vmatpush1.msra.mxu0 0.0
      %417 = vmatprep.subr.mxu0 0.0
      %418 = vmatpush1.msra.mxu0 0.0
      %419 = vmatprep.subr.mxu0 0.0
      %420 = vmatpush1.msra.mxu0 0.0
      %421 = vmatprep.subr.mxu0 0.0
      %422 = vmatpush1.msra.mxu0 0.0
      %423 = vmatprep.subr.mxu0 0.0
      %424 = vmatpush1.msra.mxu0 0.0
      %425 = vmatprep.subr.mxu0 0.0
      %426 = vmatpush1.msra.mxu0 0.0
      %427 = vmatprep.subr.mxu0 0.0
      %428 = vmatpush1.msra.mxu0 0.0
      %429 = vmatprep.subr.mxu0 0.0
      %430 = vmatpush1.msra.mxu0 0.0
      %431 = vmatprep.mubr.f32.mxu0 0.0
      %432 = vmatmul.mubr.f32.gmra.mrb[0].mxu0 %v362
      %v433 = vpop.f32.mrb[0].mxu0
      %v434 = vadd.f32 %v358, %v433
      %v435 = vpop.f32.mrb[0].mxu0
      %436 = vmatprep.mubr.f32.mxu0 0.0
      %437 = vmatmul.mubr.f32.gmra.mrb[0].mxu0 %v365
      %v438 = vpop.f32.mrb[0].mxu0
      %v439 = vadd.f32 %v358, %v438
      %v440 = vpop.f32.mrb[0].mxu0
      %441 = vdwg.mxu0
      %v442 = vld [vmem:[%s5] sm:$0xff]
      %v443 = vld [vmem:[%s5 + $0x8] sm:$0xff]
      %v444 = vld [vmem:[%s341] sm:$0x1]
      %v446 = vlaneseq
      %v447 = vshrl.u32 %v446, 7
      %v448 = vsub.s32 0, %v447
      %v449 = vrot.slane %v444, %v448
      %v451 = vadd.f32 %v442, %v449
      %v452 = vadd.f32 %v443, %v449
      %v453 = vld [vmem:[%s3] sm:$0xff]
      %v454 = vld [vmem:[%s3 + $0x8] sm:$0xff]
      %v455 = vld [vmem:[%s3 + $0x10] sm:$0xff]
      %v456 = vld [vmem:[%s3 + $0x18] sm:$0xff]
      %459 = vrot.lane.b32.xlu0 %v434, 96
      %v460 = vpop.permute.xlu0 %459
      %461 = vrot.lane.b32.xlu0 %v439, 96
      %v462 = vpop.permute.xlu0 %461
      %vm463 = vcmask 64512
      %v464 = vsel %vm463, %v434, 0
      %v466 = vsel %vm463, %v439, 0
      %v468 = vsel %vm463, %v460, 0
      %v470 = vsel %vm463, %v462, 0
      %472 = vmatprep.subr.mxu0 0.0
      %473 = vmatpush1.xpose.msra.mxu0 %v468
      %474 = vmatprep.subr.mxu0 0.0
      %475 = vmatpush1.xpose.msra.mxu0 %v470
      %476 = vmatprep.subr.mxu0 0.0
      %477 = vmatpush1.xpose.msra.mxu0 0.0
      %478 = vmatprep.subr.mxu0 0.0
      %479 = vmatpush1.xpose.msra.mxu0 0.0
      %480 = vmatprep.subr.mxu0 0.0
      %481 = vmatpush1.xpose.msra.mxu0 0.0
      %482 = vmatprep.subr.mxu0 0.0
      %483 = vmatpush1.xpose.msra.mxu0 0.0
      %484 = vmatprep.subr.mxu0 0.0
      %485 = vmatpush1.xpose.msra.mxu0 0.0
      %486 = vmatprep.subr.mxu0 0.0
      %487 = vmatpush1.xpose.msra.mxu0 0.0
      %488 = vmatprep.subr.mxu0 0.0
      %489 = vmatpush1.xpose.msra.mxu0 0.0
      %490 = vmatprep.subr.mxu0 0.0
      %491 = vmatpush1.xpose.msra.mxu0 0.0
      %492 = vmatprep.subr.mxu0 0.0
      %493 = vmatpush1.xpose.msra.mxu0 0.0
      %494 = vmatprep.subr.mxu0 0.0
      %495 = vmatpush1.xpose.msra.mxu0 0.0
      %496 = vmatprep.subr.mxu0 0.0
      %497 = vmatpush1.xpose.msra.mxu0 0.0
      %498 = vmatprep.subr.mxu0 0.0
      %499 = vmatpush1.xpose.msra.mxu0 0.0
      %500 = vmatprep.subr.mxu0 0.0
      %501 = vmatpush1.xpose.msra.mxu0 0.0
      %502 = vmatprep.subr.mxu0 0.0
      %503 = vmatpush1.xpose.msra.mxu0 0.0
      %504 = vmatprep.subr.mxu0 0.0
      %505 = vmatpush1.xpose.msra.mxu0 0.0
      %506 = vmatprep.subr.mxu0 0.0
      %507 = vmatpush1.xpose.msra.mxu0 0.0
      %508 = vmatprep.subr.mxu0 0.0
      %509 = vmatpush1.xpose.msra.mxu0 0.0
      %510 = vmatprep.subr.mxu0 0.0
      %511 = vmatpush1.xpose.msra.mxu0 0.0
      %512 = vmatprep.subr.mxu0 0.0
      %513 = vmatpush1.xpose.msra.mxu0 0.0
      %514 = vmatprep.subr.mxu0 0.0
      %515 = vmatpush1.xpose.msra.mxu0 0.0
      %516 = vmatprep.subr.mxu0 0.0
      %517 = vmatpush1.xpose.msra.mxu0 0.0
      %518 = vmatprep.subr.mxu0 0.0
      %519 = vmatpush1.xpose.msra.mxu0 0.0
      %520 = vmatprep.subr.mxu0 0.0
      %521 = vmatpush1.xpose.msra.mxu0 0.0
      %522 = vmatprep.subr.mxu0 0.0
      %523 = vmatpush1.xpose.msra.mxu0 0.0
      %524 = vmatprep.subr.mxu0 0.0
      %525 = vmatpush1.xpose.msra.mxu0 0.0
      %526 = vmatprep.subr.mxu0 0.0
      %527 = vmatpush1.xpose.msra.mxu0 0.0
      %528 = vmatprep.subr.mxu0 0.0
      %529 = vmatpush1.xpose.msra.mxu0 0.0
      %530 = vmatprep.subr.mxu0 0.0
      %531 = vmatpush1.xpose.msra.mxu0 0.0
      %532 = vmatprep.subr.mxu0 0.0
      %533 = vmatpush1.xpose.msra.mxu0 0.0
      %534 = vmatprep.subr.mxu0 0.0
      %535 = vmatpush1.xpose.msra.mxu0 0.0
      %536 = vmatprep.mubr.f32.mxu0 0.0
      %537 = vmatmul.mubr.f32.gmra.mrb[0].mxu0 %v464
      %v538 = vpop.f32.mrb[0].mxu0
      %v539 = vadd.f32 0.0, %v538
      %v540 = vpop.f32.mrb[0].mxu0
      %541 = vmatprep.mubr.f32.mxu0 0.0
      %542 = vmatmul.mubr.f32.gmra.mrb[0].mxu0 %v466
      %v543 = vpop.f32.mrb[0].mxu0
      %v544 = vadd.f32 0.0, %v543
      %v545 = vpop.f32.mrb[0].mxu0
      %546 = vdwg.mxu0
      %v547 = vmul.f32 %v539, 0.35355338
      %v548 = vmul.f32 %v544, 0.35355338
      %v549 = vadd.f32 %v547, %v451
      %v550 = vadd.f32 %v548, %v452
      %vm551 = vcmask 130048
      %v552 = vsel %vm551, %v549, -inf
      %553 = vmax.xlane.f32.xlu0 %v552
      %v554 = vpop.xlane.xlu0 %553
      %v555 = vsel %vm551, %v550, -inf
      %556 = vmax.xlane.f32.xlu0 %v555
      %v557 = vpop.xlane.xlu0 %556
      %v558 = vsub.f32 %v549, %v554
      %v559 = vsub.f32 %v550, %v557
      %v560 = vmul.f32 %v558, 1.442695
      %v561 = vpow.pop %v560
      %v562 = vmul.f32 %v559, 1.442695
      %v563 = vpow.pop %v562
      %v564 = vsel %vm551, %v561, 0.0
      %565 = vadd.xlane.f32.xlu0 %v564
      %v566 = vpop.xlane.xlu0 %565
      %v567 = vsel %vm551, %v563, 0.0
      %568 = vadd.xlane.f32.xlu0 %v567
      %v569 = vpop.xlane.xlu0 %568
      %v570 = vrcp.pop %v566
      %v571 = vrcp.pop %v569
      %v572 = vmul.f32 %v561, %v570
      %v573 = vmul.f32 %v563, %v571
      %574 = vrot.lane.b32.xlu0 %v434, 64
      %v575 = vpop.permute.xlu0 %574
      %576 = vrot.lane.b32.xlu0 %v439, 64
      %v577 = vpop.permute.xlu0 %576
      %v581 = vsel %vm551, %v572, 0
      %v584 = vsel %vm551, %v573, 0
      %586 = vmatprep.subr.mxu0 0.0
      %587 = vmatpush1.msra.mxu0 %v575
      %588 = vmatprep.subr.mxu0 0.0
      %589 = vmatpush1.msra.mxu0 %v577
      %590 = vmatprep.subr.mxu0 0.0
      %591 = vmatpush1.msra.mxu0 0.0
      %592 = vmatprep.subr.mxu0 0.0
      %593 = vmatpush1.msra.mxu0 0.0
      %594 = vmatprep.subr.mxu0 0.0
      %595 = vmatpush1.msra.mxu0 0.0
      %596 = vmatprep.subr.mxu0 0.0
      %597 = vmatpush1.msra.mxu0 0.0
      %598 = vmatprep.subr.mxu0 0.0
      %599 = vmatpush1.msra.mxu0 0.0
      %600 = vmatprep.subr.mxu0 0.0
      %601 = vmatpush1.msra.mxu0 0.0
      %602 = vmatprep.subr.mxu0 0.0
      %603 = vmatpush1.msra.mxu0 0.0
      %604 = vmatprep.subr.mxu0 0.0
      %605 = vmatpush1.msra.mxu0 0.0
      %606 = vmatprep.subr.mxu0 0.0
      %607 = vmatpush1.msra.mxu0 0.0
      %608 = vmatprep.subr.mxu0 0.0
      %609 = vmatpush1.msra.mxu0 0.0
      %610 = vmatprep.subr.mxu0 0.0
      %611 = vmatpush1.msra.mxu0 0.0
      %612 = vmatprep.subr.mxu0 0.0
      %613 = vmatpush1.msra.mxu0 0.0
      %614 = vmatprep.subr.mxu0 0.0
      %615 = vmatpush1.msra.mxu0 0.0
      %616 = vmatprep.subr.mxu0 0.0
      %617 = vmatpush1.msra.mxu0 0.0
      %618 = vmatprep.subr.mxu0 0.0
      %619 = vmatpush1.msra.mxu0 0.0
      %620 = vmatprep.subr.mxu0 0.0
      %621 = vmatpush1.msra.mxu0 0.0
      %622 = vmatprep.subr.mxu0 0.0
      %623 = vmatpush1.msra.mxu0 0.0
      %624 = vmatprep.subr.mxu0 0.0
      %625 = vmatpush1.msra.mxu0 0.0
      %626 = vmatprep.subr.mxu0 0.0
      %627 = vmatpush1.msra.mxu0 0.0
      %628 = vmatprep.subr.mxu0 0.0
      %629 = vmatpush1.msra.mxu0 0.0
      %630 = vmatprep.subr.mxu0 0.0
      %631 = vmatpush1.msra.mxu0 0.0
      %632 = vmatprep.subr.mxu0 0.0
      %633 = vmatpush1.msra.mxu0 0.0
      %634 = vmatprep.subr.mxu0 0.0
      %635 = vmatpush1.msra.mxu0 0.0
      %636 = vmatprep.subr.mxu0 0.0
      %637 = vmatpush1.msra.mxu0 0.0
      %638 = vmatprep.subr.mxu0 0.0
      %639 = vmatpush1.msra.mxu0 0.0
      %640 = vmatprep.subr.mxu0 0.0
      %641 = vmatpush1.msra.mxu0 0.0
      %642 = vmatprep.subr.mxu0 0.0
      %643 = vmatpush1.msra.mxu0 0.0
      %644 = vmatprep.subr.mxu0 0.0
      %645 = vmatpush1.msra.mxu0 0.0
      %646 = vmatprep.subr.mxu0 0.0
      %647 = vmatpush1.msra.mxu0 0.0
      %648 = vmatprep.subr.mxu0 0.0
      %649 = vmatpush1.msra.mxu0 0.0
      %650 = vmatprep.mubr.f32.mxu0 0.0
      %651 = vmatmul.mubr.f32.gmra.mrb[0].mxu0 %v581
      %v652 = vpop.f32.mrb[0].mxu0
      %v653 = vadd.f32 0.0, %v652
      %v654 = vpop.f32.mrb[0].mxu0
      %655 = vmatprep.mubr.f32.mxu0 0.0
      %656 = vmatmul.mubr.f32.gmra.mrb[0].mxu0 %v584
      %v657 = vpop.f32.mrb[0].mxu0
      %v658 = vadd.f32 0.0, %v657
      %v659 = vpop.f32.mrb[0].mxu0
      %660 = vdwg.mxu0
      %661 = vrot.lane.b32.xlu0 %v434, 120
      %v662 = vpop.permute.xlu0 %661
      %663 = vrot.lane.b32.xlu0 %v439, 120
      %v664 = vpop.permute.xlu0 %663
      %665 = vrot.lane.b32.xlu0 %v434, 88
      %v666 = vpop.permute.xlu0 %665
      %667 = vrot.lane.b32.xlu0 %v439, 88
      %v668 = vpop.permute.xlu0 %667
      %v669 = vsel %vm463, %v662, 0
      %v671 = vsel %vm463, %v664, 0
      %v673 = vsel %vm463, %v666, 0
      %v675 = vsel %vm463, %v668, 0
      %677 = vmatprep.subr.mxu0 0.0
      %678 = vmatpush1.xpose.msra.mxu0 %v673
      %679 = vmatprep.subr.mxu0 0.0
      %680 = vmatpush1.xpose.msra.mxu0 %v675
      %681 = vmatprep.subr.mxu0 0.0
      %682 = vmatpush1.xpose.msra.mxu0 0.0
      %683 = vmatprep.subr.mxu0 0.0
      %684 = vmatpush1.xpose.msra.mxu0 0.0
      %685 = vmatprep.subr.mxu0 0.0
      %686 = vmatpush1.xpose.msra.mxu0 0.0
      %687 = vmatprep.subr.mxu0 0.0
      %688 = vmatpush1.xpose.msra.mxu0 0.0
      %689 = vmatprep.subr.mxu0 0.0
      %690 = vmatpush1.xpose.msra.mxu0 0.0
      %691 = vmatprep.subr.mxu0 0.0
      %692 = vmatpush1.xpose.msra.mxu0 0.0
      %693 = vmatprep.subr.mxu0 0.0
      %694 = vmatpush1.xpose.msra.mxu0 0.0
      %695 = vmatprep.subr.mxu0 0.0
      %696 = vmatpush1.xpose.msra.mxu0 0.0
      %697 = vmatprep.subr.mxu0 0.0
      %698 = vmatpush1.xpose.msra.mxu0 0.0
      %699 = vmatprep.subr.mxu0 0.0
      %700 = vmatpush1.xpose.msra.mxu0 0.0
      %701 = vmatprep.subr.mxu0 0.0
      %702 = vmatpush1.xpose.msra.mxu0 0.0
      %703 = vmatprep.subr.mxu0 0.0
      %704 = vmatpush1.xpose.msra.mxu0 0.0
      %705 = vmatprep.subr.mxu0 0.0
      %706 = vmatpush1.xpose.msra.mxu0 0.0
      %707 = vmatprep.subr.mxu0 0.0
      %708 = vmatpush1.xpose.msra.mxu0 0.0
      %709 = vmatprep.subr.mxu0 0.0
      %710 = vmatpush1.xpose.msra.mxu0 0.0
      %711 = vmatprep.subr.mxu0 0.0
      %712 = vmatpush1.xpose.msra.mxu0 0.0
      %713 = vmatprep.subr.mxu0 0.0
      %714 = vmatpush1.xpose.msra.mxu0 0.0
      %715 = vmatprep.subr.mxu0 0.0
      %716 = vmatpush1.xpose.msra.mxu0 0.0
      %717 = vmatprep.subr.mxu0 0.0
      %718 = vmatpush1.xpose.msra.mxu0 0.0
      %719 = vmatprep.subr.mxu0 0.0
      %720 = vmatpush1.xpose.msra.mxu0 0.0
      %721 = vmatprep.subr.mxu0 0.0
      %722 = vmatpush1.xpose.msra.mxu0 0.0
      %723 = vmatprep.subr.mxu0 0.0
      %724 = vmatpush1.xpose.msra.mxu0 0.0
      %725 = vmatprep.subr.mxu0 0.0
      %726 = vmatpush1.xpose.msra.mxu0 0.0
      %727 = vmatprep.subr.mxu0 0.0
      %728 = vmatpush1.xpose.msra.mxu0 0.0
      %729 = vmatprep.subr.mxu0 0.0
      %730 = vmatpush1.xpose.msra.mxu0 0.0
      %731 = vmatprep.subr.mxu0 0.0
      %732 = vmatpush1.xpose.msra.mxu0 0.0
      %733 = vmatprep.subr.mxu0 0.0
      %734 = vmatpush1.xpose.msra.mxu0 0.0
      %735 = vmatprep.subr.mxu0 0.0
      %736 = vmatpush1.xpose.msra.mxu0 0.0
      %737 = vmatprep.subr.mxu0 0.0
      %738 = vmatpush1.xpose.msra.mxu0 0.0
      %739 = vmatprep.subr.mxu0 0.0
      %740 = vmatpush1.xpose.msra.mxu0 0.0
      %741 = vmatprep.mubr.f32.mxu0 0.0
      %742 = vmatmul.mubr.f32.gmra.mrb[0].mxu0 %v669
      %v743 = vpop.f32.mrb[0].mxu0
      %v744 = vadd.f32 0.0, %v743
      %v745 = vpop.f32.mrb[0].mxu0
      %746 = vmatprep.mubr.f32.mxu0 0.0
      %747 = vmatmul.mubr.f32.gmra.mrb[0].mxu0 %v671
      %v748 = vpop.f32.mrb[0].mxu0
      %v749 = vadd.f32 0.0, %v748
      %v750 = vpop.f32.mrb[0].mxu0
      %751 = vdwg.mxu0
      %v752 = vmul.f32 %v744, 0.35355338
      %v753 = vmul.f32 %v749, 0.35355338
      %v754 = vadd.f32 %v752, %v451
      %v755 = vadd.f32 %v753, %v452
      %v756 = vsel %vm551, %v754, -inf
      %757 = vmax.xlane.f32.xlu0 %v756
      %v758 = vpop.xlane.xlu0 %757
      %v759 = vsel %vm551, %v755, -inf
      %760 = vmax.xlane.f32.xlu0 %v759
      %v761 = vpop.xlane.xlu0 %760
      %v762 = vsub.f32 %v754, %v758
      %v763 = vsub.f32 %v755, %v761
      %v764 = vmul.f32 %v762, 1.442695
      %v765 = vpow.pop %v764
      %v766 = vmul.f32 %v763, 1.442695
      %v767 = vpow.pop %v766
      %v768 = vsel %vm551, %v765, 0.0
      %769 = vadd.xlane.f32.xlu0 %v768
      %v770 = vpop.xlane.xlu0 %769
      %v771 = vsel %vm551, %v767, 0.0
      %772 = vadd.xlane.f32.xlu0 %v771
      %v773 = vpop.xlane.xlu0 %772
      %v774 = vrcp.pop %v770
      %v775 = vrcp.pop %v773
      %v776 = vmul.f32 %v765, %v774
      %v777 = vmul.f32 %v767, %v775
      %778 = vrot.lane.b32.xlu0 %v434, 56
      %v779 = vpop.permute.xlu0 %778
      %780 = vrot.lane.b32.xlu0 %v439, 56
      %v781 = vpop.permute.xlu0 %780
      %v785 = vsel %vm551, %v776, 0
      %v788 = vsel %vm551, %v777, 0
      %790 = vmatprep.subr.mxu0 0.0
      %791 = vmatpush1.msra.mxu0 %v779
      %792 = vmatprep.subr.mxu0 0.0
      %793 = vmatpush1.msra.mxu0 %v781
      %794 = vmatprep.subr.mxu0 0.0
      %795 = vmatpush1.msra.mxu0 0.0
      %796 = vmatprep.subr.mxu0 0.0
      %797 = vmatpush1.msra.mxu0 0.0
      %798 = vmatprep.subr.mxu0 0.0
      %799 = vmatpush1.msra.mxu0 0.0
      %800 = vmatprep.subr.mxu0 0.0
      %801 = vmatpush1.msra.mxu0 0.0
      %802 = vmatprep.subr.mxu0 0.0
      %803 = vmatpush1.msra.mxu0 0.0
      %804 = vmatprep.subr.mxu0 0.0
      %805 = vmatpush1.msra.mxu0 0.0
      %806 = vmatprep.subr.mxu0 0.0
      %807 = vmatpush1.msra.mxu0 0.0
      %808 = vmatprep.subr.mxu0 0.0
      %809 = vmatpush1.msra.mxu0 0.0
      %810 = vmatprep.subr.mxu0 0.0
      %811 = vmatpush1.msra.mxu0 0.0
      %812 = vmatprep.subr.mxu0 0.0
      %813 = vmatpush1.msra.mxu0 0.0
      %814 = vmatprep.subr.mxu0 0.0
      %815 = vmatpush1.msra.mxu0 0.0
      %816 = vmatprep.subr.mxu0 0.0
      %817 = vmatpush1.msra.mxu0 0.0
      %818 = vmatprep.subr.mxu0 0.0
      %819 = vmatpush1.msra.mxu0 0.0
      %820 = vmatprep.subr.mxu0 0.0
      %821 = vmatpush1.msra.mxu0 0.0
      %822 = vmatprep.subr.mxu0 0.0
      %823 = vmatpush1.msra.mxu0 0.0
      %824 = vmatprep.subr.mxu0 0.0
      %825 = vmatpush1.msra.mxu0 0.0
      %826 = vmatprep.subr.mxu0 0.0
      %827 = vmatpush1.msra.mxu0 0.0
      %828 = vmatprep.subr.mxu0 0.0
      %829 = vmatpush1.msra.mxu0 0.0
      %830 = vmatprep.subr.mxu0 0.0
      %831 = vmatpush1.msra.mxu0 0.0
      %832 = vmatprep.subr.mxu0 0.0
      %833 = vmatpush1.msra.mxu0 0.0
      %834 = vmatprep.subr.mxu0 0.0
      %835 = vmatpush1.msra.mxu0 0.0
      %836 = vmatprep.subr.mxu0 0.0
      %837 = vmatpush1.msra.mxu0 0.0
      %838 = vmatprep.subr.mxu0 0.0
      %839 = vmatpush1.msra.mxu0 0.0
      %840 = vmatprep.subr.mxu0 0.0
      %841 = vmatpush1.msra.mxu0 0.0
      %842 = vmatprep.subr.mxu0 0.0
      %843 = vmatpush1.msra.mxu0 0.0
      %844 = vmatprep.subr.mxu0 0.0
      %845 = vmatpush1.msra.mxu0 0.0
      %846 = vmatprep.subr.mxu0 0.0
      %847 = vmatpush1.msra.mxu0 0.0
      %848 = vmatprep.subr.mxu0 0.0
      %849 = vmatpush1.msra.mxu0 0.0
      %850 = vmatprep.subr.mxu0 0.0
      %851 = vmatpush1.msra.mxu0 0.0
      %852 = vmatprep.subr.mxu0 0.0
      %853 = vmatpush1.msra.mxu0 0.0
      %854 = vmatprep.mubr.f32.mxu0 0.0
      %855 = vmatmul.mubr.f32.gmra.mrb[0].mxu0 %v785
      %v856 = vpop.f32.mrb[0].mxu0
      %v857 = vadd.f32 0.0, %v856
      %v858 = vpop.f32.mrb[0].mxu0
      %859 = vmatprep.mubr.f32.mxu0 0.0
      %860 = vmatmul.mubr.f32.gmra.mrb[0].mxu0 %v788
      %v861 = vpop.f32.mrb[0].mxu0
      %v862 = vadd.f32 0.0, %v861
      %v863 = vpop.f32.mrb[0].mxu0
      %864 = vdwg.mxu0
      %v866 = vsel %vm463, %v857, 0
      %v869 = vsel %vm463, %v862, 0
      %871 = vmatprep.subr.mxu0 0.0
      %872 = vmatpush1.msra.mxu0 %v454
      %873 = vmatprep.subr.mxu0 0.0
      %874 = vmatpush1.msra.mxu0 0.0
      %875 = vmatprep.subr.mxu0 0.0
      %876 = vmatpush1.msra.mxu0 0.0
      %877 = vmatprep.subr.mxu0 0.0
      %878 = vmatpush1.msra.mxu0 0.0
      %879 = vmatprep.subr.mxu0 0.0
      %880 = vmatpush1.msra.mxu0 0.0
      %881 = vmatprep.subr.mxu0 0.0
      %882 = vmatpush1.msra.mxu0 0.0
      %883 = vmatprep.subr.mxu0 0.0
      %884 = vmatpush1.msra.mxu0 0.0
      %885 = vmatprep.subr.mxu0 0.0
      %886 = vmatpush1.msra.mxu0 0.0
      %887 = vmatprep.subr.mxu0 0.0
      %888 = vmatpush1.msra.mxu0 0.0
      %889 = vmatprep.subr.mxu0 0.0
      %890 = vmatpush1.msra.mxu0 0.0
      %891 = vmatprep.subr.mxu0 0.0
      %892 = vmatpush1.msra.mxu0 0.0
      %893 = vmatprep.subr.mxu0 0.0
      %894 = vmatpush1.msra.mxu0 0.0
      %895 = vmatprep.subr.mxu0 0.0
      %896 = vmatpush1.msra.mxu0 0.0
      %897 = vmatprep.subr.mxu0 0.0
      %898 = vmatpush1.msra.mxu0 0.0
      %899 = vmatprep.subr.mxu0 0.0
      %900 = vmatpush1.msra.mxu0 0.0
      %901 = vmatprep.subr.mxu0 0.0
      %902 = vmatpush1.msra.mxu0 0.0
      %903 = vmatprep.subr.mxu0 0.0
      %904 = vmatpush1.msra.mxu0 0.0
      %905 = vmatprep.subr.mxu0 0.0
      %906 = vmatpush1.msra.mxu0 0.0
      %907 = vmatprep.subr.mxu0 0.0
      %908 = vmatpush1.msra.mxu0 0.0
      %909 = vmatprep.subr.mxu0 0.0
      %910 = vmatpush1.msra.mxu0 0.0
      %911 = vmatprep.subr.mxu0 0.0
      %912 = vmatpush1.msra.mxu0 0.0
      %913 = vmatprep.subr.mxu0 0.0
      %914 = vmatpush1.msra.mxu0 0.0
      %915 = vmatprep.subr.mxu0 0.0
      %916 = vmatpush1.msra.mxu0 0.0
      %917 = vmatprep.subr.mxu0 0.0
      %918 = vmatpush1.msra.mxu0 0.0
      %919 = vmatprep.subr.mxu0 0.0
      %920 = vmatpush1.msra.mxu0 0.0
      %921 = vmatprep.subr.mxu0 0.0
      %922 = vmatpush1.msra.mxu0 0.0
      %923 = vmatprep.subr.mxu0 0.0
      %924 = vmatpush1.msra.mxu0 0.0
      %925 = vmatprep.subr.mxu0 0.0
      %926 = vmatpush1.msra.mxu0 0.0
      %927 = vmatprep.subr.mxu0 0.0
      %928 = vmatpush1.msra.mxu0 0.0
      %929 = vmatprep.subr.mxu0 0.0
      %930 = vmatpush1.msra.mxu0 0.0
      %931 = vmatprep.subr.mxu0 0.0
      %932 = vmatpush1.msra.mxu0 0.0
      %933 = vmatprep.subr.mxu0 0.0
      %934 = vmatpush1.msra.mxu0 0.0
      %935 = vmatprep.mubr.f32.mxu0 0.0
      %936 = vmatmul.mubr.f32.gmra.mrb[0].mxu0 %v866
      %v937 = vpop.f32.mrb[0].mxu0
      %v938 = vadd.f32 0.0, %v937
      %v939 = vpop.f32.mrb[0].mxu0
      %940 = vmatprep.mubr.f32.mxu0 0.0
      %941 = vmatmul.mubr.f32.gmra.mrb[0].mxu0 %v869
      %v942 = vpop.f32.mrb[0].mxu0
      %v943 = vadd.f32 0.0, %v942
      %v944 = vpop.f32.mrb[0].mxu0
      %945 = vdwg.mxu0
      %v947 = vsel %vm463, %v653, 0
      %v950 = vsel %vm463, %v658, 0
      %952 = vmatprep.subr.mxu0 0.0
      %953 = vmatpush1.msra.mxu0 %v453
      %954 = vmatprep.subr.mxu0 0.0
      %955 = vmatpush1.msra.mxu0 0.0
      %956 = vmatprep.subr.mxu0 0.0
      %957 = vmatpush1.msra.mxu0 0.0
      %958 = vmatprep.subr.mxu0 0.0
      %959 = vmatpush1.msra.mxu0 0.0
      %960 = vmatprep.subr.mxu0 0.0
      %961 = vmatpush1.msra.mxu0 0.0
      %962 = vmatprep.subr.mxu0 0.0
      %963 = vmatpush1.msra.mxu0 0.0
      %964 = vmatprep.subr.mxu0 0.0
      %965 = vmatpush1.msra.mxu0 0.0
      %966 = vmatprep.subr.mxu0 0.0
      %967 = vmatpush1.msra.mxu0 0.0
      %968 = vmatprep.subr.mxu0 0.0
      %969 = vmatpush1.msra.mxu0 0.0
      %970 = vmatprep.subr.mxu0 0.0
      %971 = vmatpush1.msra.mxu0 0.0
      %972 = vmatprep.subr.mxu0 0.0
      %973 = vmatpush1.msra.mxu0 0.0
      %974 = vmatprep.subr.mxu0 0.0
      %975 = vmatpush1.msra.mxu0 0.0
      %976 = vmatprep.subr.mxu0 0.0
      %977 = vmatpush1.msra.mxu0 0.0
      %978 = vmatprep.subr.mxu0 0.0
      %979 = vmatpush1.msra.mxu0 0.0
      %980 = vmatprep.subr.mxu0 0.0
      %981 = vmatpush1.msra.mxu0 0.0
      %982 = vmatprep.subr.mxu0 0.0
      %983 = vmatpush1.msra.mxu0 0.0
      %984 = vmatprep.subr.mxu0 0.0
      %985 = vmatpush1.msra.mxu0 0.0
      %986 = vmatprep.subr.mxu0 0.0
      %987 = vmatpush1.msra.mxu0 0.0
      %988 = vmatprep.subr.mxu0 0.0
      %989 = vmatpush1.msra.mxu0 0.0
      %990 = vmatprep.subr.mxu0 0.0
      %991 = vmatpush1.msra.mxu0 0.0
      %992 = vmatprep.subr.mxu0 0.0
      %993 = vmatpush1.msra.mxu0 0.0
      %994 = vmatprep.subr.mxu0 0.0
      %995 = vmatpush1.msra.mxu0 0.0
      %996 = vmatprep.subr.mxu0 0.0
      %997 = vmatpush1.msra.mxu0 0.0
      %998 = vmatprep.subr.mxu0 0.0
      %999 = vmatpush1.msra.mxu0 0.0
      %1000 = vmatprep.subr.mxu0 0.0
      %1001 = vmatpush1.msra.mxu0 0.0
      %1002 = vmatprep.subr.mxu0 0.0
      %1003 = vmatpush1.msra.mxu0 0.0
      %1004 = vmatprep.subr.mxu0 0.0
      %1005 = vmatpush1.msra.mxu0 0.0
      %1006 = vmatprep.subr.mxu0 0.0
      %1007 = vmatpush1.msra.mxu0 0.0
      %1008 = vmatprep.subr.mxu0 0.0
      %1009 = vmatpush1.msra.mxu0 0.0
      %1010 = vmatprep.subr.mxu0 0.0
      %1011 = vmatpush1.msra.mxu0 0.0
      %1012 = vmatprep.subr.mxu0 0.0
      %1013 = vmatpush1.msra.mxu0 0.0
      %1014 = vmatprep.subr.mxu0 0.0
      %1015 = vmatpush1.msra.mxu0 0.0
      %1016 = vmatprep.mubr.f32.mxu0 0.0
      %1017 = vmatmul.mubr.f32.gmra.mrb[0].mxu0 %v947
      %v1018 = vpop.f32.mrb[0].mxu0
      %v1019 = vadd.f32 %v938, %v1018
      %v1020 = vpop.f32.mrb[0].mxu0
      %1021 = vmatprep.mubr.f32.mxu0 0.0
      %1022 = vmatmul.mubr.f32.gmra.mrb[0].mxu0 %v950
      %v1023 = vpop.f32.mrb[0].mxu0
      %v1024 = vadd.f32 %v943, %v1023
      %v1025 = vpop.f32.mrb[0].mxu0
      %1026 = vdwg.mxu0
      %1027 = vrot.lane.b32.xlu0 %v434, 112
      %v1028 = vpop.permute.xlu0 %1027
      %1029 = vrot.lane.b32.xlu0 %v439, 112
      %v1030 = vpop.permute.xlu0 %1029
      %1031 = vrot.lane.b32.xlu0 %v434, 80
      %v1032 = vpop.permute.xlu0 %1031
      %1033 = vrot.lane.b32.xlu0 %v439, 80
      %v1034 = vpop.permute.xlu0 %1033
      %v1035 = vsel %vm463, %v1028, 0
      %v1037 = vsel %vm463, %v1030, 0
      %v1039 = vsel %vm463, %v1032, 0
      %v1041 = vsel %vm463, %v1034, 0
      %1043 = vmatprep.subr.mxu0 0.0
      %1044 = vmatpush1.xpose.msra.mxu0 %v1039
      %1045 = vmatprep.subr.mxu0 0.0
      %1046 = vmatpush1.xpose.msra.mxu0 %v1041
      %1047 = vmatprep.subr.mxu0 0.0
      %1048 = vmatpush1.xpose.msra.mxu0 0.0
      %1049 = vmatprep.subr.mxu0 0.0
      %1050 = vmatpush1.xpose.msra.mxu0 0.0
      %1051 = vmatprep.subr.mxu0 0.0
      %1052 = vmatpush1.xpose.msra.mxu0 0.0
      %1053 = vmatprep.subr.mxu0 0.0
      %1054 = vmatpush1.xpose.msra.mxu0 0.0
      %1055 = vmatprep.subr.mxu0 0.0
      %1056 = vmatpush1.xpose.msra.mxu0 0.0
      %1057 = vmatprep.subr.mxu0 0.0
      %1058 = vmatpush1.xpose.msra.mxu0 0.0
      %1059 = vmatprep.subr.mxu0 0.0
      %1060 = vmatpush1.xpose.msra.mxu0 0.0
      %1061 = vmatprep.subr.mxu0 0.0
      %1062 = vmatpush1.xpose.msra.mxu0 0.0
      %1063 = vmatprep.subr.mxu0 0.0
      %1064 = vmatpush1.xpose.msra.mxu0 0.0
      %1065 = vmatprep.subr.mxu0 0.0
      %1066 = vmatpush1.xpose.msra.mxu0 0.0
      %1067 = vmatprep.subr.mxu0 0.0
      %1068 = vmatpush1.xpose.msra.mxu0 0.0
      %1069 = vmatprep.subr.mxu0 0.0
      %1070 = vmatpush1.xpose.msra.mxu0 0.0
      %1071 = vmatprep.subr.mxu0 0.0
      %1072 = vmatpush1.xpose.msra.mxu0 0.0
      %1073 = vmatprep.subr.mxu0 0.0
      %1074 = vmatpush1.xpose.msra.mxu0 0.0
      %1075 = vmatprep.subr.mxu0 0.0
      %1076 = vmatpush1.xpose.msra.mxu0 0.0
      %1077 = vmatprep.subr.mxu0 0.0
      %1078 = vmatpush1.xpose.msra.mxu0 0.0
      %1079 = vmatprep.subr.mxu0 0.0
      %1080 = vmatpush1.xpose.msra.mxu0 0.0
      %1081 = vmatprep.subr.mxu0 0.0
      %1082 = vmatpush1.xpose.msra.mxu0 0.0
      %1083 = vmatprep.subr.mxu0 0.0
      %1084 = vmatpush1.xpose.msra.mxu0 0.0
      %1085 = vmatprep.subr.mxu0 0.0
      %1086 = vmatpush1.xpose.msra.mxu0 0.0
      %1087 = vmatprep.subr.mxu0 0.0
      %1088 = vmatpush1.xpose.msra.mxu0 0.0
      %1089 = vmatprep.subr.mxu0 0.0
      %1090 = vmatpush1.xpose.msra.mxu0 0.0
      %1091 = vmatprep.subr.mxu0 0.0
      %1092 = vmatpush1.xpose.msra.mxu0 0.0
      %1093 = vmatprep.subr.mxu0 0.0
      %1094 = vmatpush1.xpose.msra.mxu0 0.0
      %1095 = vmatprep.subr.mxu0 0.0
      %1096 = vmatpush1.xpose.msra.mxu0 0.0
      %1097 = vmatprep.subr.mxu0 0.0
      %1098 = vmatpush1.xpose.msra.mxu0 0.0
      %1099 = vmatprep.subr.mxu0 0.0
      %1100 = vmatpush1.xpose.msra.mxu0 0.0
      %1101 = vmatprep.subr.mxu0 0.0
      %1102 = vmatpush1.xpose.msra.mxu0 0.0
      %1103 = vmatprep.subr.mxu0 0.0
      %1104 = vmatpush1.xpose.msra.mxu0 0.0
      %1105 = vmatprep.subr.mxu0 0.0
      %1106 = vmatpush1.xpose.msra.mxu0 0.0
      %1107 = vmatprep.mubr.f32.mxu0 0.0
      %1108 = vmatmul.mubr.f32.gmra.mrb[0].mxu0 %v1035
      %v1109 = vpop.f32.mrb[0].mxu0
      %v1110 = vadd.f32 0.0, %v1109
      %v1111 = vpop.f32.mrb[0].mxu0
      %1112 = vmatprep.mubr.f32.mxu0 0.0
      %1113 = vmatmul.mubr.f32.gmra.mrb[0].mxu0 %v1037
      %v1114 = vpop.f32.mrb[0].mxu0
      %v1115 = vadd.f32 0.0, %v1114
      %v1116 = vpop.f32.mrb[0].mxu0
      %1117 = vdwg.mxu0
      %v1118 = vmul.f32 %v1110, 0.35355338
      %v1119 = vmul.f32 %v1115, 0.35355338
      %v1120 = vadd.f32 %v1118, %v451
      %v1121 = vadd.f32 %v1119, %v452
      %v1122 = vsel %vm551, %v1120, -inf
      %1123 = vmax.xlane.f32.xlu0 %v1122
      %v1124 = vpop.xlane.xlu0 %1123
      %v1125 = vsel %vm551, %v1121, -inf
      %1126 = vmax.xlane.f32.xlu0 %v1125
      %v1127 = vpop.xlane.xlu0 %1126
      %v1128 = vsub.f32 %v1120, %v1124
      %v1129 = vsub.f32 %v1121, %v1127
      %v1130 = vmul.f32 %v1128, 1.442695
      %v1131 = vpow.pop %v1130
      %v1132 = vmul.f32 %v1129, 1.442695
      %v1133 = vpow.pop %v1132
      %v1134 = vsel %vm551, %v1131, 0.0
      %1135 = vadd.xlane.f32.xlu0 %v1134
      %v1136 = vpop.xlane.xlu0 %1135
      %v1137 = vsel %vm551, %v1133, 0.0
      %1138 = vadd.xlane.f32.xlu0 %v1137
      %v1139 = vpop.xlane.xlu0 %1138
      %v1140 = vrcp.pop %v1136
      %v1141 = vrcp.pop %v1139
      %v1142 = vmul.f32 %v1131, %v1140
      %v1143 = vmul.f32 %v1133, %v1141
      %1144 = vrot.lane.b32.xlu0 %v434, 48
      %v1145 = vpop.permute.xlu0 %1144
      %1146 = vrot.lane.b32.xlu0 %v439, 48
      %v1147 = vpop.permute.xlu0 %1146
      %v1151 = vsel %vm551, %v1142, 0
      %v1154 = vsel %vm551, %v1143, 0
      %1156 = vmatprep.subr.mxu0 0.0
      %1157 = vmatpush1.msra.mxu0 %v1145
      %1158 = vmatprep.subr.mxu0 0.0
      %1159 = vmatpush1.msra.mxu0 %v1147
      %1160 = vmatprep.subr.mxu0 0.0
      %1161 = vmatpush1.msra.mxu0 0.0
      %1162 = vmatprep.subr.mxu0 0.0
      %1163 = vmatpush1.msra.mxu0 0.0
      %1164 = vmatprep.subr.mxu0 0.0
      %1165 = vmatpush1.msra.mxu0 0.0
      %1166 = vmatprep.subr.mxu0 0.0
      %1167 = vmatpush1.msra.mxu0 0.0
      %1168 = vmatprep.subr.mxu0 0.0
      %1169 = vmatpush1.msra.mxu0 0.0
      %1170 = vmatprep.subr.mxu0 0.0
      %1171 = vmatpush1.msra.mxu0 0.0
      %1172 = vmatprep.subr.mxu0 0.0
      %1173 = vmatpush1.msra.mxu0 0.0
      %1174 = vmatprep.subr.mxu0 0.0
      %1175 = vmatpush1.msra.mxu0 0.0
      %1176 = vmatprep.subr.mxu0 0.0
      %1177 = vmatpush1.msra.mxu0 0.0
      %1178 = vmatprep.subr.mxu0 0.0
      %1179 = vmatpush1.msra.mxu0 0.0
      %1180 = vmatprep.subr.mxu0 0.0
      %1181 = vmatpush1.msra.mxu0 0.0
      %1182 = vmatprep.subr.mxu0 0.0
      %1183 = vmatpush1.msra.mxu0 0.0
      %1184 = vmatprep.subr.mxu0 0.0
      %1185 = vmatpush1.msra.mxu0 0.0
      %1186 = vmatprep.subr.mxu0 0.0
      %1187 = vmatpush1.msra.mxu0 0.0
      %1188 = vmatprep.subr.mxu0 0.0
      %1189 = vmatpush1.msra.mxu0 0.0
      %1190 = vmatprep.subr.mxu0 0.0
      %1191 = vmatpush1.msra.mxu0 0.0
      %1192 = vmatprep.subr.mxu0 0.0
      %1193 = vmatpush1.msra.mxu0 0.0
      %1194 = vmatprep.subr.mxu0 0.0
      %1195 = vmatpush1.msra.mxu0 0.0
      %1196 = vmatprep.subr.mxu0 0.0
      %1197 = vmatpush1.msra.mxu0 0.0
      %1198 = vmatprep.subr.mxu0 0.0
      %1199 = vmatpush1.msra.mxu0 0.0
      %1200 = vmatprep.subr.mxu0 0.0
      %1201 = vmatpush1.msra.mxu0 0.0
      %1202 = vmatprep.subr.mxu0 0.0
      %1203 = vmatpush1.msra.mxu0 0.0
      %1204 = vmatprep.subr.mxu0 0.0
      %1205 = vmatpush1.msra.mxu0 0.0
      %1206 = vmatprep.subr.mxu0 0.0
      %1207 = vmatpush1.msra.mxu0 0.0
      %1208 = vmatprep.subr.mxu0 0.0
      %1209 = vmatpush1.msra.mxu0 0.0
      %1210 = vmatprep.subr.mxu0 0.0
      %1211 = vmatpush1.msra.mxu0 0.0
      %1212 = vmatprep.subr.mxu0 0.0
      %1213 = vmatpush1.msra.mxu0 0.0
      %1214 = vmatprep.subr.mxu0 0.0
      %1215 = vmatpush1.msra.mxu0 0.0
      %1216 = vmatprep.subr.mxu0 0.0
      %1217 = vmatpush1.msra.mxu0 0.0
      %1218 = vmatprep.subr.mxu0 0.0
      %1219 = vmatpush1.msra.mxu0 0.0
      %1220 = vmatprep.mubr.f32.mxu0 0.0
      %1221 = vmatmul.mubr.f32.gmra.mrb[0].mxu0 %v1151
      %v1222 = vpop.f32.mrb[0].mxu0
      %v1223 = vadd.f32 0.0, %v1222
      %v1224 = vpop.f32.mrb[0].mxu0
      %1225 = vmatprep.mubr.f32.mxu0 0.0
      %1226 = vmatmul.mubr.f32.gmra.mrb[0].mxu0 %v1154
      %v1227 = vpop.f32.mrb[0].mxu0
      %v1228 = vadd.f32 0.0, %v1227
      %v1229 = vpop.f32.mrb[0].mxu0
      %1230 = vdwg.mxu0
      %v1232 = vsel %vm463, %v1223, 0
      %v1235 = vsel %vm463, %v1228, 0
      %1237 = vmatprep.subr.mxu0 0.0
      %1238 = vmatpush1.msra.mxu0 %v455
      %1239 = vmatprep.subr.mxu0 0.0
      %1240 = vmatpush1.msra.mxu0 0.0
      %1241 = vmatprep.subr.mxu0 0.0
      %1242 = vmatpush1.msra.mxu0 0.0
      %1243 = vmatprep.subr.mxu0 0.0
      %1244 = vmatpush1.msra.mxu0 0.0
      %1245 = vmatprep.subr.mxu0 0.0
      %1246 = vmatpush1.msra.mxu0 0.0
      %1247 = vmatprep.subr.mxu0 0.0
      %1248 = vmatpush1.msra.mxu0 0.0
      %1249 = vmatprep.subr.mxu0 0.0
      %1250 = vmatpush1.msra.mxu0 0.0
      %1251 = vmatprep.subr.mxu0 0.0
      %1252 = vmatpush1.msra.mxu0 0.0
      %1253 = vmatprep.subr.mxu0 0.0
      %1254 = vmatpush1.msra.mxu0 0.0
      %1255 = vmatprep.subr.mxu0 0.0
      %1256 = vmatpush1.msra.mxu0 0.0
      %1257 = vmatprep.subr.mxu0 0.0
      %1258 = vmatpush1.msra.mxu0 0.0
      %1259 = vmatprep.subr.mxu0 0.0
      %1260 = vmatpush1.msra.mxu0 0.0
      %1261 = vmatprep.subr.mxu0 0.0
      %1262 = vmatpush1.msra.mxu0 0.0
      %1263 = vmatprep.subr.mxu0 0.0
      %1264 = vmatpush1.msra.mxu0 0.0
      %1265 = vmatprep.subr.mxu0 0.0
      %1266 = vmatpush1.msra.mxu0 0.0
      %1267 = vmatprep.subr.mxu0 0.0
      %1268 = vmatpush1.msra.mxu0 0.0
      %1269 = vmatprep.subr.mxu0 0.0
      %1270 = vmatpush1.msra.mxu0 0.0
      %1271 = vmatprep.subr.mxu0 0.0
      %1272 = vmatpush1.msra.mxu0 0.0
      %1273 = vmatprep.subr.mxu0 0.0
      %1274 = vmatpush1.msra.mxu0 0.0
      %1275 = vmatprep.subr.mxu0 0.0
      %1276 = vmatpush1.msra.mxu0 0.0
      %1277 = vmatprep.subr.mxu0 0.0
      %1278 = vmatpush1.msra.mxu0 0.0
      %1279 = vmatprep.subr.mxu0 0.0
      %1280 = vmatpush1.msra.mxu0 0.0
      %1281 = vmatprep.subr.mxu0 0.0
      %1282 = vmatpush1.msra.mxu0 0.0
      %1283 = vmatprep.subr.mxu0 0.0
      %1284 = vmatpush1.msra.mxu0 0.0
      %1285 = vmatprep.subr.mxu0 0.0
      %1286 = vmatpush1.msra.mxu0 0.0
      %1287 = vmatprep.subr.mxu0 0.0
      %1288 = vmatpush1.msra.mxu0 0.0
      %1289 = vmatprep.subr.mxu0 0.0
      %1290 = vmatpush1.msra.mxu0 0.0
      %1291 = vmatprep.subr.mxu0 0.0
      %1292 = vmatpush1.msra.mxu0 0.0
      %1293 = vmatprep.subr.mxu0 0.0
      %1294 = vmatpush1.msra.mxu0 0.0
      %1295 = vmatprep.subr.mxu0 0.0
      %1296 = vmatpush1.msra.mxu0 0.0
      %1297 = vmatprep.subr.mxu0 0.0
      %1298 = vmatpush1.msra.mxu0 0.0
      %1299 = vmatprep.subr.mxu0 0.0
      %1300 = vmatpush1.msra.mxu0 0.0
      %1301 = vmatprep.mubr.f32.mxu0 0.0
      %1302 = vmatmul.mubr.f32.gmra.mrb[0].mxu0 %v1232
      %v1303 = vpop.f32.mrb[0].mxu0
      %v1304 = vadd.f32 0.0, %v1303
      %v1305 = vpop.f32.mrb[0].mxu0
      %1306 = vmatprep.mubr.f32.mxu0 0.0
      %1307 = vmatmul.mubr.f32.gmra.mrb[0].mxu0 %v1235
      %v1308 = vpop.f32.mrb[0].mxu0
      %v1309 = vadd.f32 0.0, %v1308
      %v1310 = vpop.f32.mrb[0].mxu0
      %1311 = vdwg.mxu0
      %v1312 = vadd.f32 %v1019, %v1304
      %v1313 = vadd.f32 %v1024, %v1309
      %1314 = vrot.lane.b32.xlu0 %v434, 104
      %v1315 = vpop.permute.xlu0 %1314
      %1316 = vrot.lane.b32.xlu0 %v439, 104
      %v1317 = vpop.permute.xlu0 %1316
      %1318 = vrot.lane.b32.xlu0 %v434, 72
      %v1319 = vpop.permute.xlu0 %1318
      %1320 = vrot.lane.b32.xlu0 %v439, 72
      %v1321 = vpop.permute.xlu0 %1320
      %v1322 = vsel %vm463, %v1315, 0
      %v1324 = vsel %vm463, %v1317, 0
      %v1326 = vsel %vm463, %v1319, 0
      %v1328 = vsel %vm463, %v1321, 0
      %1330 = vmatprep.subr.mxu0 0.0
      %1331 = vmatpush1.xpose.msra.mxu0 %v1326
      %1332 = vmatprep.subr.mxu0 0.0
      %1333 = vmatpush1.xpose.msra.mxu0 %v1328
      %1334 = vmatprep.subr.mxu0 0.0
      %1335 = vmatpush1.xpose.msra.mxu0 0.0
      %1336 = vmatprep.subr.mxu0 0.0
      %1337 = vmatpush1.xpose.msra.mxu0 0.0
      %1338 = vmatprep.subr.mxu0 0.0
      %1339 = vmatpush1.xpose.msra.mxu0 0.0
      %1340 = vmatprep.subr.mxu0 0.0
      %1341 = vmatpush1.xpose.msra.mxu0 0.0
      %1342 = vmatprep.subr.mxu0 0.0
      %1343 = vmatpush1.xpose.msra.mxu0 0.0
      %1344 = vmatprep.subr.mxu0 0.0
      %1345 = vmatpush1.xpose.msra.mxu0 0.0
      %1346 = vmatprep.subr.mxu0 0.0
      %1347 = vmatpush1.xpose.msra.mxu0 0.0
      %1348 = vmatprep.subr.mxu0 0.0
      %1349 = vmatpush1.xpose.msra.mxu0 0.0
      %1350 = vmatprep.subr.mxu0 0.0
      %1351 = vmatpush1.xpose.msra.mxu0 0.0
      %1352 = vmatprep.subr.mxu0 0.0
      %1353 = vmatpush1.xpose.msra.mxu0 0.0
      %1354 = vmatprep.subr.mxu0 0.0
      %1355 = vmatpush1.xpose.msra.mxu0 0.0
      %1356 = vmatprep.subr.mxu0 0.0
      %1357 = vmatpush1.xpose.msra.mxu0 0.0
      %1358 = vmatprep.subr.mxu0 0.0
      %1359 = vmatpush1.xpose.msra.mxu0 0.0
      %1360 = vmatprep.subr.mxu0 0.0
      %1361 = vmatpush1.xpose.msra.mxu0 0.0
      %1362 = vmatprep.subr.mxu0 0.0
      %1363 = vmatpush1.xpose.msra.mxu0 0.0
      %1364 = vmatprep.subr.mxu0 0.0
      %1365 = vmatpush1.xpose.msra.mxu0 0.0
      %1366 = vmatprep.subr.mxu0 0.0
      %1367 = vmatpush1.xpose.msra.mxu0 0.0
      %1368 = vmatprep.subr.mxu0 0.0
      %1369 = vmatpush1.xpose.msra.mxu0 0.0
      %1370 = vmatprep.subr.mxu0 0.0
      %1371 = vmatpush1.xpose.msra.mxu0 0.0
      %1372 = vmatprep.subr.mxu0 0.0
      %1373 = vmatpush1.xpose.msra.mxu0 0.0
      %1374 = vmatprep.subr.mxu0 0.0
      %1375 = vmatpush1.xpose.msra.mxu0 0.0
      %1376 = vmatprep.subr.mxu0 0.0
      %1377 = vmatpush1.xpose.msra.mxu0 0.0
      %1378 = vmatprep.subr.mxu0 0.0
      %1379 = vmatpush1.xpose.msra.mxu0 0.0
      %1380 = vmatprep.subr.mxu0 0.0
      %1381 = vmatpush1.xpose.msra.mxu0 0.0
      %1382 = vmatprep.subr.mxu0 0.0
      %1383 = vmatpush1.xpose.msra.mxu0 0.0
      %1384 = vmatprep.subr.mxu0 0.0
      %1385 = vmatpush1.xpose.msra.mxu0 0.0
      %1386 = vmatprep.subr.mxu0 0.0
      %1387 = vmatpush1.xpose.msra.mxu0 0.0
      %1388 = vmatprep.subr.mxu0 0.0
      %1389 = vmatpush1.xpose.msra.mxu0 0.0
      %1390 = vmatprep.subr.mxu0 0.0
      %1391 = vmatpush1.xpose.msra.mxu0 0.0
      %1392 = vmatprep.subr.mxu0 0.0
      %1393 = vmatpush1.xpose.msra.mxu0 0.0
      %1394 = vmatprep.mubr.f32.mxu0 0.0
      %1395 = vmatmul.mubr.f32.gmra.mrb[0].mxu0 %v1322
      %v1396 = vpop.f32.mrb[0].mxu0
      %v1397 = vadd.f32 0.0, %v1396
      %v1398 = vpop.f32.mrb[0].mxu0
      %1399 = vmatprep.mubr.f32.mxu0 0.0
      %1400 = vmatmul.mubr.f32.gmra.mrb[0].mxu0 %v1324
      %v1401 = vpop.f32.mrb[0].mxu0
      %v1402 = vadd.f32 0.0, %v1401
      %v1403 = vpop.f32.mrb[0].mxu0
      %1404 = vdwg.mxu0
      %v1405 = vmul.f32 %v1397, 0.35355338
      %v1406 = vmul.f32 %v1402, 0.35355338
      %v1407 = vadd.f32 %v1405, %v451
      %v1408 = vadd.f32 %v1406, %v452
      %v1409 = vsel %vm551, %v1407, -inf
      %1410 = vmax.xlane.f32.xlu0 %v1409
      %v1411 = vpop.xlane.xlu0 %1410
      %v1412 = vsel %vm551, %v1408, -inf
      %1413 = vmax.xlane.f32.xlu0 %v1412
      %v1414 = vpop.xlane.xlu0 %1413
      %v1415 = vsub.f32 %v1407, %v1411
      %v1416 = vsub.f32 %v1408, %v1414
      %v1417 = vmul.f32 %v1415, 1.442695
      %v1418 = vpow.pop %v1417
      %v1419 = vmul.f32 %v1416, 1.442695
      %v1420 = vpow.pop %v1419
      %v1421 = vsel %vm551, %v1418, 0.0
      %1422 = vadd.xlane.f32.xlu0 %v1421
      %v1423 = vpop.xlane.xlu0 %1422
      %v1424 = vsel %vm551, %v1420, 0.0
      %1425 = vadd.xlane.f32.xlu0 %v1424
      %v1426 = vpop.xlane.xlu0 %1425
      %v1427 = vrcp.pop %v1423
      %v1428 = vrcp.pop %v1426
      %v1429 = vmul.f32 %v1418, %v1427
      %v1430 = vmul.f32 %v1420, %v1428
      %1431 = vrot.lane.b32.xlu0 %v434, 40
      %v1432 = vpop.permute.xlu0 %1431
      %1433 = vrot.lane.b32.xlu0 %v439, 40
      %v1434 = vpop.permute.xlu0 %1433
      %v1438 = vsel %vm551, %v1429, 0
      %v1441 = vsel %vm551, %v1430, 0
      %1443 = vmatprep.subr.mxu0 0.0
      %1444 = vmatpush1.msra.mxu0 %v1432
      %1445 = vmatprep.subr.mxu0 0.0
      %1446 = vmatpush1.msra.mxu0 %v1434
      %1447 = vmatprep.subr.mxu0 0.0
      %1448 = vmatpush1.msra.mxu0 0.0
      %1449 = vmatprep.subr.mxu0 0.0
      %1450 = vmatpush1.msra.mxu0 0.0
      %1451 = vmatprep.subr.mxu0 0.0
      %1452 = vmatpush1.msra.mxu0 0.0
      %1453 = vmatprep.subr.mxu0 0.0
      %1454 = vmatpush1.msra.mxu0 0.0
      %1455 = vmatprep.subr.mxu0 0.0
      %1456 = vmatpush1.msra.mxu0 0.0
      %1457 = vmatprep.subr.mxu0 0.0
      %1458 = vmatpush1.msra.mxu0 0.0
      %1459 = vmatprep.subr.mxu0 0.0
      %1460 = vmatpush1.msra.mxu0 0.0
      %1461 = vmatprep.subr.mxu0 0.0
      %1462 = vmatpush1.msra.mxu0 0.0
      %1463 = vmatprep.subr.mxu0 0.0
      %1464 = vmatpush1.msra.mxu0 0.0
      %1465 = vmatprep.subr.mxu0 0.0
      %1466 = vmatpush1.msra.mxu0 0.0
      %1467 = vmatprep.subr.mxu0 0.0
      %1468 = vmatpush1.msra.mxu0 0.0
      %1469 = vmatprep.subr.mxu0 0.0
      %1470 = vmatpush1.msra.mxu0 0.0
      %1471 = vmatprep.subr.mxu0 0.0
      %1472 = vmatpush1.msra.mxu0 0.0
      %1473 = vmatprep.subr.mxu0 0.0
      %1474 = vmatpush1.msra.mxu0 0.0
      %1475 = vmatprep.subr.mxu0 0.0
      %1476 = vmatpush1.msra.mxu0 0.0
      %1477 = vmatprep.subr.mxu0 0.0
      %1478 = vmatpush1.msra.mxu0 0.0
      %1479 = vmatprep.subr.mxu0 0.0
      %1480 = vmatpush1.msra.mxu0 0.0
      %1481 = vmatprep.subr.mxu0 0.0
      %1482 = vmatpush1.msra.mxu0 0.0
      %1483 = vmatprep.subr.mxu0 0.0
      %1484 = vmatpush1.msra.mxu0 0.0
      %1485 = vmatprep.subr.mxu0 0.0
      %1486 = vmatpush1.msra.mxu0 0.0
      %1487 = vmatprep.subr.mxu0 0.0
      %1488 = vmatpush1.msra.mxu0 0.0
      %1489 = vmatprep.subr.mxu0 0.0
      %1490 = vmatpush1.msra.mxu0 0.0
      %1491 = vmatprep.subr.mxu0 0.0
      %1492 = vmatpush1.msra.mxu0 0.0
      %1493 = vmatprep.subr.mxu0 0.0
      %1494 = vmatpush1.msra.mxu0 0.0
      %1495 = vmatprep.subr.mxu0 0.0
      %1496 = vmatpush1.msra.mxu0 0.0
      %1497 = vmatprep.subr.mxu0 0.0
      %1498 = vmatpush1.msra.mxu0 0.0
      %1499 = vmatprep.subr.mxu0 0.0
      %1500 = vmatpush1.msra.mxu0 0.0
      %1501 = vmatprep.subr.mxu0 0.0
      %1502 = vmatpush1.msra.mxu0 0.0
      %1503 = vmatprep.subr.mxu0 0.0
      %1504 = vmatpush1.msra.mxu0 0.0
      %1505 = vmatprep.subr.mxu0 0.0
      %1506 = vmatpush1.msra.mxu0 0.0
      %1507 = vmatprep.mubr.f32.mxu0 0.0
      %1508 = vmatmul.mubr.f32.gmra.mrb[0].mxu0 %v1438
      %v1509 = vpop.f32.mrb[0].mxu0
      %v1510 = vadd.f32 0.0, %v1509
      %v1511 = vpop.f32.mrb[0].mxu0
      %1512 = vmatprep.mubr.f32.mxu0 0.0
      %1513 = vmatmul.mubr.f32.gmra.mrb[0].mxu0 %v1441
      %v1514 = vpop.f32.mrb[0].mxu0
      %v1515 = vadd.f32 0.0, %v1514
      %v1516 = vpop.f32.mrb[0].mxu0
      %1517 = vdwg.mxu0
      %v1519 = vsel %vm463, %v1510, 0
      %v1522 = vsel %vm463, %v1515, 0
      %1524 = vmatprep.subr.mxu0 0.0
      %1525 = vmatpush1.msra.mxu0 %v456
      %1526 = vmatprep.subr.mxu0 0.0
      %1527 = vmatpush1.msra.mxu0 0.0
      %1528 = vmatprep.subr.mxu0 0.0
      %1529 = vmatpush1.msra.mxu0 0.0
      %1530 = vmatprep.subr.mxu0 0.0
      %1531 = vmatpush1.msra.mxu0 0.0
      %1532 = vmatprep.subr.mxu0 0.0
      %1533 = vmatpush1.msra.mxu0 0.0
      %1534 = vmatprep.subr.mxu0 0.0
      %1535 = vmatpush1.msra.mxu0 0.0
      %1536 = vmatprep.subr.mxu0 0.0
      %1537 = vmatpush1.msra.mxu0 0.0
      %1538 = vmatprep.subr.mxu0 0.0
      %1539 = vmatpush1.msra.mxu0 0.0
      %1540 = vmatprep.subr.mxu0 0.0
      %1541 = vmatpush1.msra.mxu0 0.0
      %1542 = vmatprep.subr.mxu0 0.0
      %1543 = vmatpush1.msra.mxu0 0.0
      %1544 = vmatprep.subr.mxu0 0.0
      %1545 = vmatpush1.msra.mxu0 0.0
      %1546 = vmatprep.subr.mxu0 0.0
      %1547 = vmatpush1.msra.mxu0 0.0
      %1548 = vmatprep.subr.mxu0 0.0
      %1549 = vmatpush1.msra.mxu0 0.0
      %1550 = vmatprep.subr.mxu0 0.0
      %1551 = vmatpush1.msra.mxu0 0.0
      %1552 = vmatprep.subr.mxu0 0.0
      %1553 = vmatpush1.msra.mxu0 0.0
      %1554 = vmatprep.subr.mxu0 0.0
      %1555 = vmatpush1.msra.mxu0 0.0
      %1556 = vmatprep.subr.mxu0 0.0
      %1557 = vmatpush1.msra.mxu0 0.0
      %1558 = vmatprep.subr.mxu0 0.0
      %1559 = vmatpush1.msra.mxu0 0.0
      %1560 = vmatprep.subr.mxu0 0.0
      %1561 = vmatpush1.msra.mxu0 0.0
      %1562 = vmatprep.subr.mxu0 0.0
      %1563 = vmatpush1.msra.mxu0 0.0
      %1564 = vmatprep.subr.mxu0 0.0
      %1565 = vmatpush1.msra.mxu0 0.0
      %1566 = vmatprep.subr.mxu0 0.0
      %1567 = vmatpush1.msra.mxu0 0.0
      %1568 = vmatprep.subr.mxu0 0.0
      %1569 = vmatpush1.msra.mxu0 0.0
      %1570 = vmatprep.subr.mxu0 0.0
      %1571 = vmatpush1.msra.mxu0 0.0
      %1572 = vmatprep.subr.mxu0 0.0
      %1573 = vmatpush1.msra.mxu0 0.0
      %1574 = vmatprep.subr.mxu0 0.0
      %1575 = vmatpush1.msra.mxu0 0.0
      %1576 = vmatprep.subr.mxu0 0.0
      %1577 = vmatpush1.msra.mxu0 0.0
      %1578 = vmatprep.subr.mxu0 0.0
      %1579 = vmatpush1.msra.mxu0 0.0
      %1580 = vmatprep.subr.mxu0 0.0
      %1581 = vmatpush1.msra.mxu0 0.0
      %1582 = vmatprep.subr.mxu0 0.0
      %1583 = vmatpush1.msra.mxu0 0.0
      %1584 = vmatprep.subr.mxu0 0.0
      %1585 = vmatpush1.msra.mxu0 0.0
      %1586 = vmatprep.subr.mxu0 0.0
      %1587 = vmatpush1.msra.mxu0 0.0
      %1588 = vmatprep.mubr.f32.mxu0 0.0
      %1589 = vmatmul.mubr.f32.gmra.mrb[0].mxu0 %v1519
      %v1590 = vpop.f32.mrb[0].mxu0
      %v1591 = vadd.f32 0.0, %v1590
      %v1592 = vpop.f32.mrb[0].mxu0
      %1593 = vmatprep.mubr.f32.mxu0 0.0
      %1594 = vmatmul.mubr.f32.gmra.mrb[0].mxu0 %v1522
      %v1595 = vpop.f32.mrb[0].mxu0
      %v1596 = vadd.f32 0.0, %v1595
      %v1597 = vpop.f32.mrb[0].mxu0
      %1598 = vdwg.mxu0
      %v1599 = vadd.f32 %v1312, %v1591
      %v1600 = vadd.f32 %v1313, %v1596
      %v1601 = vadd.f32 %v347, %v1599
      %v1602 = vadd.f32 %v348, %v1600
      %v1603 = vld [vmem:[%s4] sm:$0x1]
      %v1605 = vlaneseq
      %v1606 = vshrl.u32 %v1605, 7
      %v1607 = vsub.s32 0, %v1606
      %v1608 = vrot.slane %v1603, %v1607
      %v1610 = vadd.f32 %v1601, %v1608
      %v1611 = vadd.f32 %v1602, %v1608
      %v1612 = vld [vmem:[%s7] sm:$0x1]
      %v1613 = vld [vmem:[%s8] sm:$0x1]
      %v1614 = vsel %vm360, %v1610, 0.0
      %1615 = vadd.xlane.f32.xlu0 %v1614
      %v1616 = vpop.xlane.xlu0 %1615
      %v1617 = vsel %vm360, %v1611, 0.0
      %1618 = vadd.xlane.f32.xlu0 %v1617
      %v1619 = vpop.xlane.xlu0 %1618
      %v1620 = vrcp.pop 32.0
      %v1621 = vmul.f32 %v1616, %v1620
      %v1622 = vmul.f32 %v1619, %v1620
      %v1623 = vsub.f32 %v1610, %v1621
      %v1624 = vsub.f32 %v1611, %v1622
      %v1625 = vmul.f32 %v1623, %v1623
      %v1626 = vmul.f32 %v1624, %v1624
      %v1627 = vsel %vm360, %v1625, 0.0
      %1628 = vadd.xlane.f32.xlu0 %v1627
      %v1629 = vpop.xlane.xlu0 %1628
      %v1630 = vsel %vm360, %v1626, 0.0
      %1631 = vadd.xlane.f32.xlu0 %v1630
      %v1632 = vpop.xlane.xlu0 %1631
      %v1633 = vmul.f32 %v1629, %v1620
      %v1634 = vmul.f32 %v1632, %v1620
      %v1635 = vadd.f32 %v1633, 1e-05
      %v1636 = vadd.f32 %v1634, 1e-05
      %v1637 = vrsqrt.pop %v1635
      %v1638 = vrsqrt.pop %v1636
      %v1639 = vmul.f32 %v1623, %v1637
      %v1640 = vmul.f32 %v1624, %v1638
      %v1642 = vlaneseq
      %v1643 = vshrl.u32 %v1642, 7
      %v1644 = vsub.s32 0, %v1643
      %v1645 = vrot.slane %v1612, %v1644
      %v1647 = vmul.f32 %v1639, %v1645
      %v1648 = vmul.f32 %v1640, %v1645
      %v1650 = vlaneseq
      %v1651 = vshrl.u32 %v1650, 7
      %v1652 = vsub.s32 0, %v1651
      %v1653 = vrot.slane %v1613, %v1652
      %v1655 = vadd.f32 %v1647, %v1653
      %v1656 = vadd.f32 %v1648, %v1653
      %1657 = vst.msk [vmem:[%s346] sm:$0xff] %vm360, %v1655
      %1658 = vst.msk [vmem:[%s346 + $0x8] sm:$0xff] %vm360, %v1656
      %p1659 = scmp.lt.s32.totalorder %s20, 1
      %s1660 = scalar_select %p1659, %s20, 1
      %s1661 = smul.addr %s1660, 2
      %s1662 = smul.addr %s1661, 8
      %s1663 = scalar_lea.vmem %s9, %s1662
      // Predicated region
      $region57: #{seq2seq_transformer_forward.16} parent=55 // pred_check
        %p1664 = pneg %p237
      $region58: #{seq2seq_transformer_forward.16} parent=55 // pred_check_branch
        %1666 = sbr.rel (%p1664) target = $region60
      $region59: #{seq2seq_transformer_forward.16} parent=55 // pred_region
        _
      $region60: #{seq2seq_transformer_forward.16} parent=55 // pred_fallthru
        _
    $region56: #{seq2seq_transformer_forward.16} parent=5 // pred_fallthru
      _
    %p1667 = scmp.le.s32.totalorder 2, %s15
    // Predicated region
    $region61: #{seq2seq_transformer_forward.16} parent=5 // pred_check
      %p1668 = pneg %p1667
    $region62: #{seq2seq_transformer_forward.16} parent=5 // pred_check_branch
      %1670 = sbr.rel (%p1668) target = $region64
    $region63: #{seq2seq_transformer_forward.16} parent=5 // pred_region
      %s1671 = ssub.s32 %s15, 2
      // Predicated region
      $region65: #{seq2seq_transformer_forward.16} parent=63 // pred_check
        %p1672 = pneg %p243
      $region66: #{seq2seq_transformer_forward.16} parent=63 // pred_check_branch
        %1674 = sbr.rel (%p1672) target = $region68
      $region67: #{seq2seq_transformer_forward.16} parent=63 // pred_region
        %p1675 = scmp.lt.s32.totalorder %s21, 1
        %s1676 = scalar_select %p1675, %s21, 1
        %s1677 = smul.addr %s1676, 2
        %s1678 = smul.addr %s1677, 8
        %s1679 = scalar_lea.vmem %s9, %s1678
      $region68: #{seq2seq_transformer_forward.16} parent=63 // pred_fallthru
        _
    $region64: #{seq2seq_transformer_forward.16} parent=5 // pred_fallthru
      _
  $region6: #{seq2seq_transformer_forward.16} parent=0 // loop_footer
    %s19 = sadd.s32 1, %s15
  $region7: #{seq2seq_transformer_forward.16} parent=0 // loop_footer_branch
    %14 = sbr.rel target = $region3
  $region8: #{seq2seq_transformer_forward.16} parent=0 // loop_exit
    _

// kernel: seq2seq_transformer_forward.15
$region0: #{seq2seq_transformer_forward.15}
  #allocation0 [shape = 'u32[]', space=smem, size = 0x4, offset = 0x4, fixed_abs, tag = 'smem constant byte address 0x4 - core index']
  #allocation1 [shape = 'u32[144,128]{1,0:T(1,128)}', space=vmem, size = 0x12000, scoped, tag = 'internal scratch']
  %s0 = inlined_call_operand.vmem [shape: f32[2,8,32], index: 0, kind: input, shape index: {}]
  %s1 = inlined_call_operand.vmem [shape: f32[1,8,32], index: 1, kind: input, shape index: {}]
  %s2 = inlined_call_operand.vmem [shape: f32[2,8,32], index: 2, kind: output, shape index: {}]
  %s3 = sld [smem:[#allocation0]]
  $region41: #{seq2seq_transformer_forward.15} parent=0
    _
  %s5 = ssub.s32 1, %s3
  %s6 = scalar_select 0, %s5, %s3
  loop: start=0, step=1, limit=4
  $region2: #{seq2seq_transformer_forward.15} parent=0 // loop_pre_header
    _
  $region3: #{seq2seq_transformer_forward.15} parent=0 // loop_header
    %s8 = sphi 0, %s12
    %p9 = scmp.ge.s32.totalorder %s8, 4
    %s18 = sphi 0, %s20
    %s21 = sphi 0, %s18
    %s22 = sphi 0, %s21
    %s38 = sphi 0, %s22
    %s42 = sphi 0, %s42
    %s44 = sphi 0, %s42
    %s45 = sphi 0, %s44
    %s59 = sphi 0, %s45
    %s65 = sphi 0, %s67
    %s68 = sphi 0, %s65
    %s69 = sphi 0, %s68
    %s85 = sphi 0, %s69
  $region4: #{seq2seq_transformer_forward.15} parent=0 // loop_header_branch
    %11 = sbr.rel (%p9) target = $region8
  $region5: #{seq2seq_transformer_forward.15} parent=0 // loop_body
    %s13 = ssub.s32 %s8, 1
    %s14 = ssub.s32 %s8, 2
    %s15 = sadd.s32 %s8, 1
    %s16 = ssub.s32 %s8, %s15
    %p17 = scmp.eq.s32.totalorder %s16, 0
    %s19 = sadd.s32 %s18, 1
    %s20 = scalar_select %p17, %s18, %s19
    %p23 = pneg %p17
    %p24 = scmp.eq.s32.totalorder %s8, 1
    %p25 = por %p23, %p24
    %p26 = scmp.ne.s32.totalorder %s18, %s21
    %p27 = scmp.eq.s32.totalorder %s8, 0
    %p28 = por %p26, %p27
    %p29 = scmp.ne.s32.totalorder %s18, %s21
    %p30 = scmp.eq.s32.totalorder %s13, 1
    %p31 = por %p29, %p30
    %p32 = scmp.ne.s32.totalorder %s21, %s22
    %p33 = scmp.eq.s32.totalorder %s13, 0
    %p34 = por %p32, %p33
    %p35 = scmp.ne.s32.totalorder %s21, %s22
    %p36 = scmp.eq.s32.totalorder %s14, 1
    %p37 = por %p35, %p36
    %p39 = scmp.ne.s32.totalorder %s22, %s38
    %p40 = scmp.eq.s32.totalorder %s14, 0
    %p41 = por %p39, %p40
    %s43 = sadd.s32 %s42, 1
    %p46 = scmp.eq.s32.totalorder %s8, 1
    %p47 = scmp.ne.s32.totalorder %s42, %s44
    %p48 = scmp.eq.s32.totalorder %s8, 0
    %p49 = por %p47, %p48
    %p50 = scmp.ne.s32.totalorder %s42, %s44
    %p51 = scmp.eq.s32.totalorder %s13, 1
    %p52 = por %p50, %p51
    %p53 = scmp.ne.s32.totalorder %s44, %s45
    %p54 = scmp.eq.s32.totalorder %s13, 0
    %p55 = por %p53, %p54
    %p56 = scmp.ne.s32.totalorder %s44, %s45
    %p57 = scmp.eq.s32.totalorder %s14, 1
    %p58 = por %p56, %p57
    %p60 = scmp.ne.s32.totalorder %s45, %s59
    %p61 = scmp.eq.s32.totalorder %s14, 0
    %p62 = por %p60, %p61
    %s63 = ssub.s32 %s8, %s15
    %p64 = scmp.eq.s32.totalorder %s63, 0
    %s66 = sadd.s32 %s65, 1
    %s67 = scalar_select %p64, %s65, %s66
    %p70 = pneg %p64
    %p71 = scmp.eq.s32.totalorder %s8, 1
    %p72 = por %p70, %p71
    %p73 = scmp.ne.s32.totalorder %s65, %s68
    %p74 = scmp.eq.s32.totalorder %s8, 0
    %p75 = por %p73, %p74
    %p76 = scmp.ne.s32.totalorder %s65, %s68
    %p77 = scmp.eq.s32.totalorder %s13, 1
    %p78 = por %p76, %p77
    %p79 = scmp.ne.s32.totalorder %s68, %s69
    %p80 = scmp.eq.s32.totalorder %s13, 0
    %p81 = por %p79, %p80
    %p82 = scmp.ne.s32.totalorder %s68, %s69
    %p83 = scmp.eq.s32.totalorder %s14, 1
    %p84 = por %p82, %p83
    %p86 = scmp.ne.s32.totalorder %s69, %s85
    %p87 = scmp.eq.s32.totalorder %s14, 0
    %p88 = por %p86, %p87
    %p89 = scmp.le.s32.totalorder 1, %s8
    %p90 = scmp.lt.s32.totalorder %s8, 3
    %p91 = pnand %p89, %p90
    %p92 = pneg %p91
    // Predicated region
    $region9: #{seq2seq_transformer_forward.15} parent=5 // pred_check
      _
    $region10: #{seq2seq_transformer_forward.15} parent=5 // pred_check_branch
      %94 = sbr.rel (%p91) target = $region12
    $region11: #{seq2seq_transformer_forward.15} parent=5 // pred_region
      %s95 = ssub.s32 %s8, 1
      // Predicated region
      $region13: #{seq2seq_transformer_forward.15} parent=11 // pred_check
        %p96 = pneg %p55
      $region14: #{seq2seq_transformer_forward.15} parent=11 // pred_check_branch
        %98 = sbr.rel (%p96) target = $region16
      $region15: #{seq2seq_transformer_forward.15} parent=11 // pred_region
        _
      $region16: #{seq2seq_transformer_forward.15} parent=11 // pred_fallthru
        _
    $region12: #{seq2seq_transformer_forward.15} parent=5 // pred_fallthru
      _
    %p99 = scmp.lt.s32.totalorder %s8, 2
    // Predicated region
    $region17: #{seq2seq_transformer_forward.15} parent=5 // pred_check
      %p100 = pneg %p99
    $region18: #{seq2seq_transformer_forward.15} parent=5 // pred_check_branch
      %102 = sbr.rel (%p100) target = $region20
    $region19: #{seq2seq_transformer_forward.15} parent=5 // pred_region
      // Predicated region
      $region21: #{seq2seq_transformer_forward.15} parent=19 // pred_check
        %p103 = pneg %p28
      $region22: #{seq2seq_transformer_forward.15} parent=19 // pred_check_branch
        %105 = sbr.rel (%p103) target = $region24
      $region23: #{seq2seq_transformer_forward.15} parent=19 // pred_region
        %p106 = scmp.lt.s32.totalorder %s8, 1
        %s107 = scalar_select %p106, %s8, 1
        %s108 = smul.addr %s107, 8
        %s109 = scalar_lea.vmem %s0, %s108
      $region24: #{seq2seq_transformer_forward.15} parent=19 // pred_fallthru
        _
    $region20: #{seq2seq_transformer_forward.15} parent=5 // pred_fallthru
      _
    %p110 = scmp.le.s32.totalorder 1, %s8
    %p111 = scmp.lt.s32.totalorder %s8, 3
    %p112 = pnand %p110, %p111
    %p113 = pneg %p112
    // Predicated region
    $region25: #{seq2seq_transformer_forward.15} parent=5 // pred_check
      _
    $region26: #{seq2seq_transformer_forward.15} parent=5 // pred_check_branch
      %115 = sbr.rel (%p112) target = $region28
    $region27: #{seq2seq_transformer_forward.15} parent=5 // pred_region
      %s116 = ssub.s32 %s8, 1
      %p117 = scmp.lt.s32.totalorder %s13, 1
      %s118 = scalar_select %p117, %s13, 1
      %s119 = smul.addr %s118, 8
      %s120 = scalar_lea.vmem %s0, %s119
      %p121 = pneg %p34
      %p122 = pneg %p31
      %p123 = pneg %p55
      %p124 = pneg %p52
      %p125 = pneg %p81
      %p126 = pneg %p78
      %p127 = scmp.lt.s32.totalorder %s13, 1
      %s128 = scalar_select %p127, %s13, 1
      %s129 = smul.addr %s128, 8
      %s130 = scalar_lea.vmem %s2, %s129
      %p131 = scmp.lt.s32.totalorder %s13, 1
      %s132 = scalar_select %p131, %s13, 1
      %s133 = smul.addr %s132, 8
      %s134 = scalar_lea.vmem %s0, %s133
      %p135 = scmp.lt.s32.totalorder %s13, 1
      %s136 = scalar_select %p135, %s13, 1
      %s137 = smul.addr %s136, 8
      %s138 = scalar_lea.vmem %s2, %s137
      %v139 = vld [vmem:[%s134] sm:$0xff]
      %v140 = vmul.f32 %v139, 5.656854
      %v141 = vld [vmem:[%s1] sm:$0xff]
      %v142 = vadd.f32 %v140, %v141
      %vm143 = vcmask 261120
      %144 = vst.msk [vmem:[%s138] sm:$0xff] %vm143, %v142
      %p145 = scmp.lt.s32.totalorder %s13, 1
      %s146 = scalar_select %p145, %s13, 1
      %s147 = smul.addr %s146, 8
      %s148 = scalar_lea.vmem %s2, %s147
      // Predicated region
      $region29: #{seq2seq_transformer_forward.15} parent=27 // pred_check
        %p149 = pneg %p78
      $region30: #{seq2seq_transformer_forward.15} parent=27 // pred_check_branch
        %151 = sbr.rel (%p149) target = $region32
      $region31: #{seq2seq_transformer_forward.15} parent=27 // pred_region
        _
      $region32: #{seq2seq_transformer_forward.15} parent=27 // pred_fallthru
        _
    $region28: #{seq2seq_transformer_forward.15} parent=5 // pred_fallthru
      _
    %p152 = scmp.le.s32.totalorder 2, %s8
    // Predicated region
    $region33: #{seq2seq_transformer_forward.15} parent=5 // pred_check
      %p153 = pneg %p152
    $region34: #{seq2seq_transformer_forward.15} parent=5 // pred_check_branch
      %155 = sbr.rel (%p153) target = $region36
    $region35: #{seq2seq_transformer_forward.15} parent=5 // pred_region
      %s156 = ssub.s32 %s8, 2
      // Predicated region
      $region37: #{seq2seq_transformer_forward.15} parent=35 // pred_check
        %p157 = pneg %p84
      $region38: #{seq2seq_transformer_forward.15} parent=35 // pred_check_branch
        %159 = sbr.rel (%p157) target = $region40
      $region39: #{seq2seq_transformer_forward.15} parent=35 // pred_region
        %p160 = scmp.lt.s32.totalorder %s14, 1
        %s161 = scalar_select %p160, %s14, 1
        %s162 = smul.addr %s161, 8
        %s163 = scalar_lea.vmem %s2, %s162
      $region40: #{seq2seq_transformer_forward.15} parent=35 // pred_fallthru
        _
    $region36: #{seq2seq_transformer_forward.15} parent=5 // pred_fallthru
      _
  $region6: #{seq2seq_transformer_forward.15} parent=0 // loop_footer
    %s12 = sadd.s32 1, %s8
  $region7: #{seq2seq_transformer_forward.15} parent=0 // loop_footer_branch
    %7 = sbr.rel target = $region3
  $region8: #{seq2seq_transformer_forward.15} parent=0 // loop_exit
    _

// kernel: seq2seq_transformer_forward.27
$region0: #{seq2seq_transformer_forward.27}
  #allocation0 [shape = 'u32[]', space=smem, size = 0x4, offset = 0x4, fixed_abs, tag = 'smem constant byte address 0x4 - core index']
  #allocation1 [shape = 'u32[144,128]{1,0:T(1,128)}', space=vmem, size = 0x12000, scoped, tag = 'internal scratch']
  %s0 = inlined_call_operand.vmem [shape: f32[2,8,32], index: 0, kind: input, shape index: {}]
  %s1 = inlined_call_operand.vmem [shape: f32[1,32], index: 1, kind: input, shape index: {}]
  %s2 = inlined_call_operand.vmem [shape: f32[1,32], index: 2, kind: input, shape index: {}]
  %s3 = inlined_call_operand.vmem [shape: f32[32,128], index: 3, kind: input, shape index: {}]
  %s4 = inlined_call_operand.vmem [shape: f32[1,128], index: 4, kind: input, shape index: {}]
  %s5 = inlined_call_operand.vmem [shape: f32[2,8,128], index: 5, kind: output, shape index: {}]
  %s6 = sld [smem:[#allocation0]]
  $region53: #{seq2seq_transformer_forward.27} parent=0
    _
  %s8 = ssub.s32 1, %s6
  %s9 = scalar_select 0, %s8, %s6
  loop: start=0, step=1, limit=4
  $region2: #{seq2seq_transformer_forward.27} parent=0 // loop_pre_header
    _
  $region3: #{seq2seq_transformer_forward.27} parent=0 // loop_header
    %s11 = sphi 0, %s15
    %p12 = scmp.ge.s32.totalorder %s11, 4
    %s21 = sphi 0, %s23
    %s24 = sphi 0, %s21
    %s25 = sphi 0, %s24
    %s41 = sphi 0, %s25
    %s45 = sphi 0, %s45
    %s47 = sphi 0, %s45
    %s48 = sphi 0, %s47
    %s62 = sphi 0, %s48
    %s66 = sphi 0, %s66
    %s68 = sphi 0, %s66
    %s69 = sphi 0, %s68
    %s83 = sphi 0, %s69
    %s87 = sphi 0, %s87
    %s89 = sphi 0, %s87
    %s90 = sphi 0, %s89
    %s104 = sphi 0, %s90
    %s108 = sphi 0, %s108
    %s110 = sphi 0, %s108
    %s111 = sphi 0, %s110
    %s125 = sphi 0, %s111
    %s131 = sphi 0, %s133
    %s134 = sphi 0, %s131
    %s135 = sphi 0, %s134
    %s151 = sphi 0, %s135
  $region4: #{seq2seq_transformer_forward.27} parent=0 // loop_header_branch
    %14 = sbr.rel (%p12) target = $region8
  $region5: #{seq2seq_transformer_forward.27} parent=0 // loop_body
    %s16 = ssub.s32 %s11, 1
    %s17 = ssub.s32 %s11, 2
    %s18 = sadd.s32 %s11, 1
    %s19 = ssub.s32 %s11, %s18
    %p20 = scmp.eq.s32.totalorder %s19, 0
    %s22 = sadd.s32 %s21, 1
    %s23 = scalar_select %p20, %s21, %s22
    %p26 = pneg %p20
    %p27 = scmp.eq.s32.totalorder %s11, 1
    %p28 = por %p26, %p27
    %p29 = scmp.ne.s32.totalorder %s21, %s24
    %p30 = scmp.eq.s32.totalorder %s11, 0
    %p31 = por %p29, %p30
    %p32 = scmp.ne.s32.totalorder %s21, %s24
    %p33 = scmp.eq.s32.totalorder %s16, 1
    %p34 = por %p32, %p33
    %p35 = scmp.ne.s32.totalorder %s24, %s25
    %p36 = scmp.eq.s32.totalorder %s16, 0
    %p37 = por %p35, %p36
    %p38 = scmp.ne.s32.totalorder %s24, %s25
    %p39 = scmp.eq.s32.totalorder %s17, 1
    %p40 = por %p38, %p39
    %p42 = scmp.ne.s32.totalorder %s25, %s41
    %p43 = scmp.eq.s32.totalorder %s17, 0
    %p44 = por %p42, %p43
    %s46 = sadd.s32 %s45, 1
    %p49 = scmp.eq.s32.totalorder %s11, 1
    %p50 = scmp.ne.s32.totalorder %s45, %s47
    %p51 = scmp.eq.s32.totalorder %s11, 0
    %p52 = por %p50, %p51
    %p53 = scmp.ne.s32.totalorder %s45, %s47
    %p54 = scmp.eq.s32.totalorder %s16, 1
    %p55 = por %p53, %p54
    %p56 = scmp.ne.s32.totalorder %s47, %s48
    %p57 = scmp.eq.s32.totalorder %s16, 0
    %p58 = por %p56, %p57
    %p59 = scmp.ne.s32.totalorder %s47, %s48
    %p60 = scmp.eq.s32.totalorder %s17, 1
    %p61 = por %p59, %p60
    %p63 = scmp.ne.s32.totalorder %s48, %s62
    %p64 = scmp.eq.s32.totalorder %s17, 0
    %p65 = por %p63, %p64
    %s67 = sadd.s32 %s66, 1
    %p70 = scmp.eq.s32.totalorder %s11, 1
    %p71 = scmp.ne.s32.totalorder %s66, %s68
    %p72 = scmp.eq.s32.totalorder %s11, 0
    %p73 = por %p71, %p72
    %p74 = scmp.ne.s32.totalorder %s66, %s68
    %p75 = scmp.eq.s32.totalorder %s16, 1
    %p76 = por %p74, %p75
    %p77 = scmp.ne.s32.totalorder %s68, %s69
    %p78 = scmp.eq.s32.totalorder %s16, 0
    %p79 = por %p77, %p78
    %p80 = scmp.ne.s32.totalorder %s68, %s69
    %p81 = scmp.eq.s32.totalorder %s17, 1
    %p82 = por %p80, %p81
    %p84 = scmp.ne.s32.totalorder %s69, %s83
    %p85 = scmp.eq.s32.totalorder %s17, 0
    %p86 = por %p84, %p85
    %s88 = sadd.s32 %s87, 1
    %p91 = scmp.eq.s32.totalorder %s11, 1
    %p92 = scmp.ne.s32.totalorder %s87, %s89
    %p93 = scmp.eq.s32.totalorder %s11, 0
    %p94 = por %p92, %p93
    %p95 = scmp.ne.s32.totalorder %s87, %s89
    %p96 = scmp.eq.s32.totalorder %s16, 1
    %p97 = por %p95, %p96
    %p98 = scmp.ne.s32.totalorder %s89, %s90
    %p99 = scmp.eq.s32.totalorder %s16, 0
    %p100 = por %p98, %p99
    %p101 = scmp.ne.s32.totalorder %s89, %s90
    %p102 = scmp.eq.s32.totalorder %s17, 1
    %p103 = por %p101, %p102
    %p105 = scmp.ne.s32.totalorder %s90, %s104
    %p106 = scmp.eq.s32.totalorder %s17, 0
    %p107 = por %p105, %p106
    %s109 = sadd.s32 %s108, 1
    %p112 = scmp.eq.s32.totalorder %s11, 1
    %p113 = scmp.ne.s32.totalorder %s108, %s110
    %p114 = scmp.eq.s32.totalorder %s11, 0
    %p115 = por %p113, %p114
    %p116 = scmp.ne.s32.totalorder %s108, %s110
    %p117 = scmp.eq.s32.totalorder %s16, 1
    %p118 = por %p116, %p117
    %p119 = scmp.ne.s32.totalorder %s110, %s111
    %p120 = scmp.eq.s32.totalorder %s16, 0
    %p121 = por %p119, %p120
    %p122 = scmp.ne.s32.totalorder %s110, %s111
    %p123 = scmp.eq.s32.totalorder %s17, 1
    %p124 = por %p122, %p123
    %p126 = scmp.ne.s32.totalorder %s111, %s125
    %p127 = scmp.eq.s32.totalorder %s17, 0
    %p128 = por %p126, %p127
    %s129 = ssub.s32 %s11, %s18
    %p130 = scmp.eq.s32.totalorder %s129, 0
    %s132 = sadd.s32 %s131, 1
    %s133 = scalar_select %p130, %s131, %s132
    %p136 = pneg %p130
    %p137 = scmp.eq.s32.totalorder %s11, 1
    %p138 = por %p136, %p137
    %p139 = scmp.ne.s32.totalorder %s131, %s134
    %p140 = scmp.eq.s32.totalorder %s11, 0
    %p141 = por %p139, %p140
    %p142 = scmp.ne.s32.totalorder %s131, %s134
    %p143 = scmp.eq.s32.totalorder %s16, 1
    %p144 = por %p142, %p143
    %p145 = scmp.ne.s32.totalorder %s134, %s135
    %p146 = scmp.eq.s32.totalorder %s16, 0
    %p147 = por %p145, %p146
    %p148 = scmp.ne.s32.totalorder %s134, %s135
    %p149 = scmp.eq.s32.totalorder %s17, 1
    %p150 = por %p148, %p149
    %p152 = scmp.ne.s32.totalorder %s135, %s151
    %p153 = scmp.eq.s32.totalorder %s17, 0
    %p154 = por %p152, %p153
    %p155 = scmp.le.s32.totalorder 1, %s11
    %p156 = scmp.lt.s32.totalorder %s11, 3
    %p157 = pnand %p155, %p156
    %p158 = pneg %p157
    // Predicated region
    $region9: #{seq2seq_transformer_forward.27} parent=5 // pred_check
      _
    $region10: #{seq2seq_transformer_forward.27} parent=5 // pred_check_branch
      %160 = sbr.rel (%p157) target = $region12
    $region11: #{seq2seq_transformer_forward.27} parent=5 // pred_region
      %s161 = ssub.s32 %s11, 1
      // Predicated region
      $region13: #{seq2seq_transformer_forward.27} parent=11 // pred_check
        %p162 = pneg %p58
      $region14: #{seq2seq_transformer_forward.27} parent=11 // pred_check_branch
        %164 = sbr.rel (%p162) target = $region16
      $region15: #{seq2seq_transformer_forward.27} parent=11 // pred_region
        _
      $region16: #{seq2seq_transformer_forward.27} parent=11 // pred_fallthru
        _
      // Predicated region
      $region17: #{seq2seq_transformer_forward.27} parent=11 // pred_check
        %p165 = pneg %p79
      $region18: #{seq2seq_transformer_forward.27} parent=11 // pred_check_branch
        %167 = sbr.rel (%p165) target = $region20
      $region19: #{seq2seq_transformer_forward.27} parent=11 // pred_region
        _
      $region20: #{seq2seq_transformer_forward.27} parent=11 // pred_fallthru
        _
      // Predicated region
      $region21: #{seq2seq_transformer_forward.27} parent=11 // pred_check
        %p168 = pneg %p100
      $region22: #{seq2seq_transformer_forward.27} parent=11 // pred_check_branch
        %170 = sbr.rel (%p168) target = $region24
      $region23: #{seq2seq_transformer_forward.27} parent=11 // pred_region
        _
      $region24: #{seq2seq_transformer_forward.27} parent=11 // pred_fallthru
        _
      // Predicated region
      $region25: #{seq2seq_transformer_forward.27} parent=11 // pred_check
        %p171 = pneg %p121
      $region26: #{seq2seq_transformer_forward.27} parent=11 // pred_check_branch
        %173 = sbr.rel (%p171) target = $region28
      $region27: #{seq2seq_transformer_forward.27} parent=11 // pred_region
        _
      $region28: #{seq2seq_transformer_forward.27} parent=11 // pred_fallthru
        _
    $region12: #{seq2seq_transformer_forward.27} parent=5 // pred_fallthru
      _
    %p174 = scmp.lt.s32.totalorder %s11, 2
    // Predicated region
    $region29: #{seq2seq_transformer_forward.27} parent=5 // pred_check
      %p175 = pneg %p174
    $region30: #{seq2seq_transformer_forward.27} parent=5 // pred_check_branch
      %177 = sbr.rel (%p175) target = $region32
    $region31: #{seq2seq_transformer_forward.27} parent=5 // pred_region
      // Predicated region
      $region33: #{seq2seq_transformer_forward.27} parent=31 // pred_check
        %p178 = pneg %p31
      $region34: #{seq2seq_transformer_forward.27} parent=31 // pred_check_branch
        %180 = sbr.rel (%p178) target = $region36
      $region35: #{seq2seq_transformer_forward.27} parent=31 // pred_region
        %p181 = scmp.lt.s32.totalorder %s11, 1
        %s182 = scalar_select %p181, %s11, 1
        %s183 = smul.addr %s182, 8
        %s184 = scalar_lea.vmem %s0, %s183
      $region36: #{seq2seq_transformer_forward.27} parent=31 // pred_fallthru
        _
    $region32: #{seq2seq_transformer_forward.27} parent=5 // pred_fallthru
      _
    %p185 = scmp.le.s32.totalorder 1, %s11
    %p186 = scmp.lt.s32.totalorder %s11, 3
    %p187 = pnand %p185, %p186
    %p188 = pneg %p187
    // Predicated region
    $region37: #{seq2seq_transformer_forward.27} parent=5 // pred_check
      _
    $region38: #{seq2seq_transformer_forward.27} parent=5 // pred_check_branch
      %190 = sbr.rel (%p187) target = $region40
    $region39: #{seq2seq_transformer_forward.27} parent=5 // pred_region
      %s191 = ssub.s32 %s11, 1
      %p192 = scmp.lt.s32.totalorder %s16, 1
      %s193 = scalar_select %p192, %s16, 1
      %s194 = smul.addr %s193, 8
      %s195 = scalar_lea.vmem %s0, %s194
      %p196 = pneg %p37
      %p197 = pneg %p34
      %p198 = pneg %p58
      %p199 = pneg %p55
      %p200 = pneg %p79
      %p201 = pneg %p76
      %p202 = pneg %p100
      %p203 = pneg %p97
      %p204 = pneg %p121
      %p205 = pneg %p118
      %p206 = pneg %p147
      %p207 = pneg %p144
      %p208 = scmp.lt.s32.totalorder %s16, 1
      %s209 = scalar_select %p208, %s16, 1
      %s210 = smul.addr %s209, 8
      %s211 = scalar_lea.vmem %s5, %s210
      %p212 = scmp.lt.s32.totalorder %s16, 1
      %s213 = scalar_select %p212, %s16, 1
      %s214 = smul.addr %s213, 8
      %s215 = scalar_lea.vmem %s0, %s214
      %p216 = scmp.lt.s32.totalorder %s16, 1
      %s217 = scalar_select %p216, %s16, 1
      %s218 = smul.addr %s217, 8
      %s219 = scalar_lea.vmem %s5, %s218
      %v220 = vld [vmem:[%s215] sm:$0xff]
      %v221 = vld [vmem:[%s1] sm:$0x1]
      %v222 = vld [vmem:[%s2] sm:$0x1]
      %vm223 = vcmask 261120
      %v224 = vsel %vm223, %v220, 0.0
      %225 = vadd.xlane.f32.xlu0 %v224
      %v226 = vpop.xlane.xlu0 %225
      %v227 = vrcp.pop 32.0
      %v228 = vmul.f32 %v226, %v227
      %v229 = vsub.f32 %v220, %v228
      %v230 = vmul.f32 %v229, %v229
      %v231 = vsel %vm223, %v230, 0.0
      %232 = vadd.xlane.f32.xlu0 %v231
      %v233 = vpop.xlane.xlu0 %232
      %v234 = vmul.f32 %v233, %v227
      %v235 = vadd.f32 %v234, 1e-05
      %v236 = vrsqrt.pop %v235
      %v237 = vmul.f32 %v229, %v236
      %v239 = vlaneseq
      %v240 = vshrl.u32 %v239, 7
      %v241 = vsub.s32 0, %v240
      %v242 = vrot.slane %v221, %v241
      %v244 = vmul.f32 %v237, %v242
      %v246 = vlaneseq
      %v247 = vshrl.u32 %v246, 7
      %v248 = vsub.s32 0, %v247
      %v249 = vrot.slane %v222, %v248
      %v251 = vadd.f32 %v244, %v249
      %v252 = vld [vmem:[%s3] sm:$0xff]
      %v253 = vld [vmem:[%s3 + $0x8] sm:$0xff]
      %v254 = vld [vmem:[%s3 + $0x10] sm:$0xff]
      %v255 = vld [vmem:[%s3 + $0x18] sm:$0xff]
      %v256 = vld [vmem:[%s4] sm:$0x1]
      %v258 = vlaneseq
      %v259 = vshrl.u32 %v258, 7
      %v260 = vsub.s32 0, %v259
      %v261 = vrot.slane %v256, %v260
      %v264 = vsel %vm223, %v251, 0
      %266 = vmatprep.subr.mxu0 0.0
      %267 = vmatpush1.msra.mxu0 %v252
      %268 = vmatprep.subr.mxu0 0.0
      %269 = vmatpush1.msra.mxu0 %v253
      %270 = vmatprep.subr.mxu0 0.0
      %271 = vmatpush1.msra.mxu0 %v254
      %272 = vmatprep.subr.mxu0 0.0
      %273 = vmatpush1.msra.mxu0 %v255
      %274 = vmatprep.subr.mxu0 0.0
      %275 = vmatpush1.msra.mxu0 0.0
      %276 = vmatprep.subr.mxu0 0.0
      %277 = vmatpush1.msra.mxu0 0.0
      %278 = vmatprep.subr.mxu0 0.0
      %279 = vmatpush1.msra.mxu0 0.0
      %280 = vmatprep.subr.mxu0 0.0
      %281 = vmatpush1.msra.mxu0 0.0
      %282 = vmatprep.subr.mxu0 0.0
      %283 = vmatpush1.msra.mxu0 0.0
      %284 = vmatprep.subr.mxu0 0.0
      %285 = vmatpush1.msra.mxu0 0.0
      %286 = vmatprep.subr.mxu0 0.0
      %287 = vmatpush1.msra.mxu0 0.0
      %288 = vmatprep.subr.mxu0 0.0
      %289 = vmatpush1.msra.mxu0 0.0
      %290 = vmatprep.subr.mxu0 0.0
      %291 = vmatpush1.msra.mxu0 0.0
      %292 = vmatprep.subr.mxu0 0.0
      %293 = vmatpush1.msra.mxu0 0.0
      %294 = vmatprep.subr.mxu0 0.0
      %295 = vmatpush1.msra.mxu0 0.0
      %296 = vmatprep.subr.mxu0 0.0
      %297 = vmatpush1.msra.mxu0 0.0
      %298 = vmatprep.subr.mxu0 0.0
      %299 = vmatpush1.msra.mxu0 0.0
      %300 = vmatprep.subr.mxu0 0.0
      %301 = vmatpush1.msra.mxu0 0.0
      %302 = vmatprep.subr.mxu0 0.0
      %303 = vmatpush1.msra.mxu0 0.0
      %304 = vmatprep.subr.mxu0 0.0
      %305 = vmatpush1.msra.mxu0 0.0
      %306 = vmatprep.subr.mxu0 0.0
      %307 = vmatpush1.msra.mxu0 0.0
      %308 = vmatprep.subr.mxu0 0.0
      %309 = vmatpush1.msra.mxu0 0.0
      %310 = vmatprep.subr.mxu0 0.0
      %311 = vmatpush1.msra.mxu0 0.0
      %312 = vmatprep.subr.mxu0 0.0
      %313 = vmatpush1.msra.mxu0 0.0
      %314 = vmatprep.subr.mxu0 0.0
      %315 = vmatpush1.msra.mxu0 0.0
      %316 = vmatprep.subr.mxu0 0.0
      %317 = vmatpush1.msra.mxu0 0.0
      %318 = vmatprep.subr.mxu0 0.0
      %319 = vmatpush1.msra.mxu0 0.0
      %320 = vmatprep.subr.mxu0 0.0
      %321 = vmatpush1.msra.mxu0 0.0
      %322 = vmatprep.subr.mxu0 0.0
      %323 = vmatpush1.msra.mxu0 0.0
      %324 = vmatprep.subr.mxu0 0.0
      %325 = vmatpush1.msra.mxu0 0.0
      %326 = vmatprep.subr.mxu0 0.0
      %327 = vmatpush1.msra.mxu0 0.0
      %328 = vmatprep.subr.mxu0 0.0
      %329 = vmatpush1.msra.mxu0 0.0
      %330 = vmatprep.mubr.f32.mxu0 0.0
      %331 = vmatmul.mubr.f32.gmra.mrb[0].mxu0 %v264
      %v332 = vpop.f32.mrb[0].mxu0
      %v333 = vadd.f32 %v261, %v332
      %v334 = vpop.f32.mrb[0].mxu0
      %335 = vdwg.mxu0
      %336 = vst [vmem:[%s219] sm:$0xff] %v333
      %p337 = scmp.lt.s32.totalorder %s16, 1
      %s338 = scalar_select %p337, %s16, 1
      %s339 = smul.addr %s338, 8
      %s340 = scalar_lea.vmem %s5, %s339
      // Predicated region
      $region41: #{seq2seq_transformer_forward.27} parent=39 // pred_check
        %p341 = pneg %p144
      $region42: #{seq2seq_transformer_forward.27} parent=39 // pred_check_branch
        %343 = sbr.rel (%p341) target = $region44
      $region43: #{seq2seq_transformer_forward.27} parent=39 // pred_region
        _
      $region44: #{seq2seq_transformer_forward.27} parent=39 // pred_fallthru
        _
    $region40: #{seq2seq_transformer_forward.27} parent=5 // pred_fallthru
      _
    %p344 = scmp.le.s32.totalorder 2, %s11
    // Predicated region
    $region45: #{seq2seq_transformer_forward.27} parent=5 // pred_check
      %p345 = pneg %p344
    $region46: #{seq2seq_transformer_forward.27} parent=5 // pred_check_branch
      %347 = sbr.rel (%p345) target = $region48
    $region47: #{seq2seq_transformer_forward.27} parent=5 // pred_region
      %s348 = ssub.s32 %s11, 2
      // Predicated region
      $region49: #{seq2seq_transformer_forward.27} parent=47 // pred_check
        %p349 = pneg %p150
      $region50: #{seq2seq_transformer_forward.27} parent=47 // pred_check_branch
        %351 = sbr.rel (%p349) target = $region52
      $region51: #{seq2seq_transformer_forward.27} parent=47 // pred_region
        %p352 = scmp.lt.s32.totalorder %s17, 1
        %s353 = scalar_select %p352, %s17, 1
        %s354 = smul.addr %s353, 8
        %s355 = scalar_lea.vmem %s5, %s354
      $region52: #{seq2seq_transformer_forward.27} parent=47 // pred_fallthru
        _
    $region48: #{seq2seq_transformer_forward.27} parent=5 // pred_fallthru
      _
  $region6: #{seq2seq_transformer_forward.27} parent=0 // loop_footer
    %s15 = sadd.s32 1, %s11
  $region7: #{seq2seq_transformer_forward.27} parent=0 // loop_footer_branch
    %10 = sbr.rel target = $region3
  $region8: #{seq2seq_transformer_forward.27} parent=0 // loop_exit
    _

// kernel: seq2seq_transformer_forward.22
$region0: #{seq2seq_transformer_forward.22}
  #allocation0 [shape = 'u32[]', space=smem, size = 0x4, offset = 0x4, fixed_abs, tag = 'smem constant byte address 0x4 - core index']
  #allocation1 [shape = 'u32[144,128]{1,0:T(1,128)}', space=vmem, size = 0x12000, scoped, tag = 'internal scratch']
  %s0 = inlined_call_operand.vmem [shape: f32[2,8,32], index: 0, kind: input, shape index: {}]
  %s1 = inlined_call_operand.vmem [shape: f32[2,16,32], index: 1, kind: input, shape index: {}]
  %s2 = inlined_call_operand.vmem [shape: f32[32,32], index: 2, kind: input, shape index: {}]
  %s3 = inlined_call_operand.vmem [shape: f32[1,32], index: 3, kind: input, shape index: {}]
  %s4 = inlined_call_operand.vmem [shape: f32[32,64], index: 4, kind: input, shape index: {}]
  %s5 = inlined_call_operand.vmem [shape: f32[1,64], index: 5, kind: input, shape index: {}]
  %s6 = inlined_call_operand.vmem [shape: f32[32,32], index: 6, kind: input, shape index: {}]
  %s7 = inlined_call_operand.vmem [shape: f32[1,32], index: 7, kind: input, shape index: {}]
  %s8 = inlined_call_operand.vmem [shape: f32[2,1,16], index: 8, kind: input, shape index: {}]
  %s9 = inlined_call_operand.vmem [shape: f32[1,32], index: 9, kind: input, shape index: {}]
  %s10 = inlined_call_operand.vmem [shape: f32[1,32], index: 10, kind: input, shape index: {}]
  %s11 = inlined_call_operand.vmem [shape: f32[2,8,32], index: 11, kind: output, shape index: {}]
  %s12 = sld [smem:[#allocation0]]
  $region77: #{seq2seq_transformer_forward.22} parent=0
    _
  %s14 = ssub.s32 1, %s12
  %s15 = scalar_select 0, %s14, %s12
  loop: start=0, step=1, limit=4
  $region2: #{seq2seq_transformer_forward.22} parent=0 // loop_pre_header
    _
  $region3: #{seq2seq_transformer_forward.22} parent=0 // loop_header
    %s17 = sphi 0, %s21
    %p18 = scmp.ge.s32.totalorder %s17, 4
    %s27 = sphi 0, %s29
    %s30 = sphi 0, %s27
    %s31 = sphi 0, %s30
    %s47 = sphi 0, %s31
    %s53 = sphi 0, %s55
    %s56 = sphi 0, %s53
    %s57 = sphi 0, %s56
    %s73 = sphi 0, %s57
    %s77 = sphi 0, %s77
    %s79 = sphi 0, %s77
    %s80 = sphi 0, %s79
    %s94 = sphi 0, %s80
    %s98 = sphi 0, %s98
    %s100 = sphi 0, %s98
    %s101 = sphi 0, %s100
    %s115 = sphi 0, %s101
    %s119 = sphi 0, %s119
    %s121 = sphi 0, %s119
    %s122 = sphi 0, %s121
    %s136 = sphi 0, %s122
    %s140 = sphi 0, %s140
    %s142 = sphi 0, %s140
    %s143 = sphi 0, %s142
    %s157 = sphi 0, %s143
    %s161 = sphi 0, %s161
    %s163 = sphi 0, %s161
    %s164 = sphi 0, %s163
    %s178 = sphi 0, %s164
    %s182 = sphi 0, %s182
    %s184 = sphi 0, %s182
    %s185 = sphi 0, %s184
    %s199 = sphi 0, %s185
    %s205 = sphi 0, %s207
    %s208 = sphi 0, %s205
    %s209 = sphi 0, %s208
    %s225 = sphi 0, %s209
    %s229 = sphi 0, %s229
    %s231 = sphi 0, %s229
    %s232 = sphi 0, %s231
    %s246 = sphi 0, %s232
    %s250 = sphi 0, %s250
    %s252 = sphi 0, %s250
    %s253 = sphi 0, %s252
    %s267 = sphi 0, %s253
    %s273 = sphi 0, %s275
    %s276 = sphi 0, %s273
    %s277 = sphi 0, %s276
    %s293 = sphi 0, %s277
  $region4: #{seq2seq_transformer_forward.22} parent=0 // loop_header_branch
    %20 = sbr.rel (%p18) target = $region8
  $region5: #{seq2seq_transformer_forward.22} parent=0 // loop_body
    %s22 = ssub.s32 %s17, 1
    %s23 = ssub.s32 %s17, 2
    %s24 = sadd.s32 %s17, 1
    %s25 = ssub.s32 %s17, %s24
    %p26 = scmp.eq.s32.totalorder %s25, 0
    %s28 = sadd.s32 %s27, 1
    %s29 = scalar_select %p26, %s27, %s28
    %p32 = pneg %p26
    %p33 = scmp.eq.s32.totalorder %s17, 1
    %p34 = por %p32, %p33
    %p35 = scmp.ne.s32.totalorder %s27, %s30
    %p36 = scmp.eq.s32.totalorder %s17, 0
    %p37 = por %p35, %p36
    %p38 = scmp.ne.s32.totalorder %s27, %s30
    %p39 = scmp.eq.s32.totalorder %s22, 1
    %p40 = por %p38, %p39
    %p41 = scmp.ne.s32.totalorder %s30, %s31
    %p42 = scmp.eq.s32.totalorder %s22, 0
    %p43 = por %p41, %p42
    %p44 = scmp.ne.s32.totalorder %s30, %s31
    %p45 = scmp.eq.s32.totalorder %s23, 1
    %p46 = por %p44, %p45
    %p48 = scmp.ne.s32.totalorder %s31, %s47
    %p49 = scmp.eq.s32.totalorder %s23, 0
    %p50 = por %p48, %p49
    %s51 = ssub.s32 %s17, %s24
    %p52 = scmp.eq.s32.totalorder %s51, 0
    %s54 = sadd.s32 %s53, 1
    %s55 = scalar_select %p52, %s53, %s54
    %p58 = pneg %p52
    %p59 = scmp.eq.s32.totalorder %s17, 1
    %p60 = por %p58, %p59
    %p61 = scmp.ne.s32.totalorder %s53, %s56
    %p62 = scmp.eq.s32.totalorder %s17, 0
    %p63 = por %p61, %p62
    %p64 = scmp.ne.s32.totalorder %s53, %s56
    %p65 = scmp.eq.s32.totalorder %s22, 1
    %p66 = por %p64, %p65
    %p67 = scmp.ne.s32.totalorder %s56, %s57
    %p68 = scmp.eq.s32.totalorder %s22, 0
    %p69 = por %p67, %p68
    %p70 = scmp.ne.s32.totalorder %s56, %s57
    %p71 = scmp.eq.s32.totalorder %s23, 1
    %p72 = por %p70, %p71
    %p74 = scmp.ne.s32.totalorder %s57, %s73
    %p75 = scmp.eq.s32.totalorder %s23, 0
    %p76 = por %p74, %p75
    %s78 = sadd.s32 %s77, 1
    %p81 = scmp.eq.s32.totalorder %s17, 1
    %p82 = scmp.ne.s32.totalorder %s77, %s79
    %p83 = scmp.eq.s32.totalorder %s17, 0
    %p84 = por %p82, %p83
    %p85 = scmp.ne.s32.totalorder %s77, %s79
    %p86 = scmp.eq.s32.totalorder %s22, 1
    %p87 = por %p85, %p86
    %p88 = scmp.ne.s32.totalorder %s79, %s80
    %p89 = scmp.eq.s32.totalorder %s22, 0
    %p90 = por %p88, %p89
    %p91 = scmp.ne.s32.totalorder %s79, %s80
    %p92 = scmp.eq.s32.totalorder %s23, 1
    %p93 = por %p91, %p92
    %p95 = scmp.ne.s32.totalorder %s80, %s94
    %p96 = scmp.eq.s32.totalorder %s23, 0
    %p97 = por %p95, %p96
    %s99 = sadd.s32 %s98, 1
    %p102 = scmp.eq.s32.totalorder %s17, 1
    %p103 = scmp.ne.s32.totalorder %s98, %s100
    %p104 = scmp.eq.s32.totalorder %s17, 0
    %p105 = por %p103, %p104
    %p106 = scmp.ne.s32.totalorder %s98, %s100
    %p107 = scmp.eq.s32.totalorder %s22, 1
    %p108 = por %p106, %p107
    %p109 = scmp.ne.s32.totalorder %s100, %s101
    %p110 = scmp.eq.s32.totalorder %s22, 0
    %p111 = por %p109, %p110
    %p112 = scmp.ne.s32.totalorder %s100, %s101
    %p113 = scmp.eq.s32.totalorder %s23, 1
    %p114 = por %p112, %p113
    %p116 = scmp.ne.s32.totalorder %s101, %s115
    %p117 = scmp.eq.s32.totalorder %s23, 0
    %p118 = por %p116, %p117
    %s120 = sadd.s32 %s119, 1
    %p123 = scmp.eq.s32.totalorder %s17, 1
    %p124 = scmp.ne.s32.totalorder %s119, %s121
    %p125 = scmp.eq.s32.totalorder %s17, 0
    %p126 = por %p124, %p125
    %p127 = scmp.ne.s32.totalorder %s119, %s121
    %p128 = scmp.eq.s32.totalorder %s22, 1
    %p129 = por %p127, %p128
    %p130 = scmp.ne.s32.totalorder %s121, %s122
    %p131 = scmp.eq.s32.totalorder %s22, 0
    %p132 = por %p130, %p131
    %p133 = scmp.ne.s32.totalorder %s121, %s122
    %p134 = scmp.eq.s32.totalorder %s23, 1
    %p135 = por %p133, %p134
    %p137 = scmp.ne.s32.totalorder %s122, %s136
    %p138 = scmp.eq.s32.totalorder %s23, 0
    %p139 = por %p137, %p138
    %s141 = sadd.s32 %s140, 1
    %p144 = scmp.eq.s32.totalorder %s17, 1
    %p145 = scmp.ne.s32.totalorder %s140, %s142
    %p146 = scmp.eq.s32.totalorder %s17, 0
    %p147 = por %p145, %p146
    %p148 = scmp.ne.s32.totalorder %s140, %s142
    %p149 = scmp.eq.s32.totalorder %s22, 1
    %p150 = por %p148, %p149
    %p151 = scmp.ne.s32.totalorder %s142, %s143
    %p152 = scmp.eq.s32.totalorder %s22, 0
    %p153 = por %p151, %p152
    %p154 = scmp.ne.s32.totalorder %s142, %s143
    %p155 = scmp.eq.s32.totalorder %s23, 1
    %p156 = por %p154, %p155
    %p158 = scmp.ne.s32.totalorder %s143, %s157
    %p159 = scmp.eq.s32.totalorder %s23, 0
    %p160 = por %p158, %p159
    %s162 = sadd.s32 %s161, 1
    %p165 = scmp.eq.s32.totalorder %s17, 1
    %p166 = scmp.ne.s32.totalorder %s161, %s163
    %p167 = scmp.eq.s32.totalorder %s17, 0
    %p168 = por %p166, %p167
    %p169 = scmp.ne.s32.totalorder %s161, %s163
    %p170 = scmp.eq.s32.totalorder %s22, 1
    %p171 = por %p169, %p170
    %p172 = scmp.ne.s32.totalorder %s163, %s164
    %p173 = scmp.eq.s32.totalorder %s22, 0
    %p174 = por %p172, %p173
    %p175 = scmp.ne.s32.totalorder %s163, %s164
    %p176 = scmp.eq.s32.totalorder %s23, 1
    %p177 = por %p175, %p176
    %p179 = scmp.ne.s32.totalorder %s164, %s178
    %p180 = scmp.eq.s32.totalorder %s23, 0
    %p181 = por %p179, %p180
    %s183 = sadd.s32 %s182, 1
    %p186 = scmp.eq.s32.totalorder %s17, 1
    %p187 = scmp.ne.s32.totalorder %s182, %s184
    %p188 = scmp.eq.s32.totalorder %s17, 0
    %p189 = por %p187, %p188
    %p190 = scmp.ne.s32.totalorder %s182, %s184
    %p191 = scmp.eq.s32.totalorder %s22, 1
    %p192 = por %p190, %p191
    %p193 = scmp.ne.s32.totalorder %s184, %s185
    %p194 = scmp.eq.s32.totalorder %s22, 0
    %p195 = por %p193, %p194
    %p196 = scmp.ne.s32.totalorder %s184, %s185
    %p197 = scmp.eq.s32.totalorder %s23, 1
    %p198 = por %p196, %p197
    %p200 = scmp.ne.s32.totalorder %s185, %s199
    %p201 = scmp.eq.s32.totalorder %s23, 0
    %p202 = por %p200, %p201
    %s203 = ssub.s32 %s17, %s24
    %p204 = scmp.eq.s32.totalorder %s203, 0
    %s206 = sadd.s32 %s205, 1
    %s207 = scalar_select %p204, %s205, %s206
    %p210 = pneg %p204
    %p211 = scmp.eq.s32.totalorder %s17, 1
    %p212 = por %p210, %p211
    %p213 = scmp.ne.s32.totalorder %s205, %s208
    %p214 = scmp.eq.s32.totalorder %s17, 0
    %p215 = por %p213, %p214
    %p216 = scmp.ne.s32.totalorder %s205, %s208
    %p217 = scmp.eq.s32.totalorder %s22, 1
    %p218 = por %p216, %p217
    %p219 = scmp.ne.s32.totalorder %s208, %s209
    %p220 = scmp.eq.s32.totalorder %s22, 0
    %p221 = por %p219, %p220
    %p222 = scmp.ne.s32.totalorder %s208, %s209
    %p223 = scmp.eq.s32.totalorder %s23, 1
    %p224 = por %p222, %p223
    %p226 = scmp.ne.s32.totalorder %s209, %s225
    %p227 = scmp.eq.s32.totalorder %s23, 0
    %p228 = por %p226, %p227
    %s230 = sadd.s32 %s229, 1
    %p233 = scmp.eq.s32.totalorder %s17, 1
    %p234 = scmp.ne.s32.totalorder %s229, %s231
    %p235 = scmp.eq.s32.totalorder %s17, 0
    %p236 = por %p234, %p235
    %p237 = scmp.ne.s32.totalorder %s229, %s231
    %p238 = scmp.eq.s32.totalorder %s22, 1
    %p239 = por %p237, %p238
    %p240 = scmp.ne.s32.totalorder %s231, %s232
    %p241 = scmp.eq.s32.totalorder %s22, 0
    %p242 = por %p240, %p241
    %p243 = scmp.ne.s32.totalorder %s231, %s232
    %p244 = scmp.eq.s32.totalorder %s23, 1
    %p245 = por %p243, %p244
    %p247 = scmp.ne.s32.totalorder %s232, %s246
    %p248 = scmp.eq.s32.totalorder %s23, 0
    %p249 = por %p247, %p248
    %s251 = sadd.s32 %s250, 1
    %p254 = scmp.eq.s32.totalorder %s17, 1
    %p255 = scmp.ne.s32.totalorder %s250, %s252
    %p256 = scmp.eq.s32.totalorder %s17, 0
    %p257 = por %p255, %p256
    %p258 = scmp.ne.s32.totalorder %s250, %s252
    %p259 = scmp.eq.s32.totalorder %s22, 1
    %p260 = por %p258, %p259
    %p261 = scmp.ne.s32.totalorder %s252, %s253
    %p262 = scmp.eq.s32.totalorder %s22, 0
    %p263 = por %p261, %p262
    %p264 = scmp.ne.s32.totalorder %s252, %s253
    %p265 = scmp.eq.s32.totalorder %s23, 1
    %p266 = por %p264, %p265
    %p268 = scmp.ne.s32.totalorder %s253, %s267
    %p269 = scmp.eq.s32.totalorder %s23, 0
    %p270 = por %p268, %p269
    %s271 = ssub.s32 %s17, %s24
    %p272 = scmp.eq.s32.totalorder %s271, 0
    %s274 = sadd.s32 %s273, 1
    %s275 = scalar_select %p272, %s273, %s274
    %p278 = pneg %p272
    %p279 = scmp.eq.s32.totalorder %s17, 1
    %p280 = por %p278, %p279
    %p281 = scmp.ne.s32.totalorder %s273, %s276
    %p282 = scmp.eq.s32.totalorder %s17, 0
    %p283 = por %p281, %p282
    %p284 = scmp.ne.s32.totalorder %s273, %s276
    %p285 = scmp.eq.s32.totalorder %s22, 1
    %p286 = por %p284, %p285
    %p287 = scmp.ne.s32.totalorder %s276, %s277
    %p288 = scmp.eq.s32.totalorder %s22, 0
    %p289 = por %p287, %p288
    %p290 = scmp.ne.s32.totalorder %s276, %s277
    %p291 = scmp.eq.s32.totalorder %s23, 1
    %p292 = por %p290, %p291
    %p294 = scmp.ne.s32.totalorder %s277, %s293
    %p295 = scmp.eq.s32.totalorder %s23, 0
    %p296 = por %p294, %p295
    %p297 = scmp.le.s32.totalorder 1, %s17
    %p298 = scmp.lt.s32.totalorder %s17, 3
    %p299 = pnand %p297, %p298
    %p300 = pneg %p299
    // Predicated region
    $region9: #{seq2seq_transformer_forward.22} parent=5 // pred_check
      _
    $region10: #{seq2seq_transformer_forward.22} parent=5 // pred_check_branch
      %302 = sbr.rel (%p299) target = $region12
    $region11: #{seq2seq_transformer_forward.22} parent=5 // pred_region
      %s303 = ssub.s32 %s17, 1
      // Predicated region
      $region13: #{seq2seq_transformer_forward.22} parent=11 // pred_check
        %p304 = pneg %p90
      $region14: #{seq2seq_transformer_forward.22} parent=11 // pred_check_branch
        %306 = sbr.rel (%p304) target = $region16
      $region15: #{seq2seq_transformer_forward.22} parent=11 // pred_region
        _
      $region16: #{seq2seq_transformer_forward.22} parent=11 // pred_fallthru
        _
      // Predicated region
      $region17: #{seq2seq_transformer_forward.22} parent=11 // pred_check
        %p307 = pneg %p111
      $region18: #{seq2seq_transformer_forward.22} parent=11 // pred_check_branch
        %309 = sbr.rel (%p307) target = $region20
      $region19: #{seq2seq_transformer_forward.22} parent=11 // pred_region
        _
      $region20: #{seq2seq_transformer_forward.22} parent=11 // pred_fallthru
        _
      // Predicated region
      $region21: #{seq2seq_transformer_forward.22} parent=11 // pred_check
        %p310 = pneg %p132
      $region22: #{seq2seq_transformer_forward.22} parent=11 // pred_check_branch
        %312 = sbr.rel (%p310) target = $region24
      $region23: #{seq2seq_transformer_forward.22} parent=11 // pred_region
        _
      $region24: #{seq2seq_transformer_forward.22} parent=11 // pred_fallthru
        _
      // Predicated region
      $region25: #{seq2seq_transformer_forward.22} parent=11 // pred_check
        %p313 = pneg %p153
      $region26: #{seq2seq_transformer_forward.22} parent=11 // pred_check_branch
        %315 = sbr.rel (%p313) target = $region28
      $region27: #{seq2seq_transformer_forward.22} parent=11 // pred_region
        _
      $region28: #{seq2seq_transformer_forward.22} parent=11 // pred_fallthru
        _
      // Predicated region
      $region29: #{seq2seq_transformer_forward.22} parent=11 // pred_check
        %p316 = pneg %p174
      $region30: #{seq2seq_transformer_forward.22} parent=11 // pred_check_branch
        %318 = sbr.rel (%p316) target = $region32
      $region31: #{seq2seq_transformer_forward.22} parent=11 // pred_region
        _
      $region32: #{seq2seq_transformer_forward.22} parent=11 // pred_fallthru
        _
      // Predicated region
      $region33: #{seq2seq_transformer_forward.22} parent=11 // pred_check
        %p319 = pneg %p195
      $region34: #{seq2seq_transformer_forward.22} parent=11 // pred_check_branch
        %321 = sbr.rel (%p319) target = $region36
      $region35: #{seq2seq_transformer_forward.22} parent=11 // pred_region
        _
      $region36: #{seq2seq_transformer_forward.22} parent=11 // pred_fallthru
        _
      // Predicated region
      $region37: #{seq2seq_transformer_forward.22} parent=11 // pred_check
        %p322 = pneg %p242
      $region38: #{seq2seq_transformer_forward.22} parent=11 // pred_check_branch
        %324 = sbr.rel (%p322) target = $region40
      $region39: #{seq2seq_transformer_forward.22} parent=11 // pred_region
        _
      $region40: #{seq2seq_transformer_forward.22} parent=11 // pred_fallthru
        _
      // Predicated region
      $region41: #{seq2seq_transformer_forward.22} parent=11 // pred_check
        %p325 = pneg %p263
      $region42: #{seq2seq_transformer_forward.22} parent=11 // pred_check_branch
        %327 = sbr.rel (%p325) target = $region44
      $region43: #{seq2seq_transformer_forward.22} parent=11 // pred_region
        _
      $region44: #{seq2seq_transformer_forward.22} parent=11 // pred_fallthru
        _
    $region12: #{seq2seq_transformer_forward.22} parent=5 // pred_fallthru
      _
    %p328 = scmp.lt.s32.totalorder %s17, 2
    // Predicated region
    $region45: #{seq2seq_transformer_forward.22} parent=5 // pred_check
      %p329 = pneg %p328
    $region46: #{seq2seq_transformer_forward.22} parent=5 // pred_check_branch
      %331 = sbr.rel (%p329) target = $region48
    $region47: #{seq2seq_transformer_forward.22} parent=5 // pred_region
      // Predicated region
      $region49: #{seq2seq_transformer_forward.22} parent=47 // pred_check
        %p332 = pneg %p37
      $region50: #{seq2seq_transformer_forward.22} parent=47 // pred_check_branch
        %334 = sbr.rel (%p332) target = $region52
      $region51: #{seq2seq_transformer_forward.22} parent=47 // pred_region
        %p335 = scmp.lt.s32.totalorder %s17, 1
        %s336 = scalar_select %p335, %s17, 1
        %s337 = smul.addr %s336, 8
        %s338 = scalar_lea.vmem %s0, %s337
      $region52: #{seq2seq_transformer_forward.22} parent=47 // pred_fallthru
        _
      // Predicated region
      $region53: #{seq2seq_transformer_forward.22} parent=47 // pred_check
        %p339 = pneg %p63
      $region54: #{seq2seq_transformer_forward.22} parent=47 // pred_check_branch
        %341 = sbr.rel (%p339) target = $region56
      $region55: #{seq2seq_transformer_forward.22} parent=47 // pred_region
        %p342 = scmp.lt.s32.totalorder %s17, 1
        %s343 = scalar_select %p342, %s17, 1
        %s344 = smul.addr %s343, 2
        %s345 = smul.addr %s344, 8
        %s346 = scalar_lea.vmem %s1, %s345
      $region56: #{seq2seq_transformer_forward.22} parent=47 // pred_fallthru
        _
      // Predicated region
      $region57: #{seq2seq_transformer_forward.22} parent=47 // pred_check
        %p347 = pneg %p215
      $region58: #{seq2seq_transformer_forward.22} parent=47 // pred_check_branch
        %349 = sbr.rel (%p347) target = $region60
      $region59: #{seq2seq_transformer_forward.22} parent=47 // pred_region
        %p350 = scmp.lt.s32.totalorder %s17, 1
        %s351 = scalar_select %p350, %s17, 1
        %s352 = scalar_lea.vmem %s8, %s351
      $region60: #{seq2seq_transformer_forward.22} parent=47 // pred_fallthru
        _
    $region48: #{seq2seq_transformer_forward.22} parent=5 // pred_fallthru
      _
    %p353 = scmp.le.s32.totalorder 1, %s17
    %p354 = scmp.lt.s32.totalorder %s17, 3
    %p355 = pnand %p353, %p354
    %p356 = pneg %p355
    // Predicated region
    $region61: #{seq2seq_transformer_forward.22} parent=5 // pred_check
      _
    $region62: #{seq2seq_transformer_forward.22} parent=5 // pred_check_branch
      %358 = sbr.rel (%p355) target = $region64
    $region63: #{seq2seq_transformer_forward.22} parent=5 // pred_region
      %s359 = ssub.s32 %s17, 1
      %p360 = scmp.lt.s32.totalorder %s22, 1
      %s361 = scalar_select %p360, %s22, 1
      %s362 = smul.addr %s361, 8
      %s363 = scalar_lea.vmem %s0, %s362
      %p364 = pneg %p43
      %p365 = pneg %p40
      %p366 = scmp.lt.s32.totalorder %s22, 1
      %s367 = scalar_select %p366, %s22, 1
      %s368 = smul.addr %s367, 2
      %s369 = smul.addr %s368, 8
      %s370 = scalar_lea.vmem %s1, %s369
      %p371 = pneg %p69
      %p372 = pneg %p66
      %p373 = pneg %p90
      %p374 = pneg %p87
      %p375 = pneg %p111
      %p376 = pneg %p108
      %p377 = pneg %p132
      %p378 = pneg %p129
      %p379 = pneg %p153
      %p380 = pneg %p150
      %p381 = pneg %p174
      %p382 = pneg %p171
      %p383 = pneg %p195
      %p384 = pneg %p192
      %p385 = scmp.lt.s32.totalorder %s22, 1
      %s386 = scalar_select %p385, %s22, 1
      %s387 = scalar_lea.vmem %s8, %s386
      %p388 = pneg %p221
      %p389 = pneg %p218
      %p390 = pneg %p242
      %p391 = pneg %p239
      %p392 = pneg %p263
      %p393 = pneg %p260
      %p394 = pneg %p289
      %p395 = pneg %p286
      %p396 = scmp.lt.s32.totalorder %s22, 1
      %s397 = scalar_select %p396, %s22, 1
      %s398 = smul.addr %s397, 8
      %s399 = scalar_lea.vmem %s11, %s398
      %p400 = scmp.lt.s32.totalorder %s22, 1
      %s401 = scalar_select %p400, %s22, 1
      %s402 = smul.addr %s401, 8
      %s403 = scalar_lea.vmem %s0, %s402
      %p404 = scmp.lt.s32.totalorder %s22, 1
      %s405 = scalar_select %p404, %s22, 1
      %s406 = smul.addr %s405, 2
      %s407 = smul.addr %s406, 8
      %s408 = scalar_lea.vmem %s1, %s407
      %p409 = scmp.lt.s32.totalorder %s22, 1
      %s410 = scalar_select %p409, %s22, 1
      %s411 = scalar_lea.vmem %s8, %s410
      %p412 = scmp.lt.s32.totalorder %s22, 1
      %s413 = scalar_select %p412, %s22, 1
      %s414 = smul.addr %s413, 8
      %s415 = scalar_lea.vmem %s11, %s414
      %v416 = vld [vmem:[%s403] sm:$0xff]
      %v417 = vld [vmem:[%s408] sm:$0xff]
      %v418 = vld [vmem:[%s408 + $0x8] sm:$0xff]
      %v419 = vld [vmem:[%s2] sm:$0xff]
      %v420 = vld [vmem:[%s2 + $0x8] sm:$0xff]
      %v421 = vld [vmem:[%s2 + $0x10] sm:$0xff]
      %v422 = vld [vmem:[%s2 + $0x18] sm:$0xff]
      %v423 = vld [vmem:[%s3] sm:$0x1]
      %v425 = vlaneseq
      %v426 = vshrl.u32 %v425, 7
      %v427 = vsub.s32 0, %v426
      %v428 = vrot.slane %v423, %v427
      %vm430 = vcmask 261120
      %v432 = vsel %vm430, %v416, 0
      %434 = vmatprep.subr.mxu0 0.0
      %435 = vmatpush1.msra.mxu0 %v419
      %436 = vmatprep.subr.mxu0 0.0
      %437 = vmatpush1.msra.mxu0 %v420
      %438 = vmatprep.subr.mxu0 0.0
      %439 = vmatpush1.msra.mxu0 %v421
      %440 = vmatprep.subr.mxu0 0.0
      %441 = vmatpush1.msra.mxu0 %v422
      %442 = vmatprep.subr.mxu0 0.0
      %443 = vmatpush1.msra.mxu0 0.0
      %444 = vmatprep.subr.mxu0 0.0
      %445 = vmatpush1.msra.mxu0 0.0
      %446 = vmatprep.subr.mxu0 0.0
      %447 = vmatpush1.msra.mxu0 0.0
      %448 = vmatprep.subr.mxu0 0.0
      %449 = vmatpush1.msra.mxu0 0.0
      %450 = vmatprep.subr.mxu0 0.0
      %451 = vmatpush1.msra.mxu0 0.0
      %452 = vmatprep.subr.mxu0 0.0
      %453 = vmatpush1.msra.mxu0 0.0
      %454 = vmatprep.subr.mxu0 0.0
      %455 = vmatpush1.msra.mxu0 0.0
      %456 = vmatprep.subr.mxu0 0.0
      %457 = vmatpush1.msra.mxu0 0.0
      %458 = vmatprep.subr.mxu0 0.0
      %459 = vmatpush1.msra.mxu0 0.0
      %460 = vmatprep.subr.mxu0 0.0
      %461 = vmatpush1.msra.mxu0 0.0
      %462 = vmatprep.subr.mxu0 0.0
      %463 = vmatpush1.msra.mxu0 0.0
      %464 = vmatprep.subr.mxu0 0.0
      %465 = vmatpush1.msra.mxu0 0.0
      %466 = vmatprep.subr.mxu0 0.0
      %467 = vmatpush1.msra.mxu0 0.0
      %468 = vmatprep.subr.mxu0 0.0
      %469 = vmatpush1.msra.mxu0 0.0
      %470 = vmatprep.subr.mxu0 0.0
      %471 = vmatpush1.msra.mxu0 0.0
      %472 = vmatprep.subr.mxu0 0.0
      %473 = vmatpush1.msra.mxu0 0.0
      %474 = vmatprep.subr.mxu0 0.0
      %475 = vmatpush1.msra.mxu0 0.0
      %476 = vmatprep.subr.mxu0 0.0
      %477 = vmatpush1.msra.mxu0 0.0
      %478 = vmatprep.subr.mxu0 0.0
      %479 = vmatpush1.msra.mxu0 0.0
      %480 = vmatprep.subr.mxu0 0.0
      %481 = vmatpush1.msra.mxu0 0.0
      %482 = vmatprep.subr.mxu0 0.0
      %483 = vmatpush1.msra.mxu0 0.0
      %484 = vmatprep.subr.mxu0 0.0
      %485 = vmatpush1.msra.mxu0 0.0
      %486 = vmatprep.subr.mxu0 0.0
      %487 = vmatpush1.msra.mxu0 0.0
      %488 = vmatprep.subr.mxu0 0.0
      %489 = vmatpush1.msra.mxu0 0.0
      %490 = vmatprep.subr.mxu0 0.0
      %491 = vmatpush1.msra.mxu0 0.0
      %492 = vmatprep.subr.mxu0 0.0
      %493 = vmatpush1.msra.mxu0 0.0
      %494 = vmatprep.subr.mxu0 0.0
      %495 = vmatpush1.msra.mxu0 0.0
      %496 = vmatprep.subr.mxu0 0.0
      %497 = vmatpush1.msra.mxu0 0.0
      %498 = vmatprep.mubr.f32.mxu0 0.0
      %499 = vmatmul.mubr.f32.gmra.mrb[0].mxu0 %v432
      %v500 = vpop.f32.mrb[0].mxu0
      %v501 = vadd.f32 %v428, %v500
      %v502 = vpop.f32.mrb[0].mxu0
      %503 = vdwg.mxu0
      %v504 = vld [vmem:[%s4] sm:$0xff]
      %v505 = vld [vmem:[%s4 + $0x8] sm:$0xff]
      %v506 = vld [vmem:[%s4 + $0x10] sm:$0xff]
      %v507 = vld [vmem:[%s4 + $0x18] sm:$0xff]
      %v508 = vld [vmem:[%s5] sm:$0x1]
      %v510 = vlaneseq
      %v511 = vshrl.u32 %v510, 7
      %v512 = vsub.s32 0, %v511
      %v513 = vrot.slane %v508, %v512
      %v516 = vsel %vm430, %v417, 0
      %v519 = vsel %vm430, %v418, 0
      %521 = vmatprep.subr.mxu0 0.0
      %522 = vmatpush1.msra.mxu0 %v504
      %523 = vmatprep.subr.mxu0 0.0
      %524 = vmatpush1.msra.mxu0 %v505
      %525 = vmatprep.subr.mxu0 0.0
      %526 = vmatpush1.msra.mxu0 %v506
      %527 = vmatprep.subr.mxu0 0.0
      %528 = vmatpush1.msra.mxu0 %v507
      %529 = vmatprep.subr.mxu0 0.0
      %530 = vmatpush1.msra.mxu0 0.0
      %531 = vmatprep.subr.mxu0 0.0
      %532 = vmatpush1.msra.mxu0 0.0
      %533 = vmatprep.subr.mxu0 0.0
      %534 = vmatpush1.msra.mxu0 0.0
      %535 = vmatprep.subr.mxu0 0.0
      %536 = vmatpush1.msra.mxu0 0.0
      %537 = vmatprep.subr.mxu0 0.0
      %538 = vmatpush1.msra.mxu0 0.0
      %539 = vmatprep.subr.mxu0 0.0
      %540 = vmatpush1.msra.mxu0 0.0
      %541 = vmatprep.subr.mxu0 0.0
      %542 = vmatpush1.msra.mxu0 0.0
      %543 = vmatprep.subr.mxu0 0.0
      %544 = vmatpush1.msra.mxu0 0.0
      %545 = vmatprep.subr.mxu0 0.0
      %546 = vmatpush1.msra.mxu0 0.0
      %547 = vmatprep.subr.mxu0 0.0
      %548 = vmatpush1.msra.mxu0 0.0
      %549 = vmatprep.subr.mxu0 0.0
      %550 = vmatpush1.msra.mxu0 0.0
      %551 = vmatprep.subr.mxu0 0.0
      %552 = vmatpush1.msra.mxu0 0.0
      %553 = vmatprep.subr.mxu0 0.0
      %554 = vmatpush1.msra.mxu0 0.0
      %555 = vmatprep.subr.mxu0 0.0
      %556 = vmatpush1.msra.mxu0 0.0
      %557 = vmatprep.subr.mxu0 0.0
      %558 = vmatpush1.msra.mxu0 0.0
      %559 = vmatprep.subr.mxu0 0.0
      %560 = vmatpush1.msra.mxu0 0.0
      %561 = vmatprep.subr.mxu0 0.0
      %562 = vmatpush1.msra.mxu0 0.0
      %563 = vmatprep.subr.mxu0 0.0
      %564 = vmatpush1.msra.mxu0 0.0
      %565 = vmatprep.subr.mxu0 0.0
      %566 = vmatpush1.msra.mxu0 0.0
      %567 = vmatprep.subr.mxu0 0.0
      %568 = vmatpush1.msra.mxu0 0.0
      %569 = vmatprep.subr.mxu0 0.0
      %570 = vmatpush1.msra.mxu0 0.0
      %571 = vmatprep.subr.mxu0 0.0
      %572 = vmatpush1.msra.mxu0 0.0
      %573 = vmatprep.subr.mxu0 0.0
      %574 = vmatpush1.msra.mxu0 0.0
      %575 = vmatprep.subr.mxu0 0.0
      %576 = vmatpush1.msra.mxu0 0.0
      %577 = vmatprep.subr.mxu0 0.0
      %578 = vmatpush1.msra.mxu0 0.0
      %579 = vmatprep.subr.mxu0 0.0
      %580 = vmatpush1.msra.mxu0 0.0
      %581 = vmatprep.subr.mxu0 0.0
      %582 = vmatpush1.msra.mxu0 0.0
      %583 = vmatprep.subr.mxu0 0.0
      %584 = vmatpush1.msra.mxu0 0.0
      %585 = vmatprep.mubr.f32.mxu0 0.0
      %586 = vmatmul.mubr.f32.gmra.mrb[0].mxu0 %v516
      %v587 = vpop.f32.mrb[0].mxu0
      %v588 = vadd.f32 %v513, %v587
      %v589 = vpop.f32.mrb[0].mxu0
      %590 = vmatprep.mubr.f32.mxu0 0.0
      %591 = vmatmul.mubr.f32.gmra.mrb[0].mxu0 %v519
      %v592 = vpop.f32.mrb[0].mxu0
      %v593 = vadd.f32 %v513, %v592
      %v594 = vpop.f32.mrb[0].mxu0
      %595 = vdwg.mxu0
      %v596 = vld [vmem:[%s411] sm:$0x1]
      %v597 = vld [vmem:[%s6] sm:$0xff]
      %v598 = vld [vmem:[%s6 + $0x8] sm:$0xff]
      %v599 = vld [vmem:[%s6 + $0x10] sm:$0xff]
      %v600 = vld [vmem:[%s6 + $0x18] sm:$0xff]
      %vm601 = vcmask 64512
      %v603 = vsel %vm601, %v501, 0
      %v606 = vsel %vm601, %v588, 0
      %v609 = vsel %vm601, %v593, 0
      %611 = vmatprep.subr.mxu0 0.0
      %612 = vmatpush1.xpose.msra.mxu0 %v606
      %613 = vmatprep.subr.mxu0 0.0
      %614 = vmatpush1.xpose.msra.mxu0 %v609
      %615 = vmatprep.subr.mxu0 0.0
      %616 = vmatpush1.xpose.msra.mxu0 0.0
      %617 = vmatprep.subr.mxu0 0.0
      %618 = vmatpush1.xpose.msra.mxu0 0.0
      %619 = vmatprep.subr.mxu0 0.0
      %620 = vmatpush1.xpose.msra.mxu0 0.0
      %621 = vmatprep.subr.mxu0 0.0
      %622 = vmatpush1.xpose.msra.mxu0 0.0
      %623 = vmatprep.subr.mxu0 0.0
      %624 = vmatpush1.xpose.msra.mxu0 0.0
      %625 = vmatprep.subr.mxu0 0.0
      %626 = vmatpush1.xpose.msra.mxu0 0.0
      %627 = vmatprep.subr.mxu0 0.0
      %628 = vmatpush1.xpose.msra.mxu0 0.0
      %629 = vmatprep.subr.mxu0 0.0
      %630 = vmatpush1.xpose.msra.mxu0 0.0
      %631 = vmatprep.subr.mxu0 0.0
      %632 = vmatpush1.xpose.msra.mxu0 0.0
      %633 = vmatprep.subr.mxu0 0.0
      %634 = vmatpush1.xpose.msra.mxu0 0.0
      %635 = vmatprep.subr.mxu0 0.0
      %636 = vmatpush1.xpose.msra.mxu0 0.0
      %637 = vmatprep.subr.mxu0 0.0
      %638 = vmatpush1.xpose.msra.mxu0 0.0
      %639 = vmatprep.subr.mxu0 0.0
      %640 = vmatpush1.xpose.msra.mxu0 0.0
      %641 = vmatprep.subr.mxu0 0.0
      %642 = vmatpush1.xpose.msra.mxu0 0.0
      %643 = vmatprep.subr.mxu0 0.0
      %644 = vmatpush1.xpose.msra.mxu0 0.0
      %645 = vmatprep.subr.mxu0 0.0
      %646 = vmatpush1.xpose.msra.mxu0 0.0
      %647 = vmatprep.subr.mxu0 0.0
      %648 = vmatpush1.xpose.msra.mxu0 0.0
      %649 = vmatprep.subr.mxu0 0.0
      %650 = vmatpush1.xpose.msra.mxu0 0.0
      %651 = vmatprep.subr.mxu0 0.0
      %652 = vmatpush1.xpose.msra.mxu0 0.0
      %653 = vmatprep.subr.mxu0 0.0
      %654 = vmatpush1.xpose.msra.mxu0 0.0
      %655 = vmatprep.subr.mxu0 0.0
      %656 = vmatpush1.xpose.msra.mxu0 0.0
      %657 = vmatprep.subr.mxu0 0.0
      %658 = vmatpush1.xpose.msra.mxu0 0.0
      %659 = vmatprep.subr.mxu0 0.0
      %660 = vmatpush1.xpose.msra.mxu0 0.0
      %661 = vmatprep.subr.mxu0 0.0
      %662 = vmatpush1.xpose.msra.mxu0 0.0
      %663 = vmatprep.subr.mxu0 0.0
      %664 = vmatpush1.xpose.msra.mxu0 0.0
      %665 = vmatprep.subr.mxu0 0.0
      %666 = vmatpush1.xpose.msra.mxu0 0.0
      %667 = vmatprep.subr.mxu0 0.0
      %668 = vmatpush1.xpose.msra.mxu0 0.0
      %669 = vmatprep.subr.mxu0 0.0
      %670 = vmatpush1.xpose.msra.mxu0 0.0
      %671 = vmatprep.subr.mxu0 0.0
      %672 = vmatpush1.xpose.msra.mxu0 0.0
      %673 = vmatprep.subr.mxu0 0.0
      %674 = vmatpush1.xpose.msra.mxu0 0.0
      %675 = vmatprep.mubr.f32.mxu0 0.0
      %676 = vmatmul.mubr.f32.gmra.mrb[0].mxu0 %v603
      %v677 = vpop.f32.mrb[0].mxu0
      %v678 = vadd.f32 0.0, %v677
      %v679 = vpop.f32.mrb[0].mxu0
      %680 = vdwg.mxu0
      %v681 = vmul.f32 %v678, 0.35355338
      %v683 = vlaneseq
      %v684 = vshrl.u32 %v683, 7
      %v685 = vsub.s32 0, %v684
      %v686 = vrot.slane %v596, %v685
      %v688 = vadd.f32 %v681, %v686
      %vm689 = vcmask 130048
      %v690 = vsel %vm689, %v688, -inf
      %691 = vmax.xlane.f32.xlu0 %v690
      %v692 = vpop.xlane.xlu0 %691
      %v693 = vsub.f32 %v688, %v692
      %v694 = vmul.f32 %v693, 1.442695
      %v695 = vpow.pop %v694
      %v696 = vsel %vm689, %v695, 0.0
      %697 = vadd.xlane.f32.xlu0 %v696
      %v698 = vpop.xlane.xlu0 %697
      %v699 = vrcp.pop %v698
      %v700 = vmul.f32 %v695, %v699
      %701 = vrot.lane.b32.xlu0 %v588, 96
      %v702 = vpop.permute.xlu0 %701
      %703 = vrot.lane.b32.xlu0 %v593, 96
      %v704 = vpop.permute.xlu0 %703
      %v708 = vsel %vm689, %v700, 0
      %710 = vmatprep.subr.mxu0 0.0
      %711 = vmatpush1.msra.mxu0 %v702
      %712 = vmatprep.subr.mxu0 0.0
      %713 = vmatpush1.msra.mxu0 %v704
      %714 = vmatprep.subr.mxu0 0.0
      %715 = vmatpush1.msra.mxu0 0.0
      %716 = vmatprep.subr.mxu0 0.0
      %717 = vmatpush1.msra.mxu0 0.0
      %718 = vmatprep.subr.mxu0 0.0
      %719 = vmatpush1.msra.mxu0 0.0
      %720 = vmatprep.subr.mxu0 0.0
      %721 = vmatpush1.msra.mxu0 0.0
      %722 = vmatprep.subr.mxu0 0.0
      %723 = vmatpush1.msra.mxu0 0.0
      %724 = vmatprep.subr.mxu0 0.0
      %725 = vmatpush1.msra.mxu0 0.0
      %726 = vmatprep.subr.mxu0 0.0
      %727 = vmatpush1.msra.mxu0 0.0
      %728 = vmatprep.subr.mxu0 0.0
      %729 = vmatpush1.msra.mxu0 0.0
      %730 = vmatprep.subr.mxu0 0.0
      %731 = vmatpush1.msra.mxu0 0.0
      %732 = vmatprep.subr.mxu0 0.0
      %733 = vmatpush1.msra.mxu0 0.0
      %734 = vmatprep.subr.mxu0 0.0
      %735 = vmatpush1.msra.mxu0 0.0
      %736 = vmatprep.subr.mxu0 0.0
      %737 = vmatpush1.msra.mxu0 0.0
      %738 = vmatprep.subr.mxu0 0.0
      %739 = vmatpush1.msra.mxu0 0.0
      %740 = vmatprep.subr.mxu0 0.0
      %741 = vmatpush1.msra.mxu0 0.0
      %742 = vmatprep.subr.mxu0 0.0
      %743 = vmatpush1.msra.mxu0 0.0
      %744 = vmatprep.subr.mxu0 0.0
      %745 = vmatpush1.msra.mxu0 0.0
      %746 = vmatprep.subr.mxu0 0.0
      %747 = vmatpush1.msra.mxu0 0.0
      %748 = vmatprep.subr.mxu0 0.0
      %749 = vmatpush1.msra.mxu0 0.0
      %750 = vmatprep.subr.mxu0 0.0
      %751 = vmatpush1.msra.mxu0 0.0
      %752 = vmatprep.subr.mxu0 0.0
      %753 = vmatpush1.msra.mxu0 0.0
      %754 = vmatprep.subr.mxu0 0.0
      %755 = vmatpush1.msra.mxu0 0.0
      %756 = vmatprep.subr.mxu0 0.0
      %757 = vmatpush1.msra.mxu0 0.0
      %758 = vmatprep.subr.mxu0 0.0
      %759 = vmatpush1.msra.mxu0 0.0
      %760 = vmatprep.subr.mxu0 0.0
      %761 = vmatpush1.msra.mxu0 0.0
      %762 = vmatprep.subr.mxu0 0.0
      %763 = vmatpush1.msra.mxu0 0.0
      %764 = vmatprep.subr.mxu0 0.0
      %765 = vmatpush1.msra.mxu0 0.0
      %766 = vmatprep.subr.mxu0 0.0
      %767 = vmatpush1.msra.mxu0 0.0
      %768 = vmatprep.subr.mxu0 0.0
      %769 = vmatpush1.msra.mxu0 0.0
      %770 = vmatprep.subr.mxu0 0.0
      %771 = vmatpush1.msra.mxu0 0.0
      %772 = vmatprep.subr.mxu0 0.0
      %773 = vmatpush1.msra.mxu0 0.0
      %774 = vmatprep.mubr.f32.mxu0 0.0
      %775 = vmatmul.mubr.f32.gmra.mrb[0].mxu0 %v708
      %v776 = vpop.f32.mrb[0].mxu0
      %v777 = vadd.f32 0.0, %v776
      %v778 = vpop.f32.mrb[0].mxu0
      %779 = vdwg.mxu0
      %780 = vrot.lane.b32.xlu0 %v501, 120
      %v781 = vpop.permute.xlu0 %780
      %782 = vrot.lane.b32.xlu0 %v588, 120
      %v783 = vpop.permute.xlu0 %782
      %784 = vrot.lane.b32.xlu0 %v593, 120
      %v785 = vpop.permute.xlu0 %784
      %v786 = vsel %vm601, %v781, 0
      %v788 = vsel %vm601, %v783, 0
      %v790 = vsel %vm601, %v785, 0
      %792 = vmatprep.subr.mxu0 0.0
      %793 = vmatpush1.xpose.msra.mxu0 %v788
      %794 = vmatprep.subr.mxu0 0.0
      %795 = vmatpush1.xpose.msra.mxu0 %v790
      %796 = vmatprep.subr.mxu0 0.0
      %797 = vmatpush1.xpose.msra.mxu0 0.0
      %798 = vmatprep.subr.mxu0 0.0
      %799 = vmatpush1.xpose.msra.mxu0 0.0
      %800 = vmatprep.subr.mxu0 0.0
      %801 = vmatpush1.xpose.msra.mxu0 0.0
      %802 = vmatprep.subr.mxu0 0.0
      %803 = vmatpush1.xpose.msra.mxu0 0.0
      %804 = vmatprep.subr.mxu0 0.0
      %805 = vmatpush1.xpose.msra.mxu0 0.0
      %806 = vmatprep.subr.mxu0 0.0
      %807 = vmatpush1.xpose.msra.mxu0 0.0
      %808 = vmatprep.subr.mxu0 0.0
      %809 = vmatpush1.xpose.msra.mxu0 0.0
      %810 = vmatprep.subr.mxu0 0.0
      %811 = vmatpush1.xpose.msra.mxu0 0.0
      %812 = vmatprep.subr.mxu0 0.0
      %813 = vmatpush1.xpose.msra.mxu0 0.0
      %814 = vmatprep.subr.mxu0 0.0
      %815 = vmatpush1.xpose.msra.mxu0 0.0
      %816 = vmatprep.subr.mxu0 0.0
      %817 = vmatpush1.xpose.msra.mxu0 0.0
      %818 = vmatprep.subr.mxu0 0.0
      %819 = vmatpush1.xpose.msra.mxu0 0.0
      %820 = vmatprep.subr.mxu0 0.0
      %821 = vmatpush1.xpose.msra.mxu0 0.0
      %822 = vmatprep.subr.mxu0 0.0
      %823 = vmatpush1.xpose.msra.mxu0 0.0
      %824 = vmatprep.subr.mxu0 0.0
      %825 = vmatpush1.xpose.msra.mxu0 0.0
      %826 = vmatprep.subr.mxu0 0.0
      %827 = vmatpush1.xpose.msra.mxu0 0.0
      %828 = vmatprep.subr.mxu0 0.0
      %829 = vmatpush1.xpose.msra.mxu0 0.0
      %830 = vmatprep.subr.mxu0 0.0
      %831 = vmatpush1.xpose.msra.mxu0 0.0
      %832 = vmatprep.subr.mxu0 0.0
      %833 = vmatpush1.xpose.msra.mxu0 0.0
      %834 = vmatprep.subr.mxu0 0.0
      %835 = vmatpush1.xpose.msra.mxu0 0.0
      %836 = vmatprep.subr.mxu0 0.0
      %837 = vmatpush1.xpose.msra.mxu0 0.0
      %838 = vmatprep.subr.mxu0 0.0
      %839 = vmatpush1.xpose.msra.mxu0 0.0
      %840 = vmatprep.subr.mxu0 0.0
      %841 = vmatpush1.xpose.msra.mxu0 0.0
      %842 = vmatprep.subr.mxu0 0.0
      %843 = vmatpush1.xpose.msra.mxu0 0.0
      %844 = vmatprep.subr.mxu0 0.0
      %845 = vmatpush1.xpose.msra.mxu0 0.0
      %846 = vmatprep.subr.mxu0 0.0
      %847 = vmatpush1.xpose.msra.mxu0 0.0
      %848 = vmatprep.subr.mxu0 0.0
      %849 = vmatpush1.xpose.msra.mxu0 0.0
      %850 = vmatprep.subr.mxu0 0.0
      %851 = vmatpush1.xpose.msra.mxu0 0.0
      %852 = vmatprep.subr.mxu0 0.0
      %853 = vmatpush1.xpose.msra.mxu0 0.0
      %854 = vmatprep.subr.mxu0 0.0
      %855 = vmatpush1.xpose.msra.mxu0 0.0
      %856 = vmatprep.mubr.f32.mxu0 0.0
      %857 = vmatmul.mubr.f32.gmra.mrb[0].mxu0 %v786
      %v858 = vpop.f32.mrb[0].mxu0
      %v859 = vadd.f32 0.0, %v858
      %v860 = vpop.f32.mrb[0].mxu0
      %861 = vdwg.mxu0
      %v862 = vmul.f32 %v859, 0.35355338
      %v863 = vadd.f32 %v862, %v686
      %v864 = vsel %vm689, %v863, -inf
      %865 = vmax.xlane.f32.xlu0 %v864
      %v866 = vpop.xlane.xlu0 %865
      %v867 = vsub.f32 %v863, %v866
      %v868 = vmul.f32 %v867, 1.442695
      %v869 = vpow.pop %v868
      %v870 = vsel %vm689, %v869, 0.0
      %871 = vadd.xlane.f32.xlu0 %v870
      %v872 = vpop.xlane.xlu0 %871
      %v873 = vrcp.pop %v872
      %v874 = vmul.f32 %v869, %v873
      %875 = vrot.lane.b32.xlu0 %v588, 88
      %v876 = vpop.permute.xlu0 %875
      %877 = vrot.lane.b32.xlu0 %v593, 88
      %v878 = vpop.permute.xlu0 %877
      %v882 = vsel %vm689, %v874, 0
      %884 = vmatprep.subr.mxu0 0.0
      %885 = vmatpush1.msra.mxu0 %v876
      %886 = vmatprep.subr.mxu0 0.0
      %887 = vmatpush1.msra.mxu0 %v878
      %888 = vmatprep.subr.mxu0 0.0
      %889 = vmatpush1.msra.mxu0 0.0
      %890 = vmatprep.subr.mxu0 0.0
      %891 = vmatpush1.msra.mxu0 0.0
      %892 = vmatprep.subr.mxu0 0.0
      %893 = vmatpush1.msra.mxu0 0.0
      %894 = vmatprep.subr.mxu0 0.0
      %895 = vmatpush1.msra.mxu0 0.0
      %896 = vmatprep.subr.mxu0 0.0
      %897 = vmatpush1.msra.mxu0 0.0
      %898 = vmatprep.subr.mxu0 0.0
      %899 = vmatpush1.msra.mxu0 0.0
      %900 = vmatprep.subr.mxu0 0.0
      %901 = vmatpush1.msra.mxu0 0.0
      %902 = vmatprep.subr.mxu0 0.0
      %903 = vmatpush1.msra.mxu0 0.0
      %904 = vmatprep.subr.mxu0 0.0
      %905 = vmatpush1.msra.mxu0 0.0
      %906 = vmatprep.subr.mxu0 0.0
      %907 = vmatpush1.msra.mxu0 0.0
      %908 = vmatprep.subr.mxu0 0.0
      %909 = vmatpush1.msra.mxu0 0.0
      %910 = vmatprep.subr.mxu0 0.0
      %911 = vmatpush1.msra.mxu0 0.0
      %912 = vmatprep.subr.mxu0 0.0
      %913 = vmatpush1.msra.mxu0 0.0
      %914 = vmatprep.subr.mxu0 0.0
      %915 = vmatpush1.msra.mxu0 0.0
      %916 = vmatprep.subr.mxu0 0.0
      %917 = vmatpush1.msra.mxu0 0.0
      %918 = vmatprep.subr.mxu0 0.0
      %919 = vmatpush1.msra.mxu0 0.0
      %920 = vmatprep.subr.mxu0 0.0
      %921 = vmatpush1.msra.mxu0 0.0
      %922 = vmatprep.subr.mxu0 0.0
      %923 = vmatpush1.msra.mxu0 0.0
      %924 = vmatprep.subr.mxu0 0.0
      %925 = vmatpush1.msra.mxu0 0.0
      %926 = vmatprep.subr.mxu0 0.0
      %927 = vmatpush1.msra.mxu0 0.0
      %928 = vmatprep.subr.mxu0 0.0
      %929 = vmatpush1.msra.mxu0 0.0
      %930 = vmatprep.subr.mxu0 0.0
      %931 = vmatpush1.msra.mxu0 0.0
      %932 = vmatprep.subr.mxu0 0.0
      %933 = vmatpush1.msra.mxu0 0.0
      %934 = vmatprep.subr.mxu0 0.0
      %935 = vmatpush1.msra.mxu0 0.0
      %936 = vmatprep.subr.mxu0 0.0
      %937 = vmatpush1.msra.mxu0 0.0
      %938 = vmatprep.subr.mxu0 0.0
      %939 = vmatpush1.msra.mxu0 0.0
      %940 = vmatprep.subr.mxu0 0.0
      %941 = vmatpush1.msra.mxu0 0.0
      %942 = vmatprep.subr.mxu0 0.0
      %943 = vmatpush1.msra.mxu0 0.0
      %944 = vmatprep.subr.mxu0 0.0
      %945 = vmatpush1.msra.mxu0 0.0
      %946 = vmatprep.subr.mxu0 0.0
      %947 = vmatpush1.msra.mxu0 0.0
      %948 = vmatprep.mubr.f32.mxu0 0.0
      %949 = vmatmul.mubr.f32.gmra.mrb[0].mxu0 %v882
      %v950 = vpop.f32.mrb[0].mxu0
      %v951 = vadd.f32 0.0, %v950
      %v952 = vpop.f32.mrb[0].mxu0
      %953 = vdwg.mxu0
      %v955 = vsel %vm601, %v951, 0
      %957 = vmatprep.subr.mxu0 0.0
      %958 = vmatpush1.msra.mxu0 %v598
      %959 = vmatprep.subr.mxu0 0.0
      %960 = vmatpush1.msra.mxu0 0.0
      %961 = vmatprep.subr.mxu0 0.0
      %962 = vmatpush1.msra.mxu0 0.0
      %963 = vmatprep.subr.mxu0 0.0
      %964 = vmatpush1.msra.mxu0 0.0
      %965 = vmatprep.subr.mxu0 0.0
      %966 = vmatpush1.msra.mxu0 0.0
      %967 = vmatprep.subr.mxu0 0.0
      %968 = vmatpush1.msra.mxu0 0.0
      %969 = vmatprep.subr.mxu0 0.0
      %970 = vmatpush1.msra.mxu0 0.0
      %971 = vmatprep.subr.mxu0 0.0
      %972 = vmatpush1.msra.mxu0 0.0
      %973 = vmatprep.subr.mxu0 0.0
      %974 = vmatpush1.msra.mxu0 0.0
      %975 = vmatprep.subr.mxu0 0.0
      %976 = vmatpush1.msra.mxu0 0.0
      %977 = vmatprep.subr.mxu0 0.0
      %978 = vmatpush1.msra.mxu0 0.0
      %979 = vmatprep.subr.mxu0 0.0
      %980 = vmatpush1.msra.mxu0 0.0
      %981 = vmatprep.subr.mxu0 0.0
      %982 = vmatpush1.msra.mxu0 0.0
      %983 = vmatprep.subr.mxu0 0.0
      %984 = vmatpush1.msra.mxu0 0.0
      %985 = vmatprep.subr.mxu0 0.0
      %986 = vmatpush1.msra.mxu0 0.0
      %987 = vmatprep.subr.mxu0 0.0
      %988 = vmatpush1.msra.mxu0 0.0
      %989 = vmatprep.subr.mxu0 0.0
      %990 = vmatpush1.msra.mxu0 0.0
      %991 = vmatprep.subr.mxu0 0.0
      %992 = vmatpush1.msra.mxu0 0.0
      %993 = vmatprep.subr.mxu0 0.0
      %994 = vmatpush1.msra.mxu0 0.0
      %995 = vmatprep.subr.mxu0 0.0
      %996 = vmatpush1.msra.mxu0 0.0
      %997 = vmatprep.subr.mxu0 0.0
      %998 = vmatpush1.msra.mxu0 0.0
      %999 = vmatprep.subr.mxu0 0.0
      %1000 = vmatpush1.msra.mxu0 0.0
      %1001 = vmatprep.subr.mxu0 0.0
      %1002 = vmatpush1.msra.mxu0 0.0
      %1003 = vmatprep.subr.mxu0 0.0
      %1004 = vmatpush1.msra.mxu0 0.0
      %1005 = vmatprep.subr.mxu0 0.0
      %1006 = vmatpush1.msra.mxu0 0.0
      %1007 = vmatprep.subr.mxu0 0.0
      %1008 = vmatpush1.msra.mxu0 0.0
      %1009 = vmatprep.subr.mxu0 0.0
      %1010 = vmatpush1.msra.mxu0 0.0
      %1011 = vmatprep.subr.mxu0 0.0
      %1012 = vmatpush1.msra.mxu0 0.0
      %1013 = vmatprep.subr.mxu0 0.0
      %1014 = vmatpush1.msra.mxu0 0.0
      %1015 = vmatprep.subr.mxu0 0.0
      %1016 = vmatpush1.msra.mxu0 0.0
      %1017 = vmatprep.subr.mxu0 0.0
      %1018 = vmatpush1.msra.mxu0 0.0
      %1019 = vmatprep.subr.mxu0 0.0
      %1020 = vmatpush1.msra.mxu0 0.0
      %1021 = vmatprep.mubr.f32.mxu0 0.0
      %1022 = vmatmul.mubr.f32.gmra.mrb[0].mxu0 %v955
      %v1023 = vpop.f32.mrb[0].mxu0
      %v1024 = vadd.f32 0.0, %v1023
      %v1025 = vpop.f32.mrb[0].mxu0
      %1026 = vdwg.mxu0
      %v1028 = vsel %vm601, %v777, 0
      %1030 = vmatprep.subr.mxu0 0.0
      %1031 = vmatpush1.msra.mxu0 %v597
      %1032 = vmatprep.subr.mxu0 0.0
      %1033 = vmatpush1.msra.mxu0 0.0
      %1034 = vmatprep.subr.mxu0 0.0
      %1035 = vmatpush1.msra.mxu0 0.0
      %1036 = vmatprep.subr.mxu0 0.0
      %1037 = vmatpush1.msra.mxu0 0.0
      %1038 = vmatprep.subr.mxu0 0.0
      %1039 = vmatpush1.msra.mxu0 0.0
      %1040 = vmatprep.subr.mxu0 0.0
      %1041 = vmatpush1.msra.mxu0 0.0
      %1042 = vmatprep.subr.mxu0 0.0
      %1043 = vmatpush1.msra.mxu0 0.0
      %1044 = vmatprep.subr.mxu0 0.0
      %1045 = vmatpush1.msra.mxu0 0.0
      %1046 = vmatprep.subr.mxu0 0.0
      %1047 = vmatpush1.msra.mxu0 0.0
      %1048 = vmatprep.subr.mxu0 0.0
      %1049 = vmatpush1.msra.mxu0 0.0
      %1050 = vmatprep.subr.mxu0 0.0
      %1051 = vmatpush1.msra.mxu0 0.0
      %1052 = vmatprep.subr.mxu0 0.0
      %1053 = vmatpush1.msra.mxu0 0.0
      %1054 = vmatprep.subr.mxu0 0.0
      %1055 = vmatpush1.msra.mxu0 0.0
      %1056 = vmatprep.subr.mxu0 0.0
      %1057 = vmatpush1.msra.mxu0 0.0
      %1058 = vmatprep.subr.mxu0 0.0
      %1059 = vmatpush1.msra.mxu0 0.0
      %1060 = vmatprep.subr.mxu0 0.0
      %1061 = vmatpush1.msra.mxu0 0.0
      %1062 = vmatprep.subr.mxu0 0.0
      %1063 = vmatpush1.msra.mxu0 0.0
      %1064 = vmatprep.subr.mxu0 0.0
      %1065 = vmatpush1.msra.mxu0 0.0
      %1066 = vmatprep.subr.mxu0 0.0
      %1067 = vmatpush1.msra.mxu0 0.0
      %1068 = vmatprep.subr.mxu0 0.0
      %1069 = vmatpush1.msra.mxu0 0.0
      %1070 = vmatprep.subr.mxu0 0.0
      %1071 = vmatpush1.msra.mxu0 0.0
      %1072 = vmatprep.subr.mxu0 0.0
      %1073 = vmatpush1.msra.mxu0 0.0
      %1074 = vmatprep.subr.mxu0 0.0
      %1075 = vmatpush1.msra.mxu0 0.0
      %1076 = vmatprep.subr.mxu0 0.0
      %1077 = vmatpush1.msra.mxu0 0.0
      %1078 = vmatprep.subr.mxu0 0.0
      %1079 = vmatpush1.msra.mxu0 0.0
      %1080 = vmatprep.subr.mxu0 0.0
      %1081 = vmatpush1.msra.mxu0 0.0
      %1082 = vmatprep.subr.mxu0 0.0
      %1083 = vmatpush1.msra.mxu0 0.0
      %1084 = vmatprep.subr.mxu0 0.0
      %1085 = vmatpush1.msra.mxu0 0.0
      %1086 = vmatprep.subr.mxu0 0.0
      %1087 = vmatpush1.msra.mxu0 0.0
      %1088 = vmatprep.subr.mxu0 0.0
      %1089 = vmatpush1.msra.mxu0 0.0
      %1090 = vmatprep.subr.mxu0 0.0
      %1091 = vmatpush1.msra.mxu0 0.0
      %1092 = vmatprep.subr.mxu0 0.0
      %1093 = vmatpush1.msra.mxu0 0.0
      %1094 = vmatprep.mubr.f32.mxu0 0.0
      %1095 = vmatmul.mubr.f32.gmra.mrb[0].mxu0 %v1028
      %v1096 = vpop.f32.mrb[0].mxu0
      %v1097 = vadd.f32 %v1024, %v1096
      %v1098 = vpop.f32.mrb[0].mxu0
      %1099 = vdwg.mxu0
      %1100 = vrot.lane.b32.xlu0 %v501, 112
      %v1101 = vpop.permute.xlu0 %1100
      %1102 = vrot.lane.b32.xlu0 %v588, 112
      %v1103 = vpop.permute.xlu0 %1102
      %1104 = vrot.lane.b32.xlu0 %v593, 112
      %v1105 = vpop.permute.xlu0 %1104
      %v1106 = vsel %vm601, %v1101, 0
      %v1108 = vsel %vm601, %v1103, 0
      %v1110 = vsel %vm601, %v1105, 0
      %1112 = vmatprep.subr.mxu0 0.0
      %1113 = vmatpush1.xpose.msra.mxu0 %v1108
      %1114 = vmatprep.subr.mxu0 0.0
      %1115 = vmatpush1.xpose.msra.mxu0 %v1110
      %1116 = vmatprep.subr.mxu0 0.0
      %1117 = vmatpush1.xpose.msra.mxu0 0.0
      %1118 = vmatprep.subr.mxu0 0.0
      %1119 = vmatpush1.xpose.msra.mxu0 0.0
      %1120 = vmatprep.subr.mxu0 0.0
      %1121 = vmatpush1.xpose.msra.mxu0 0.0
      %1122 = vmatprep.subr.mxu0 0.0
      %1123 = vmatpush1.xpose.msra.mxu0 0.0
      %1124 = vmatprep.subr.mxu0 0.0
      %1125 = vmatpush1.xpose.msra.mxu0 0.0
      %1126 = vmatprep.subr.mxu0 0.0
      %1127 = vmatpush1.xpose.msra.mxu0 0.0
      %1128 = vmatprep.subr.mxu0 0.0
      %1129 = vmatpush1.xpose.msra.mxu0 0.0
      %1130 = vmatprep.subr.mxu0 0.0
      %1131 = vmatpush1.xpose.msra.mxu0 0.0
      %1132 = vmatprep.subr.mxu0 0.0
      %1133 = vmatpush1.xpose.msra.mxu0 0.0
      %1134 = vmatprep.subr.mxu0 0.0
      %1135 = vmatpush1.xpose.msra.mxu0 0.0
      %1136 = vmatprep.subr.mxu0 0.0
      %1137 = vmatpush1.xpose.msra.mxu0 0.0
      %1138 = vmatprep.subr.mxu0 0.0
      %1139 = vmatpush1.xpose.msra.mxu0 0.0
      %1140 = vmatprep.subr.mxu0 0.0
      %1141 = vmatpush1.xpose.msra.mxu0 0.0
      %1142 = vmatprep.subr.mxu0 0.0
      %1143 = vmatpush1.xpose.msra.mxu0 0.0
      %1144 = vmatprep.subr.mxu0 0.0
      %1145 = vmatpush1.xpose.msra.mxu0 0.0
      %1146 = vmatprep.subr.mxu0 0.0
      %1147 = vmatpush1.xpose.msra.mxu0 0.0
      %1148 = vmatprep.subr.mxu0 0.0
      %1149 = vmatpush1.xpose.msra.mxu0 0.0
      %1150 = vmatprep.subr.mxu0 0.0
      %1151 = vmatpush1.xpose.msra.mxu0 0.0
      %1152 = vmatprep.subr.mxu0 0.0
      %1153 = vmatpush1.xpose.msra.mxu0 0.0
      %1154 = vmatprep.subr.mxu0 0.0
      %1155 = vmatpush1.xpose.msra.mxu0 0.0
      %1156 = vmatprep.subr.mxu0 0.0
      %1157 = vmatpush1.xpose.msra.mxu0 0.0
      %1158 = vmatprep.subr.mxu0 0.0
      %1159 = vmatpush1.xpose.msra.mxu0 0.0
      %1160 = vmatprep.subr.mxu0 0.0
      %1161 = vmatpush1.xpose.msra.mxu0 0.0
      %1162 = vmatprep.subr.mxu0 0.0
      %1163 = vmatpush1.xpose.msra.mxu0 0.0
      %1164 = vmatprep.subr.mxu0 0.0
      %1165 = vmatpush1.xpose.msra.mxu0 0.0
      %1166 = vmatprep.subr.mxu0 0.0
      %1167 = vmatpush1.xpose.msra.mxu0 0.0
      %1168 = vmatprep.subr.mxu0 0.0
      %1169 = vmatpush1.xpose.msra.mxu0 0.0
      %1170 = vmatprep.subr.mxu0 0.0
      %1171 = vmatpush1.xpose.msra.mxu0 0.0
      %1172 = vmatprep.subr.mxu0 0.0
      %1173 = vmatpush1.xpose.msra.mxu0 0.0
      %1174 = vmatprep.subr.mxu0 0.0
      %1175 = vmatpush1.xpose.msra.mxu0 0.0
      %1176 = vmatprep.mubr.f32.mxu0 0.0
      %1177 = vmatmul.mubr.f32.gmra.mrb[0].mxu0 %v1106
      %v1178 = vpop.f32.mrb[0].mxu0
      %v1179 = vadd.f32 0.0, %v1178
      %v1180 = vpop.f32.mrb[0].mxu0
      %1181 = vdwg.mxu0
      %v1182 = vmul.f32 %v1179, 0.35355338
      %v1183 = vadd.f32 %v1182, %v686
      %v1184 = vsel %vm689, %v1183, -inf
      %1185 = vmax.xlane.f32.xlu0 %v1184
      %v1186 = vpop.xlane.xlu0 %1185
      %v1187 = vsub.f32 %v1183, %v1186
      %v1188 = vmul.f32 %v1187, 1.442695
      %v1189 = vpow.pop %v1188
      %v1190 = vsel %vm689, %v1189, 0.0
      %1191 = vadd.xlane.f32.xlu0 %v1190
      %v1192 = vpop.xlane.xlu0 %1191
      %v1193 = vrcp.pop %v1192
      %v1194 = vmul.f32 %v1189, %v1193
      %1195 = vrot.lane.b32.xlu0 %v588, 80
      %v1196 = vpop.permute.xlu0 %1195
      %1197 = vrot.lane.b32.xlu0 %v593, 80
      %v1198 = vpop.permute.xlu0 %1197
      %v1202 = vsel %vm689, %v1194, 0
      %1204 = vmatprep.subr.mxu0 0.0
      %1205 = vmatpush1.msra.mxu0 %v1196
      %1206 = vmatprep.subr.mxu0 0.0
      %1207 = vmatpush1.msra.mxu0 %v1198
      %1208 = vmatprep.subr.mxu0 0.0
      %1209 = vmatpush1.msra.mxu0 0.0
      %1210 = vmatprep.subr.mxu0 0.0
      %1211 = vmatpush1.msra.mxu0 0.0
      %1212 = vmatprep.subr.mxu0 0.0
      %1213 = vmatpush1.msra.mxu0 0.0
      %1214 = vmatprep.subr.mxu0 0.0
      %1215 = vmatpush1.msra.mxu0 0.0
      %1216 = vmatprep.subr.mxu0 0.0
      %1217 = vmatpush1.msra.mxu0 0.0
      %1218 = vmatprep.subr.mxu0 0.0
      %1219 = vmatpush1.msra.mxu0 0.0
      %1220 = vmatprep.subr.mxu0 0.0
      %1221 = vmatpush1.msra.mxu0 0.0
      %1222 = vmatprep.subr.mxu0 0.0
      %1223 = vmatpush1.msra.mxu0 0.0
      %1224 = vmatprep.subr.mxu0 0.0
      %1225 = vmatpush1.msra.mxu0 0.0
      %1226 = vmatprep.subr.mxu0 0.0
      %1227 = vmatpush1.msra.mxu0 0.0
      %1228 = vmatprep.subr.mxu0 0.0
      %1229 = vmatpush1.msra.mxu0 0.0
      %1230 = vmatprep.subr.mxu0 0.0
      %1231 = vmatpush1.msra.mxu0 0.0
      %1232 = vmatprep.subr.mxu0 0.0
      %1233 = vmatpush1.msra.mxu0 0.0
      %1234 = vmatprep.subr.mxu0 0.0
      %1235 = vmatpush1.msra.mxu0 0.0
      %1236 = vmatprep.subr.mxu0 0.0
      %1237 = vmatpush1.msra.mxu0 0.0
      %1238 = vmatprep.subr.mxu0 0.0
      %1239 = vmatpush1.msra.mxu0 0.0
      %1240 = vmatprep.subr.mxu0 0.0
      %1241 = vmatpush1.msra.mxu0 0.0
      %1242 = vmatprep.subr.mxu0 0.0
      %1243 = vmatpush1.msra.mxu0 0.0
      %1244 = vmatprep.subr.mxu0 0.0
      %1245 = vmatpush1.msra.mxu0 0.0
      %1246 = vmatprep.subr.mxu0 0.0
      %1247 = vmatpush1.msra.mxu0 0.0
      %1248 = vmatprep.subr.mxu0 0.0
      %1249 = vmatpush1.msra.mxu0 0.0
      %1250 = vmatprep.subr.mxu0 0.0
      %1251 = vmatpush1.msra.mxu0 0.0
      %1252 = vmatprep.subr.mxu0 0.0
      %1253 = vmatpush1.msra.mxu0 0.0
      %1254 = vmatprep.subr.mxu0 0.0
      %1255 = vmatpush1.msra.mxu0 0.0
      %1256 = vmatprep.subr.mxu0 0.0
      %1257 = vmatpush1.msra.mxu0 0.0
      %1258 = vmatprep.subr.mxu0 0.0
      %1259 = vmatpush1.msra.mxu0 0.0
      %1260 = vmatprep.subr.mxu0 0.0
      %1261 = vmatpush1.msra.mxu0 0.0
      %1262 = vmatprep.subr.mxu0 0.0
      %1263 = vmatpush1.msra.mxu0 0.0
      %1264 = vmatprep.subr.mxu0 0.0
      %1265 = vmatpush1.msra.mxu0 0.0
      %1266 = vmatprep.subr.mxu0 0.0
      %1267 = vmatpush1.msra.mxu0 0.0
      %1268 = vmatprep.mubr.f32.mxu0 0.0
      %1269 = vmatmul.mubr.f32.gmra.mrb[0].mxu0 %v1202
      %v1270 = vpop.f32.mrb[0].mxu0
      %v1271 = vadd.f32 0.0, %v1270
      %v1272 = vpop.f32.mrb[0].mxu0
      %1273 = vdwg.mxu0
      %v1275 = vsel %vm601, %v1271, 0
      %1277 = vmatprep.subr.mxu0 0.0
      %1278 = vmatpush1.msra.mxu0 %v599
      %1279 = vmatprep.subr.mxu0 0.0
      %1280 = vmatpush1.msra.mxu0 0.0
      %1281 = vmatprep.subr.mxu0 0.0
      %1282 = vmatpush1.msra.mxu0 0.0
      %1283 = vmatprep.subr.mxu0 0.0
      %1284 = vmatpush1.msra.mxu0 0.0
      %1285 = vmatprep.subr.mxu0 0.0
      %1286 = vmatpush1.msra.mxu0 0.0
      %1287 = vmatprep.subr.mxu0 0.0
      %1288 = vmatpush1.msra.mxu0 0.0
      %1289 = vmatprep.subr.mxu0 0.0
      %1290 = vmatpush1.msra.mxu0 0.0
      %1291 = vmatprep.subr.mxu0 0.0
      %1292 = vmatpush1.msra.mxu0 0.0
      %1293 = vmatprep.subr.mxu0 0.0
      %1294 = vmatpush1.msra.mxu0 0.0
      %1295 = vmatprep.subr.mxu0 0.0
      %1296 = vmatpush1.msra.mxu0 0.0
      %1297 = vmatprep.subr.mxu0 0.0
      %1298 = vmatpush1.msra.mxu0 0.0
      %1299 = vmatprep.subr.mxu0 0.0
      %1300 = vmatpush1.msra.mxu0 0.0
      %1301 = vmatprep.subr.mxu0 0.0
      %1302 = vmatpush1.msra.mxu0 0.0
      %1303 = vmatprep.subr.mxu0 0.0
      %1304 = vmatpush1.msra.mxu0 0.0
      %1305 = vmatprep.subr.mxu0 0.0
      %1306 = vmatpush1.msra.mxu0 0.0
      %1307 = vmatprep.subr.mxu0 0.0
      %1308 = vmatpush1.msra.mxu0 0.0
      %1309 = vmatprep.subr.mxu0 0.0
      %1310 = vmatpush1.msra.mxu0 0.0
      %1311 = vmatprep.subr.mxu0 0.0
      %1312 = vmatpush1.msra.mxu0 0.0
      %1313 = vmatprep.subr.mxu0 0.0
      %1314 = vmatpush1.msra.mxu0 0.0
      %1315 = vmatprep.subr.mxu0 0.0
      %1316 = vmatpush1.msra.mxu0 0.0
      %1317 = vmatprep.subr.mxu0 0.0
      %1318 = vmatpush1.msra.mxu0 0.0
      %1319 = vmatprep.subr.mxu0 0.0
      %1320 = vmatpush1.msra.mxu0 0.0
      %1321 = vmatprep.subr.mxu0 0.0
      %1322 = vmatpush1.msra.mxu0 0.0
      %1323 = vmatprep.subr.mxu0 0.0
      %1324 = vmatpush1.msra.mxu0 0.0
      %1325 = vmatprep.subr.mxu0 0.0
      %1326 = vmatpush1.msra.mxu0 0.0
      %1327 = vmatprep.subr.mxu0 0.0
      %1328 = vmatpush1.msra.mxu0 0.0
      %1329 = vmatprep.subr.mxu0 0.0
      %1330 = vmatpush1.msra.mxu0 0.0
      %1331 = vmatprep.subr.mxu0 0.0
      %1332 = vmatpush1.msra.mxu0 0.0
      %1333 = vmatprep.subr.mxu0 0.0
      %1334 = vmatpush1.msra.mxu0 0.0
      %1335 = vmatprep.subr.mxu0 0.0
      %1336 = vmatpush1.msra.mxu0 0.0
      %1337 = vmatprep.subr.mxu0 0.0
      %1338 = vmatpush1.msra.mxu0 0.0
      %1339 = vmatprep.subr.mxu0 0.0
      %1340 = vmatpush1.msra.mxu0 0.0
      %1341 = vmatprep.mubr.f32.mxu0 0.0
      %1342 = vmatmul.mubr.f32.gmra.mrb[0].mxu0 %v1275
      %v1343 = vpop.f32.mrb[0].mxu0
      %v1344 = vadd.f32 0.0, %v1343
      %v1345 = vpop.f32.mrb[0].mxu0
      %1346 = vdwg.mxu0
      %v1347 = vadd.f32 %v1097, %v1344
      %1348 = vrot.lane.b32.xlu0 %v501, 104
      %v1349 = vpop.permute.xlu0 %1348
      %1350 = vrot.lane.b32.xlu0 %v588, 104
      %v1351 = vpop.permute.xlu0 %1350
      %1352 = vrot.lane.b32.xlu0 %v593, 104
      %v1353 = vpop.permute.xlu0 %1352
      %v1354 = vsel %vm601, %v1349, 0
      %v1356 = vsel %vm601, %v1351, 0
      %v1358 = vsel %vm601, %v1353, 0
      %1360 = vmatprep.subr.mxu0 0.0
      %1361 = vmatpush1.xpose.msra.mxu0 %v1356
      %1362 = vmatprep.subr.mxu0 0.0
      %1363 = vmatpush1.xpose.msra.mxu0 %v1358
      %1364 = vmatprep.subr.mxu0 0.0
      %1365 = vmatpush1.xpose.msra.mxu0 0.0
      %1366 = vmatprep.subr.mxu0 0.0
      %1367 = vmatpush1.xpose.msra.mxu0 0.0
      %1368 = vmatprep.subr.mxu0 0.0
      %1369 = vmatpush1.xpose.msra.mxu0 0.0
      %1370 = vmatprep.subr.mxu0 0.0
      %1371 = vmatpush1.xpose.msra.mxu0 0.0
      %1372 = vmatprep.subr.mxu0 0.0
      %1373 = vmatpush1.xpose.msra.mxu0 0.0
      %1374 = vmatprep.subr.mxu0 0.0
      %1375 = vmatpush1.xpose.msra.mxu0 0.0
      %1376 = vmatprep.subr.mxu0 0.0
      %1377 = vmatpush1.xpose.msra.mxu0 0.0
      %1378 = vmatprep.subr.mxu0 0.0
      %1379 = vmatpush1.xpose.msra.mxu0 0.0
      %1380 = vmatprep.subr.mxu0 0.0
      %1381 = vmatpush1.xpose.msra.mxu0 0.0
      %1382 = vmatprep.subr.mxu0 0.0
      %1383 = vmatpush1.xpose.msra.mxu0 0.0
      %1384 = vmatprep.subr.mxu0 0.0
      %1385 = vmatpush1.xpose.msra.mxu0 0.0
      %1386 = vmatprep.subr.mxu0 0.0
      %1387 = vmatpush1.xpose.msra.mxu0 0.0
      %1388 = vmatprep.subr.mxu0 0.0
      %1389 = vmatpush1.xpose.msra.mxu0 0.0
      %1390 = vmatprep.subr.mxu0 0.0
      %1391 = vmatpush1.xpose.msra.mxu0 0.0
      %1392 = vmatprep.subr.mxu0 0.0
      %1393 = vmatpush1.xpose.msra.mxu0 0.0
      %1394 = vmatprep.subr.mxu0 0.0
      %1395 = vmatpush1.xpose.msra.mxu0 0.0
      %1396 = vmatprep.subr.mxu0 0.0
      %1397 = vmatpush1.xpose.msra.mxu0 0.0
      %1398 = vmatprep.subr.mxu0 0.0
      %1399 = vmatpush1.xpose.msra.mxu0 0.0
      %1400 = vmatprep.subr.mxu0 0.0
      %1401 = vmatpush1.xpose.msra.mxu0 0.0
      %1402 = vmatprep.subr.mxu0 0.0
      %1403 = vmatpush1.xpose.msra.mxu0 0.0
      %1404 = vmatprep.subr.mxu0 0.0
      %1405 = vmatpush1.xpose.msra.mxu0 0.0
      %1406 = vmatprep.subr.mxu0 0.0
      %1407 = vmatpush1.xpose.msra.mxu0 0.0
      %1408 = vmatprep.subr.mxu0 0.0
      %1409 = vmatpush1.xpose.msra.mxu0 0.0
      %1410 = vmatprep.subr.mxu0 0.0
      %1411 = vmatpush1.xpose.msra.mxu0 0.0
      %1412 = vmatprep.subr.mxu0 0.0
      %1413 = vmatpush1.xpose.msra.mxu0 0.0
      %1414 = vmatprep.subr.mxu0 0.0
      %1415 = vmatpush1.xpose.msra.mxu0 0.0
      %1416 = vmatprep.subr.mxu0 0.0
      %1417 = vmatpush1.xpose.msra.mxu0 0.0
      %1418 = vmatprep.subr.mxu0 0.0
      %1419 = vmatpush1.xpose.msra.mxu0 0.0
      %1420 = vmatprep.subr.mxu0 0.0
      %1421 = vmatpush1.xpose.msra.mxu0 0.0
      %1422 = vmatprep.subr.mxu0 0.0
      %1423 = vmatpush1.xpose.msra.mxu0 0.0
      %1424 = vmatprep.mubr.f32.mxu0 0.0
      %1425 = vmatmul.mubr.f32.gmra.mrb[0].mxu0 %v1354
      %v1426 = vpop.f32.mrb[0].mxu0
      %v1427 = vadd.f32 0.0, %v1426
      %v1428 = vpop.f32.mrb[0].mxu0
      %1429 = vdwg.mxu0
      %v1430 = vmul.f32 %v1427, 0.35355338
      %v1431 = vadd.f32 %v1430, %v686
      %v1432 = vsel %vm689, %v1431, -inf
      %1433 = vmax.xlane.f32.xlu0 %v1432
      %v1434 = vpop.xlane.xlu0 %1433
      %v1435 = vsub.f32 %v1431, %v1434
      %v1436 = vmul.f32 %v1435, 1.442695
      %v1437 = vpow.pop %v1436
      %v1438 = vsel %vm689, %v1437, 0.0
      %1439 = vadd.xlane.f32.xlu0 %v1438
      %v1440 = vpop.xlane.xlu0 %1439
      %v1441 = vrcp.pop %v1440
      %v1442 = vmul.f32 %v1437, %v1441
      %1443 = vrot.lane.b32.xlu0 %v588, 72
      %v1444 = vpop.permute.xlu0 %1443
      %1445 = vrot.lane.b32.xlu0 %v593, 72
      %v1446 = vpop.permute.xlu0 %1445
      %v1450 = vsel %vm689, %v1442, 0
      %1452 = vmatprep.subr.mxu0 0.0
      %1453 = vmatpush1.msra.mxu0 %v1444
      %1454 = vmatprep.subr.mxu0 0.0
      %1455 = vmatpush1.msra.mxu0 %v1446
      %1456 = vmatprep.subr.mxu0 0.0
      %1457 = vmatpush1.msra.mxu0 0.0
      %1458 = vmatprep.subr.mxu0 0.0
      %1459 = vmatpush1.msra.mxu0 0.0
      %1460 = vmatprep.subr.mxu0 0.0
      %1461 = vmatpush1.msra.mxu0 0.0
      %1462 = vmatprep.subr.mxu0 0.0
      %1463 = vmatpush1.msra.mxu0 0.0
      %1464 = vmatprep.subr.mxu0 0.0
      %1465 = vmatpush1.msra.mxu0 0.0
      %1466 = vmatprep.subr.mxu0 0.0
      %1467 = vmatpush1.msra.mxu0 0.0
      %1468 = vmatprep.subr.mxu0 0.0
      %1469 = vmatpush1.msra.mxu0 0.0
      %1470 = vmatprep.subr.mxu0 0.0
      %1471 = vmatpush1.msra.mxu0 0.0
      %1472 = vmatprep.subr.mxu0 0.0
      %1473 = vmatpush1.msra.mxu0 0.0
      %1474 = vmatprep.subr.mxu0 0.0
      %1475 = vmatpush1.msra.mxu0 0.0
      %1476 = vmatprep.subr.mxu0 0.0
      %1477 = vmatpush1.msra.mxu0 0.0
      %1478 = vmatprep.subr.mxu0 0.0
      %1479 = vmatpush1.msra.mxu0 0.0
      %1480 = vmatprep.subr.mxu0 0.0
      %1481 = vmatpush1.msra.mxu0 0.0
      %1482 = vmatprep.subr.mxu0 0.0
      %1483 = vmatpush1.msra.mxu0 0.0
      %1484 = vmatprep.subr.mxu0 0.0
      %1485 = vmatpush1.msra.mxu0 0.0
      %1486 = vmatprep.subr.mxu0 0.0
      %1487 = vmatpush1.msra.mxu0 0.0
      %1488 = vmatprep.subr.mxu0 0.0
      %1489 = vmatpush1.msra.mxu0 0.0
      %1490 = vmatprep.subr.mxu0 0.0
      %1491 = vmatpush1.msra.mxu0 0.0
      %1492 = vmatprep.subr.mxu0 0.0
      %1493 = vmatpush1.msra.mxu0 0.0
      %1494 = vmatprep.subr.mxu0 0.0
      %1495 = vmatpush1.msra.mxu0 0.0
      %1496 = vmatprep.subr.mxu0 0.0
      %1497 = vmatpush1.msra.mxu0 0.0
      %1498 = vmatprep.subr.mxu0 0.0
      %1499 = vmatpush1.msra.mxu0 0.0
      %1500 = vmatprep.subr.mxu0 0.0
      %1501 = vmatpush1.msra.mxu0 0.0
      %1502 = vmatprep.subr.mxu0 0.0
      %1503 = vmatpush1.msra.mxu0 0.0
      %1504 = vmatprep.subr.mxu0 0.0
      %1505 = vmatpush1.msra.mxu0 0.0
      %1506 = vmatprep.subr.mxu0 0.0
      %1507 = vmatpush1.msra.mxu0 0.0
      %1508 = vmatprep.subr.mxu0 0.0
      %1509 = vmatpush1.msra.mxu0 0.0
      %1510 = vmatprep.subr.mxu0 0.0
      %1511 = vmatpush1.msra.mxu0 0.0
      %1512 = vmatprep.subr.mxu0 0.0
      %1513 = vmatpush1.msra.mxu0 0.0
      %1514 = vmatprep.subr.mxu0 0.0
      %1515 = vmatpush1.msra.mxu0 0.0
      %1516 = vmatprep.mubr.f32.mxu0 0.0
      %1517 = vmatmul.mubr.f32.gmra.mrb[0].mxu0 %v1450
      %v1518 = vpop.f32.mrb[0].mxu0
      %v1519 = vadd.f32 0.0, %v1518
      %v1520 = vpop.f32.mrb[0].mxu0
      %1521 = vdwg.mxu0
      %v1523 = vsel %vm601, %v1519, 0
      %1525 = vmatprep.subr.mxu0 0.0
      %1526 = vmatpush1.msra.mxu0 %v600
      %1527 = vmatprep.subr.mxu0 0.0
      %1528 = vmatpush1.msra.mxu0 0.0
      %1529 = vmatprep.subr.mxu0 0.0
      %1530 = vmatpush1.msra.mxu0 0.0
      %1531 = vmatprep.subr.mxu0 0.0
      %1532 = vmatpush1.msra.mxu0 0.0
      %1533 = vmatprep.subr.mxu0 0.0
      %1534 = vmatpush1.msra.mxu0 0.0
      %1535 = vmatprep.subr.mxu0 0.0
      %1536 = vmatpush1.msra.mxu0 0.0
      %1537 = vmatprep.subr.mxu0 0.0
      %1538 = vmatpush1.msra.mxu0 0.0
      %1539 = vmatprep.subr.mxu0 0.0
      %1540 = vmatpush1.msra.mxu0 0.0
      %1541 = vmatprep.subr.mxu0 0.0
      %1542 = vmatpush1.msra.mxu0 0.0
      %1543 = vmatprep.subr.mxu0 0.0
      %1544 = vmatpush1.msra.mxu0 0.0
      %1545 = vmatprep.subr.mxu0 0.0
      %1546 = vmatpush1.msra.mxu0 0.0
      %1547 = vmatprep.subr.mxu0 0.0
      %1548 = vmatpush1.msra.mxu0 0.0
      %1549 = vmatprep.subr.mxu0 0.0
      %1550 = vmatpush1.msra.mxu0 0.0
      %1551 = vmatprep.subr.mxu0 0.0
      %1552 = vmatpush1.msra.mxu0 0.0
      %1553 = vmatprep.subr.mxu0 0.0
      %1554 = vmatpush1.msra.mxu0 0.0
      %1555 = vmatprep.subr.mxu0 0.0
      %1556 = vmatpush1.msra.mxu0 0.0
      %1557 = vmatprep.subr.mxu0 0.0
      %1558 = vmatpush1.msra.mxu0 0.0
      %1559 = vmatprep.subr.mxu0 0.0
      %1560 = vmatpush1.msra.mxu0 0.0
      %1561 = vmatprep.subr.mxu0 0.0
      %1562 = vmatpush1.msra.mxu0 0.0
      %1563 = vmatprep.subr.mxu0 0.0
      %1564 = vmatpush1.msra.mxu0 0.0
      %1565 = vmatprep.subr.mxu0 0.0
      %1566 = vmatpush1.msra.mxu0 0.0
      %1567 = vmatprep.subr.mxu0 0.0
      %1568 = vmatpush1.msra.mxu0 0.0
      %1569 = vmatprep.subr.mxu0 0.0
      %1570 = vmatpush1.msra.mxu0 0.0
      %1571 = vmatprep.subr.mxu0 0.0
      %1572 = vmatpush1.msra.mxu0 0.0
      %1573 = vmatprep.subr.mxu0 0.0
      %1574 = vmatpush1.msra.mxu0 0.0
      %1575 = vmatprep.subr.mxu0 0.0
      %1576 = vmatpush1.msra.mxu0 0.0
      %1577 = vmatprep.subr.mxu0 0.0
      %1578 = vmatpush1.msra.mxu0 0.0
      %1579 = vmatprep.subr.mxu0 0.0
      %1580 = vmatpush1.msra.mxu0 0.0
      %1581 = vmatprep.subr.mxu0 0.0
      %1582 = vmatpush1.msra.mxu0 0.0
      %1583 = vmatprep.subr.mxu0 0.0
      %1584 = vmatpush1.msra.mxu0 0.0
      %1585 = vmatprep.subr.mxu0 0.0
      %1586 = vmatpush1.msra.mxu0 0.0
      %1587 = vmatprep.subr.mxu0 0.0
      %1588 = vmatpush1.msra.mxu0 0.0
      %1589 = vmatprep.mubr.f32.mxu0 0.0
      %1590 = vmatmul.mubr.f32.gmra.mrb[0].mxu0 %v1523
      %v1591 = vpop.f32.mrb[0].mxu0
      %v1592 = vadd.f32 0.0, %v1591
      %v1593 = vpop.f32.mrb[0].mxu0
      %1594 = vdwg.mxu0
      %v1595 = vadd.f32 %v1347, %v1592
      %v1596 = vadd.f32 %v416, %v1595
      %v1597 = vld [vmem:[%s7] sm:$0x1]
      %v1599 = vlaneseq
      %v1600 = vshrl.u32 %v1599, 7
      %v1601 = vsub.s32 0, %v1600
      %v1602 = vrot.slane %v1597, %v1601
      %v1604 = vadd.f32 %v1596, %v1602
      %v1605 = vld [vmem:[%s9] sm:$0x1]
      %v1606 = vld [vmem:[%s10] sm:$0x1]
      %v1607 = vsel %vm430, %v1604, 0.0
      %1608 = vadd.xlane.f32.xlu0 %v1607
      %v1609 = vpop.xlane.xlu0 %1608
      %v1610 = vrcp.pop 32.0
      %v1611 = vmul.f32 %v1609, %v1610
      %v1612 = vsub.f32 %v1604, %v1611
      %v1613 = vmul.f32 %v1612, %v1612
      %v1614 = vsel %vm430, %v1613, 0.0
      %1615 = vadd.xlane.f32.xlu0 %v1614
      %v1616 = vpop.xlane.xlu0 %1615
      %v1617 = vmul.f32 %v1616, %v1610
      %v1618 = vadd.f32 %v1617, 1e-05
      %v1619 = vrsqrt.pop %v1618
      %v1620 = vmul.f32 %v1612, %v1619
      %v1622 = vlaneseq
      %v1623 = vshrl.u32 %v1622, 7
      %v1624 = vsub.s32 0, %v1623
      %v1625 = vrot.slane %v1605, %v1624
      %v1627 = vmul.f32 %v1620, %v1625
      %v1629 = vlaneseq
      %v1630 = vshrl.u32 %v1629, 7
      %v1631 = vsub.s32 0, %v1630
      %v1632 = vrot.slane %v1606, %v1631
      %v1634 = vadd.f32 %v1627, %v1632
      %1635 = vst.msk [vmem:[%s415] sm:$0xff] %vm430, %v1634
      %p1636 = scmp.lt.s32.totalorder %s22, 1
      %s1637 = scalar_select %p1636, %s22, 1
      %s1638 = smul.addr %s1637, 8
      %s1639 = scalar_lea.vmem %s11, %s1638
      // Predicated region
      $region65: #{seq2seq_transformer_forward.22} parent=63 // pred_check
        %p1640 = pneg %p286
      $region66: #{seq2seq_transformer_forward.22} parent=63 // pred_check_branch
        %1642 = sbr.rel (%p1640) target = $region68
      $region67: #{seq2seq_transformer_forward.22} parent=63 // pred_region
        _
      $region68: #{seq2seq_transformer_forward.22} parent=63 // pred_fallthru
        _
    $region64: #{seq2seq_transformer_forward.22} parent=5 // pred_fallthru
      _
    %p1643 = scmp.le.s32.totalorder 2, %s17
    // Predicated region
    $region69: #{seq2seq_transformer_forward.22} parent=5 // pred_check
      %p1644 = pneg %p1643
    $region70: #{seq2seq_transformer_forward.22} parent=5 // pred_check_branch
      %1646 = sbr.rel (%p1644) target = $region72
    $region71: #{seq2seq_transformer_forward.22} parent=5 // pred_region
      %s1647 = ssub.s32 %s17, 2
      // Predicated region
      $region73: #{seq2seq_transformer_forward.22} parent=71 // pred_check
        %p1648 = pneg %p292
      $region74: #{seq2seq_transformer_forward.22} parent=71 // pred_check_branch
        %1650 = sbr.rel (%p1648) target = $region76
      $region75: #{seq2seq_transformer_forward.22} parent=71 // pred_region
        %p1651 = scmp.lt.s32.totalorder %s23, 1
        %s1652 = scalar_select %p1651, %s23, 1
        %s1653 = smul.addr %s1652, 8
        %s1654 = scalar_lea.vmem %s11, %s1653
      $region76: #{seq2seq_transformer_forward.22} parent=71 // pred_fallthru
        _
    $region72: #{seq2seq_transformer_forward.22} parent=5 // pred_fallthru
      _
  $region6: #{seq2seq_transformer_forward.22} parent=0 // loop_footer
    %s21 = sadd.s32 1, %s17
  $region7: #{seq2seq_transformer_forward.22} parent=0 // loop_footer_branch
    %16 = sbr.rel target = $region3
  $region8: #{seq2seq_transformer_forward.22} parent=0 // loop_exit
    _

// kernel: seq2seq_transformer_forward.21
$region0: #{seq2seq_transformer_forward.21}
  #allocation0 [shape = 'u32[]', space=smem, size = 0x4, offset = 0x4, fixed_abs, tag = 'smem constant byte address 0x4 - core index']
  #allocation1 [shape = 'u32[144,128]{1,0:T(1,128)}', space=vmem, size = 0x12000, scoped, tag = 'internal scratch']
  %s0 = inlined_call_operand.vmem [shape: f32[2,8,32], index: 0, kind: input, shape index: {}]
  %s1 = inlined_call_operand.vmem [shape: f32[32,96], index: 1, kind: input, shape index: {}]
  %s2 = inlined_call_operand.vmem [shape: f32[1,96], index: 2, kind: input, shape index: {}]
  %s3 = inlined_call_operand.vmem [shape: f32[32,32], index: 3, kind: input, shape index: {}]
  %s4 = inlined_call_operand.vmem [shape: f32[1,32], index: 4, kind: input, shape index: {}]
  %s5 = inlined_call_operand.vmem [shape: f32[8,8], index: 5, kind: input, shape index: {}]
  %s6 = inlined_call_operand.vmem [shape: f32[2,1,8], index: 6, kind: input, shape index: {}]
  %s7 = inlined_call_operand.vmem [shape: f32[1,32], index: 7, kind: input, shape index: {}]
  %s8 = inlined_call_operand.vmem [shape: f32[1,32], index: 8, kind: input, shape index: {}]
  %s9 = inlined_call_operand.vmem [shape: f32[2,8,32], index: 9, kind: output, shape index: {}]
  %s10 = sld [smem:[#allocation0]]
  $region69: #{seq2seq_transformer_forward.21} parent=0
    _
  %s12 = ssub.s32 1, %s10
  %s13 = scalar_select 0, %s12, %s10
  loop: start=0, step=1, limit=4
  $region2: #{seq2seq_transformer_forward.21} parent=0 // loop_pre_header
    _
  $region3: #{seq2seq_transformer_forward.21} parent=0 // loop_header
    %s15 = sphi 0, %s19
    %p16 = scmp.ge.s32.totalorder %s15, 4
    %s25 = sphi 0, %s27
    %s28 = sphi 0, %s25
    %s29 = sphi 0, %s28
    %s45 = sphi 0, %s29
    %s49 = sphi 0, %s49
    %s51 = sphi 0, %s49
    %s52 = sphi 0, %s51
    %s66 = sphi 0, %s52
    %s70 = sphi 0, %s70
    %s72 = sphi 0, %s70
    %s73 = sphi 0, %s72
    %s87 = sphi 0, %s73
    %s91 = sphi 0, %s91
    %s93 = sphi 0, %s91
    %s94 = sphi 0, %s93
    %s108 = sphi 0, %s94
    %s112 = sphi 0, %s112
    %s114 = sphi 0, %s112
    %s115 = sphi 0, %s114
    %s129 = sphi 0, %s115
    %s133 = sphi 0, %s133
    %s135 = sphi 0, %s133
    %s136 = sphi 0, %s135
    %s150 = sphi 0, %s136
    %s156 = sphi 0, %s158
    %s159 = sphi 0, %s156
    %s160 = sphi 0, %s159
    %s176 = sphi 0, %s160
    %s180 = sphi 0, %s180
    %s182 = sphi 0, %s180
    %s183 = sphi 0, %s182
    %s197 = sphi 0, %s183
    %s201 = sphi 0, %s201
    %s203 = sphi 0, %s201
    %s204 = sphi 0, %s203
    %s218 = sphi 0, %s204
    %s224 = sphi 0, %s226
    %s227 = sphi 0, %s224
    %s228 = sphi 0, %s227
    %s244 = sphi 0, %s228
  $region4: #{seq2seq_transformer_forward.21} parent=0 // loop_header_branch
    %18 = sbr.rel (%p16) target = $region8
  $region5: #{seq2seq_transformer_forward.21} parent=0 // loop_body
    %s20 = ssub.s32 %s15, 1
    %s21 = ssub.s32 %s15, 2
    %s22 = sadd.s32 %s15, 1
    %s23 = ssub.s32 %s15, %s22
    %p24 = scmp.eq.s32.totalorder %s23, 0
    %s26 = sadd.s32 %s25, 1
    %s27 = scalar_select %p24, %s25, %s26
    %p30 = pneg %p24
    %p31 = scmp.eq.s32.totalorder %s15, 1
    %p32 = por %p30, %p31
    %p33 = scmp.ne.s32.totalorder %s25, %s28
    %p34 = scmp.eq.s32.totalorder %s15, 0
    %p35 = por %p33, %p34
    %p36 = scmp.ne.s32.totalorder %s25, %s28
    %p37 = scmp.eq.s32.totalorder %s20, 1
    %p38 = por %p36, %p37
    %p39 = scmp.ne.s32.totalorder %s28, %s29
    %p40 = scmp.eq.s32.totalorder %s20, 0
    %p41 = por %p39, %p40
    %p42 = scmp.ne.s32.totalorder %s28, %s29
    %p43 = scmp.eq.s32.totalorder %s21, 1
    %p44 = por %p42, %p43
    %p46 = scmp.ne.s32.totalorder %s29, %s45
    %p47 = scmp.eq.s32.totalorder %s21, 0
    %p48 = por %p46, %p47
    %s50 = sadd.s32 %s49, 1
    %p53 = scmp.eq.s32.totalorder %s15, 1
    %p54 = scmp.ne.s32.totalorder %s49, %s51
    %p55 = scmp.eq.s32.totalorder %s15, 0
    %p56 = por %p54, %p55
    %p57 = scmp.ne.s32.totalorder %s49, %s51
    %p58 = scmp.eq.s32.totalorder %s20, 1
    %p59 = por %p57, %p58
    %p60 = scmp.ne.s32.totalorder %s51, %s52
    %p61 = scmp.eq.s32.totalorder %s20, 0
    %p62 = por %p60, %p61
    %p63 = scmp.ne.s32.totalorder %s51, %s52
    %p64 = scmp.eq.s32.totalorder %s21, 1
    %p65 = por %p63, %p64
    %p67 = scmp.ne.s32.totalorder %s52, %s66
    %p68 = scmp.eq.s32.totalorder %s21, 0
    %p69 = por %p67, %p68
    %s71 = sadd.s32 %s70, 1
    %p74 = scmp.eq.s32.totalorder %s15, 1
    %p75 = scmp.ne.s32.totalorder %s70, %s72
    %p76 = scmp.eq.s32.totalorder %s15, 0
    %p77 = por %p75, %p76
    %p78 = scmp.ne.s32.totalorder %s70, %s72
    %p79 = scmp.eq.s32.totalorder %s20, 1
    %p80 = por %p78, %p79
    %p81 = scmp.ne.s32.totalorder %s72, %s73
    %p82 = scmp.eq.s32.totalorder %s20, 0
    %p83 = por %p81, %p82
    %p84 = scmp.ne.s32.totalorder %s72, %s73
    %p85 = scmp.eq.s32.totalorder %s21, 1
    %p86 = por %p84, %p85
    %p88 = scmp.ne.s32.totalorder %s73, %s87
    %p89 = scmp.eq.s32.totalorder %s21, 0
    %p90 = por %p88, %p89
    %s92 = sadd.s32 %s91, 1
    %p95 = scmp.eq.s32.totalorder %s15, 1
    %p96 = scmp.ne.s32.totalorder %s91, %s93
    %p97 = scmp.eq.s32.totalorder %s15, 0
    %p98 = por %p96, %p97
    %p99 = scmp.ne.s32.totalorder %s91, %s93
    %p100 = scmp.eq.s32.totalorder %s20, 1
    %p101 = por %p99, %p100
    %p102 = scmp.ne.s32.totalorder %s93, %s94
    %p103 = scmp.eq.s32.totalorder %s20, 0
    %p104 = por %p102, %p103
    %p105 = scmp.ne.s32.totalorder %s93, %s94
    %p106 = scmp.eq.s32.totalorder %s21, 1
    %p107 = por %p105, %p106
    %p109 = scmp.ne.s32.totalorder %s94, %s108
    %p110 = scmp.eq.s32.totalorder %s21, 0
    %p111 = por %p109, %p110
    %s113 = sadd.s32 %s112, 1
    %p116 = scmp.eq.s32.totalorder %s15, 1
    %p117 = scmp.ne.s32.totalorder %s112, %s114
    %p118 = scmp.eq.s32.totalorder %s15, 0
    %p119 = por %p117, %p118
    %p120 = scmp.ne.s32.totalorder %s112, %s114
    %p121 = scmp.eq.s32.totalorder %s20, 1
    %p122 = por %p120, %p121
    %p123 = scmp.ne.s32.totalorder %s114, %s115
    %p124 = scmp.eq.s32.totalorder %s20, 0
    %p125 = por %p123, %p124
    %p126 = scmp.ne.s32.totalorder %s114, %s115
    %p127 = scmp.eq.s32.totalorder %s21, 1
    %p128 = por %p126, %p127
    %p130 = scmp.ne.s32.totalorder %s115, %s129
    %p131 = scmp.eq.s32.totalorder %s21, 0
    %p132 = por %p130, %p131
    %s134 = sadd.s32 %s133, 1
    %p137 = scmp.eq.s32.totalorder %s15, 1
    %p138 = scmp.ne.s32.totalorder %s133, %s135
    %p139 = scmp.eq.s32.totalorder %s15, 0
    %p140 = por %p138, %p139
    %p141 = scmp.ne.s32.totalorder %s133, %s135
    %p142 = scmp.eq.s32.totalorder %s20, 1
    %p143 = por %p141, %p142
    %p144 = scmp.ne.s32.totalorder %s135, %s136
    %p145 = scmp.eq.s32.totalorder %s20, 0
    %p146 = por %p144, %p145
    %p147 = scmp.ne.s32.totalorder %s135, %s136
    %p148 = scmp.eq.s32.totalorder %s21, 1
    %p149 = por %p147, %p148
    %p151 = scmp.ne.s32.totalorder %s136, %s150
    %p152 = scmp.eq.s32.totalorder %s21, 0
    %p153 = por %p151, %p152
    %s154 = ssub.s32 %s15, %s22
    %p155 = scmp.eq.s32.totalorder %s154, 0
    %s157 = sadd.s32 %s156, 1
    %s158 = scalar_select %p155, %s156, %s157
    %p161 = pneg %p155
    %p162 = scmp.eq.s32.totalorder %s15, 1
    %p163 = por %p161, %p162
    %p164 = scmp.ne.s32.totalorder %s156, %s159
    %p165 = scmp.eq.s32.totalorder %s15, 0
    %p166 = por %p164, %p165
    %p167 = scmp.ne.s32.totalorder %s156, %s159
    %p168 = scmp.eq.s32.totalorder %s20, 1
    %p169 = por %p167, %p168
    %p170 = scmp.ne.s32.totalorder %s159, %s160
    %p171 = scmp.eq.s32.totalorder %s20, 0
    %p172 = por %p170, %p171
    %p173 = scmp.ne.s32.totalorder %s159, %s160
    %p174 = scmp.eq.s32.totalorder %s21, 1
    %p175 = por %p173, %p174
    %p177 = scmp.ne.s32.totalorder %s160, %s176
    %p178 = scmp.eq.s32.totalorder %s21, 0
    %p179 = por %p177, %p178
    %s181 = sadd.s32 %s180, 1
    %p184 = scmp.eq.s32.totalorder %s15, 1
    %p185 = scmp.ne.s32.totalorder %s180, %s182
    %p186 = scmp.eq.s32.totalorder %s15, 0
    %p187 = por %p185, %p186
    %p188 = scmp.ne.s32.totalorder %s180, %s182
    %p189 = scmp.eq.s32.totalorder %s20, 1
    %p190 = por %p188, %p189
    %p191 = scmp.ne.s32.totalorder %s182, %s183
    %p192 = scmp.eq.s32.totalorder %s20, 0
    %p193 = por %p191, %p192
    %p194 = scmp.ne.s32.totalorder %s182, %s183
    %p195 = scmp.eq.s32.totalorder %s21, 1
    %p196 = por %p194, %p195
    %p198 = scmp.ne.s32.totalorder %s183, %s197
    %p199 = scmp.eq.s32.totalorder %s21, 0
    %p200 = por %p198, %p199
    %s202 = sadd.s32 %s201, 1
    %p205 = scmp.eq.s32.totalorder %s15, 1
    %p206 = scmp.ne.s32.totalorder %s201, %s203
    %p207 = scmp.eq.s32.totalorder %s15, 0
    %p208 = por %p206, %p207
    %p209 = scmp.ne.s32.totalorder %s201, %s203
    %p210 = scmp.eq.s32.totalorder %s20, 1
    %p211 = por %p209, %p210
    %p212 = scmp.ne.s32.totalorder %s203, %s204
    %p213 = scmp.eq.s32.totalorder %s20, 0
    %p214 = por %p212, %p213
    %p215 = scmp.ne.s32.totalorder %s203, %s204
    %p216 = scmp.eq.s32.totalorder %s21, 1
    %p217 = por %p215, %p216
    %p219 = scmp.ne.s32.totalorder %s204, %s218
    %p220 = scmp.eq.s32.totalorder %s21, 0
    %p221 = por %p219, %p220
    %s222 = ssub.s32 %s15, %s22
    %p223 = scmp.eq.s32.totalorder %s222, 0
    %s225 = sadd.s32 %s224, 1
    %s226 = scalar_select %p223, %s224, %s225
    %p229 = pneg %p223
    %p230 = scmp.eq.s32.totalorder %s15, 1
    %p231 = por %p229, %p230
    %p232 = scmp.ne.s32.totalorder %s224, %s227
    %p233 = scmp.eq.s32.totalorder %s15, 0
    %p234 = por %p232, %p233
    %p235 = scmp.ne.s32.totalorder %s224, %s227
    %p236 = scmp.eq.s32.totalorder %s20, 1
    %p237 = por %p235, %p236
    %p238 = scmp.ne.s32.totalorder %s227, %s228
    %p239 = scmp.eq.s32.totalorder %s20, 0
    %p240 = por %p238, %p239
    %p241 = scmp.ne.s32.totalorder %s227, %s228
    %p242 = scmp.eq.s32.totalorder %s21, 1
    %p243 = por %p241, %p242
    %p245 = scmp.ne.s32.totalorder %s228, %s244
    %p246 = scmp.eq.s32.totalorder %s21, 0
    %p247 = por %p245, %p246
    %p248 = scmp.le.s32.totalorder 1, %s15
    %p249 = scmp.lt.s32.totalorder %s15, 3
    %p250 = pnand %p248, %p249
    %p251 = pneg %p250
    // Predicated region
    $region9: #{seq2seq_transformer_forward.21} parent=5 // pred_check
      _
    $region10: #{seq2seq_transformer_forward.21} parent=5 // pred_check_branch
      %253 = sbr.rel (%p250) target = $region12
    $region11: #{seq2seq_transformer_forward.21} parent=5 // pred_region
      %s254 = ssub.s32 %s15, 1
      // Predicated region
      $region13: #{seq2seq_transformer_forward.21} parent=11 // pred_check
        %p255 = pneg %p62
      $region14: #{seq2seq_transformer_forward.21} parent=11 // pred_check_branch
        %257 = sbr.rel (%p255) target = $region16
      $region15: #{seq2seq_transformer_forward.21} parent=11 // pred_region
        _
      $region16: #{seq2seq_transformer_forward.21} parent=11 // pred_fallthru
        _
      // Predicated region
      $region17: #{seq2seq_transformer_forward.21} parent=11 // pred_check
        %p258 = pneg %p83
      $region18: #{seq2seq_transformer_forward.21} parent=11 // pred_check_branch
        %260 = sbr.rel (%p258) target = $region20
      $region19: #{seq2seq_transformer_forward.21} parent=11 // pred_region
        _
      $region20: #{seq2seq_transformer_forward.21} parent=11 // pred_fallthru
        _
      // Predicated region
      $region21: #{seq2seq_transformer_forward.21} parent=11 // pred_check
        %p261 = pneg %p104
      $region22: #{seq2seq_transformer_forward.21} parent=11 // pred_check_branch
        %263 = sbr.rel (%p261) target = $region24
      $region23: #{seq2seq_transformer_forward.21} parent=11 // pred_region
        _
      $region24: #{seq2seq_transformer_forward.21} parent=11 // pred_fallthru
        _
      // Predicated region
      $region25: #{seq2seq_transformer_forward.21} parent=11 // pred_check
        %p264 = pneg %p125
      $region26: #{seq2seq_transformer_forward.21} parent=11 // pred_check_branch
        %266 = sbr.rel (%p264) target = $region28
      $region27: #{seq2seq_transformer_forward.21} parent=11 // pred_region
        _
      $region28: #{seq2seq_transformer_forward.21} parent=11 // pred_fallthru
        _
      // Predicated region
      $region29: #{seq2seq_transformer_forward.21} parent=11 // pred_check
        %p267 = pneg %p146
      $region30: #{seq2seq_transformer_forward.21} parent=11 // pred_check_branch
        %269 = sbr.rel (%p267) target = $region32
      $region31: #{seq2seq_transformer_forward.21} parent=11 // pred_region
        _
      $region32: #{seq2seq_transformer_forward.21} parent=11 // pred_fallthru
        _
      // Predicated region
      $region33: #{seq2seq_transformer_forward.21} parent=11 // pred_check
        %p270 = pneg %p193
      $region34: #{seq2seq_transformer_forward.21} parent=11 // pred_check_branch
        %272 = sbr.rel (%p270) target = $region36
      $region35: #{seq2seq_transformer_forward.21} parent=11 // pred_region
        _
      $region36: #{seq2seq_transformer_forward.21} parent=11 // pred_fallthru
        _
      // Predicated region
      $region37: #{seq2seq_transformer_forward.21} parent=11 // pred_check
        %p273 = pneg %p214
      $region38: #{seq2seq_transformer_forward.21} parent=11 // pred_check_branch
        %275 = sbr.rel (%p273) target = $region40
      $region39: #{seq2seq_transformer_forward.21} parent=11 // pred_region
        _
      $region40: #{seq2seq_transformer_forward.21} parent=11 // pred_fallthru
        _
    $region12: #{seq2seq_transformer_forward.21} parent=5 // pred_fallthru
      _
    %p276 = scmp.lt.s32.totalorder %s15, 2
    // Predicated region
    $region41: #{seq2seq_transformer_forward.21} parent=5 // pred_check
      %p277 = pneg %p276
    $region42: #{seq2seq_transformer_forward.21} parent=5 // pred_check_branch
      %279 = sbr.rel (%p277) target = $region44
    $region43: #{seq2seq_transformer_forward.21} parent=5 // pred_region
      // Predicated region
      $region45: #{seq2seq_transformer_forward.21} parent=43 // pred_check
        %p280 = pneg %p35
      $region46: #{seq2seq_transformer_forward.21} parent=43 // pred_check_branch
        %282 = sbr.rel (%p280) target = $region48
      $region47: #{seq2seq_transformer_forward.21} parent=43 // pred_region
        %p283 = scmp.lt.s32.totalorder %s15, 1
        %s284 = scalar_select %p283, %s15, 1
        %s285 = smul.addr %s284, 8
        %s286 = scalar_lea.vmem %s0, %s285
      $region48: #{seq2seq_transformer_forward.21} parent=43 // pred_fallthru
        _
      // Predicated region
      $region49: #{seq2seq_transformer_forward.21} parent=43 // pred_check
        %p287 = pneg %p166
      $region50: #{seq2seq_transformer_forward.21} parent=43 // pred_check_branch
        %289 = sbr.rel (%p287) target = $region52
      $region51: #{seq2seq_transformer_forward.21} parent=43 // pred_region
        %p290 = scmp.lt.s32.totalorder %s15, 1
        %s291 = scalar_select %p290, %s15, 1
        %s292 = scalar_lea.vmem %s6, %s291
      $region52: #{seq2seq_transformer_forward.21} parent=43 // pred_fallthru
        _
    $region44: #{seq2seq_transformer_forward.21} parent=5 // pred_fallthru
      _
    %p293 = scmp.le.s32.totalorder 1, %s15
    %p294 = scmp.lt.s32.totalorder %s15, 3
    %p295 = pnand %p293, %p294
    %p296 = pneg %p295
    // Predicated region
    $region53: #{seq2seq_transformer_forward.21} parent=5 // pred_check
      _
    $region54: #{seq2seq_transformer_forward.21} parent=5 // pred_check_branch
      %298 = sbr.rel (%p295) target = $region56
    $region55: #{seq2seq_transformer_forward.21} parent=5 // pred_region
      %s299 = ssub.s32 %s15, 1
      %p300 = scmp.lt.s32.totalorder %s20, 1
      %s301 = scalar_select %p300, %s20, 1
      %s302 = smul.addr %s301, 8
      %s303 = scalar_lea.vmem %s0, %s302
      %p304 = pneg %p41
      %p305 = pneg %p38
      %p306 = pneg %p62
      %p307 = pneg %p59
      %p308 = pneg %p83
      %p309 = pneg %p80
      %p310 = pneg %p104
      %p311 = pneg %p101
      %p312 = pneg %p125
      %p313 = pneg %p122
      %p314 = pneg %p146
      %p315 = pneg %p143
      %p316 = scmp.lt.s32.totalorder %s20, 1
      %s317 = scalar_select %p316, %s20, 1
      %s318 = scalar_lea.vmem %s6, %s317
      %p319 = pneg %p172
      %p320 = pneg %p169
      %p321 = pneg %p193
      %p322 = pneg %p190
      %p323 = pneg %p214
      %p324 = pneg %p211
      %p325 = pneg %p240
      %p326 = pneg %p237
      %p327 = scmp.lt.s32.totalorder %s20, 1
      %s328 = scalar_select %p327, %s20, 1
      %s329 = smul.addr %s328, 8
      %s330 = scalar_lea.vmem %s9, %s329
      %p331 = scmp.lt.s32.totalorder %s20, 1
      %s332 = scalar_select %p331, %s20, 1
      %s333 = smul.addr %s332, 8
      %s334 = scalar_lea.vmem %s0, %s333
      %p335 = scmp.lt.s32.totalorder %s20, 1
      %s336 = scalar_select %p335, %s20, 1
      %s337 = scalar_lea.vmem %s6, %s336
      %p338 = scmp.lt.s32.totalorder %s20, 1
      %s339 = scalar_select %p338, %s20, 1
      %s340 = smul.addr %s339, 8
      %s341 = scalar_lea.vmem %s9, %s340
      %v342 = vld [vmem:[%s334] sm:$0xff]
      %v343 = vld [vmem:[%s1] sm:$0xff]
      %v344 = vld [vmem:[%s1 + $0x8] sm:$0xff]
      %v345 = vld [vmem:[%s1 + $0x10] sm:$0xff]
      %v346 = vld [vmem:[%s1 + $0x18] sm:$0xff]
      %v347 = vld [vmem:[%s2] sm:$0x1]
      %v349 = vlaneseq
      %v350 = vshrl.u32 %v349, 7
      %v351 = vsub.s32 0, %v350
      %v352 = vrot.slane %v347, %v351
      %vm354 = vcmask 261120
      %v356 = vsel %vm354, %v342, 0
      %358 = vmatprep.subr.mxu0 0.0
      %359 = vmatpush1.msra.mxu0 %v343
      %360 = vmatprep.subr.mxu0 0.0
      %361 = vmatpush1.msra.mxu0 %v344
      %362 = vmatprep.subr.mxu0 0.0
      %363 = vmatpush1.msra.mxu0 %v345
      %364 = vmatprep.subr.mxu0 0.0
      %365 = vmatpush1.msra.mxu0 %v346
      %366 = vmatprep.subr.mxu0 0.0
      %367 = vmatpush1.msra.mxu0 0.0
      %368 = vmatprep.subr.mxu0 0.0
      %369 = vmatpush1.msra.mxu0 0.0
      %370 = vmatprep.subr.mxu0 0.0
      %371 = vmatpush1.msra.mxu0 0.0
      %372 = vmatprep.subr.mxu0 0.0
      %373 = vmatpush1.msra.mxu0 0.0
      %374 = vmatprep.subr.mxu0 0.0
      %375 = vmatpush1.msra.mxu0 0.0
      %376 = vmatprep.subr.mxu0 0.0
      %377 = vmatpush1.msra.mxu0 0.0
      %378 = vmatprep.subr.mxu0 0.0
      %379 = vmatpush1.msra.mxu0 0.0
      %380 = vmatprep.subr.mxu0 0.0
      %381 = vmatpush1.msra.mxu0 0.0
      %382 = vmatprep.subr.mxu0 0.0
      %383 = vmatpush1.msra.mxu0 0.0
      %384 = vmatprep.subr.mxu0 0.0
      %385 = vmatpush1.msra.mxu0 0.0
      %386 = vmatprep.subr.mxu0 0.0
      %387 = vmatpush1.msra.mxu0 0.0
      %388 = vmatprep.subr.mxu0 0.0
      %389 = vmatpush1.msra.mxu0 0.0
      %390 = vmatprep.subr.mxu0 0.0
      %391 = vmatpush1.msra.mxu0 0.0
      %392 = vmatprep.subr.mxu0 0.0
      %393 = vmatpush1.msra.mxu0 0.0
      %394 = vmatprep.subr.mxu0 0.0
      %395 = vmatpush1.msra.mxu0 0.0
      %396 = vmatprep.subr.mxu0 0.0
      %397 = vmatpush1.msra.mxu0 0.0
      %398 = vmatprep.subr.mxu0 0.0
      %399 = vmatpush1.msra.mxu0 0.0
      %400 = vmatprep.subr.mxu0 0.0
      %401 = vmatpush1.msra.mxu0 0.0
      %402 = vmatprep.subr.mxu0 0.0
      %403 = vmatpush1.msra.mxu0 0.0
      %404 = vmatprep.subr.mxu0 0.0
      %405 = vmatpush1.msra.mxu0 0.0
      %406 = vmatprep.subr.mxu0 0.0
      %407 = vmatpush1.msra.mxu0 0.0
      %408 = vmatprep.subr.mxu0 0.0
      %409 = vmatpush1.msra.mxu0 0.0
      %410 = vmatprep.subr.mxu0 0.0
      %411 = vmatpush1.msra.mxu0 0.0
      %412 = vmatprep.subr.mxu0 0.0
      %413 = vmatpush1.msra.mxu0 0.0
      %414 = vmatprep.subr.mxu0 0.0
      %415 = vmatpush1.msra.mxu0 0.0
      %416 = vmatprep.subr.mxu0 0.0
      %417 = vmatpush1.msra.mxu0 0.0
      %418 = vmatprep.subr.mxu0 0.0
      %419 = vmatpush1.msra.mxu0 0.0
      %420 = vmatprep.subr.mxu0 0.0
      %421 = vmatpush1.msra.mxu0 0.0
      %422 = vmatprep.mubr.f32.mxu0 0.0
      %423 = vmatmul.mubr.f32.gmra.mrb[0].mxu0 %v356
      %v424 = vpop.f32.mrb[0].mxu0
      %v425 = vadd.f32 %v352, %v424
      %v426 = vpop.f32.mrb[0].mxu0
      %427 = vdwg.mxu0
      %v428 = vld [vmem:[%s5] sm:$0xff]
      %v429 = vld [vmem:[%s337] sm:$0x1]
      %v431 = vlaneseq
      %v432 = vshrl.u32 %v431, 7
      %v433 = vsub.s32 0, %v432
      %v434 = vrot.slane %v429, %v433
      %v436 = vadd.f32 %v428, %v434
      %v437 = vld [vmem:[%s3] sm:$0xff]
      %v438 = vld [vmem:[%s3 + $0x8] sm:$0xff]
      %v439 = vld [vmem:[%s3 + $0x10] sm:$0xff]
      %v440 = vld [vmem:[%s3 + $0x18] sm:$0xff]
      %442 = vrot.lane.b32.xlu0 %v425, 96
      %v443 = vpop.permute.xlu0 %442
      %vm444 = vcmask 64512
      %v445 = vsel %vm444, %v425, 0
      %v447 = vsel %vm444, %v443, 0
      %449 = vmatprep.subr.mxu0 0.0
      %450 = vmatpush1.xpose.msra.mxu0 %v447
      %451 = vmatprep.subr.mxu0 0.0
      %452 = vmatpush1.xpose.msra.mxu0 0.0
      %453 = vmatprep.subr.mxu0 0.0
      %454 = vmatpush1.xpose.msra.mxu0 0.0
      %455 = vmatprep.subr.mxu0 0.0
      %456 = vmatpush1.xpose.msra.mxu0 0.0
      %457 = vmatprep.subr.mxu0 0.0
      %458 = vmatpush1.xpose.msra.mxu0 0.0
      %459 = vmatprep.subr.mxu0 0.0
      %460 = vmatpush1.xpose.msra.mxu0 0.0
      %461 = vmatprep.subr.mxu0 0.0
      %462 = vmatpush1.xpose.msra.mxu0 0.0
      %463 = vmatprep.subr.mxu0 0.0
      %464 = vmatpush1.xpose.msra.mxu0 0.0
      %465 = vmatprep.subr.mxu0 0.0
      %466 = vmatpush1.xpose.msra.mxu0 0.0
      %467 = vmatprep.subr.mxu0 0.0
      %468 = vmatpush1.xpose.msra.mxu0 0.0
      %469 = vmatprep.subr.mxu0 0.0
      %470 = vmatpush1.xpose.msra.mxu0 0.0
      %471 = vmatprep.subr.mxu0 0.0
      %472 = vmatpush1.xpose.msra.mxu0 0.0
      %473 = vmatprep.subr.mxu0 0.0
      %474 = vmatpush1.xpose.msra.mxu0 0.0
      %475 = vmatprep.subr.mxu0 0.0
      %476 = vmatpush1.xpose.msra.mxu0 0.0
      %477 = vmatprep.subr.mxu0 0.0
      %478 = vmatpush1.xpose.msra.mxu0 0.0
      %479 = vmatprep.subr.mxu0 0.0
      %480 = vmatpush1.xpose.msra.mxu0 0.0
      %481 = vmatprep.subr.mxu0 0.0
      %482 = vmatpush1.xpose.msra.mxu0 0.0
      %483 = vmatprep.subr.mxu0 0.0
      %484 = vmatpush1.xpose.msra.mxu0 0.0
      %485 = vmatprep.subr.mxu0 0.0
      %486 = vmatpush1.xpose.msra.mxu0 0.0
      %487 = vmatprep.subr.mxu0 0.0
      %488 = vmatpush1.xpose.msra.mxu0 0.0
      %489 = vmatprep.subr.mxu0 0.0
      %490 = vmatpush1.xpose.msra.mxu0 0.0
      %491 = vmatprep.subr.mxu0 0.0
      %492 = vmatpush1.xpose.msra.mxu0 0.0
      %493 = vmatprep.subr.mxu0 0.0
      %494 = vmatpush1.xpose.msra.mxu0 0.0
      %495 = vmatprep.subr.mxu0 0.0
      %496 = vmatpush1.xpose.msra.mxu0 0.0
      %497 = vmatprep.subr.mxu0 0.0
      %498 = vmatpush1.xpose.msra.mxu0 0.0
      %499 = vmatprep.subr.mxu0 0.0
      %500 = vmatpush1.xpose.msra.mxu0 0.0
      %501 = vmatprep.subr.mxu0 0.0
      %502 = vmatpush1.xpose.msra.mxu0 0.0
      %503 = vmatprep.subr.mxu0 0.0
      %504 = vmatpush1.xpose.msra.mxu0 0.0
      %505 = vmatprep.subr.mxu0 0.0
      %506 = vmatpush1.xpose.msra.mxu0 0.0
      %507 = vmatprep.subr.mxu0 0.0
      %508 = vmatpush1.xpose.msra.mxu0 0.0
      %509 = vmatprep.subr.mxu0 0.0
      %510 = vmatpush1.xpose.msra.mxu0 0.0
      %511 = vmatprep.subr.mxu0 0.0
      %512 = vmatpush1.xpose.msra.mxu0 0.0
      %513 = vmatprep.mubr.f32.mxu0 0.0
      %514 = vmatmul.mubr.f32.gmra.mrb[0].mxu0 %v445
      %v515 = vpop.f32.mrb[0].mxu0
      %v516 = vadd.f32 0.0, %v515
      %v517 = vpop.f32.mrb[0].mxu0
      %518 = vdwg.mxu0
      %v519 = vmul.f32 %v516, 0.35355338
      %v520 = vadd.f32 %v519, %v436
      %v521 = vsel %vm444, %v520, -inf
      %522 = vmax.xlane.f32.xlu0 %v521
      %v523 = vpop.xlane.xlu0 %522
      %v524 = vsub.f32 %v520, %v523
      %v525 = vmul.f32 %v524, 1.442695
      %v526 = vpow.pop %v525
      %v527 = vsel %vm444, %v526, 0.0
      %528 = vadd.xlane.f32.xlu0 %v527
      %v529 = vpop.xlane.xlu0 %528
      %v530 = vrcp.pop %v529
      %v531 = vmul.f32 %v526, %v530
      %532 = vrot.lane.b32.xlu0 %v425, 64
      %v533 = vpop.permute.xlu0 %532
      %v536 = vsel %vm444, %v531, 0
      %538 = vmatprep.subr.mxu0 0.0
      %539 = vmatpush1.msra.mxu0 %v533
      %540 = vmatprep.subr.mxu0 0.0
      %541 = vmatpush1.msra.mxu0 0.0
      %542 = vmatprep.subr.mxu0 0.0
      %543 = vmatpush1.msra.mxu0 0.0
      %544 = vmatprep.subr.mxu0 0.0
      %545 = vmatpush1.msra.mxu0 0.0
      %546 = vmatprep.subr.mxu0 0.0
      %547 = vmatpush1.msra.mxu0 0.0
      %548 = vmatprep.subr.mxu0 0.0
      %549 = vmatpush1.msra.mxu0 0.0
      %550 = vmatprep.subr.mxu0 0.0
      %551 = vmatpush1.msra.mxu0 0.0
      %552 = vmatprep.subr.mxu0 0.0
      %553 = vmatpush1.msra.mxu0 0.0
      %554 = vmatprep.subr.mxu0 0.0
      %555 = vmatpush1.msra.mxu0 0.0
      %556 = vmatprep.subr.mxu0 0.0
      %557 = vmatpush1.msra.mxu0 0.0
      %558 = vmatprep.subr.mxu0 0.0
      %559 = vmatpush1.msra.mxu0 0.0
      %560 = vmatprep.subr.mxu0 0.0
      %561 = vmatpush1.msra.mxu0 0.0
      %562 = vmatprep.subr.mxu0 0.0
      %563 = vmatpush1.msra.mxu0 0.0
      %564 = vmatprep.subr.mxu0 0.0
      %565 = vmatpush1.msra.mxu0 0.0
      %566 = vmatprep.subr.mxu0 0.0
      %567 = vmatpush1.msra.mxu0 0.0
      %568 = vmatprep.subr.mxu0 0.0
      %569 = vmatpush1.msra.mxu0 0.0
      %570 = vmatprep.subr.mxu0 0.0
      %571 = vmatpush1.msra.mxu0 0.0
      %572 = vmatprep.subr.mxu0 0.0
      %573 = vmatpush1.msra.mxu0 0.0
      %574 = vmatprep.subr.mxu0 0.0
      %575 = vmatpush1.msra.mxu0 0.0
      %576 = vmatprep.subr.mxu0 0.0
      %577 = vmatpush1.msra.mxu0 0.0
      %578 = vmatprep.subr.mxu0 0.0
      %579 = vmatpush1.msra.mxu0 0.0
      %580 = vmatprep.subr.mxu0 0.0
      %581 = vmatpush1.msra.mxu0 0.0
      %582 = vmatprep.subr.mxu0 0.0
      %583 = vmatpush1.msra.mxu0 0.0
      %584 = vmatprep.subr.mxu0 0.0
      %585 = vmatpush1.msra.mxu0 0.0
      %586 = vmatprep.subr.mxu0 0.0
      %587 = vmatpush1.msra.mxu0 0.0
      %588 = vmatprep.subr.mxu0 0.0
      %589 = vmatpush1.msra.mxu0 0.0
      %590 = vmatprep.subr.mxu0 0.0
      %591 = vmatpush1.msra.mxu0 0.0
      %592 = vmatprep.subr.mxu0 0.0
      %593 = vmatpush1.msra.mxu0 0.0
      %594 = vmatprep.subr.mxu0 0.0
      %595 = vmatpush1.msra.mxu0 0.0
      %596 = vmatprep.subr.mxu0 0.0
      %597 = vmatpush1.msra.mxu0 0.0
      %598 = vmatprep.subr.mxu0 0.0
      %599 = vmatpush1.msra.mxu0 0.0
      %600 = vmatprep.subr.mxu0 0.0
      %601 = vmatpush1.msra.mxu0 0.0
      %602 = vmatprep.mubr.f32.mxu0 0.0
      %603 = vmatmul.mubr.f32.gmra.mrb[0].mxu0 %v536
      %v604 = vpop.f32.mrb[0].mxu0
      %v605 = vadd.f32 0.0, %v604
      %v606 = vpop.f32.mrb[0].mxu0
      %607 = vdwg.mxu0
      %608 = vrot.lane.b32.xlu0 %v425, 120
      %v609 = vpop.permute.xlu0 %608
      %610 = vrot.lane.b32.xlu0 %v425, 88
      %v611 = vpop.permute.xlu0 %610
      %v612 = vsel %vm444, %v609, 0
      %v614 = vsel %vm444, %v611, 0
      %616 = vmatprep.subr.mxu0 0.0
      %617 = vmatpush1.xpose.msra.mxu0 %v614
      %618 = vmatprep.subr.mxu0 0.0
      %619 = vmatpush1.xpose.msra.mxu0 0.0
      %620 = vmatprep.subr.mxu0 0.0
      %621 = vmatpush1.xpose.msra.mxu0 0.0
      %622 = vmatprep.subr.mxu0 0.0
      %623 = vmatpush1.xpose.msra.mxu0 0.0
      %624 = vmatprep.subr.mxu0 0.0
      %625 = vmatpush1.xpose.msra.mxu0 0.0
      %626 = vmatprep.subr.mxu0 0.0
      %627 = vmatpush1.xpose.msra.mxu0 0.0
      %628 = vmatprep.subr.mxu0 0.0
      %629 = vmatpush1.xpose.msra.mxu0 0.0
      %630 = vmatprep.subr.mxu0 0.0
      %631 = vmatpush1.xpose.msra.mxu0 0.0
      %632 = vmatprep.subr.mxu0 0.0
      %633 = vmatpush1.xpose.msra.mxu0 0.0
      %634 = vmatprep.subr.mxu0 0.0
      %635 = vmatpush1.xpose.msra.mxu0 0.0
      %636 = vmatprep.subr.mxu0 0.0
      %637 = vmatpush1.xpose.msra.mxu0 0.0
      %638 = vmatprep.subr.mxu0 0.0
      %639 = vmatpush1.xpose.msra.mxu0 0.0
      %640 = vmatprep.subr.mxu0 0.0
      %641 = vmatpush1.xpose.msra.mxu0 0.0
      %642 = vmatprep.subr.mxu0 0.0
      %643 = vmatpush1.xpose.msra.mxu0 0.0
      %644 = vmatprep.subr.mxu0 0.0
      %645 = vmatpush1.xpose.msra.mxu0 0.0
      %646 = vmatprep.subr.mxu0 0.0
      %647 = vmatpush1.xpose.msra.mxu0 0.0
      %648 = vmatprep.subr.mxu0 0.0
      %649 = vmatpush1.xpose.msra.mxu0 0.0
      %650 = vmatprep.subr.mxu0 0.0
      %651 = vmatpush1.xpose.msra.mxu0 0.0
      %652 = vmatprep.subr.mxu0 0.0
      %653 = vmatpush1.xpose.msra.mxu0 0.0
      %654 = vmatprep.subr.mxu0 0.0
      %655 = vmatpush1.xpose.msra.mxu0 0.0
      %656 = vmatprep.subr.mxu0 0.0
      %657 = vmatpush1.xpose.msra.mxu0 0.0
      %658 = vmatprep.subr.mxu0 0.0
      %659 = vmatpush1.xpose.msra.mxu0 0.0
      %660 = vmatprep.subr.mxu0 0.0
      %661 = vmatpush1.xpose.msra.mxu0 0.0
      %662 = vmatprep.subr.mxu0 0.0
      %663 = vmatpush1.xpose.msra.mxu0 0.0
      %664 = vmatprep.subr.mxu0 0.0
      %665 = vmatpush1.xpose.msra.mxu0 0.0
      %666 = vmatprep.subr.mxu0 0.0
      %667 = vmatpush1.xpose.msra.mxu0 0.0
      %668 = vmatprep.subr.mxu0 0.0
      %669 = vmatpush1.xpose.msra.mxu0 0.0
      %670 = vmatprep.subr.mxu0 0.0
      %671 = vmatpush1.xpose.msra.mxu0 0.0
      %672 = vmatprep.subr.mxu0 0.0
      %673 = vmatpush1.xpose.msra.mxu0 0.0
      %674 = vmatprep.subr.mxu0 0.0
      %675 = vmatpush1.xpose.msra.mxu0 0.0
      %676 = vmatprep.subr.mxu0 0.0
      %677 = vmatpush1.xpose.msra.mxu0 0.0
      %678 = vmatprep.subr.mxu0 0.0
      %679 = vmatpush1.xpose.msra.mxu0 0.0
      %680 = vmatprep.mubr.f32.mxu0 0.0
      %681 = vmatmul.mubr.f32.gmra.mrb[0].mxu0 %v612
      %v682 = vpop.f32.mrb[0].mxu0
      %v683 = vadd.f32 0.0, %v682
      %v684 = vpop.f32.mrb[0].mxu0
      %685 = vdwg.mxu0
      %v686 = vmul.f32 %v683, 0.35355338
      %v687 = vadd.f32 %v686, %v436
      %v688 = vsel %vm444, %v687, -inf
      %689 = vmax.xlane.f32.xlu0 %v688
      %v690 = vpop.xlane.xlu0 %689
      %v691 = vsub.f32 %v687, %v690
      %v692 = vmul.f32 %v691, 1.442695
      %v693 = vpow.pop %v692
      %v694 = vsel %vm444, %v693, 0.0
      %695 = vadd.xlane.f32.xlu0 %v694
      %v696 = vpop.xlane.xlu0 %695
      %v697 = vrcp.pop %v696
      %v698 = vmul.f32 %v693, %v697
      %699 = vrot.lane.b32.xlu0 %v425, 56
      %v700 = vpop.permute.xlu0 %699
      %v703 = vsel %vm444, %v698, 0
      %705 = vmatprep.subr.mxu0 0.0
      %706 = vmatpush1.msra.mxu0 %v700
      %707 = vmatprep.subr.mxu0 0.0
      %708 = vmatpush1.msra.mxu0 0.0
      %709 = vmatprep.subr.mxu0 0.0
      %710 = vmatpush1.msra.mxu0 0.0
      %711 = vmatprep.subr.mxu0 0.0
      %712 = vmatpush1.msra.mxu0 0.0
      %713 = vmatprep.subr.mxu0 0.0
      %714 = vmatpush1.msra.mxu0 0.0
      %715 = vmatprep.subr.mxu0 0.0
      %716 = vmatpush1.msra.mxu0 0.0
      %717 = vmatprep.subr.mxu0 0.0
      %718 = vmatpush1.msra.mxu0 0.0
      %719 = vmatprep.subr.mxu0 0.0
      %720 = vmatpush1.msra.mxu0 0.0
      %721 = vmatprep.subr.mxu0 0.0
      %722 = vmatpush1.msra.mxu0 0.0
      %723 = vmatprep.subr.mxu0 0.0
      %724 = vmatpush1.msra.mxu0 0.0
      %725 = vmatprep.subr.mxu0 0.0
      %726 = vmatpush1.msra.mxu0 0.0
      %727 = vmatprep.subr.mxu0 0.0
      %728 = vmatpush1.msra.mxu0 0.0
      %729 = vmatprep.subr.mxu0 0.0
      %730 = vmatpush1.msra.mxu0 0.0
      %731 = vmatprep.subr.mxu0 0.0
      %732 = vmatpush1.msra.mxu0 0.0
      %733 = vmatprep.subr.mxu0 0.0
      %734 = vmatpush1.msra.mxu0 0.0
      %735 = vmatprep.subr.mxu0 0.0
      %736 = vmatpush1.msra.mxu0 0.0
      %737 = vmatprep.subr.mxu0 0.0
      %738 = vmatpush1.msra.mxu0 0.0
      %739 = vmatprep.subr.mxu0 0.0
      %740 = vmatpush1.msra.mxu0 0.0
      %741 = vmatprep.subr.mxu0 0.0
      %742 = vmatpush1.msra.mxu0 0.0
      %743 = vmatprep.subr.mxu0 0.0
      %744 = vmatpush1.msra.mxu0 0.0
      %745 = vmatprep.subr.mxu0 0.0
      %746 = vmatpush1.msra.mxu0 0.0
      %747 = vmatprep.subr.mxu0 0.0
      %748 = vmatpush1.msra.mxu0 0.0
      %749 = vmatprep.subr.mxu0 0.0
      %750 = vmatpush1.msra.mxu0 0.0
      %751 = vmatprep.subr.mxu0 0.0
      %752 = vmatpush1.msra.mxu0 0.0
      %753 = vmatprep.subr.mxu0 0.0
      %754 = vmatpush1.msra.mxu0 0.0
      %755 = vmatprep.subr.mxu0 0.0
      %756 = vmatpush1.msra.mxu0 0.0
      %757 = vmatprep.subr.mxu0 0.0
      %758 = vmatpush1.msra.mxu0 0.0
      %759 = vmatprep.subr.mxu0 0.0
      %760 = vmatpush1.msra.mxu0 0.0
      %761 = vmatprep.subr.mxu0 0.0
      %762 = vmatpush1.msra.mxu0 0.0
      %763 = vmatprep.subr.mxu0 0.0
      %764 = vmatpush1.msra.mxu0 0.0
      %765 = vmatprep.subr.mxu0 0.0
      %766 = vmatpush1.msra.mxu0 0.0
      %767 = vmatprep.subr.mxu0 0.0
      %768 = vmatpush1.msra.mxu0 0.0
      %769 = vmatprep.mubr.f32.mxu0 0.0
      %770 = vmatmul.mubr.f32.gmra.mrb[0].mxu0 %v703
      %v771 = vpop.f32.mrb[0].mxu0
      %v772 = vadd.f32 0.0, %v771
      %v773 = vpop.f32.mrb[0].mxu0
      %774 = vdwg.mxu0
      %v776 = vsel %vm444, %v772, 0
      %778 = vmatprep.subr.mxu0 0.0
      %779 = vmatpush1.msra.mxu0 %v438
      %780 = vmatprep.subr.mxu0 0.0
      %781 = vmatpush1.msra.mxu0 0.0
      %782 = vmatprep.subr.mxu0 0.0
      %783 = vmatpush1.msra.mxu0 0.0
      %784 = vmatprep.subr.mxu0 0.0
      %785 = vmatpush1.msra.mxu0 0.0
      %786 = vmatprep.subr.mxu0 0.0
      %787 = vmatpush1.msra.mxu0 0.0
      %788 = vmatprep.subr.mxu0 0.0
      %789 = vmatpush1.msra.mxu0 0.0
      %790 = vmatprep.subr.mxu0 0.0
      %791 = vmatpush1.msra.mxu0 0.0
      %792 = vmatprep.subr.mxu0 0.0
      %793 = vmatpush1.msra.mxu0 0.0
      %794 = vmatprep.subr.mxu0 0.0
      %795 = vmatpush1.msra.mxu0 0.0
      %796 = vmatprep.subr.mxu0 0.0
      %797 = vmatpush1.msra.mxu0 0.0
      %798 = vmatprep.subr.mxu0 0.0
      %799 = vmatpush1.msra.mxu0 0.0
      %800 = vmatprep.subr.mxu0 0.0
      %801 = vmatpush1.msra.mxu0 0.0
      %802 = vmatprep.subr.mxu0 0.0
      %803 = vmatpush1.msra.mxu0 0.0
      %804 = vmatprep.subr.mxu0 0.0
      %805 = vmatpush1.msra.mxu0 0.0
      %806 = vmatprep.subr.mxu0 0.0
      %807 = vmatpush1.msra.mxu0 0.0
      %808 = vmatprep.subr.mxu0 0.0
      %809 = vmatpush1.msra.mxu0 0.0
      %810 = vmatprep.subr.mxu0 0.0
      %811 = vmatpush1.msra.mxu0 0.0
      %812 = vmatprep.subr.mxu0 0.0
      %813 = vmatpush1.msra.mxu0 0.0
      %814 = vmatprep.subr.mxu0 0.0
      %815 = vmatpush1.msra.mxu0 0.0
      %816 = vmatprep.subr.mxu0 0.0
      %817 = vmatpush1.msra.mxu0 0.0
      %818 = vmatprep.subr.mxu0 0.0
      %819 = vmatpush1.msra.mxu0 0.0
      %820 = vmatprep.subr.mxu0 0.0
      %821 = vmatpush1.msra.mxu0 0.0
      %822 = vmatprep.subr.mxu0 0.0
      %823 = vmatpush1.msra.mxu0 0.0
      %824 = vmatprep.subr.mxu0 0.0
      %825 = vmatpush1.msra.mxu0 0.0
      %826 = vmatprep.subr.mxu0 0.0
      %827 = vmatpush1.msra.mxu0 0.0
      %828 = vmatprep.subr.mxu0 0.0
      %829 = vmatpush1.msra.mxu0 0.0
      %830 = vmatprep.subr.mxu0 0.0
      %831 = vmatpush1.msra.mxu0 0.0
      %832 = vmatprep.subr.mxu0 0.0
      %833 = vmatpush1.msra.mxu0 0.0
      %834 = vmatprep.subr.mxu0 0.0
      %835 = vmatpush1.msra.mxu0 0.0
      %836 = vmatprep.subr.mxu0 0.0
      %837 = vmatpush1.msra.mxu0 0.0
      %838 = vmatprep.subr.mxu0 0.0
      %839 = vmatpush1.msra.mxu0 0.0
      %840 = vmatprep.subr.mxu0 0.0
      %841 = vmatpush1.msra.mxu0 0.0
      %842 = vmatprep.mubr.f32.mxu0 0.0
      %843 = vmatmul.mubr.f32.gmra.mrb[0].mxu0 %v776
      %v844 = vpop.f32.mrb[0].mxu0
      %v845 = vadd.f32 0.0, %v844
      %v846 = vpop.f32.mrb[0].mxu0
      %847 = vdwg.mxu0
      %v849 = vsel %vm444, %v605, 0
      %851 = vmatprep.subr.mxu0 0.0
      %852 = vmatpush1.msra.mxu0 %v437
      %853 = vmatprep.subr.mxu0 0.0
      %854 = vmatpush1.msra.mxu0 0.0
      %855 = vmatprep.subr.mxu0 0.0
      %856 = vmatpush1.msra.mxu0 0.0
      %857 = vmatprep.subr.mxu0 0.0
      %858 = vmatpush1.msra.mxu0 0.0
      %859 = vmatprep.subr.mxu0 0.0
      %860 = vmatpush1.msra.mxu0 0.0
      %861 = vmatprep.subr.mxu0 0.0
      %862 = vmatpush1.msra.mxu0 0.0
      %863 = vmatprep.subr.mxu0 0.0
      %864 = vmatpush1.msra.mxu0 0.0
      %865 = vmatprep.subr.mxu0 0.0
      %866 = vmatpush1.msra.mxu0 0.0
      %867 = vmatprep.subr.mxu0 0.0
      %868 = vmatpush1.msra.mxu0 0.0
      %869 = vmatprep.subr.mxu0 0.0
      %870 = vmatpush1.msra.mxu0 0.0
      %871 = vmatprep.subr.mxu0 0.0
      %872 = vmatpush1.msra.mxu0 0.0
      %873 = vmatprep.subr.mxu0 0.0
      %874 = vmatpush1.msra.mxu0 0.0
      %875 = vmatprep.subr.mxu0 0.0
      %876 = vmatpush1.msra.mxu0 0.0
      %877 = vmatprep.subr.mxu0 0.0
      %878 = vmatpush1.msra.mxu0 0.0
      %879 = vmatprep.subr.mxu0 0.0
      %880 = vmatpush1.msra.mxu0 0.0
      %881 = vmatprep.subr.mxu0 0.0
      %882 = vmatpush1.msra.mxu0 0.0
      %883 = vmatprep.subr.mxu0 0.0
      %884 = vmatpush1.msra.mxu0 0.0
      %885 = vmatprep.subr.mxu0 0.0
      %886 = vmatpush1.msra.mxu0 0.0
      %887 = vmatprep.subr.mxu0 0.0
      %888 = vmatpush1.msra.mxu0 0.0
      %889 = vmatprep.subr.mxu0 0.0
      %890 = vmatpush1.msra.mxu0 0.0
      %891 = vmatprep.subr.mxu0 0.0
      %892 = vmatpush1.msra.mxu0 0.0
      %893 = vmatprep.subr.mxu0 0.0
      %894 = vmatpush1.msra.mxu0 0.0
      %895 = vmatprep.subr.mxu0 0.0
      %896 = vmatpush1.msra.mxu0 0.0
      %897 = vmatprep.subr.mxu0 0.0
      %898 = vmatpush1.msra.mxu0 0.0
      %899 = vmatprep.subr.mxu0 0.0
      %900 = vmatpush1.msra.mxu0 0.0
      %901 = vmatprep.subr.mxu0 0.0
      %902 = vmatpush1.msra.mxu0 0.0
      %903 = vmatprep.subr.mxu0 0.0
      %904 = vmatpush1.msra.mxu0 0.0
      %905 = vmatprep.subr.mxu0 0.0
      %906 = vmatpush1.msra.mxu0 0.0
      %907 = vmatprep.subr.mxu0 0.0
      %908 = vmatpush1.msra.mxu0 0.0
      %909 = vmatprep.subr.mxu0 0.0
      %910 = vmatpush1.msra.mxu0 0.0
      %911 = vmatprep.subr.mxu0 0.0
      %912 = vmatpush1.msra.mxu0 0.0
      %913 = vmatprep.subr.mxu0 0.0
      %914 = vmatpush1.msra.mxu0 0.0
      %915 = vmatprep.mubr.f32.mxu0 0.0
      %916 = vmatmul.mubr.f32.gmra.mrb[0].mxu0 %v849
      %v917 = vpop.f32.mrb[0].mxu0
      %v918 = vadd.f32 %v845, %v917
      %v919 = vpop.f32.mrb[0].mxu0
      %920 = vdwg.mxu0
      %921 = vrot.lane.b32.xlu0 %v425, 112
      %v922 = vpop.permute.xlu0 %921
      %923 = vrot.lane.b32.xlu0 %v425, 80
      %v924 = vpop.permute.xlu0 %923
      %v925 = vsel %vm444, %v922, 0
      %v927 = vsel %vm444, %v924, 0
      %929 = vmatprep.subr.mxu0 0.0
      %930 = vmatpush1.xpose.msra.mxu0 %v927
      %931 = vmatprep.subr.mxu0 0.0
      %932 = vmatpush1.xpose.msra.mxu0 0.0
      %933 = vmatprep.subr.mxu0 0.0
      %934 = vmatpush1.xpose.msra.mxu0 0.0
      %935 = vmatprep.subr.mxu0 0.0
      %936 = vmatpush1.xpose.msra.mxu0 0.0
      %937 = vmatprep.subr.mxu0 0.0
      %938 = vmatpush1.xpose.msra.mxu0 0.0
      %939 = vmatprep.subr.mxu0 0.0
      %940 = vmatpush1.xpose.msra.mxu0 0.0
      %941 = vmatprep.subr.mxu0 0.0
      %942 = vmatpush1.xpose.msra.mxu0 0.0
      %943 = vmatprep.subr.mxu0 0.0
      %944 = vmatpush1.xpose.msra.mxu0 0.0
      %945 = vmatprep.subr.mxu0 0.0
      %946 = vmatpush1.xpose.msra.mxu0 0.0
      %947 = vmatprep.subr.mxu0 0.0
      %948 = vmatpush1.xpose.msra.mxu0 0.0
      %949 = vmatprep.subr.mxu0 0.0
      %950 = vmatpush1.xpose.msra.mxu0 0.0
      %951 = vmatprep.subr.mxu0 0.0
      %952 = vmatpush1.xpose.msra.mxu0 0.0
      %953 = vmatprep.subr.mxu0 0.0
      %954 = vmatpush1.xpose.msra.mxu0 0.0
      %955 = vmatprep.subr.mxu0 0.0
      %956 = vmatpush1.xpose.msra.mxu0 0.0
      %957 = vmatprep.subr.mxu0 0.0
      %958 = vmatpush1.xpose.msra.mxu0 0.0
      %959 = vmatprep.subr.mxu0 0.0
      %960 = vmatpush1.xpose.msra.mxu0 0.0
      %961 = vmatprep.subr.mxu0 0.0
      %962 = vmatpush1.xpose.msra.mxu0 0.0
      %963 = vmatprep.subr.mxu0 0.0
      %964 = vmatpush1.xpose.msra.mxu0 0.0
      %965 = vmatprep.subr.mxu0 0.0
      %966 = vmatpush1.xpose.msra.mxu0 0.0
      %967 = vmatprep.subr.mxu0 0.0
      %968 = vmatpush1.xpose.msra.mxu0 0.0
      %969 = vmatprep.subr.mxu0 0.0
      %970 = vmatpush1.xpose.msra.mxu0 0.0
      %971 = vmatprep.subr.mxu0 0.0
      %972 = vmatpush1.xpose.msra.mxu0 0.0
      %973 = vmatprep.subr.mxu0 0.0
      %974 = vmatpush1.xpose.msra.mxu0 0.0
      %975 = vmatprep.subr.mxu0 0.0
      %976 = vmatpush1.xpose.msra.mxu0 0.0
      %977 = vmatprep.subr.mxu0 0.0
      %978 = vmatpush1.xpose.msra.mxu0 0.0
      %979 = vmatprep.subr.mxu0 0.0
      %980 = vmatpush1.xpose.msra.mxu0 0.0
      %981 = vmatprep.subr.mxu0 0.0
      %982 = vmatpush1.xpose.msra.mxu0 0.0
      %983 = vmatprep.subr.mxu0 0.0
      %984 = vmatpush1.xpose.msra.mxu0 0.0
      %985 = vmatprep.subr.mxu0 0.0
      %986 = vmatpush1.xpose.msra.mxu0 0.0
      %987 = vmatprep.subr.mxu0 0.0
      %988 = vmatpush1.xpose.msra.mxu0 0.0
      %989 = vmatprep.subr.mxu0 0.0
      %990 = vmatpush1.xpose.msra.mxu0 0.0
      %991 = vmatprep.subr.mxu0 0.0
      %992 = vmatpush1.xpose.msra.mxu0 0.0
      %993 = vmatprep.mubr.f32.mxu0 0.0
      %994 = vmatmul.mubr.f32.gmra.mrb[0].mxu0 %v925
      %v995 = vpop.f32.mrb[0].mxu0
      %v996 = vadd.f32 0.0, %v995
      %v997 = vpop.f32.mrb[0].mxu0
      %998 = vdwg.mxu0
      %v999 = vmul.f32 %v996, 0.35355338
      %v1000 = vadd.f32 %v999, %v436
      %v1001 = vsel %vm444, %v1000, -inf
      %1002 = vmax.xlane.f32.xlu0 %v1001
      %v1003 = vpop.xlane.xlu0 %1002
      %v1004 = vsub.f32 %v1000, %v1003
      %v1005 = vmul.f32 %v1004, 1.442695
      %v1006 = vpow.pop %v1005
      %v1007 = vsel %vm444, %v1006, 0.0
      %1008 = vadd.xlane.f32.xlu0 %v1007
      %v1009 = vpop.xlane.xlu0 %1008
      %v1010 = vrcp.pop %v1009
      %v1011 = vmul.f32 %v1006, %v1010
      %1012 = vrot.lane.b32.xlu0 %v425, 48
      %v1013 = vpop.permute.xlu0 %1012
      %v1016 = vsel %vm444, %v1011, 0
      %1018 = vmatprep.subr.mxu0 0.0
      %1019 = vmatpush1.msra.mxu0 %v1013
      %1020 = vmatprep.subr.mxu0 0.0
      %1021 = vmatpush1.msra.mxu0 0.0
      %1022 = vmatprep.subr.mxu0 0.0
      %1023 = vmatpush1.msra.mxu0 0.0
      %1024 = vmatprep.subr.mxu0 0.0
      %1025 = vmatpush1.msra.mxu0 0.0
      %1026 = vmatprep.subr.mxu0 0.0
      %1027 = vmatpush1.msra.mxu0 0.0
      %1028 = vmatprep.subr.mxu0 0.0
      %1029 = vmatpush1.msra.mxu0 0.0
      %1030 = vmatprep.subr.mxu0 0.0
      %1031 = vmatpush1.msra.mxu0 0.0
      %1032 = vmatprep.subr.mxu0 0.0
      %1033 = vmatpush1.msra.mxu0 0.0
      %1034 = vmatprep.subr.mxu0 0.0
      %1035 = vmatpush1.msra.mxu0 0.0
      %1036 = vmatprep.subr.mxu0 0.0
      %1037 = vmatpush1.msra.mxu0 0.0
      %1038 = vmatprep.subr.mxu0 0.0
      %1039 = vmatpush1.msra.mxu0 0.0
      %1040 = vmatprep.subr.mxu0 0.0
      %1041 = vmatpush1.msra.mxu0 0.0
      %1042 = vmatprep.subr.mxu0 0.0
      %1043 = vmatpush1.msra.mxu0 0.0
      %1044 = vmatprep.subr.mxu0 0.0
      %1045 = vmatpush1.msra.mxu0 0.0
      %1046 = vmatprep.subr.mxu0 0.0
      %1047 = vmatpush1.msra.mxu0 0.0
      %1048 = vmatprep.subr.mxu0 0.0
      %1049 = vmatpush1.msra.mxu0 0.0
      %1050 = vmatprep.subr.mxu0 0.0
      %1051 = vmatpush1.msra.mxu0 0.0
      %1052 = vmatprep.subr.mxu0 0.0
      %1053 = vmatpush1.msra.mxu0 0.0
      %1054 = vmatprep.subr.mxu0 0.0
      %1055 = vmatpush1.msra.mxu0 0.0
      %1056 = vmatprep.subr.mxu0 0.0
      %1057 = vmatpush1.msra.mxu0 0.0
      %1058 = vmatprep.subr.mxu0 0.0
      %1059 = vmatpush1.msra.mxu0 0.0
      %1060 = vmatprep.subr.mxu0 0.0
      %1061 = vmatpush1.msra.mxu0 0.0
      %1062 = vmatprep.subr.mxu0 0.0
      %1063 = vmatpush1.msra.mxu0 0.0
      %1064 = vmatprep.subr.mxu0 0.0
      %1065 = vmatpush1.msra.mxu0 0.0
      %1066 = vmatprep.subr.mxu0 0.0
      %1067 = vmatpush1.msra.mxu0 0.0
      %1068 = vmatprep.subr.mxu0 0.0
      %1069 = vmatpush1.msra.mxu0 0.0
      %1070 = vmatprep.subr.mxu0 0.0
      %1071 = vmatpush1.msra.mxu0 0.0
      %1072 = vmatprep.subr.mxu0 0.0
      %1073 = vmatpush1.msra.mxu0 0.0
      %1074 = vmatprep.subr.mxu0 0.0
      %1075 = vmatpush1.msra.mxu0 0.0
      %1076 = vmatprep.subr.mxu0 0.0
      %1077 = vmatpush1.msra.mxu0 0.0
      %1078 = vmatprep.subr.mxu0 0.0
      %1079 = vmatpush1.msra.mxu0 0.0
      %1080 = vmatprep.subr.mxu0 0.0
      %1081 = vmatpush1.msra.mxu0 0.0
      %1082 = vmatprep.mubr.f32.mxu0 0.0
      %1083 = vmatmul.mubr.f32.gmra.mrb[0].mxu0 %v1016
      %v1084 = vpop.f32.mrb[0].mxu0
      %v1085 = vadd.f32 0.0, %v1084
      %v1086 = vpop.f32.mrb[0].mxu0
      %1087 = vdwg.mxu0
      %v1089 = vsel %vm444, %v1085, 0
      %1091 = vmatprep.subr.mxu0 0.0
      %1092 = vmatpush1.msra.mxu0 %v439
      %1093 = vmatprep.subr.mxu0 0.0
      %1094 = vmatpush1.msra.mxu0 0.0
      %1095 = vmatprep.subr.mxu0 0.0
      %1096 = vmatpush1.msra.mxu0 0.0
      %1097 = vmatprep.subr.mxu0 0.0
      %1098 = vmatpush1.msra.mxu0 0.0
      %1099 = vmatprep.subr.mxu0 0.0
      %1100 = vmatpush1.msra.mxu0 0.0
      %1101 = vmatprep.subr.mxu0 0.0
      %1102 = vmatpush1.msra.mxu0 0.0
      %1103 = vmatprep.subr.mxu0 0.0
      %1104 = vmatpush1.msra.mxu0 0.0
      %1105 = vmatprep.subr.mxu0 0.0
      %1106 = vmatpush1.msra.mxu0 0.0
      %1107 = vmatprep.subr.mxu0 0.0
      %1108 = vmatpush1.msra.mxu0 0.0
      %1109 = vmatprep.subr.mxu0 0.0
      %1110 = vmatpush1.msra.mxu0 0.0
      %1111 = vmatprep.subr.mxu0 0.0
      %1112 = vmatpush1.msra.mxu0 0.0
      %1113 = vmatprep.subr.mxu0 0.0
      %1114 = vmatpush1.msra.mxu0 0.0
      %1115 = vmatprep.subr.mxu0 0.0
      %1116 = vmatpush1.msra.mxu0 0.0
      %1117 = vmatprep.subr.mxu0 0.0
      %1118 = vmatpush1.msra.mxu0 0.0
      %1119 = vmatprep.subr.mxu0 0.0
      %1120 = vmatpush1.msra.mxu0 0.0
      %1121 = vmatprep.subr.mxu0 0.0
      %1122 = vmatpush1.msra.mxu0 0.0
      %1123 = vmatprep.subr.mxu0 0.0
      %1124 = vmatpush1.msra.mxu0 0.0
      %1125 = vmatprep.subr.mxu0 0.0
      %1126 = vmatpush1.msra.mxu0 0.0
      %1127 = vmatprep.subr.mxu0 0.0
      %1128 = vmatpush1.msra.mxu0 0.0
      %1129 = vmatprep.subr.mxu0 0.0
      %1130 = vmatpush1.msra.mxu0 0.0
      %1131 = vmatprep.subr.mxu0 0.0
      %1132 = vmatpush1.msra.mxu0 0.0
      %1133 = vmatprep.subr.mxu0 0.0
      %1134 = vmatpush1.msra.mxu0 0.0
      %1135 = vmatprep.subr.mxu0 0.0
      %1136 = vmatpush1.msra.mxu0 0.0
      %1137 = vmatprep.subr.mxu0 0.0
      %1138 = vmatpush1.msra.mxu0 0.0
      %1139 = vmatprep.subr.mxu0 0.0
      %1140 = vmatpush1.msra.mxu0 0.0
      %1141 = vmatprep.subr.mxu0 0.0
      %1142 = vmatpush1.msra.mxu0 0.0
      %1143 = vmatprep.subr.mxu0 0.0
      %1144 = vmatpush1.msra.mxu0 0.0
      %1145 = vmatprep.subr.mxu0 0.0
      %1146 = vmatpush1.msra.mxu0 0.0
      %1147 = vmatprep.subr.mxu0 0.0
      %1148 = vmatpush1.msra.mxu0 0.0
      %1149 = vmatprep.subr.mxu0 0.0
      %1150 = vmatpush1.msra.mxu0 0.0
      %1151 = vmatprep.subr.mxu0 0.0
      %1152 = vmatpush1.msra.mxu0 0.0
      %1153 = vmatprep.subr.mxu0 0.0
      %1154 = vmatpush1.msra.mxu0 0.0
      %1155 = vmatprep.mubr.f32.mxu0 0.0
      %1156 = vmatmul.mubr.f32.gmra.mrb[0].mxu0 %v1089
      %v1157 = vpop.f32.mrb[0].mxu0
      %v1158 = vadd.f32 0.0, %v1157
      %v1159 = vpop.f32.mrb[0].mxu0
      %1160 = vdwg.mxu0
      %v1161 = vadd.f32 %v918, %v1158
      %1162 = vrot.lane.b32.xlu0 %v425, 104
      %v1163 = vpop.permute.xlu0 %1162
      %1164 = vrot.lane.b32.xlu0 %v425, 72
      %v1165 = vpop.permute.xlu0 %1164
      %v1166 = vsel %vm444, %v1163, 0
      %v1168 = vsel %vm444, %v1165, 0
      %1170 = vmatprep.subr.mxu0 0.0
      %1171 = vmatpush1.xpose.msra.mxu0 %v1168
      %1172 = vmatprep.subr.mxu0 0.0
      %1173 = vmatpush1.xpose.msra.mxu0 0.0
      %1174 = vmatprep.subr.mxu0 0.0
      %1175 = vmatpush1.xpose.msra.mxu0 0.0
      %1176 = vmatprep.subr.mxu0 0.0
      %1177 = vmatpush1.xpose.msra.mxu0 0.0
      %1178 = vmatprep.subr.mxu0 0.0
      %1179 = vmatpush1.xpose.msra.mxu0 0.0
      %1180 = vmatprep.subr.mxu0 0.0
      %1181 = vmatpush1.xpose.msra.mxu0 0.0
      %1182 = vmatprep.subr.mxu0 0.0
      %1183 = vmatpush1.xpose.msra.mxu0 0.0
      %1184 = vmatprep.subr.mxu0 0.0
      %1185 = vmatpush1.xpose.msra.mxu0 0.0
      %1186 = vmatprep.subr.mxu0 0.0
      %1187 = vmatpush1.xpose.msra.mxu0 0.0
      %1188 = vmatprep.subr.mxu0 0.0
      %1189 = vmatpush1.xpose.msra.mxu0 0.0
      %1190 = vmatprep.subr.mxu0 0.0
      %1191 = vmatpush1.xpose.msra.mxu0 0.0
      %1192 = vmatprep.subr.mxu0 0.0
      %1193 = vmatpush1.xpose.msra.mxu0 0.0
      %1194 = vmatprep.subr.mxu0 0.0
      %1195 = vmatpush1.xpose.msra.mxu0 0.0
      %1196 = vmatprep.subr.mxu0 0.0
      %1197 = vmatpush1.xpose.msra.mxu0 0.0
      %1198 = vmatprep.subr.mxu0 0.0
      %1199 = vmatpush1.xpose.msra.mxu0 0.0
      %1200 = vmatprep.subr.mxu0 0.0
      %1201 = vmatpush1.xpose.msra.mxu0 0.0
      %1202 = vmatprep.subr.mxu0 0.0
      %1203 = vmatpush1.xpose.msra.mxu0 0.0
      %1204 = vmatprep.subr.mxu0 0.0
      %1205 = vmatpush1.xpose.msra.mxu0 0.0
      %1206 = vmatprep.subr.mxu0 0.0
      %1207 = vmatpush1.xpose.msra.mxu0 0.0
      %1208 = vmatprep.subr.mxu0 0.0
      %1209 = vmatpush1.xpose.msra.mxu0 0.0
      %1210 = vmatprep.subr.mxu0 0.0
      %1211 = vmatpush1.xpose.msra.mxu0 0.0
      %1212 = vmatprep.subr.mxu0 0.0
      %1213 = vmatpush1.xpose.msra.mxu0 0.0
      %1214 = vmatprep.subr.mxu0 0.0
      %1215 = vmatpush1.xpose.msra.mxu0 0.0
      %1216 = vmatprep.subr.mxu0 0.0
      %1217 = vmatpush1.xpose.msra.mxu0 0.0
      %1218 = vmatprep.subr.mxu0 0.0
      %1219 = vmatpush1.xpose.msra.mxu0 0.0
      %1220 = vmatprep.subr.mxu0 0.0
      %1221 = vmatpush1.xpose.msra.mxu0 0.0
      %1222 = vmatprep.subr.mxu0 0.0
      %1223 = vmatpush1.xpose.msra.mxu0 0.0
      %1224 = vmatprep.subr.mxu0 0.0
      %1225 = vmatpush1.xpose.msra.mxu0 0.0
      %1226 = vmatprep.subr.mxu0 0.0
      %1227 = vmatpush1.xpose.msra.mxu0 0.0
      %1228 = vmatprep.subr.mxu0 0.0
      %1229 = vmatpush1.xpose.msra.mxu0 0.0
      %1230 = vmatprep.subr.mxu0 0.0
      %1231 = vmatpush1.xpose.msra.mxu0 0.0
      %1232 = vmatprep.subr.mxu0 0.0
      %1233 = vmatpush1.xpose.msra.mxu0 0.0
      %1234 = vmatprep.mubr.f32.mxu0 0.0
      %1235 = vmatmul.mubr.f32.gmra.mrb[0].mxu0 %v1166
      %v1236 = vpop.f32.mrb[0].mxu0
      %v1237 = vadd.f32 0.0, %v1236
      %v1238 = vpop.f32.mrb[0].mxu0
      %1239 = vdwg.mxu0
      %v1240 = vmul.f32 %v1237, 0.35355338
      %v1241 = vadd.f32 %v1240, %v436
      %v1242 = vsel %vm444, %v1241, -inf
      %1243 = vmax.xlane.f32.xlu0 %v1242
      %v1244 = vpop.xlane.xlu0 %1243
      %v1245 = vsub.f32 %v1241, %v1244
      %v1246 = vmul.f32 %v1245, 1.442695
      %v1247 = vpow.pop %v1246
      %v1248 = vsel %vm444, %v1247, 0.0
      %1249 = vadd.xlane.f32.xlu0 %v1248
      %v1250 = vpop.xlane.xlu0 %1249
      %v1251 = vrcp.pop %v1250
      %v1252 = vmul.f32 %v1247, %v1251
      %1253 = vrot.lane.b32.xlu0 %v425, 40
      %v1254 = vpop.permute.xlu0 %1253
      %v1257 = vsel %vm444, %v1252, 0
      %1259 = vmatprep.subr.mxu0 0.0
      %1260 = vmatpush1.msra.mxu0 %v1254
      %1261 = vmatprep.subr.mxu0 0.0
      %1262 = vmatpush1.msra.mxu0 0.0
      %1263 = vmatprep.subr.mxu0 0.0
      %1264 = vmatpush1.msra.mxu0 0.0
      %1265 = vmatprep.subr.mxu0 0.0
      %1266 = vmatpush1.msra.mxu0 0.0
      %1267 = vmatprep.subr.mxu0 0.0
      %1268 = vmatpush1.msra.mxu0 0.0
      %1269 = vmatprep.subr.mxu0 0.0
      %1270 = vmatpush1.msra.mxu0 0.0
      %1271 = vmatprep.subr.mxu0 0.0
      %1272 = vmatpush1.msra.mxu0 0.0
      %1273 = vmatprep.subr.mxu0 0.0
      %1274 = vmatpush1.msra.mxu0 0.0
      %1275 = vmatprep.subr.mxu0 0.0
      %1276 = vmatpush1.msra.mxu0 0.0
      %1277 = vmatprep.subr.mxu0 0.0
      %1278 = vmatpush1.msra.mxu0 0.0
      %1279 = vmatprep.subr.mxu0 0.0
      %1280 = vmatpush1.msra.mxu0 0.0
      %1281 = vmatprep.subr.mxu0 0.0
      %1282 = vmatpush1.msra.mxu0 0.0
      %1283 = vmatprep.subr.mxu0 0.0
      %1284 = vmatpush1.msra.mxu0 0.0
      %1285 = vmatprep.subr.mxu0 0.0
      %1286 = vmatpush1.msra.mxu0 0.0
      %1287 = vmatprep.subr.mxu0 0.0
      %1288 = vmatpush1.msra.mxu0 0.0
      %1289 = vmatprep.subr.mxu0 0.0
      %1290 = vmatpush1.msra.mxu0 0.0
      %1291 = vmatprep.subr.mxu0 0.0
      %1292 = vmatpush1.msra.mxu0 0.0
      %1293 = vmatprep.subr.mxu0 0.0
      %1294 = vmatpush1.msra.mxu0 0.0
      %1295 = vmatprep.subr.mxu0 0.0
      %1296 = vmatpush1.msra.mxu0 0.0
      %1297 = vmatprep.subr.mxu0 0.0
      %1298 = vmatpush1.msra.mxu0 0.0
      %1299 = vmatprep.subr.mxu0 0.0
      %1300 = vmatpush1.msra.mxu0 0.0
      %1301 = vmatprep.subr.mxu0 0.0
      %1302 = vmatpush1.msra.mxu0 0.0
      %1303 = vmatprep.subr.mxu0 0.0
      %1304 = vmatpush1.msra.mxu0 0.0
      %1305 = vmatprep.subr.mxu0 0.0
      %1306 = vmatpush1.msra.mxu0 0.0
      %1307 = vmatprep.subr.mxu0 0.0
      %1308 = vmatpush1.msra.mxu0 0.0
      %1309 = vmatprep.subr.mxu0 0.0
      %1310 = vmatpush1.msra.mxu0 0.0
      %1311 = vmatprep.subr.mxu0 0.0
      %1312 = vmatpush1.msra.mxu0 0.0
      %1313 = vmatprep.subr.mxu0 0.0
      %1314 = vmatpush1.msra.mxu0 0.0
      %1315 = vmatprep.subr.mxu0 0.0
      %1316 = vmatpush1.msra.mxu0 0.0
      %1317 = vmatprep.subr.mxu0 0.0
      %1318 = vmatpush1.msra.mxu0 0.0
      %1319 = vmatprep.subr.mxu0 0.0
      %1320 = vmatpush1.msra.mxu0 0.0
      %1321 = vmatprep.subr.mxu0 0.0
      %1322 = vmatpush1.msra.mxu0 0.0
      %1323 = vmatprep.mubr.f32.mxu0 0.0
      %1324 = vmatmul.mubr.f32.gmra.mrb[0].mxu0 %v1257
      %v1325 = vpop.f32.mrb[0].mxu0
      %v1326 = vadd.f32 0.0, %v1325
      %v1327 = vpop.f32.mrb[0].mxu0
      %1328 = vdwg.mxu0
      %v1330 = vsel %vm444, %v1326, 0
      %1332 = vmatprep.subr.mxu0 0.0
      %1333 = vmatpush1.msra.mxu0 %v440
      %1334 = vmatprep.subr.mxu0 0.0
      %1335 = vmatpush1.msra.mxu0 0.0
      %1336 = vmatprep.subr.mxu0 0.0
      %1337 = vmatpush1.msra.mxu0 0.0
      %1338 = vmatprep.subr.mxu0 0.0
      %1339 = vmatpush1.msra.mxu0 0.0
      %1340 = vmatprep.subr.mxu0 0.0
      %1341 = vmatpush1.msra.mxu0 0.0
      %1342 = vmatprep.subr.mxu0 0.0
      %1343 = vmatpush1.msra.mxu0 0.0
      %1344 = vmatprep.subr.mxu0 0.0
      %1345 = vmatpush1.msra.mxu0 0.0
      %1346 = vmatprep.subr.mxu0 0.0
      %1347 = vmatpush1.msra.mxu0 0.0
      %1348 = vmatprep.subr.mxu0 0.0
      %1349 = vmatpush1.msra.mxu0 0.0
      %1350 = vmatprep.subr.mxu0 0.0
      %1351 = vmatpush1.msra.mxu0 0.0
      %1352 = vmatprep.subr.mxu0 0.0
      %1353 = vmatpush1.msra.mxu0 0.0
      %1354 = vmatprep.subr.mxu0 0.0
      %1355 = vmatpush1.msra.mxu0 0.0
      %1356 = vmatprep.subr.mxu0 0.0
      %1357 = vmatpush1.msra.mxu0 0.0
      %1358 = vmatprep.subr.mxu0 0.0
      %1359 = vmatpush1.msra.mxu0 0.0
      %1360 = vmatprep.subr.mxu0 0.0
      %1361 = vmatpush1.msra.mxu0 0.0
      %1362 = vmatprep.subr.mxu0 0.0
      %1363 = vmatpush1.msra.mxu0 0.0
      %1364 = vmatprep.subr.mxu0 0.0
      %1365 = vmatpush1.msra.mxu0 0.0
      %1366 = vmatprep.subr.mxu0 0.0
      %1367 = vmatpush1.msra.mxu0 0.0
      %1368 = vmatprep.subr.mxu0 0.0
      %1369 = vmatpush1.msra.mxu0 0.0
      %1370 = vmatprep.subr.mxu0 0.0
      %1371 = vmatpush1.msra.mxu0 0.0
      %1372 = vmatprep.subr.mxu0 0.0
      %1373 = vmatpush1.msra.mxu0 0.0
      %1374 = vmatprep.subr.mxu0 0.0
      %1375 = vmatpush1.msra.mxu0 0.0
      %1376 = vmatprep.subr.mxu0 0.0
      %1377 = vmatpush1.msra.mxu0 0.0
      %1378 = vmatprep.subr.mxu0 0.0
      %1379 = vmatpush1.msra.mxu0 0.0
      %1380 = vmatprep.subr.mxu0 0.0
      %1381 = vmatpush1.msra.mxu0 0.0
      %1382 = vmatprep.subr.mxu0 0.0
      %1383 = vmatpush1.msra.mxu0 0.0
      %1384 = vmatprep.subr.mxu0 0.0
      %1385 = vmatpush1.msra.mxu0 0.0
      %1386 = vmatprep.subr.mxu0 0.0
      %1387 = vmatpush1.msra.mxu0 0.0
      %1388 = vmatprep.subr.mxu0 0.0
      %1389 = vmatpush1.msra.mxu0 0.0
      %1390 = vmatprep.subr.mxu0 0.0
      %1391 = vmatpush1.msra.mxu0 0.0
      %1392 = vmatprep.subr.mxu0 0.0
      %1393 = vmatpush1.msra.mxu0 0.0
      %1394 = vmatprep.subr.mxu0 0.0
      %1395 = vmatpush1.msra.mxu0 0.0
      %1396 = vmatprep.mubr.f32.mxu0 0.0
      %1397 = vmatmul.mubr.f32.gmra.mrb[0].mxu0 %v1330
      %v1398 = vpop.f32.mrb[0].mxu0
      %v1399 = vadd.f32 0.0, %v1398
      %v1400 = vpop.f32.mrb[0].mxu0
      %1401 = vdwg.mxu0
      %v1402 = vadd.f32 %v1161, %v1399
      %v1403 = vadd.f32 %v342, %v1402
      %v1404 = vld [vmem:[%s4] sm:$0x1]
      %v1406 = vlaneseq
      %v1407 = vshrl.u32 %v1406, 7
      %v1408 = vsub.s32 0, %v1407
      %v1409 = vrot.slane %v1404, %v1408
      %v1411 = vadd.f32 %v1403, %v1409
      %v1412 = vld [vmem:[%s7] sm:$0x1]
      %v1413 = vld [vmem:[%s8] sm:$0x1]
      %v1414 = vsel %vm354, %v1411, 0.0
      %1415 = vadd.xlane.f32.xlu0 %v1414
      %v1416 = vpop.xlane.xlu0 %1415
      %v1417 = vrcp.pop 32.0
      %v1418 = vmul.f32 %v1416, %v1417
      %v1419 = vsub.f32 %v1411, %v1418
      %v1420 = vmul.f32 %v1419, %v1419
      %v1421 = vsel %vm354, %v1420, 0.0
      %1422 = vadd.xlane.f32.xlu0 %v1421
      %v1423 = vpop.xlane.xlu0 %1422
      %v1424 = vmul.f32 %v1423, %v1417
      %v1425 = vadd.f32 %v1424, 1e-05
      %v1426 = vrsqrt.pop %v1425
      %v1427 = vmul.f32 %v1419, %v1426
      %v1429 = vlaneseq
      %v1430 = vshrl.u32 %v1429, 7
      %v1431 = vsub.s32 0, %v1430
      %v1432 = vrot.slane %v1412, %v1431
      %v1434 = vmul.f32 %v1427, %v1432
      %v1436 = vlaneseq
      %v1437 = vshrl.u32 %v1436, 7
      %v1438 = vsub.s32 0, %v1437
      %v1439 = vrot.slane %v1413, %v1438
      %v1441 = vadd.f32 %v1434, %v1439
      %1442 = vst.msk [vmem:[%s341] sm:$0xff] %vm354, %v1441
      %p1443 = scmp.lt.s32.totalorder %s20, 1
      %s1444 = scalar_select %p1443, %s20, 1
      %s1445 = smul.addr %s1444, 8
      %s1446 = scalar_lea.vmem %s9, %s1445
      // Predicated region
      $region57: #{seq2seq_transformer_forward.21} parent=55 // pred_check
        %p1447 = pneg %p237
      $region58: #{seq2seq_transformer_forward.21} parent=55 // pred_check_branch
        %1449 = sbr.rel (%p1447) target = $region60
      $region59: #{seq2seq_transformer_forward.21} parent=55 // pred_region
        _
      $region60: #{seq2seq_transformer_forward.21} parent=55 // pred_fallthru
        _
    $region56: #{seq2seq_transformer_forward.21} parent=5 // pred_fallthru
      _
    %p1450 = scmp.le.s32.totalorder 2, %s15
    // Predicated region
    $region61: #{seq2seq_transformer_forward.21} parent=5 // pred_check
      %p1451 = pneg %p1450
    $region62: #{seq2seq_transformer_forward.21} parent=5 // pred_check_branch
      %1453 = sbr.rel (%p1451) target = $region64
    $region63: #{seq2seq_transformer_forward.21} parent=5 // pred_region
      %s1454 = ssub.s32 %s15, 2
      // Predicated region
      $region65: #{seq2seq_transformer_forward.21} parent=63 // pred_check
        %p1455 = pneg %p243
      $region66: #{seq2seq_transformer_forward.21} parent=63 // pred_check_branch
        %1457 = sbr.rel (%p1455) target = $region68
      $region67: #{seq2seq_transformer_forward.21} parent=63 // pred_region
        %p1458 = scmp.lt.s32.totalorder %s21, 1
        %s1459 = scalar_select %p1458, %s21, 1
        %s1460 = smul.addr %s1459, 8
        %s1461 = scalar_lea.vmem %s9, %s1460
      $region68: #{seq2seq_transformer_forward.21} parent=63 // pred_fallthru
        _
    $region64: #{seq2seq_transformer_forward.21} parent=5 // pred_fallthru
      _
  $region6: #{seq2seq_transformer_forward.21} parent=0 // loop_footer
    %s19 = sadd.s32 1, %s15
  $region7: #{seq2seq_transformer_forward.21} parent=0 // loop_footer_branch
    %14 = sbr.rel target = $region3
  $region8: #{seq2seq_transformer_forward.21} parent=0 // loop_exit
    _

// kernel: seq2seq_transformer_forward.23
$region0: #{seq2seq_transformer_forward.23}
  #allocation0 [shape = 'u32[]', space=smem, size = 0x4, offset = 0x4, fixed_abs, tag = 'smem constant byte address 0x4 - core index']
  #allocation1 [shape = 'u32[144,128]{1,0:T(1,128)}', space=vmem, size = 0x12000, scoped, tag = 'internal scratch']
  %s0 = inlined_call_operand.vmem [shape: f32[2,8,32], index: 0, kind: input, shape index: {}]
  %s1 = inlined_call_operand.vmem [shape: f32[32,64], index: 1, kind: input, shape index: {}]
  %s2 = inlined_call_operand.vmem [shape: f32[1,64], index: 2, kind: input, shape index: {}]
  %s3 = inlined_call_operand.vmem [shape: f32[64,32], index: 3, kind: input, shape index: {}]
  %s4 = inlined_call_operand.vmem [shape: f32[1,32], index: 4, kind: input, shape index: {}]
  %s5 = inlined_call_operand.vmem [shape: f32[1,32], index: 5, kind: input, shape index: {}]
  %s6 = inlined_call_operand.vmem [shape: f32[1,32], index: 6, kind: input, shape index: {}]
  %s7 = inlined_call_operand.vmem [shape: f32[2,8,32], index: 7, kind: output, shape index: {}]
  %s8 = sld [smem:[#allocation0]]
  $region61: #{seq2seq_transformer_forward.23} parent=0
    _
  %s10 = ssub.s32 1, %s8
  %s11 = scalar_select 0, %s10, %s8
  loop: start=0, step=1, limit=4
  $region2: #{seq2seq_transformer_forward.23} parent=0 // loop_pre_header
    _
  $region3: #{seq2seq_transformer_forward.23} parent=0 // loop_header
    %s13 = sphi 0, %s17
    %p14 = scmp.ge.s32.totalorder %s13, 4
    %s23 = sphi 0, %s25
    %s26 = sphi 0, %s23
    %s27 = sphi 0, %s26
    %s43 = sphi 0, %s27
    %s47 = sphi 0, %s47
    %s49 = sphi 0, %s47
    %s50 = sphi 0, %s49
    %s64 = sphi 0, %s50
    %s68 = sphi 0, %s68
    %s70 = sphi 0, %s68
    %s71 = sphi 0, %s70
    %s85 = sphi 0, %s71
    %s89 = sphi 0, %s89
    %s91 = sphi 0, %s89
    %s92 = sphi 0, %s91
    %s106 = sphi 0, %s92
    %s110 = sphi 0, %s110
    %s112 = sphi 0, %s110
    %s113 = sphi 0, %s112
    %s127 = sphi 0, %s113
    %s131 = sphi 0, %s131
    %s133 = sphi 0, %s131
    %s134 = sphi 0, %s133
    %s148 = sphi 0, %s134
    %s152 = sphi 0, %s152
    %s154 = sphi 0, %s152
    %s155 = sphi 0, %s154
    %s169 = sphi 0, %s155
    %s175 = sphi 0, %s177
    %s178 = sphi 0, %s175
    %s179 = sphi 0, %s178
    %s195 = sphi 0, %s179
  $region4: #{seq2seq_transformer_forward.23} parent=0 // loop_header_branch
    %16 = sbr.rel (%p14) target = $region8
  $region5: #{seq2seq_transformer_forward.23} parent=0 // loop_body
    %s18 = ssub.s32 %s13, 1
    %s19 = ssub.s32 %s13, 2
    %s20 = sadd.s32 %s13, 1
    %s21 = ssub.s32 %s13, %s20
    %p22 = scmp.eq.s32.totalorder %s21, 0
    %s24 = sadd.s32 %s23, 1
    %s25 = scalar_select %p22, %s23, %s24
    %p28 = pneg %p22
    %p29 = scmp.eq.s32.totalorder %s13, 1
    %p30 = por %p28, %p29
    %p31 = scmp.ne.s32.totalorder %s23, %s26
    %p32 = scmp.eq.s32.totalorder %s13, 0
    %p33 = por %p31, %p32
    %p34 = scmp.ne.s32.totalorder %s23, %s26
    %p35 = scmp.eq.s32.totalorder %s18, 1
    %p36 = por %p34, %p35
    %p37 = scmp.ne.s32.totalorder %s26, %s27
    %p38 = scmp.eq.s32.totalorder %s18, 0
    %p39 = por %p37, %p38
    %p40 = scmp.ne.s32.totalorder %s26, %s27
    %p41 = scmp.eq.s32.totalorder %s19, 1
    %p42 = por %p40, %p41
    %p44 = scmp.ne.s32.totalorder %s27, %s43
    %p45 = scmp.eq.s32.totalorder %s19, 0
    %p46 = por %p44, %p45
    %s48 = sadd.s32 %s47, 1
    %p51 = scmp.eq.s32.totalorder %s13, 1
    %p52 = scmp.ne.s32.totalorder %s47, %s49
    %p53 = scmp.eq.s32.totalorder %s13, 0
    %p54 = por %p52, %p53
    %p55 = scmp.ne.s32.totalorder %s47, %s49
    %p56 = scmp.eq.s32.totalorder %s18, 1
    %p57 = por %p55, %p56
    %p58 = scmp.ne.s32.totalorder %s49, %s50
    %p59 = scmp.eq.s32.totalorder %s18, 0
    %p60 = por %p58, %p59
    %p61 = scmp.ne.s32.totalorder %s49, %s50
    %p62 = scmp.eq.s32.totalorder %s19, 1
    %p63 = por %p61, %p62
    %p65 = scmp.ne.s32.totalorder %s50, %s64
    %p66 = scmp.eq.s32.totalorder %s19, 0
    %p67 = por %p65, %p66
    %s69 = sadd.s32 %s68, 1
    %p72 = scmp.eq.s32.totalorder %s13, 1
    %p73 = scmp.ne.s32.totalorder %s68, %s70
    %p74 = scmp.eq.s32.totalorder %s13, 0
    %p75 = por %p73, %p74
    %p76 = scmp.ne.s32.totalorder %s68, %s70
    %p77 = scmp.eq.s32.totalorder %s18, 1
    %p78 = por %p76, %p77
    %p79 = scmp.ne.s32.totalorder %s70, %s71
    %p80 = scmp.eq.s32.totalorder %s18, 0
    %p81 = por %p79, %p80
    %p82 = scmp.ne.s32.totalorder %s70, %s71
    %p83 = scmp.eq.s32.totalorder %s19, 1
    %p84 = por %p82, %p83
    %p86 = scmp.ne.s32.totalorder %s71, %s85
    %p87 = scmp.eq.s32.totalorder %s19, 0
    %p88 = por %p86, %p87
    %s90 = sadd.s32 %s89, 1
    %p93 = scmp.eq.s32.totalorder %s13, 1
    %p94 = scmp.ne.s32.totalorder %s89, %s91
    %p95 = scmp.eq.s32.totalorder %s13, 0
    %p96 = por %p94, %p95
    %p97 = scmp.ne.s32.totalorder %s89, %s91
    %p98 = scmp.eq.s32.totalorder %s18, 1
    %p99 = por %p97, %p98
    %p100 = scmp.ne.s32.totalorder %s91, %s92
    %p101 = scmp.eq.s32.totalorder %s18, 0
    %p102 = por %p100, %p101
    %p103 = scmp.ne.s32.totalorder %s91, %s92
    %p104 = scmp.eq.s32.totalorder %s19, 1
    %p105 = por %p103, %p104
    %p107 = scmp.ne.s32.totalorder %s92, %s106
    %p108 = scmp.eq.s32.totalorder %s19, 0
    %p109 = por %p107, %p108
    %s111 = sadd.s32 %s110, 1
    %p114 = scmp.eq.s32.totalorder %s13, 1
    %p115 = scmp.ne.s32.totalorder %s110, %s112
    %p116 = scmp.eq.s32.totalorder %s13, 0
    %p117 = por %p115, %p116
    %p118 = scmp.ne.s32.totalorder %s110, %s112
    %p119 = scmp.eq.s32.totalorder %s18, 1
    %p120 = por %p118, %p119
    %p121 = scmp.ne.s32.totalorder %s112, %s113
    %p122 = scmp.eq.s32.totalorder %s18, 0
    %p123 = por %p121, %p122
    %p124 = scmp.ne.s32.totalorder %s112, %s113
    %p125 = scmp.eq.s32.totalorder %s19, 1
    %p126 = por %p124, %p125
    %p128 = scmp.ne.s32.totalorder %s113, %s127
    %p129 = scmp.eq.s32.totalorder %s19, 0
    %p130 = por %p128, %p129
    %s132 = sadd.s32 %s131, 1
    %p135 = scmp.eq.s32.totalorder %s13, 1
    %p136 = scmp.ne.s32.totalorder %s131, %s133
    %p137 = scmp.eq.s32.totalorder %s13, 0
    %p138 = por %p136, %p137
    %p139 = scmp.ne.s32.totalorder %s131, %s133
    %p140 = scmp.eq.s32.totalorder %s18, 1
    %p141 = por %p139, %p140
    %p142 = scmp.ne.s32.totalorder %s133, %s134
    %p143 = scmp.eq.s32.totalorder %s18, 0
    %p144 = por %p142, %p143
    %p145 = scmp.ne.s32.totalorder %s133, %s134
    %p146 = scmp.eq.s32.totalorder %s19, 1
    %p147 = por %p145, %p146
    %p149 = scmp.ne.s32.totalorder %s134, %s148
    %p150 = scmp.eq.s32.totalorder %s19, 0
    %p151 = por %p149, %p150
    %s153 = sadd.s32 %s152, 1
    %p156 = scmp.eq.s32.totalorder %s13, 1
    %p157 = scmp.ne.s32.totalorder %s152, %s154
    %p158 = scmp.eq.s32.totalorder %s13, 0
    %p159 = por %p157, %p158
    %p160 = scmp.ne.s32.totalorder %s152, %s154
    %p161 = scmp.eq.s32.totalorder %s18, 1
    %p162 = por %p160, %p161
    %p163 = scmp.ne.s32.totalorder %s154, %s155
    %p164 = scmp.eq.s32.totalorder %s18, 0
    %p165 = por %p163, %p164
    %p166 = scmp.ne.s32.totalorder %s154, %s155
    %p167 = scmp.eq.s32.totalorder %s19, 1
    %p168 = por %p166, %p167
    %p170 = scmp.ne.s32.totalorder %s155, %s169
    %p171 = scmp.eq.s32.totalorder %s19, 0
    %p172 = por %p170, %p171
    %s173 = ssub.s32 %s13, %s20
    %p174 = scmp.eq.s32.totalorder %s173, 0
    %s176 = sadd.s32 %s175, 1
    %s177 = scalar_select %p174, %s175, %s176
    %p180 = pneg %p174
    %p181 = scmp.eq.s32.totalorder %s13, 1
    %p182 = por %p180, %p181
    %p183 = scmp.ne.s32.totalorder %s175, %s178
    %p184 = scmp.eq.s32.totalorder %s13, 0
    %p185 = por %p183, %p184
    %p186 = scmp.ne.s32.totalorder %s175, %s178
    %p187 = scmp.eq.s32.totalorder %s18, 1
    %p188 = por %p186, %p187
    %p189 = scmp.ne.s32.totalorder %s178, %s179
    %p190 = scmp.eq.s32.totalorder %s18, 0
    %p191 = por %p189, %p190
    %p192 = scmp.ne.s32.totalorder %s178, %s179
    %p193 = scmp.eq.s32.totalorder %s19, 1
    %p194 = por %p192, %p193
    %p196 = scmp.ne.s32.totalorder %s179, %s195
    %p197 = scmp.eq.s32.totalorder %s19, 0
    %p198 = por %p196, %p197
    %p199 = scmp.le.s32.totalorder 1, %s13
    %p200 = scmp.lt.s32.totalorder %s13, 3
    %p201 = pnand %p199, %p200
    %p202 = pneg %p201
    // Predicated region
    $region9: #{seq2seq_transformer_forward.23} parent=5 // pred_check
      _
    $region10: #{seq2seq_transformer_forward.23} parent=5 // pred_check_branch
      %204 = sbr.rel (%p201) target = $region12
    $region11: #{seq2seq_transformer_forward.23} parent=5 // pred_region
      %s205 = ssub.s32 %s13, 1
      // Predicated region
      $region13: #{seq2seq_transformer_forward.23} parent=11 // pred_check
        %p206 = pneg %p60
      $region14: #{seq2seq_transformer_forward.23} parent=11 // pred_check_branch
        %208 = sbr.rel (%p206) target = $region16
      $region15: #{seq2seq_transformer_forward.23} parent=11 // pred_region
        _
      $region16: #{seq2seq_transformer_forward.23} parent=11 // pred_fallthru
        _
      // Predicated region
      $region17: #{seq2seq_transformer_forward.23} parent=11 // pred_check
        %p209 = pneg %p81
      $region18: #{seq2seq_transformer_forward.23} parent=11 // pred_check_branch
        %211 = sbr.rel (%p209) target = $region20
      $region19: #{seq2seq_transformer_forward.23} parent=11 // pred_region
        _
      $region20: #{seq2seq_transformer_forward.23} parent=11 // pred_fallthru
        _
      // Predicated region
      $region21: #{seq2seq_transformer_forward.23} parent=11 // pred_check
        %p212 = pneg %p102
      $region22: #{seq2seq_transformer_forward.23} parent=11 // pred_check_branch
        %214 = sbr.rel (%p212) target = $region24
      $region23: #{seq2seq_transformer_forward.23} parent=11 // pred_region
        _
      $region24: #{seq2seq_transformer_forward.23} parent=11 // pred_fallthru
        _
      // Predicated region
      $region25: #{seq2seq_transformer_forward.23} parent=11 // pred_check
        %p215 = pneg %p123
      $region26: #{seq2seq_transformer_forward.23} parent=11 // pred_check_branch
        %217 = sbr.rel (%p215) target = $region28
      $region27: #{seq2seq_transformer_forward.23} parent=11 // pred_region
        _
      $region28: #{seq2seq_transformer_forward.23} parent=11 // pred_fallthru
        _
      // Predicated region
      $region29: #{seq2seq_transformer_forward.23} parent=11 // pred_check
        %p218 = pneg %p144
      $region30: #{seq2seq_transformer_forward.23} parent=11 // pred_check_branch
        %220 = sbr.rel (%p218) target = $region32
      $region31: #{seq2seq_transformer_forward.23} parent=11 // pred_region
        _
      $region32: #{seq2seq_transformer_forward.23} parent=11 // pred_fallthru
        _
      // Predicated region
      $region33: #{seq2seq_transformer_forward.23} parent=11 // pred_check
        %p221 = pneg %p165
      $region34: #{seq2seq_transformer_forward.23} parent=11 // pred_check_branch
        %223 = sbr.rel (%p221) target = $region36
      $region35: #{seq2seq_transformer_forward.23} parent=11 // pred_region
        _
      $region36: #{seq2seq_transformer_forward.23} parent=11 // pred_fallthru
        _
    $region12: #{seq2seq_transformer_forward.23} parent=5 // pred_fallthru
      _
    %p224 = scmp.lt.s32.totalorder %s13, 2
    // Predicated region
    $region37: #{seq2seq_transformer_forward.23} parent=5 // pred_check
      %p225 = pneg %p224
    $region38: #{seq2seq_transformer_forward.23} parent=5 // pred_check_branch
      %227 = sbr.rel (%p225) target = $region40
    $region39: #{seq2seq_transformer_forward.23} parent=5 // pred_region
      // Predicated region
      $region41: #{seq2seq_transformer_forward.23} parent=39 // pred_check
        %p228 = pneg %p33
      $region42: #{seq2seq_transformer_forward.23} parent=39 // pred_check_branch
        %230 = sbr.rel (%p228) target = $region44
      $region43: #{seq2seq_transformer_forward.23} parent=39 // pred_region
        %p231 = scmp.lt.s32.totalorder %s13, 1
        %s232 = scalar_select %p231, %s13, 1
        %s233 = smul.addr %s232, 8
        %s234 = scalar_lea.vmem %s0, %s233
      $region44: #{seq2seq_transformer_forward.23} parent=39 // pred_fallthru
        _
    $region40: #{seq2seq_transformer_forward.23} parent=5 // pred_fallthru
      _
    %p235 = scmp.le.s32.totalorder 1, %s13
    %p236 = scmp.lt.s32.totalorder %s13, 3
    %p237 = pnand %p235, %p236
    %p238 = pneg %p237
    // Predicated region
    $region45: #{seq2seq_transformer_forward.23} parent=5 // pred_check
      _
    $region46: #{seq2seq_transformer_forward.23} parent=5 // pred_check_branch
      %240 = sbr.rel (%p237) target = $region48
    $region47: #{seq2seq_transformer_forward.23} parent=5 // pred_region
      %s241 = ssub.s32 %s13, 1
      %p242 = scmp.lt.s32.totalorder %s18, 1
      %s243 = scalar_select %p242, %s18, 1
      %s244 = smul.addr %s243, 8
      %s245 = scalar_lea.vmem %s0, %s244
      %p246 = pneg %p39
      %p247 = pneg %p36
      %p248 = pneg %p60
      %p249 = pneg %p57
      %p250 = pneg %p81
      %p251 = pneg %p78
      %p252 = pneg %p102
      %p253 = pneg %p99
      %p254 = pneg %p123
      %p255 = pneg %p120
      %p256 = pneg %p144
      %p257 = pneg %p141
      %p258 = pneg %p165
      %p259 = pneg %p162
      %p260 = pneg %p191
      %p261 = pneg %p188
      %p262 = scmp.lt.s32.totalorder %s18, 1
      %s263 = scalar_select %p262, %s18, 1
      %s264 = smul.addr %s263, 8
      %s265 = scalar_lea.vmem %s7, %s264
      %p266 = scmp.lt.s32.totalorder %s18, 1
      %s267 = scalar_select %p266, %s18, 1
      %s268 = smul.addr %s267, 8
      %s269 = scalar_lea.vmem %s0, %s268
      %p270 = scmp.lt.s32.totalorder %s18, 1
      %s271 = scalar_select %p270, %s18, 1
      %s272 = smul.addr %s271, 8
      %s273 = scalar_lea.vmem %s7, %s272
      %v274 = vld [vmem:[%s269] sm:$0xff]
      %v275 = vld [vmem:[%s1] sm:$0xff]
      %v276 = vld [vmem:[%s1 + $0x8] sm:$0xff]
      %v277 = vld [vmem:[%s1 + $0x10] sm:$0xff]
      %v278 = vld [vmem:[%s1 + $0x18] sm:$0xff]
      %v279 = vld [vmem:[%s2] sm:$0x1]
      %v281 = vlaneseq
      %v282 = vshrl.u32 %v281, 7
      %v283 = vsub.s32 0, %v282
      %v284 = vrot.slane %v279, %v283
      %vm286 = vcmask 261120
      %v288 = vsel %vm286, %v274, 0
      %290 = vmatprep.subr.mxu0 0.0
      %291 = vmatpush1.msra.mxu0 %v275
      %292 = vmatprep.subr.mxu0 0.0
      %293 = vmatpush1.msra.mxu0 %v276
      %294 = vmatprep.subr.mxu0 0.0
      %295 = vmatpush1.msra.mxu0 %v277
      %296 = vmatprep.subr.mxu0 0.0
      %297 = vmatpush1.msra.mxu0 %v278
      %298 = vmatprep.subr.mxu0 0.0
      %299 = vmatpush1.msra.mxu0 0.0
      %300 = vmatprep.subr.mxu0 0.0
      %301 = vmatpush1.msra.mxu0 0.0
      %302 = vmatprep.subr.mxu0 0.0
      %303 = vmatpush1.msra.mxu0 0.0
      %304 = vmatprep.subr.mxu0 0.0
      %305 = vmatpush1.msra.mxu0 0.0
      %306 = vmatprep.subr.mxu0 0.0
      %307 = vmatpush1.msra.mxu0 0.0
      %308 = vmatprep.subr.mxu0 0.0
      %309 = vmatpush1.msra.mxu0 0.0
      %310 = vmatprep.subr.mxu0 0.0
      %311 = vmatpush1.msra.mxu0 0.0
      %312 = vmatprep.subr.mxu0 0.0
      %313 = vmatpush1.msra.mxu0 0.0
      %314 = vmatprep.subr.mxu0 0.0
      %315 = vmatpush1.msra.mxu0 0.0
      %316 = vmatprep.subr.mxu0 0.0
      %317 = vmatpush1.msra.mxu0 0.0
      %318 = vmatprep.subr.mxu0 0.0
      %319 = vmatpush1.msra.mxu0 0.0
      %320 = vmatprep.subr.mxu0 0.0
      %321 = vmatpush1.msra.mxu0 0.0
      %322 = vmatprep.subr.mxu0 0.0
      %323 = vmatpush1.msra.mxu0 0.0
      %324 = vmatprep.subr.mxu0 0.0
      %325 = vmatpush1.msra.mxu0 0.0
      %326 = vmatprep.subr.mxu0 0.0
      %327 = vmatpush1.msra.mxu0 0.0
      %328 = vmatprep.subr.mxu0 0.0
      %329 = vmatpush1.msra.mxu0 0.0
      %330 = vmatprep.subr.mxu0 0.0
      %331 = vmatpush1.msra.mxu0 0.0
      %332 = vmatprep.subr.mxu0 0.0
      %333 = vmatpush1.msra.mxu0 0.0
      %334 = vmatprep.subr.mxu0 0.0
      %335 = vmatpush1.msra.mxu0 0.0
      %336 = vmatprep.subr.mxu0 0.0
      %337 = vmatpush1.msra.mxu0 0.0
      %338 = vmatprep.subr.mxu0 0.0
      %339 = vmatpush1.msra.mxu0 0.0
      %340 = vmatprep.subr.mxu0 0.0
      %341 = vmatpush1.msra.mxu0 0.0
      %342 = vmatprep.subr.mxu0 0.0
      %343 = vmatpush1.msra.mxu0 0.0
      %344 = vmatprep.subr.mxu0 0.0
      %345 = vmatpush1.msra.mxu0 0.0
      %346 = vmatprep.subr.mxu0 0.0
      %347 = vmatpush1.msra.mxu0 0.0
      %348 = vmatprep.subr.mxu0 0.0
      %349 = vmatpush1.msra.mxu0 0.0
      %350 = vmatprep.subr.mxu0 0.0
      %351 = vmatpush1.msra.mxu0 0.0
      %352 = vmatprep.subr.mxu0 0.0
      %353 = vmatpush1.msra.mxu0 0.0
      %354 = vmatprep.mubr.f32.mxu0 0.0
      %355 = vmatmul.mubr.f32.gmra.mrb[0].mxu0 %v288
      %v356 = vpop.f32.mrb[0].mxu0
      %v357 = vadd.f32 %v284, %v356
      %v358 = vpop.f32.mrb[0].mxu0
      %359 = vdwg.mxu0
      %v360 = vmax.f32 %v357, 0.0
      %v361 = vld [vmem:[%s3] sm:$0xff]
      %v362 = vld [vmem:[%s3 + $0x8] sm:$0xff]
      %v363 = vld [vmem:[%s3 + $0x10] sm:$0xff]
      %v364 = vld [vmem:[%s3 + $0x18] sm:$0xff]
      %v365 = vld [vmem:[%s3 + $0x20] sm:$0xff]
      %v366 = vld [vmem:[%s3 + $0x28] sm:$0xff]
      %v367 = vld [vmem:[%s3 + $0x30] sm:$0xff]
      %v368 = vld [vmem:[%s3 + $0x38] sm:$0xff]
      %v369 = vld [vmem:[%s4] sm:$0x1]
      %v371 = vlaneseq
      %v372 = vshrl.u32 %v371, 7
      %v373 = vsub.s32 0, %v372
      %v374 = vrot.slane %v369, %v373
      %vm376 = vcmask 523264
      %v378 = vsel %vm376, %v360, 0
      %380 = vmatprep.subr.mxu0 0.0
      %381 = vmatpush1.msra.mxu0 %v361
      %382 = vmatprep.subr.mxu0 0.0
      %383 = vmatpush1.msra.mxu0 %v362
      %384 = vmatprep.subr.mxu0 0.0
      %385 = vmatpush1.msra.mxu0 %v363
      %386 = vmatprep.subr.mxu0 0.0
      %387 = vmatpush1.msra.mxu0 %v364
      %388 = vmatprep.subr.mxu0 0.0
      %389 = vmatpush1.msra.mxu0 %v365
      %390 = vmatprep.subr.mxu0 0.0
      %391 = vmatpush1.msra.mxu0 %v366
      %392 = vmatprep.subr.mxu0 0.0
      %393 = vmatpush1.msra.mxu0 %v367
      %394 = vmatprep.subr.mxu0 0.0
      %395 = vmatpush1.msra.mxu0 %v368
      %396 = vmatprep.subr.mxu0 0.0
      %397 = vmatpush1.msra.mxu0 0.0
      %398 = vmatprep.subr.mxu0 0.0
      %399 = vmatpush1.msra.mxu0 0.0
      %400 = vmatprep.subr.mxu0 0.0
      %401 = vmatpush1.msra.mxu0 0.0
      %402 = vmatprep.subr.mxu0 0.0
      %403 = vmatpush1.msra.mxu0 0.0
      %404 = vmatprep.subr.mxu0 0.0
      %405 = vmatpush1.msra.mxu0 0.0
      %406 = vmatprep.subr.mxu0 0.0
      %407 = vmatpush1.msra.mxu0 0.0
      %408 = vmatprep.subr.mxu0 0.0
      %409 = vmatpush1.msra.mxu0 0.0
      %410 = vmatprep.subr.mxu0 0.0
      %411 = vmatpush1.msra.mxu0 0.0
      %412 = vmatprep.subr.mxu0 0.0
      %413 = vmatpush1.msra.mxu0 0.0
      %414 = vmatprep.subr.mxu0 0.0
      %415 = vmatpush1.msra.mxu0 0.0
      %416 = vmatprep.subr.mxu0 0.0
      %417 = vmatpush1.msra.mxu0 0.0
      %418 = vmatprep.subr.mxu0 0.0
      %419 = vmatpush1.msra.mxu0 0.0
      %420 = vmatprep.subr.mxu0 0.0
      %421 = vmatpush1.msra.mxu0 0.0
      %422 = vmatprep.subr.mxu0 0.0
      %423 = vmatpush1.msra.mxu0 0.0
      %424 = vmatprep.subr.mxu0 0.0
      %425 = vmatpush1.msra.mxu0 0.0
      %426 = vmatprep.subr.mxu0 0.0
      %427 = vmatpush1.msra.mxu0 0.0
      %428 = vmatprep.subr.mxu0 0.0
      %429 = vmatpush1.msra.mxu0 0.0
      %430 = vmatprep.subr.mxu0 0.0
      %431 = vmatpush1.msra.mxu0 0.0
      %432 = vmatprep.subr.mxu0 0.0
      %433 = vmatpush1.msra.mxu0 0.0
      %434 = vmatprep.subr.mxu0 0.0
      %435 = vmatpush1.msra.mxu0 0.0
      %436 = vmatprep.subr.mxu0 0.0
      %437 = vmatpush1.msra.mxu0 0.0
      %438 = vmatprep.subr.mxu0 0.0
      %439 = vmatpush1.msra.mxu0 0.0
      %440 = vmatprep.subr.mxu0 0.0
      %441 = vmatpush1.msra.mxu0 0.0
      %442 = vmatprep.subr.mxu0 0.0
      %443 = vmatpush1.msra.mxu0 0.0
      %444 = vmatprep.mubr.f32.mxu0 0.0
      %445 = vmatmul.mubr.f32.gmra.mrb[0].mxu0 %v378
      %v446 = vpop.f32.mrb[0].mxu0
      %v447 = vadd.f32 %v374, %v446
      %v448 = vpop.f32.mrb[0].mxu0
      %449 = vdwg.mxu0
      %v450 = vadd.f32 %v274, %v447
      %v451 = vld [vmem:[%s5] sm:$0x1]
      %v452 = vld [vmem:[%s6] sm:$0x1]
      %v453 = vsel %vm286, %v450, 0.0
      %454 = vadd.xlane.f32.xlu0 %v453
      %v455 = vpop.xlane.xlu0 %454
      %v456 = vrcp.pop 32.0
      %v457 = vmul.f32 %v455, %v456
      %v458 = vsub.f32 %v450, %v457
      %v459 = vmul.f32 %v458, %v458
      %v460 = vsel %vm286, %v459, 0.0
      %461 = vadd.xlane.f32.xlu0 %v460
      %v462 = vpop.xlane.xlu0 %461
      %v463 = vmul.f32 %v462, %v456
      %v464 = vadd.f32 %v463, 1e-05
      %v465 = vrsqrt.pop %v464
      %v466 = vmul.f32 %v458, %v465
      %v468 = vlaneseq
      %v469 = vshrl.u32 %v468, 7
      %v470 = vsub.s32 0, %v469
      %v471 = vrot.slane %v451, %v470
      %v473 = vmul.f32 %v466, %v471
      %v475 = vlaneseq
      %v476 = vshrl.u32 %v475, 7
      %v477 = vsub.s32 0, %v476
      %v478 = vrot.slane %v452, %v477
      %v480 = vadd.f32 %v473, %v478
      %481 = vst.msk [vmem:[%s273] sm:$0xff] %vm286, %v480
      %p482 = scmp.lt.s32.totalorder %s18, 1
      %s483 = scalar_select %p482, %s18, 1
      %s484 = smul.addr %s483, 8
      %s485 = scalar_lea.vmem %s7, %s484
      // Predicated region
      $region49: #{seq2seq_transformer_forward.23} parent=47 // pred_check
        %p486 = pneg %p188
      $region50: #{seq2seq_transformer_forward.23} parent=47 // pred_check_branch
        %488 = sbr.rel (%p486) target = $region52
      $region51: #{seq2seq_transformer_forward.23} parent=47 // pred_region
        _
      $region52: #{seq2seq_transformer_forward.23} parent=47 // pred_fallthru
        _
    $region48: #{seq2seq_transformer_forward.23} parent=5 // pred_fallthru
      _
    %p489 = scmp.le.s32.totalorder 2, %s13
    // Predicated region
    $region53: #{seq2seq_transformer_forward.23} parent=5 // pred_check
      %p490 = pneg %p489
    $region54: #{seq2seq_transformer_forward.23} parent=5 // pred_check_branch
      %492 = sbr.rel (%p490) target = $region56
    $region55: #{seq2seq_transformer_forward.23} parent=5 // pred_region
      %s493 = ssub.s32 %s13, 2
      // Predicated region
      $region57: #{seq2seq_transformer_forward.23} parent=55 // pred_check
        %p494 = pneg %p194
      $region58: #{seq2seq_transformer_forward.23} parent=55 // pred_check_branch
        %496 = sbr.rel (%p494) target = $region60
      $region59: #{seq2seq_transformer_forward.23} parent=55 // pred_region
        %p497 = scmp.lt.s32.totalorder %s19, 1
        %s498 = scalar_select %p497, %s19, 1
        %s499 = smul.addr %s498, 8
        %s500 = scalar_lea.vmem %s7, %s499
      $region60: #{seq2seq_transformer_forward.23} parent=55 // pred_fallthru
        _
    $region56: #{seq2seq_transformer_forward.23} parent=5 // pred_fallthru
      _
  $region6: #{seq2seq_transformer_forward.23} parent=0 // loop_footer
    %s17 = sadd.s32 1, %s13
  $region7: #{seq2seq_transformer_forward.23} parent=0 // loop_footer_branch
    %12 = sbr.rel target = $region3
  $region8: #{seq2seq_transformer_forward.23} parent=0 // loop_exit
    _

</llo_original>
